<compile_context>
chip_gen: v6e
topology: v6e:2x2x1
jax: 0.10.0
libtpu: 0.0.40
codegen_flags: <defaults>
</compile_context>

<pallas_src>
import functools
import math

import jax
import jax.numpy as jnp
from jax.experimental import pallas as pl
from jax.experimental.pallas import tpu as pltpu

D_MODEL = 512
DIM_FF = 512
NHEAD = 1  # MMIL_Net instantiates Self_HANLayer with nhead=1


# ---------------------------------------------------------------------------
# In-kernel helpers (pure jnp + pl; only ever traced inside the Pallas kernel)
# ---------------------------------------------------------------------------

def _layernorm_f32(x, g, b, eps=1e-5):
    mean = jnp.mean(x, axis=-1, keepdims=True)
    var = jnp.mean(jnp.square(x - mean), axis=-1, keepdims=True)
    return (x - mean) * jax.lax.rsqrt(var + eps) * g + b


def _sdpa_heads(Q, K, V, nhead):
    """Multi-head SDPA on (T, D) f32 tiles.  Returns (out (T,D) f32, attn (T,T) f32)."""
    t, d = Q.shape
    dh = d // nhead
    scale = 1.0 / math.sqrt(dh)
    outs = []
    attn_sum = jnp.zeros((t, t), jnp.float32)
    for h in range(nhead):                                  # static unrolled loop
        sl = slice(h * dh, (h + 1) * dh)
        qh = Q[:, sl].astype(jnp.bfloat16)
        kh = K[:, sl].astype(jnp.bfloat16)
        vh = V[:, sl].astype(jnp.bfloat16)
        s = jax.lax.dot_general(qh, kh, (((1,), (1,)), ((), ())),
                                preferred_element_type=jnp.float32) * scale
        s = s - jnp.max(s, axis=-1, keepdims=True)
        e = jnp.exp(s)
        p = e * pl.reciprocal(jnp.sum(e, axis=-1, keepdims=True), approx=True)
        attn_sum = attn_sum + p
        outs.append(jnp.dot(p.astype(jnp.bfloat16), vh,
                            preferred_element_type=jnp.float32))
    o = outs[0] if nhead == 1 else jnp.concatenate(outs, axis=-1)
    return o, attn_sum * (1.0 / nhead)


# ---------------------------------------------------------------------------
# Fused Self_HANLayer kernel (one grid step = one batch element)
# ---------------------------------------------------------------------------

def _self_han_kernel(*refs, with_ca, nhead):
    if with_ca:
        (srcq_ref, srcv_ref,
         s_wqkv, s_bqkv, s_wo, s_bo,
         c_wq, c_bq, c_wkv, c_bkv, c_wo, c_bo,
         w1, b1, w2, b2,
         n1g, n1b, n2g, n2b,
         out_ref, attn_ref) = refs
    else:
        (srcq_ref,
         s_wqkv, s_bqkv, s_wo, s_bo,
         w1, b1, w2, b2,
         n1g, n1b, n2g, n2b,
         out_ref, attn_ref) = refs

    x_in = srcq_ref[0]                                   # (T, D) float32
    d = x_in.shape[-1]
    x_bf = x_in.astype(jnp.bfloat16)

    # ---- self attention: fused QKV projection (D -> 3D) in one MXU pass ----
    qkv = jnp.dot(x_bf, s_wqkv[...], preferred_element_type=jnp.float32) + s_bqkv[...]
    o_self, attn = _sdpa_heads(qkv[:, :d], qkv[:, d:2 * d], qkv[:, 2 * d:], nhead)
    src2 = jnp.dot(o_self.astype(jnp.bfloat16), s_wo[...],
                   preferred_element_type=jnp.float32) + s_bo[...]

    x = x_in + src2                                       # dropout12: eval identity

    if with_ca:
        # ---- cross-modal attention: q from src_q, fused KV projection on src_v ----
        v_bf = srcv_ref[0].astype(jnp.bfloat16)
        Qc = jnp.dot(x_bf, c_wq[...], preferred_element_type=jnp.float32) + c_bq[...]
        KVc = jnp.dot(v_bf, c_wkv[...], preferred_element_type=jnp.float32) + c_bkv[...]
        o_cm, _ = _sdpa_heads(Qc, KVc[:, :d], KVc[:, d:], nhead)
        src1 = jnp.dot(o_cm.astype(jnp.bfloat16), c_wo[...],
                       preferred_element_type=jnp.float32) + c_bo[...]
        x = x + src1                                      # dropout11: eval identity

    x = _layernorm_f32(x, n1g[...], n1b[...])             # norm1

    # ---- feed-forward: linear1 + ReLU + linear2 fused, residual, norm2 ----
    h = jnp.maximum(jnp.dot(x.astype(jnp.bfloat16), w1[...],
                            preferred_element_type=jnp.float32) + b1[...], 0.0)
    y = jnp.dot(h.astype(jnp.bfloat16), w2[...],
                preferred_element_type=jnp.float32) + b2[...]
    x = _layernorm_f32(x + y, n2g[...], n2b[...])          # norm2

    out_ref[...] = x[None]
    attn_ref[...] = attn[None]


# ---------------------------------------------------------------------------
# Wrapper
# ---------------------------------------------------------------------------

def self_han_layer(params, src_q, src_v=None, with_ca=True, nhead=NHEAD):
    """src_q/src_v: (B, T, D) float32.  Returns (out (B,T,D), attn (B,T,T))."""
    B, T, D = src_q.shape
    p = params

    x_spec = pl.BlockSpec((1, T, D), lambda i: (i, 0, 0))

    def w_spec(a):
        return pl.BlockSpec(a.shape, lambda i: (0, 0))     # constant: DMA'd once

    self_w = [p["self_w_qkv"], p["self_b_qkv"], p["self_w_o"], p["self_b_o"]]
    cm_w = [p["cm_w_q"], p["cm_b_q"], p["cm_w_kv"], p["cm_b_kv"],
            p["cm_w_o"], p["cm_b_o"]]
    ffn_norm = [p["w1"], p["b1"], p["w2"], p["b2"],
                p["norm1_g"], p["norm1_b"], p["norm2_g"], p["norm2_b"]]

    if with_ca:
        inputs = [src_q, src_v] + self_w + cm_w + ffn_norm
        in_specs = [x_spec, x_spec] + [w_spec(a) for a in self_w + cm_w + ffn_norm]
    else:
        inputs = [src_q] + self_w + ffn_norm
        in_specs = [x_spec] + [w_spec(a) for a in self_w + ffn_norm]

    out, attn = pl.pallas_call(
        functools.partial(_self_han_kernel, with_ca=with_ca, nhead=nhead),
        grid=(B,),
        in_specs=in_specs,
        out_specs=(
            pl.BlockSpec((1, T, D), lambda i: (i, 0, 0)),
            pl.BlockSpec((1, T, T), lambda i: (i, 0, 0)),
        ),
        out_shape=(
            jax.ShapeDtypeStruct((B, T, D), jnp.float32),
            jax.ShapeDtypeStruct((B, T, T), jnp.float32),
        ),
        compiler_params=pltpu.CompilerParams(
            dimension_semantics=("parallel",),
            vmem_limit_bytes=48 * 1024 * 1024,
        ),
    )(*inputs)
    return out, attn


# ---------------------------------------------------------------------------
# Pure-JAX reference (mirrors the kernel's bf16-matmul / f32-accumulate math)
# ---------------------------------------------------------------------------

def reference_forward(params, src_q, src_v=None, with_ca=True, nhead=NHEAD, eps=1e-5):
    p = params
    D = src_q.shape[-1]
    dh = D // nhead
    scale = 1.0 / math.sqrt(dh)

    def mm(x, w, b):
        return jnp.dot(x.astype(jnp.bfloat16), w,
                       preferred_element_type=jnp.float32) + b

    def sdpa(Q, K, V):
        outs, attn_sum = [], 0.0
        for h in range(nhead):
            sl = slice(h * dh, (h + 1) * dh)
            s = jnp.einsum("btd,bsd->bts",
                           Q[..., sl].astype(jnp.bfloat16),
                           K[..., sl].astype(jnp.bfloat16),
                           preferred_element_type=jnp.float32) * scale
            pmat = jax.nn.softmax(s, axis=-1)
            attn_sum = attn_sum + pmat
            outs.append(jnp.einsum("bts,bsd->btd",
                                   pmat.astype(jnp.bfloat16),
                                   V[..., sl].astype(jnp.bfloat16),
                                   preferred_element_type=jnp.float32))
        o = outs[0] if nhead == 1 else jnp.concatenate(outs, axis=-1)
        return o, attn_sum / nhead

    def ln(x, g, b):
        m = jnp.mean(x, axis=-1, keepdims=True)
        v = jnp.mean(jnp.square(x - m), axis=-1, keepdims=True)
        return (x - m) * jax.lax.rsqrt(v + eps) * g + b

    qkv = mm(src_q, p["self_w_qkv"], p["self_b_qkv"])
    o_self, attn = sdpa(qkv[..., :D], qkv[..., D:2 * D], qkv[..., 2 * D:])
    x = src_q + mm(o_self, p["self_w_o"], p["self_b_o"])
    if with_ca:
        Qc = mm(src_q, p["cm_w_q"], p["cm_b_q"])
        KVc = mm(src_v, p["cm_w_kv"], p["cm_b_kv"])
        o_cm, _ = sdpa(Qc, KVc[..., :D], KVc[..., D:])
        x = x + mm(o_cm, p["cm_w_o"], p["cm_b_o"])
    x = ln(x, p["norm1_g"], p["norm1_b"])
    h = jnp.maximum(mm(x, p["w1"], p["b1"]), 0.0)
    x = ln(x + mm(h, p["w2"], p["b2"]), p["norm2_g"], p["norm2_b"])
    return x, attn


# ---------------------------------------------------------------------------
# Deterministic parameter init (weights stored in bf16, biases / norms in f32)
# ---------------------------------------------------------------------------

def init_params(key, d_model=D_MODEL, dim_ff=DIM_FF):
    ks = jax.random.split(key, 7)

    def lin(k, fan_in, fan_out):
        kw, kb = jax.random.split(k)
        bound = 1.0 / math.sqrt(fan_in)
        w = jax.random.uniform(kw, (fan_in, fan_out), jnp.float32, -bound, bound)
        b = jax.random.uniform(kb, (fan_out,), jnp.float32, -bound, bound)
        return w.astype(jnp.bfloat16), b.reshape(1, -1)

    s_w_qkv, s_b_qkv = lin(ks[0], d_model, 3 * d_model)
    s_wo, s_bo = lin(ks[1], d_model, d_model)
    c_wq, c_bq = lin(ks[2], d_model, d_model)
    c_wkv, c_bkv = lin(ks[3], d_model, 2 * d_model)
    c_wo, c_bo = lin(ks[4], d_model, d_model)
    w1, b1 = lin(ks[5], d_model, dim_ff)
    w2, b2 = lin(ks[6], dim_ff, d_model)

    return dict(
        self_w_qkv=s_w_qkv, self_b_qkv=s_b_qkv, self_w_o=s_wo, self_b_o=s_bo,
        cm_w_q=c_wq, cm_b_q=c_bq, cm_w_kv=c_wkv, cm_b_kv=c_bkv,
        cm_w_o=c_wo, cm_b_o=c_bo,
        w1=w1, b1=b1, w2=w2, b2=b2,
        norm1_g=jnp.ones((1, d_model), jnp.float32),
        norm1_b=jnp.zeros((1, d_model), jnp.float32),
        norm2_g=jnp.ones((1, d_model), jnp.float32),
        norm2_b=jnp.zeros((1, d_model), jnp.float32),
    )


if __name__ == "__main__":
    key = jax.random.PRNGKey(0)
    kp, kq, kv = jax.random.split(key, 3)

    B, T = 2, 10
    params = init_params(kp)
    src_q = jax.random.normal(kq, (B, T, D_MODEL), dtype=jnp.float32)
    src_v = jax.random.normal(kv, (B, T, D_MODEL), dtype=jnp.float32)

    fwd_ca = jax.jit(functools.partial(self_han_layer, with_ca=True))
    fwd_sa = jax.jit(functools.partial(self_han_layer, with_ca=False))

    out_ca, attn_ca = jax.block_until_ready(fwd_ca(params, src_q, src_v))
    out_sa, attn_sa = jax.block_until_ready(fwd_sa(params, src_q))

    assert out_ca.shape == (B, T, D_MODEL) and attn_ca.shape == (B, T, T)
    assert out_sa.shape == (B, T, D_MODEL) and attn_sa.shape == (B, T, T)

    # loose numerical sanity check vs. a pure-JAX reference with the same
    # bf16-operand / f32-accumulate math (kernel uses approx reciprocal)
    ref_ca, ref_attn_ca = reference_forward(params, src_q, src_v, with_ca=True)
    ref_sa, ref_attn_sa = reference_forward(params, src_q, with_ca=False)
    assert float(jnp.max(jnp.abs(out_ca - ref_ca))) < 5e-2
    assert float(jnp.max(jnp.abs(out_sa - ref_sa))) < 5e-2
    assert float(jnp.max(jnp.abs(attn_ca - ref_attn_ca))) < 5e-2
    assert float(jnp.max(jnp.abs(attn_sa - ref_attn_sa))) < 5e-2

    print("KERNEL_OK")
</pallas_src>

<mosaic_0001>
module attributes {stable_mosaic.version = 11 : i64} {
  func.func @_self_han_kernel(%arg0: i32, %arg1: memref<1x10x512xf32, #tpu.memory_space<vmem>>, %arg2: memref<1x10x512xf32, #tpu.memory_space<vmem>>, %arg3: memref<512x1536xbf16, #tpu.memory_space<vmem>>, %arg4: memref<1x1536xf32, #tpu.memory_space<vmem>>, %arg5: memref<512x512xbf16, #tpu.memory_space<vmem>>, %arg6: memref<1x512xf32, #tpu.memory_space<vmem>>, %arg7: memref<512x512xbf16, #tpu.memory_space<vmem>>, %arg8: memref<1x512xf32, #tpu.memory_space<vmem>>, %arg9: memref<512x1024xbf16, #tpu.memory_space<vmem>>, %arg10: memref<1x1024xf32, #tpu.memory_space<vmem>>, %arg11: memref<512x512xbf16, #tpu.memory_space<vmem>>, %arg12: memref<1x512xf32, #tpu.memory_space<vmem>>, %arg13: memref<512x512xbf16, #tpu.memory_space<vmem>>, %arg14: memref<1x512xf32, #tpu.memory_space<vmem>>, %arg15: memref<512x512xbf16, #tpu.memory_space<vmem>>, %arg16: memref<1x512xf32, #tpu.memory_space<vmem>>, %arg17: memref<1x512xf32, #tpu.memory_space<vmem>>, %arg18: memref<1x512xf32, #tpu.memory_space<vmem>>, %arg19: memref<1x512xf32, #tpu.memory_space<vmem>>, %arg20: memref<1x512xf32, #tpu.memory_space<vmem>>, %arg21: memref<1x10x512xf32, #tpu.memory_space<vmem>>, %arg22: memref<1x10x10xf32, #tpu.memory_space<vmem>>) attributes {dimension_semantics = [#tpu.dimension_semantics<parallel>], iteration_bounds = array<i64: 2>, scalar_prefetch = 0 : i64, scratch_operands = 0 : i64, tpu.core_type = #tpu.core_type<tc>, window_params = [{transform_indices = @transform_0, window_bounds = array<i64: 1, 10, 512>}, {transform_indices = @transform_1, window_bounds = array<i64: 1, 10, 512>}, {pipeline_mode = #tpu.pipeline_mode<synchronous>, transform_indices = @transform_2, window_bounds = array<i64: 512, 1536>}, {pipeline_mode = #tpu.pipeline_mode<synchronous>, transform_indices = @transform_3, window_bounds = array<i64: 1, 1536>}, {pipeline_mode = #tpu.pipeline_mode<synchronous>, transform_indices = @transform_4, window_bounds = array<i64: 512, 512>}, {pipeline_mode = #tpu.pipeline_mode<synchronous>, transform_indices = @transform_5, window_bounds = array<i64: 1, 512>}, {pipeline_mode = #tpu.pipeline_mode<synchronous>, transform_indices = @transform_6, window_bounds = array<i64: 512, 512>}, {pipeline_mode = #tpu.pipeline_mode<synchronous>, transform_indices = @transform_7, window_bounds = array<i64: 1, 512>}, {pipeline_mode = #tpu.pipeline_mode<synchronous>, transform_indices = @transform_8, window_bounds = array<i64: 512, 1024>}, {pipeline_mode = #tpu.pipeline_mode<synchronous>, transform_indices = @transform_9, window_bounds = array<i64: 1, 1024>}, {pipeline_mode = #tpu.pipeline_mode<synchronous>, transform_indices = @transform_10, window_bounds = array<i64: 512, 512>}, {pipeline_mode = #tpu.pipeline_mode<synchronous>, transform_indices = @transform_11, window_bounds = array<i64: 1, 512>}, {pipeline_mode = #tpu.pipeline_mode<synchronous>, transform_indices = @transform_12, window_bounds = array<i64: 512, 512>}, {pipeline_mode = #tpu.pipeline_mode<synchronous>, transform_indices = @transform_13, window_bounds = array<i64: 1, 512>}, {pipeline_mode = #tpu.pipeline_mode<synchronous>, transform_indices = @transform_14, window_bounds = array<i64: 512, 512>}, {pipeline_mode = #tpu.pipeline_mode<synchronous>, transform_indices = @transform_15, window_bounds = array<i64: 1, 512>}, {pipeline_mode = #tpu.pipeline_mode<synchronous>, transform_indices = @transform_16, window_bounds = array<i64: 1, 512>}, {pipeline_mode = #tpu.pipeline_mode<synchronous>, transform_indices = @transform_17, window_bounds = array<i64: 1, 512>}, {pipeline_mode = #tpu.pipeline_mode<synchronous>, transform_indices = @transform_18, window_bounds = array<i64: 1, 512>}, {pipeline_mode = #tpu.pipeline_mode<synchronous>, transform_indices = @transform_19, window_bounds = array<i64: 1, 512>}, {transform_indices = @transform_20, window_bounds = array<i64: 1, 10, 512>}, {transform_indices = @transform_21, window_bounds = array<i64: 1, 10, 10>}]} {
    %c0 = arith.constant 0 : index
    %c0_0 = arith.constant 0 : index
    %c0_1 = arith.constant 0 : index
    %0 = vector.load %arg1[%c0, %c0_0, %c0_1] : memref<1x10x512xf32, #tpu.memory_space<vmem>>, vector<1x10x512xf32>
    %1 = vector.shape_cast %0 : vector<1x10x512xf32> to vector<10x512xf32>
    %2 = arith.truncf %1 : vector<10x512xf32> to vector<10x512xbf16>
    %c0_2 = arith.constant 0 : index
    %c0_3 = arith.constant 0 : index
    %3 = vector.load %arg3[%c0_2, %c0_3] : memref<512x1536xbf16, #tpu.memory_space<vmem>>, vector<512x1536xbf16>
    %cst = arith.constant dense<0.000000e+00> : vector<10x1536xf32>
    %4 = tpu.matmul %2, %3, %cst {dimension_numbers = #tpu.dot_dimension_numbers<[1], [0], [0], [1], [0, 0, 1, 1], [], []>} : vector<10x512xbf16>, vector<512x1536xbf16>, vector<10x1536xf32> -> vector<10x1536xf32>
    %c0_4 = arith.constant 0 : index
    %c0_5 = arith.constant 0 : index
    %5 = vector.load %arg4[%c0_4, %c0_5] : memref<1x1536xf32, #tpu.memory_space<vmem>>, vector<1x1536xf32>
    %6 = vector.broadcast %5 : vector<1x1536xf32> to vector<10x1536xf32>
    %7 = arith.addf %4, %6 : vector<10x1536xf32>
    %8 = vector.extract_strided_slice %7 {offsets = [0, 0], sizes = [10, 512], strides = [1, 1]} : vector<10x1536xf32> to vector<10x512xf32>
    %9 = vector.extract_strided_slice %7 {offsets = [0, 512], sizes = [10, 512], strides = [1, 1]} : vector<10x1536xf32> to vector<10x512xf32>
    %10 = vector.extract_strided_slice %7 {offsets = [0, 1024], sizes = [10, 512], strides = [1, 1]} : vector<10x1536xf32> to vector<10x512xf32>
    %cst_6 = arith.constant 0.000000e+00 : f32
    %11 = vector.broadcast %cst_6 : f32 to vector<10x10xf32>
    %12 = arith.truncf %8 : vector<10x512xf32> to vector<10x512xbf16>
    %13 = arith.truncf %9 : vector<10x512xf32> to vector<10x512xbf16>
    %14 = arith.truncf %10 : vector<10x512xf32> to vector<10x512xbf16>
    %cst_7 = arith.constant dense<0.000000e+00> : vector<10x10xf32>
    %15 = tpu.matmul %12, %13, %cst_7 {dimension_numbers = #tpu.dot_dimension_numbers<[1], [1], [0], [0], [0, 0, 1, 0], [], []>} : vector<10x512xbf16>, vector<10x512xbf16>, vector<10x10xf32> -> vector<10x10xf32>
    %cst_8 = arith.constant 0.0441941731 : f32
    %16 = vector.broadcast %cst_8 : f32 to vector<10x10xf32>
    %17 = arith.mulf %15, %16 : vector<10x10xf32>
    %cst_9 = arith.constant dense<0xFF800000> : vector<10xf32>
    %18 = vector.multi_reduction <maximumf>, %17, %cst_9 [1] : vector<10x10xf32> to vector<10xf32>
    %19 = vector.shape_cast %18 : vector<10xf32> to vector<10x1xf32>
    %20 = vector.broadcast %19 : vector<10x1xf32> to vector<10x10xf32>
    %21 = arith.subf %17, %20 : vector<10x10xf32>
    %22 = math.exp %21 : vector<10x10xf32>
    %cst_10 = arith.constant dense<0.000000e+00> : vector<10xf32>
    %23 = vector.multi_reduction <add>, %22, %cst_10 [1] : vector<10x10xf32> to vector<10xf32>
    %24 = vector.shape_cast %23 : vector<10xf32> to vector<10x1xf32>
    %25 = tpu.reciprocal %24 {approx = true} : vector<10x1xf32> -> vector<10x1xf32>
    %26 = vector.broadcast %25 : vector<10x1xf32> to vector<10x10xf32>
    %27 = arith.mulf %22, %26 : vector<10x10xf32>
    %28 = arith.addf %11, %27 : vector<10x10xf32>
    %29 = arith.truncf %27 : vector<10x10xf32> to vector<10x10xbf16>
    %cst_11 = arith.constant dense<0.000000e+00> : vector<10x512xf32>
    %30 = tpu.matmul %29, %14, %cst_11 {dimension_numbers = #tpu.dot_dimension_numbers<[1], [0], [0], [1], [0, 0, 1, 1], [], []>} : vector<10x10xbf16>, vector<10x512xbf16>, vector<10x512xf32> -> vector<10x512xf32>
    %cst_12 = arith.constant 1.000000e+00 : f32
    %31 = vector.broadcast %cst_12 : f32 to vector<10x10xf32>
    %32 = arith.mulf %28, %31 : vector<10x10xf32>
    %33 = arith.truncf %30 : vector<10x512xf32> to vector<10x512xbf16>
    %c0_13 = arith.constant 0 : index
    %c0_14 = arith.constant 0 : index
    %34 = vector.load %arg5[%c0_13, %c0_14] : memref<512x512xbf16, #tpu.memory_space<vmem>>, vector<512x512xbf16>
    %cst_15 = arith.constant dense<0.000000e+00> : vector<10x512xf32>
    %35 = tpu.matmul %33, %34, %cst_15 {dimension_numbers = #tpu.dot_dimension_numbers<[1], [0], [0], [1], [0, 0, 1, 1], [], []>} : vector<10x512xbf16>, vector<512x512xbf16>, vector<10x512xf32> -> vector<10x512xf32>
    %c0_16 = arith.constant 0 : index
    %c0_17 = arith.constant 0 : index
    %36 = vector.load %arg6[%c0_16, %c0_17] : memref<1x512xf32, #tpu.memory_space<vmem>>, vector<1x512xf32>
    %37 = vector.broadcast %36 : vector<1x512xf32> to vector<10x512xf32>
    %38 = arith.addf %35, %37 : vector<10x512xf32>
    %39 = arith.addf %1, %38 : vector<10x512xf32>
    %c0_18 = arith.constant 0 : index
    %c0_19 = arith.constant 0 : index
    %c0_20 = arith.constant 0 : index
    %40 = vector.load %arg2[%c0_18, %c0_19, %c0_20] : memref<1x10x512xf32, #tpu.memory_space<vmem>>, vector<1x10x512xf32>
    %41 = vector.shape_cast %40 : vector<1x10x512xf32> to vector<10x512xf32>
    %42 = arith.truncf %41 : vector<10x512xf32> to vector<10x512xbf16>
    %c0_21 = arith.constant 0 : index
    %c0_22 = arith.constant 0 : index
    %43 = vector.load %arg7[%c0_21, %c0_22] : memref<512x512xbf16, #tpu.memory_space<vmem>>, vector<512x512xbf16>
    %cst_23 = arith.constant dense<0.000000e+00> : vector<10x512xf32>
    %44 = tpu.matmul %2, %43, %cst_23 {dimension_numbers = #tpu.dot_dimension_numbers<[1], [0], [0], [1], [0, 0, 1, 1], [], []>} : vector<10x512xbf16>, vector<512x512xbf16>, vector<10x512xf32> -> vector<10x512xf32>
    %c0_24 = arith.constant 0 : index
    %c0_25 = arith.constant 0 : index
    %45 = vector.load %arg8[%c0_24, %c0_25] : memref<1x512xf32, #tpu.memory_space<vmem>>, vector<1x512xf32>
    %46 = vector.broadcast %45 : vector<1x512xf32> to vector<10x512xf32>
    %47 = arith.addf %44, %46 : vector<10x512xf32>
    %c0_26 = arith.constant 0 : index
    %c0_27 = arith.constant 0 : index
    %48 = vector.load %arg9[%c0_26, %c0_27] : memref<512x1024xbf16, #tpu.memory_space<vmem>>, vector<512x1024xbf16>
    %cst_28 = arith.constant dense<0.000000e+00> : vector<10x1024xf32>
    %49 = tpu.matmul %42, %48, %cst_28 {dimension_numbers = #tpu.dot_dimension_numbers<[1], [0], [0], [1], [0, 0, 1, 1], [], []>} : vector<10x512xbf16>, vector<512x1024xbf16>, vector<10x1024xf32> -> vector<10x1024xf32>
    %c0_29 = arith.constant 0 : index
    %c0_30 = arith.constant 0 : index
    %50 = vector.load %arg10[%c0_29, %c0_30] : memref<1x1024xf32, #tpu.memory_space<vmem>>, vector<1x1024xf32>
    %51 = vector.broadcast %50 : vector<1x1024xf32> to vector<10x1024xf32>
    %52 = arith.addf %49, %51 : vector<10x1024xf32>
    %53 = vector.extract_strided_slice %52 {offsets = [0, 0], sizes = [10, 512], strides = [1, 1]} : vector<10x1024xf32> to vector<10x512xf32>
    %54 = vector.extract_strided_slice %52 {offsets = [0, 512], sizes = [10, 512], strides = [1, 1]} : vector<10x1024xf32> to vector<10x512xf32>
    %55 = arith.truncf %47 : vector<10x512xf32> to vector<10x512xbf16>
    %56 = arith.truncf %53 : vector<10x512xf32> to vector<10x512xbf16>
    %57 = arith.truncf %54 : vector<10x512xf32> to vector<10x512xbf16>
    %cst_31 = arith.constant dense<0.000000e+00> : vector<10x10xf32>
    %58 = tpu.matmul %55, %56, %cst_31 {dimension_numbers = #tpu.dot_dimension_numbers<[1], [1], [0], [0], [0, 0, 1, 0], [], []>} : vector<10x512xbf16>, vector<10x512xbf16>, vector<10x10xf32> -> vector<10x10xf32>
    %cst_32 = arith.constant 0.0441941731 : f32
    %59 = vector.broadcast %cst_32 : f32 to vector<10x10xf32>
    %60 = arith.mulf %58, %59 : vector<10x10xf32>
    %cst_33 = arith.constant dense<0xFF800000> : vector<10xf32>
    %61 = vector.multi_reduction <maximumf>, %60, %cst_33 [1] : vector<10x10xf32> to vector<10xf32>
    %62 = vector.shape_cast %61 : vector<10xf32> to vector<10x1xf32>
    %63 = vector.broadcast %62 : vector<10x1xf32> to vector<10x10xf32>
    %64 = arith.subf %60, %63 : vector<10x10xf32>
    %65 = math.exp %64 : vector<10x10xf32>
    %cst_34 = arith.constant dense<0.000000e+00> : vector<10xf32>
    %66 = vector.multi_reduction <add>, %65, %cst_34 [1] : vector<10x10xf32> to vector<10xf32>
    %67 = vector.shape_cast %66 : vector<10xf32> to vector<10x1xf32>
    %68 = tpu.reciprocal %67 {approx = true} : vector<10x1xf32> -> vector<10x1xf32>
    %69 = vector.broadcast %68 : vector<10x1xf32> to vector<10x10xf32>
    %70 = arith.mulf %65, %69 : vector<10x10xf32>
    %71 = arith.truncf %70 : vector<10x10xf32> to vector<10x10xbf16>
    %cst_35 = arith.constant dense<0.000000e+00> : vector<10x512xf32>
    %72 = tpu.matmul %71, %57, %cst_35 {dimension_numbers = #tpu.dot_dimension_numbers<[1], [0], [0], [1], [0, 0, 1, 1], [], []>} : vector<10x10xbf16>, vector<10x512xbf16>, vector<10x512xf32> -> vector<10x512xf32>
    %73 = arith.truncf %72 : vector<10x512xf32> to vector<10x512xbf16>
    %c0_36 = arith.constant 0 : index
    %c0_37 = arith.constant 0 : index
    %74 = vector.load %arg11[%c0_36, %c0_37] : memref<512x512xbf16, #tpu.memory_space<vmem>>, vector<512x512xbf16>
    %cst_38 = arith.constant dense<0.000000e+00> : vector<10x512xf32>
    %75 = tpu.matmul %73, %74, %cst_38 {dimension_numbers = #tpu.dot_dimension_numbers<[1], [0], [0], [1], [0, 0, 1, 1], [], []>} : vector<10x512xbf16>, vector<512x512xbf16>, vector<10x512xf32> -> vector<10x512xf32>
    %c0_39 = arith.constant 0 : index
    %c0_40 = arith.constant 0 : index
    %76 = vector.load %arg12[%c0_39, %c0_40] : memref<1x512xf32, #tpu.memory_space<vmem>>, vector<1x512xf32>
    %77 = vector.broadcast %76 : vector<1x512xf32> to vector<10x512xf32>
    %78 = arith.addf %75, %77 : vector<10x512xf32>
    %79 = arith.addf %39, %78 : vector<10x512xf32>
    %c0_41 = arith.constant 0 : index
    %c0_42 = arith.constant 0 : index
    %80 = vector.load %arg17[%c0_41, %c0_42] : memref<1x512xf32, #tpu.memory_space<vmem>>, vector<1x512xf32>
    %c0_43 = arith.constant 0 : index
    %c0_44 = arith.constant 0 : index
    %81 = vector.load %arg18[%c0_43, %c0_44] : memref<1x512xf32, #tpu.memory_space<vmem>>, vector<1x512xf32>
    %cst_45 = arith.constant dense<0.000000e+00> : vector<10xf32>
    %82 = vector.multi_reduction <add>, %79, %cst_45 [1] : vector<10x512xf32> to vector<10xf32>
    %83 = vector.shape_cast %82 : vector<10xf32> to vector<10x1xf32>
    %cst_46 = arith.constant 5.120000e+02 : f32
    %84 = vector.broadcast %cst_46 : f32 to vector<10x1xf32>
    %85 = arith.divf %83, %84 : vector<10x1xf32>
    %86 = vector.broadcast %85 : vector<10x1xf32> to vector<10x512xf32>
    %87 = arith.subf %79, %86 : vector<10x512xf32>
    %88 = arith.mulf %87, %87 : vector<10x512xf32>
    %cst_47 = arith.constant dense<0.000000e+00> : vector<10xf32>
    %89 = vector.multi_reduction <add>, %88, %cst_47 [1] : vector<10x512xf32> to vector<10xf32>
    %90 = vector.shape_cast %89 : vector<10xf32> to vector<10x1xf32>
    %cst_48 = arith.constant 5.120000e+02 : f32
    %91 = vector.broadcast %cst_48 : f32 to vector<10x1xf32>
    %92 = arith.divf %90, %91 : vector<10x1xf32>
    %93 = vector.broadcast %85 : vector<10x1xf32> to vector<10x512xf32>
    %94 = arith.subf %79, %93 : vector<10x512xf32>
    %cst_49 = arith.constant 9.99999974E-6 : f32
    %95 = vector.broadcast %cst_49 : f32 to vector<10x1xf32>
    %96 = arith.addf %92, %95 : vector<10x1xf32>
    %97 = math.rsqrt %96 : vector<10x1xf32>
    %98 = vector.broadcast %97 : vector<10x1xf32> to vector<10x512xf32>
    %99 = arith.mulf %94, %98 : vector<10x512xf32>
    %100 = vector.broadcast %80 : vector<1x512xf32> to vector<10x512xf32>
    %101 = arith.mulf %99, %100 : vector<10x512xf32>
    %102 = vector.broadcast %81 : vector<1x512xf32> to vector<10x512xf32>
    %103 = arith.addf %101, %102 : vector<10x512xf32>
    %104 = arith.truncf %103 : vector<10x512xf32> to vector<10x512xbf16>
    %c0_50 = arith.constant 0 : index
    %c0_51 = arith.constant 0 : index
    %105 = vector.load %arg13[%c0_50, %c0_51] : memref<512x512xbf16, #tpu.memory_space<vmem>>, vector<512x512xbf16>
    %cst_52 = arith.constant dense<0.000000e+00> : vector<10x512xf32>
    %106 = tpu.matmul %104, %105, %cst_52 {dimension_numbers = #tpu.dot_dimension_numbers<[1], [0], [0], [1], [0, 0, 1, 1], [], []>} : vector<10x512xbf16>, vector<512x512xbf16>, vector<10x512xf32> -> vector<10x512xf32>
    %c0_53 = arith.constant 0 : index
    %c0_54 = arith.constant 0 : index
    %107 = vector.load %arg14[%c0_53, %c0_54] : memref<1x512xf32, #tpu.memory_space<vmem>>, vector<1x512xf32>
    %108 = vector.broadcast %107 : vector<1x512xf32> to vector<10x512xf32>
    %109 = arith.addf %106, %108 : vector<10x512xf32>
    %cst_55 = arith.constant 0.000000e+00 : f32
    %110 = vector.broadcast %cst_55 : f32 to vector<10x512xf32>
    %111 = arith.maximumf %109, %110 : vector<10x512xf32>
    %112 = arith.truncf %111 : vector<10x512xf32> to vector<10x512xbf16>
    %c0_56 = arith.constant 0 : index
    %c0_57 = arith.constant 0 : index
    %113 = vector.load %arg15[%c0_56, %c0_57] : memref<512x512xbf16, #tpu.memory_space<vmem>>, vector<512x512xbf16>
    %cst_58 = arith.constant dense<0.000000e+00> : vector<10x512xf32>
    %114 = tpu.matmul %112, %113, %cst_58 {dimension_numbers = #tpu.dot_dimension_numbers<[1], [0], [0], [1], [0, 0, 1, 1], [], []>} : vector<10x512xbf16>, vector<512x512xbf16>, vector<10x512xf32> -> vector<10x512xf32>
    %c0_59 = arith.constant 0 : index
    %c0_60 = arith.constant 0 : index
    %115 = vector.load %arg16[%c0_59, %c0_60] : memref<1x512xf32, #tpu.memory_space<vmem>>, vector<1x512xf32>
    %116 = vector.broadcast %115 : vector<1x512xf32> to vector<10x512xf32>
    %117 = arith.addf %114, %116 : vector<10x512xf32>
    %118 = arith.addf %103, %117 : vector<10x512xf32>
    %c0_61 = arith.constant 0 : index
    %c0_62 = arith.constant 0 : index
    %119 = vector.load %arg19[%c0_61, %c0_62] : memref<1x512xf32, #tpu.memory_space<vmem>>, vector<1x512xf32>
    %c0_63 = arith.constant 0 : index
    %c0_64 = arith.constant 0 : index
    %120 = vector.load %arg20[%c0_63, %c0_64] : memref<1x512xf32, #tpu.memory_space<vmem>>, vector<1x512xf32>
    %cst_65 = arith.constant dense<0.000000e+00> : vector<10xf32>
    %121 = vector.multi_reduction <add>, %118, %cst_65 [1] : vector<10x512xf32> to vector<10xf32>
    %122 = vector.shape_cast %121 : vector<10xf32> to vector<10x1xf32>
    %cst_66 = arith.constant 5.120000e+02 : f32
    %123 = vector.broadcast %cst_66 : f32 to vector<10x1xf32>
    %124 = arith.divf %122, %123 : vector<10x1xf32>
    %125 = vector.broadcast %124 : vector<10x1xf32> to vector<10x512xf32>
    %126 = arith.subf %118, %125 : vector<10x512xf32>
    %127 = arith.mulf %126, %126 : vector<10x512xf32>
    %cst_67 = arith.constant dense<0.000000e+00> : vector<10xf32>
    %128 = vector.multi_reduction <add>, %127, %cst_67 [1] : vector<10x512xf32> to vector<10xf32>
    %129 = vector.shape_cast %128 : vector<10xf32> to vector<10x1xf32>
    %cst_68 = arith.constant 5.120000e+02 : f32
    %130 = vector.broadcast %cst_68 : f32 to vector<10x1xf32>
    %131 = arith.divf %129, %130 : vector<10x1xf32>
    %132 = vector.broadcast %124 : vector<10x1xf32> to vector<10x512xf32>
    %133 = arith.subf %118, %132 : vector<10x512xf32>
    %cst_69 = arith.constant 9.99999974E-6 : f32
    %134 = vector.broadcast %cst_69 : f32 to vector<10x1xf32>
    %135 = arith.addf %131, %134 : vector<10x1xf32>
    %136 = math.rsqrt %135 : vector<10x1xf32>
    %137 = vector.broadcast %136 : vector<10x1xf32> to vector<10x512xf32>
    %138 = arith.mulf %133, %137 : vector<10x512xf32>
    %139 = vector.broadcast %119 : vector<1x512xf32> to vector<10x512xf32>
    %140 = arith.mulf %138, %139 : vector<10x512xf32>
    %141 = vector.broadcast %120 : vector<1x512xf32> to vector<10x512xf32>
    %142 = arith.addf %140, %141 : vector<10x512xf32>
    %143 = vector.shape_cast %142 : vector<10x512xf32> to vector<1x10x512xf32>
    %c0_70 = arith.constant 0 : index
    %c0_71 = arith.constant 0 : index
    %c0_72 = arith.constant 0 : index
    %144 = vector.load %arg21[%c0_70, %c0_71, %c0_72] : memref<1x10x512xf32, #tpu.memory_space<vmem>>, vector<1x10x512xf32>
    tpu.vector_store %arg21[%c0_70, %c0_71, %c0_72], %143 {strides = array<i32>} : memref<1x10x512xf32, #tpu.memory_space<vmem>>, vector<1x10x512xf32>,
    %145 = vector.shape_cast %32 : vector<10x10xf32> to vector<1x10x10xf32>
    %c0_73 = arith.constant 0 : index
    %c0_74 = arith.constant 0 : index
    %c0_75 = arith.constant 0 : index
    %146 = vector.load %arg22[%c0_73, %c0_74, %c0_75] : memref<1x10x10xf32, #tpu.memory_space<vmem>>, vector<1x10x10xf32>
    tpu.vector_store %arg22[%c0_73, %c0_74, %c0_75], %145 {strides = array<i32>} : memref<1x10x10xf32, #tpu.memory_space<vmem>>, vector<1x10x10xf32>,
    return
  }
  func.func @transform_0(%arg0: i32) -> (i32, i32, i32) {
    %c0_i32 = arith.constant 0 : i32
    %c0_i32_0 = arith.constant 0 : i32
    %c0_i32_1 = arith.constant 0 : i32
    return %arg0, %c0_i32, %c0_i32_0 : i32, i32, i32
  }
  func.func @transform_1(%arg0: i32) -> (i32, i32, i32) {
    %c0_i32 = arith.constant 0 : i32
    %c0_i32_0 = arith.constant 0 : i32
    %c0_i32_1 = arith.constant 0 : i32
    return %arg0, %c0_i32, %c0_i32_0 : i32, i32, i32
  }
  func.func @transform_2(%arg0: i32) -> (i32, i32) {
    %c0_i32 = arith.constant 0 : i32
    %c0_i32_0 = arith.constant 0 : i32
    %c0_i32_1 = arith.constant 0 : i32
    return %c0_i32, %c0_i32_0 : i32, i32
  }
  func.func @transform_3(%arg0: i32) -> (i32, i32) {
    %c0_i32 = arith.constant 0 : i32
    %c0_i32_0 = arith.constant 0 : i32
    %c0_i32_1 = arith.constant 0 : i32
    return %c0_i32, %c0_i32_0 : i32, i32
  }
  func.func @transform_4(%arg0: i32) -> (i32, i32) {
    %c0_i32 = arith.constant 0 : i32
    %c0_i32_0 = arith.constant 0 : i32
    %c0_i32_1 = arith.constant 0 : i32
    return %c0_i32, %c0_i32_0 : i32, i32
  }
  func.func @transform_5(%arg0: i32) -> (i32, i32) {
    %c0_i32 = arith.constant 0 : i32
    %c0_i32_0 = arith.constant 0 : i32
    %c0_i32_1 = arith.constant 0 : i32
    return %c0_i32, %c0_i32_0 : i32, i32
  }
  func.func @transform_6(%arg0: i32) -> (i32, i32) {
    %c0_i32 = arith.constant 0 : i32
    %c0_i32_0 = arith.constant 0 : i32
    %c0_i32_1 = arith.constant 0 : i32
    return %c0_i32, %c0_i32_0 : i32, i32
  }
  func.func @transform_7(%arg0: i32) -> (i32, i32) {
    %c0_i32 = arith.constant 0 : i32
    %c0_i32_0 = arith.constant 0 : i32
    %c0_i32_1 = arith.constant 0 : i32
    return %c0_i32, %c0_i32_0 : i32, i32
  }
  func.func @transform_8(%arg0: i32) -> (i32, i32) {
    %c0_i32 = arith.constant 0 : i32
    %c0_i32_0 = arith.constant 0 : i32
    %c0_i32_1 = arith.constant 0 : i32
    return %c0_i32, %c0_i32_0 : i32, i32
  }
  func.func @transform_9(%arg0: i32) -> (i32, i32) {
    %c0_i32 = arith.constant 0 : i32
    %c0_i32_0 = arith.constant 0 : i32
    %c0_i32_1 = arith.constant 0 : i32
    return %c0_i32, %c0_i32_0 : i32, i32
  }
  func.func @transform_10(%arg0: i32) -> (i32, i32) {
    %c0_i32 = arith.constant 0 : i32
    %c0_i32_0 = arith.constant 0 : i32
    %c0_i32_1 = arith.constant 0 : i32
    return %c0_i32, %c0_i32_0 : i32, i32
  }
  func.func @transform_11(%arg0: i32) -> (i32, i32) {
    %c0_i32 = arith.constant 0 : i32
    %c0_i32_0 = arith.constant 0 : i32
    %c0_i32_1 = arith.constant 0 : i32
    return %c0_i32, %c0_i32_0 : i32, i32
  }
  func.func @transform_12(%arg0: i32) -> (i32, i32) {
    %c0_i32 = arith.constant 0 : i32
    %c0_i32_0 = arith.constant 0 : i32
    %c0_i32_1 = arith.constant 0 : i32
    return %c0_i32, %c0_i32_0 : i32, i32
  }
  func.func @transform_13(%arg0: i32) -> (i32, i32) {
    %c0_i32 = arith.constant 0 : i32
    %c0_i32_0 = arith.constant 0 : i32
    %c0_i32_1 = arith.constant 0 : i32
    return %c0_i32, %c0_i32_0 : i32, i32
  }
  func.func @transform_14(%arg0: i32) -> (i32, i32) {
    %c0_i32 = arith.constant 0 : i32
    %c0_i32_0 = arith.constant 0 : i32
    %c0_i32_1 = arith.constant 0 : i32
    return %c0_i32, %c0_i32_0 : i32, i32
  }
  func.func @transform_15(%arg0: i32) -> (i32, i32) {
    %c0_i32 = arith.constant 0 : i32
    %c0_i32_0 = arith.constant 0 : i32
    %c0_i32_1 = arith.constant 0 : i32
    return %c0_i32, %c0_i32_0 : i32, i32
  }
  func.func @transform_16(%arg0: i32) -> (i32, i32) {
    %c0_i32 = arith.constant 0 : i32
    %c0_i32_0 = arith.constant 0 : i32
    %c0_i32_1 = arith.constant 0 : i32
    return %c0_i32, %c0_i32_0 : i32, i32
  }
  func.func @transform_17(%arg0: i32) -> (i32, i32) {
    %c0_i32 = arith.constant 0 : i32
    %c0_i32_0 = arith.constant 0 : i32
    %c0_i32_1 = arith.constant 0 : i32
    return %c0_i32, %c0_i32_0 : i32, i32
  }
  func.func @transform_18(%arg0: i32) -> (i32, i32) {
    %c0_i32 = arith.constant 0 : i32
    %c0_i32_0 = arith.constant 0 : i32
    %c0_i32_1 = arith.constant 0 : i32
    return %c0_i32, %c0_i32_0 : i32, i32
  }
  func.func @transform_19(%arg0: i32) -> (i32, i32) {
    %c0_i32 = arith.constant 0 : i32
    %c0_i32_0 = arith.constant 0 : i32
    %c0_i32_1 = arith.constant 0 : i32
    return %c0_i32, %c0_i32_0 : i32, i32
  }
  func.func @transform_20(%arg0: i32) -> (i32, i32, i32) {
    %c0_i32 = arith.constant 0 : i32
    %c0_i32_0 = arith.constant 0 : i32
    %c0_i32_1 = arith.constant 0 : i32
    return %arg0, %c0_i32, %c0_i32_0 : i32, i32, i32
  }
  func.func @transform_21(%arg0: i32) -> (i32, i32, i32) {
    %c0_i32 = arith.constant 0 : i32
    %c0_i32_0 = arith.constant 0 : i32
    %c0_i32_1 = arith.constant 0 : i32
    return %arg0, %c0_i32, %c0_i32_0 : i32, i32, i32
  }
}

</mosaic_0001>

<llo_original>
// kernel: self_han_layer.1
$region0: #{self_han_layer.1}
  #allocation0 [shape = 'u32[]', space=smem, size = 0x4, offset = 0x4, fixed_abs, tag = 'smem constant byte address 0x4 - core index']
  #allocation1 [shape = 'u32[144,128]{1,0:T(1,128)}', space=vmem, size = 0x12000, scoped, tag = 'internal scratch']
  %s0 = inlined_call_operand.vmem [shape: f32[2,10,512], index: 0, kind: input, shape index: {}]
  %s1 = inlined_call_operand.vmem [shape: f32[2,10,512], index: 1, kind: input, shape index: {}]
  %s2 = inlined_call_operand.hbm [shape: bf16[512,1536], index: 2, kind: input, shape index: {}]
  %s3 = inlined_call_operand.hbm [shape: f32[1,1536], index: 3, kind: input, shape index: {}]
  %s4 = inlined_call_operand.hbm [shape: bf16[512,512], index: 4, kind: input, shape index: {}]
  %s5 = inlined_call_operand.hbm [shape: f32[1,512], index: 5, kind: input, shape index: {}]
  %s6 = inlined_call_operand.hbm [shape: bf16[512,512], index: 6, kind: input, shape index: {}]
  %s7 = inlined_call_operand.hbm [shape: f32[1,512], index: 7, kind: input, shape index: {}]
  %s8 = inlined_call_operand.hbm [shape: bf16[512,1024], index: 8, kind: input, shape index: {}]
  %s9 = inlined_call_operand.hbm [shape: f32[1,1024], index: 9, kind: input, shape index: {}]
  %s10 = inlined_call_operand.hbm [shape: bf16[512,512], index: 10, kind: input, shape index: {}]
  %s11 = inlined_call_operand.hbm [shape: f32[1,512], index: 11, kind: input, shape index: {}]
  %s12 = inlined_call_operand.hbm [shape: bf16[512,512], index: 12, kind: input, shape index: {}]
  %s13 = inlined_call_operand.hbm [shape: f32[1,512], index: 13, kind: input, shape index: {}]
  %s14 = inlined_call_operand.hbm [shape: bf16[512,512], index: 14, kind: input, shape index: {}]
  %s15 = inlined_call_operand.hbm [shape: f32[1,512], index: 15, kind: input, shape index: {}]
  %s16 = inlined_call_operand.hbm [shape: f32[1,512], index: 16, kind: input, shape index: {}]
  %s17 = inlined_call_operand.hbm [shape: f32[1,512], index: 17, kind: input, shape index: {}]
  %s18 = inlined_call_operand.hbm [shape: f32[1,512], index: 18, kind: input, shape index: {}]
  %s19 = inlined_call_operand.hbm [shape: f32[1,512], index: 19, kind: input, shape index: {}]
  %s20 = inlined_call_operand.vmem [shape: f32[2,10,512], index: 20, kind: output, shape index: {0}]
  %s21 = inlined_call_operand.vmem [shape: f32[2,10,10], index: 21, kind: output, shape index: {1}]
  %22 = xla_tuple %s20, %s21
  %s23 = sld [smem:[#allocation0]]
  $region193: #{self_han_layer.1} parent=0
    _
  %s25 = ssub.s32 1, %s23
  %s26 = scalar_select 0, %s25, %s23
  $region1: #{self_han_layer.1} parent=0
    #allocation2 [shape = 'u8[1572864]{0}', space=vmem, size = 0x180000, scoped, tag = 'input window, operand 2, single buffered']
    #allocation3 [shape = 's32[2]{0}', space=sflag, size = 0x8, scoped, tag = 'scoped memory for self_han_layer.1']
    #allocation4 [shape = 'u8[6144]{0}', space=vmem, size = 0x1800, scoped, tag = 'input window, operand 3, single buffered']
    #allocation5 [shape = 's32[1]{0}', space=sflag, size = 0x4, scoped, tag = 'scoped memory for self_han_layer.1']
    #allocation6 [shape = 'u8[524288]{0}', space=vmem, size = 0x80000, scoped, tag = 'input window, operand 4, single buffered']
    #allocation7 [shape = 'u8[2048]{0}', space=vmem, size = 0x800, scoped, tag = 'input window, operand 5, single buffered']
    #allocation8 [shape = 's32[1]{0}', space=sflag, size = 0x4, scoped, tag = 'scoped memory for self_han_layer.1']
    #allocation9 [shape = 'u8[524288]{0}', space=vmem, size = 0x80000, scoped, tag = 'input window, operand 6, single buffered']
    #allocation10 [shape = 'u8[2048]{0}', space=vmem, size = 0x800, scoped, tag = 'input window, operand 7, single buffered']
    #allocation11 [shape = 's32[1]{0}', space=sflag, size = 0x4, scoped, tag = 'scoped memory for self_han_layer.1']
    #allocation12 [shape = 'u8[1048576]{0}', space=vmem, size = 0x100000, scoped, tag = 'input window, operand 8, single buffered']
    #allocation13 [shape = 'u8[4096]{0}', space=vmem, size = 0x1000, scoped, tag = 'input window, operand 9, single buffered']
    #allocation14 [shape = 's32[1]{0}', space=sflag, size = 0x4, scoped, tag = 'scoped memory for self_han_layer.1']
    #allocation15 [shape = 'u8[524288]{0}', space=vmem, size = 0x80000, scoped, tag = 'input window, operand 10, single buffered']
    #allocation16 [shape = 'u8[2048]{0}', space=vmem, size = 0x800, scoped, tag = 'input window, operand 11, single buffered']
    #allocation17 [shape = 's32[1]{0}', space=sflag, size = 0x4, scoped, tag = 'scoped memory for self_han_layer.1']
    #allocation18 [shape = 'u8[524288]{0}', space=vmem, size = 0x80000, scoped, tag = 'input window, operand 12, single buffered']
    #allocation19 [shape = 'u8[2048]{0}', space=vmem, size = 0x800, scoped, tag = 'input window, operand 13, single buffered']
    #allocation20 [shape = 's32[1]{0}', space=sflag, size = 0x4, scoped, tag = 'scoped memory for self_han_layer.1']
    #allocation21 [shape = 'u8[524288]{0}', space=vmem, size = 0x80000, scoped, tag = 'input window, operand 14, single buffered']
    #allocation22 [shape = 'u8[2048]{0}', space=vmem, size = 0x800, scoped, tag = 'input window, operand 15, single buffered']
    #allocation23 [shape = 's32[1]{0}', space=sflag, size = 0x4, scoped, tag = 'scoped memory for self_han_layer.1']
    #allocation24 [shape = 'u8[2048]{0}', space=vmem, size = 0x800, scoped, tag = 'input window, operand 16, single buffered']
    #allocation25 [shape = 'u8[2048]{0}', space=vmem, size = 0x800, scoped, tag = 'input window, operand 17, single buffered']
    #allocation26 [shape = 's32[1]{0}', space=sflag, size = 0x4, scoped, tag = 'scoped memory for self_han_layer.1']
    #allocation27 [shape = 'u8[2048]{0}', space=vmem, size = 0x800, scoped, tag = 'input window, operand 18, single buffered']
    #allocation28 [shape = 'u8[2048]{0}', space=vmem, size = 0x800, scoped, tag = 'input window, operand 19, single buffered']
    #allocation29 [shape = 's32[1]{0}', space=sflag, size = 0x4, scoped, tag = 'scoped memory for self_han_layer.1']
    %27 = vsyncpa [#allocation3], 0
    %28 = vsyncpa [#allocation5], 0
    %29 = vsyncpa [#allocation8], 0
    %30 = vsyncpa [#allocation11], 0
    %31 = vsyncpa [#allocation14], 0
    %32 = vsyncpa [#allocation17], 0
    %33 = vsyncpa [#allocation20], 0
    %34 = vsyncpa [#allocation23], 0
    %35 = vsyncpa [#allocation26], 0
    %36 = vsyncpa [#allocation29], 0
    loop: start=0, step=1, limit=4
    $region2: #{self_han_layer.1} parent=1 // loop_pre_header
      _
    $region3: #{self_han_layer.1} parent=1 // loop_header
      %s38 = sphi 0, %s42
      %p39 = scmp.ge.s32.totalorder %s38, 4
      %s48 = sphi 0, %s50
      %s51 = sphi 0, %s48
      %s52 = sphi 0, %s51
      %s68 = sphi 0, %s52
      %s74 = sphi 0, %s76
      %s77 = sphi 0, %s74
      %s78 = sphi 0, %s77
      %s94 = sphi 0, %s78
      %s98 = sphi 0, %s98
      %s100 = sphi 0, %s98
      %s101 = sphi 0, %s100
      %s115 = sphi 0, %s101
      %s119 = sphi 0, %s119
      %s121 = sphi 0, %s119
      %s122 = sphi 0, %s121
      %s136 = sphi 0, %s122
      %s140 = sphi 0, %s140
      %s142 = sphi 0, %s140
      %s143 = sphi 0, %s142
      %s157 = sphi 0, %s143
      %s161 = sphi 0, %s161
      %s163 = sphi 0, %s161
      %s164 = sphi 0, %s163
      %s178 = sphi 0, %s164
      %s182 = sphi 0, %s182
      %s184 = sphi 0, %s182
      %s185 = sphi 0, %s184
      %s199 = sphi 0, %s185
      %s203 = sphi 0, %s203
      %s205 = sphi 0, %s203
      %s206 = sphi 0, %s205
      %s220 = sphi 0, %s206
      %s224 = sphi 0, %s224
      %s226 = sphi 0, %s224
      %s227 = sphi 0, %s226
      %s241 = sphi 0, %s227
      %s245 = sphi 0, %s245
      %s247 = sphi 0, %s245
      %s248 = sphi 0, %s247
      %s262 = sphi 0, %s248
      %s266 = sphi 0, %s266
      %s268 = sphi 0, %s266
      %s269 = sphi 0, %s268
      %s283 = sphi 0, %s269
      %s287 = sphi 0, %s287
      %s289 = sphi 0, %s287
      %s290 = sphi 0, %s289
      %s304 = sphi 0, %s290
      %s308 = sphi 0, %s308
      %s310 = sphi 0, %s308
      %s311 = sphi 0, %s310
      %s325 = sphi 0, %s311
      %s329 = sphi 0, %s329
      %s331 = sphi 0, %s329
      %s332 = sphi 0, %s331
      %s346 = sphi 0, %s332
      %s350 = sphi 0, %s350
      %s352 = sphi 0, %s350
      %s353 = sphi 0, %s352
      %s367 = sphi 0, %s353
      %s371 = sphi 0, %s371
      %s373 = sphi 0, %s371
      %s374 = sphi 0, %s373
      %s388 = sphi 0, %s374
      %s392 = sphi 0, %s392
      %s394 = sphi 0, %s392
      %s395 = sphi 0, %s394
      %s409 = sphi 0, %s395
      %s413 = sphi 0, %s413
      %s415 = sphi 0, %s413
      %s416 = sphi 0, %s415
      %s430 = sphi 0, %s416
      %s434 = sphi 0, %s434
      %s436 = sphi 0, %s434
      %s437 = sphi 0, %s436
      %s451 = sphi 0, %s437
      %s455 = sphi 0, %s455
      %s457 = sphi 0, %s455
      %s458 = sphi 0, %s457
      %s472 = sphi 0, %s458
      %s478 = sphi 0, %s480
      %s481 = sphi 0, %s478
      %s482 = sphi 0, %s481
      %s498 = sphi 0, %s482
      %s504 = sphi 0, %s506
      %s507 = sphi 0, %s504
      %s508 = sphi 0, %s507
      %s524 = sphi 0, %s508
    $region4: #{self_han_layer.1} parent=1 // loop_header_branch
      %41 = sbr.rel (%p39) target = $region8
    $region5: #{self_han_layer.1} parent=1 // loop_body
      %s43 = ssub.s32 %s38, 1
      %s44 = ssub.s32 %s38, 2
      %s45 = sadd.s32 %s38, 1
      %s46 = ssub.s32 %s38, %s45
      %p47 = scmp.eq.s32.totalorder %s46, 0
      %s49 = sadd.s32 %s48, 1
      %s50 = scalar_select %p47, %s48, %s49
      %p53 = pneg %p47
      %p54 = scmp.eq.s32.totalorder %s38, 1
      %p55 = por %p53, %p54
      %p56 = scmp.ne.s32.totalorder %s48, %s51
      %p57 = scmp.eq.s32.totalorder %s38, 0
      %p58 = por %p56, %p57
      %p59 = scmp.ne.s32.totalorder %s48, %s51
      %p60 = scmp.eq.s32.totalorder %s43, 1
      %p61 = por %p59, %p60
      %p62 = scmp.ne.s32.totalorder %s51, %s52
      %p63 = scmp.eq.s32.totalorder %s43, 0
      %p64 = por %p62, %p63
      %p65 = scmp.ne.s32.totalorder %s51, %s52
      %p66 = scmp.eq.s32.totalorder %s44, 1
      %p67 = por %p65, %p66
      %p69 = scmp.ne.s32.totalorder %s52, %s68
      %p70 = scmp.eq.s32.totalorder %s44, 0
      %p71 = por %p69, %p70
      %s72 = ssub.s32 %s38, %s45
      %p73 = scmp.eq.s32.totalorder %s72, 0
      %s75 = sadd.s32 %s74, 1
      %s76 = scalar_select %p73, %s74, %s75
      %p79 = pneg %p73
      %p80 = scmp.eq.s32.totalorder %s38, 1
      %p81 = por %p79, %p80
      %p82 = scmp.ne.s32.totalorder %s74, %s77
      %p83 = scmp.eq.s32.totalorder %s38, 0
      %p84 = por %p82, %p83
      %p85 = scmp.ne.s32.totalorder %s74, %s77
      %p86 = scmp.eq.s32.totalorder %s43, 1
      %p87 = por %p85, %p86
      %p88 = scmp.ne.s32.totalorder %s77, %s78
      %p89 = scmp.eq.s32.totalorder %s43, 0
      %p90 = por %p88, %p89
      %p91 = scmp.ne.s32.totalorder %s77, %s78
      %p92 = scmp.eq.s32.totalorder %s44, 1
      %p93 = por %p91, %p92
      %p95 = scmp.ne.s32.totalorder %s78, %s94
      %p96 = scmp.eq.s32.totalorder %s44, 0
      %p97 = por %p95, %p96
      %s99 = sadd.s32 %s98, 1
      %p102 = scmp.eq.s32.totalorder %s38, 1
      %p103 = scmp.ne.s32.totalorder %s98, %s100
      %p104 = scmp.eq.s32.totalorder %s38, 0
      %p105 = por %p103, %p104
      %p106 = scmp.ne.s32.totalorder %s98, %s100
      %p107 = scmp.eq.s32.totalorder %s43, 1
      %p108 = por %p106, %p107
      %p109 = scmp.ne.s32.totalorder %s100, %s101
      %p110 = scmp.eq.s32.totalorder %s43, 0
      %p111 = por %p109, %p110
      %p112 = scmp.ne.s32.totalorder %s100, %s101
      %p113 = scmp.eq.s32.totalorder %s44, 1
      %p114 = por %p112, %p113
      %p116 = scmp.ne.s32.totalorder %s101, %s115
      %p117 = scmp.eq.s32.totalorder %s44, 0
      %p118 = por %p116, %p117
      %s120 = sadd.s32 %s119, 1
      %p123 = scmp.eq.s32.totalorder %s38, 1
      %p124 = scmp.ne.s32.totalorder %s119, %s121
      %p125 = scmp.eq.s32.totalorder %s38, 0
      %p126 = por %p124, %p125
      %p127 = scmp.ne.s32.totalorder %s119, %s121
      %p128 = scmp.eq.s32.totalorder %s43, 1
      %p129 = por %p127, %p128
      %p130 = scmp.ne.s32.totalorder %s121, %s122
      %p131 = scmp.eq.s32.totalorder %s43, 0
      %p132 = por %p130, %p131
      %p133 = scmp.ne.s32.totalorder %s121, %s122
      %p134 = scmp.eq.s32.totalorder %s44, 1
      %p135 = por %p133, %p134
      %p137 = scmp.ne.s32.totalorder %s122, %s136
      %p138 = scmp.eq.s32.totalorder %s44, 0
      %p139 = por %p137, %p138
      %s141 = sadd.s32 %s140, 1
      %p144 = scmp.eq.s32.totalorder %s38, 1
      %p145 = scmp.ne.s32.totalorder %s140, %s142
      %p146 = scmp.eq.s32.totalorder %s38, 0
      %p147 = por %p145, %p146
      %p148 = scmp.ne.s32.totalorder %s140, %s142
      %p149 = scmp.eq.s32.totalorder %s43, 1
      %p150 = por %p148, %p149
      %p151 = scmp.ne.s32.totalorder %s142, %s143
      %p152 = scmp.eq.s32.totalorder %s43, 0
      %p153 = por %p151, %p152
      %p154 = scmp.ne.s32.totalorder %s142, %s143
      %p155 = scmp.eq.s32.totalorder %s44, 1
      %p156 = por %p154, %p155
      %p158 = scmp.ne.s32.totalorder %s143, %s157
      %p159 = scmp.eq.s32.totalorder %s44, 0
      %p160 = por %p158, %p159
      %s162 = sadd.s32 %s161, 1
      %p165 = scmp.eq.s32.totalorder %s38, 1
      %p166 = scmp.ne.s32.totalorder %s161, %s163
      %p167 = scmp.eq.s32.totalorder %s38, 0
      %p168 = por %p166, %p167
      %p169 = scmp.ne.s32.totalorder %s161, %s163
      %p170 = scmp.eq.s32.totalorder %s43, 1
      %p171 = por %p169, %p170
      %p172 = scmp.ne.s32.totalorder %s163, %s164
      %p173 = scmp.eq.s32.totalorder %s43, 0
      %p174 = por %p172, %p173
      %p175 = scmp.ne.s32.totalorder %s163, %s164
      %p176 = scmp.eq.s32.totalorder %s44, 1
      %p177 = por %p175, %p176
      %p179 = scmp.ne.s32.totalorder %s164, %s178
      %p180 = scmp.eq.s32.totalorder %s44, 0
      %p181 = por %p179, %p180
      %s183 = sadd.s32 %s182, 1
      %p186 = scmp.eq.s32.totalorder %s38, 1
      %p187 = scmp.ne.s32.totalorder %s182, %s184
      %p188 = scmp.eq.s32.totalorder %s38, 0
      %p189 = por %p187, %p188
      %p190 = scmp.ne.s32.totalorder %s182, %s184
      %p191 = scmp.eq.s32.totalorder %s43, 1
      %p192 = por %p190, %p191
      %p193 = scmp.ne.s32.totalorder %s184, %s185
      %p194 = scmp.eq.s32.totalorder %s43, 0
      %p195 = por %p193, %p194
      %p196 = scmp.ne.s32.totalorder %s184, %s185
      %p197 = scmp.eq.s32.totalorder %s44, 1
      %p198 = por %p196, %p197
      %p200 = scmp.ne.s32.totalorder %s185, %s199
      %p201 = scmp.eq.s32.totalorder %s44, 0
      %p202 = por %p200, %p201
      %s204 = sadd.s32 %s203, 1
      %p207 = scmp.eq.s32.totalorder %s38, 1
      %p208 = scmp.ne.s32.totalorder %s203, %s205
      %p209 = scmp.eq.s32.totalorder %s38, 0
      %p210 = por %p208, %p209
      %p211 = scmp.ne.s32.totalorder %s203, %s205
      %p212 = scmp.eq.s32.totalorder %s43, 1
      %p213 = por %p211, %p212
      %p214 = scmp.ne.s32.totalorder %s205, %s206
      %p215 = scmp.eq.s32.totalorder %s43, 0
      %p216 = por %p214, %p215
      %p217 = scmp.ne.s32.totalorder %s205, %s206
      %p218 = scmp.eq.s32.totalorder %s44, 1
      %p219 = por %p217, %p218
      %p221 = scmp.ne.s32.totalorder %s206, %s220
      %p222 = scmp.eq.s32.totalorder %s44, 0
      %p223 = por %p221, %p222
      %s225 = sadd.s32 %s224, 1
      %p228 = scmp.eq.s32.totalorder %s38, 1
      %p229 = scmp.ne.s32.totalorder %s224, %s226
      %p230 = scmp.eq.s32.totalorder %s38, 0
      %p231 = por %p229, %p230
      %p232 = scmp.ne.s32.totalorder %s224, %s226
      %p233 = scmp.eq.s32.totalorder %s43, 1
      %p234 = por %p232, %p233
      %p235 = scmp.ne.s32.totalorder %s226, %s227
      %p236 = scmp.eq.s32.totalorder %s43, 0
      %p237 = por %p235, %p236
      %p238 = scmp.ne.s32.totalorder %s226, %s227
      %p239 = scmp.eq.s32.totalorder %s44, 1
      %p240 = por %p238, %p239
      %p242 = scmp.ne.s32.totalorder %s227, %s241
      %p243 = scmp.eq.s32.totalorder %s44, 0
      %p244 = por %p242, %p243
      %s246 = sadd.s32 %s245, 1
      %p249 = scmp.eq.s32.totalorder %s38, 1
      %p250 = scmp.ne.s32.totalorder %s245, %s247
      %p251 = scmp.eq.s32.totalorder %s38, 0
      %p252 = por %p250, %p251
      %p253 = scmp.ne.s32.totalorder %s245, %s247
      %p254 = scmp.eq.s32.totalorder %s43, 1
      %p255 = por %p253, %p254
      %p256 = scmp.ne.s32.totalorder %s247, %s248
      %p257 = scmp.eq.s32.totalorder %s43, 0
      %p258 = por %p256, %p257
      %p259 = scmp.ne.s32.totalorder %s247, %s248
      %p260 = scmp.eq.s32.totalorder %s44, 1
      %p261 = por %p259, %p260
      %p263 = scmp.ne.s32.totalorder %s248, %s262
      %p264 = scmp.eq.s32.totalorder %s44, 0
      %p265 = por %p263, %p264
      %s267 = sadd.s32 %s266, 1
      %p270 = scmp.eq.s32.totalorder %s38, 1
      %p271 = scmp.ne.s32.totalorder %s266, %s268
      %p272 = scmp.eq.s32.totalorder %s38, 0
      %p273 = por %p271, %p272
      %p274 = scmp.ne.s32.totalorder %s266, %s268
      %p275 = scmp.eq.s32.totalorder %s43, 1
      %p276 = por %p274, %p275
      %p277 = scmp.ne.s32.totalorder %s268, %s269
      %p278 = scmp.eq.s32.totalorder %s43, 0
      %p279 = por %p277, %p278
      %p280 = scmp.ne.s32.totalorder %s268, %s269
      %p281 = scmp.eq.s32.totalorder %s44, 1
      %p282 = por %p280, %p281
      %p284 = scmp.ne.s32.totalorder %s269, %s283
      %p285 = scmp.eq.s32.totalorder %s44, 0
      %p286 = por %p284, %p285
      %s288 = sadd.s32 %s287, 1
      %p291 = scmp.eq.s32.totalorder %s38, 1
      %p292 = scmp.ne.s32.totalorder %s287, %s289
      %p293 = scmp.eq.s32.totalorder %s38, 0
      %p294 = por %p292, %p293
      %p295 = scmp.ne.s32.totalorder %s287, %s289
      %p296 = scmp.eq.s32.totalorder %s43, 1
      %p297 = por %p295, %p296
      %p298 = scmp.ne.s32.totalorder %s289, %s290
      %p299 = scmp.eq.s32.totalorder %s43, 0
      %p300 = por %p298, %p299
      %p301 = scmp.ne.s32.totalorder %s289, %s290
      %p302 = scmp.eq.s32.totalorder %s44, 1
      %p303 = por %p301, %p302
      %p305 = scmp.ne.s32.totalorder %s290, %s304
      %p306 = scmp.eq.s32.totalorder %s44, 0
      %p307 = por %p305, %p306
      %s309 = sadd.s32 %s308, 1
      %p312 = scmp.eq.s32.totalorder %s38, 1
      %p313 = scmp.ne.s32.totalorder %s308, %s310
      %p314 = scmp.eq.s32.totalorder %s38, 0
      %p315 = por %p313, %p314
      %p316 = scmp.ne.s32.totalorder %s308, %s310
      %p317 = scmp.eq.s32.totalorder %s43, 1
      %p318 = por %p316, %p317
      %p319 = scmp.ne.s32.totalorder %s310, %s311
      %p320 = scmp.eq.s32.totalorder %s43, 0
      %p321 = por %p319, %p320
      %p322 = scmp.ne.s32.totalorder %s310, %s311
      %p323 = scmp.eq.s32.totalorder %s44, 1
      %p324 = por %p322, %p323
      %p326 = scmp.ne.s32.totalorder %s311, %s325
      %p327 = scmp.eq.s32.totalorder %s44, 0
      %p328 = por %p326, %p327
      %s330 = sadd.s32 %s329, 1
      %p333 = scmp.eq.s32.totalorder %s38, 1
      %p334 = scmp.ne.s32.totalorder %s329, %s331
      %p335 = scmp.eq.s32.totalorder %s38, 0
      %p336 = por %p334, %p335
      %p337 = scmp.ne.s32.totalorder %s329, %s331
      %p338 = scmp.eq.s32.totalorder %s43, 1
      %p339 = por %p337, %p338
      %p340 = scmp.ne.s32.totalorder %s331, %s332
      %p341 = scmp.eq.s32.totalorder %s43, 0
      %p342 = por %p340, %p341
      %p343 = scmp.ne.s32.totalorder %s331, %s332
      %p344 = scmp.eq.s32.totalorder %s44, 1
      %p345 = por %p343, %p344
      %p347 = scmp.ne.s32.totalorder %s332, %s346
      %p348 = scmp.eq.s32.totalorder %s44, 0
      %p349 = por %p347, %p348
      %s351 = sadd.s32 %s350, 1
      %p354 = scmp.eq.s32.totalorder %s38, 1
      %p355 = scmp.ne.s32.totalorder %s350, %s352
      %p356 = scmp.eq.s32.totalorder %s38, 0
      %p357 = por %p355, %p356
      %p358 = scmp.ne.s32.totalorder %s350, %s352
      %p359 = scmp.eq.s32.totalorder %s43, 1
      %p360 = por %p358, %p359
      %p361 = scmp.ne.s32.totalorder %s352, %s353
      %p362 = scmp.eq.s32.totalorder %s43, 0
      %p363 = por %p361, %p362
      %p364 = scmp.ne.s32.totalorder %s352, %s353
      %p365 = scmp.eq.s32.totalorder %s44, 1
      %p366 = por %p364, %p365
      %p368 = scmp.ne.s32.totalorder %s353, %s367
      %p369 = scmp.eq.s32.totalorder %s44, 0
      %p370 = por %p368, %p369
      %s372 = sadd.s32 %s371, 1
      %p375 = scmp.eq.s32.totalorder %s38, 1
      %p376 = scmp.ne.s32.totalorder %s371, %s373
      %p377 = scmp.eq.s32.totalorder %s38, 0
      %p378 = por %p376, %p377
      %p379 = scmp.ne.s32.totalorder %s371, %s373
      %p380 = scmp.eq.s32.totalorder %s43, 1
      %p381 = por %p379, %p380
      %p382 = scmp.ne.s32.totalorder %s373, %s374
      %p383 = scmp.eq.s32.totalorder %s43, 0
      %p384 = por %p382, %p383
      %p385 = scmp.ne.s32.totalorder %s373, %s374
      %p386 = scmp.eq.s32.totalorder %s44, 1
      %p387 = por %p385, %p386
      %p389 = scmp.ne.s32.totalorder %s374, %s388
      %p390 = scmp.eq.s32.totalorder %s44, 0
      %p391 = por %p389, %p390
      %s393 = sadd.s32 %s392, 1
      %p396 = scmp.eq.s32.totalorder %s38, 1
      %p397 = scmp.ne.s32.totalorder %s392, %s394
      %p398 = scmp.eq.s32.totalorder %s38, 0
      %p399 = por %p397, %p398
      %p400 = scmp.ne.s32.totalorder %s392, %s394
      %p401 = scmp.eq.s32.totalorder %s43, 1
      %p402 = por %p400, %p401
      %p403 = scmp.ne.s32.totalorder %s394, %s395
      %p404 = scmp.eq.s32.totalorder %s43, 0
      %p405 = por %p403, %p404
      %p406 = scmp.ne.s32.totalorder %s394, %s395
      %p407 = scmp.eq.s32.totalorder %s44, 1
      %p408 = por %p406, %p407
      %p410 = scmp.ne.s32.totalorder %s395, %s409
      %p411 = scmp.eq.s32.totalorder %s44, 0
      %p412 = por %p410, %p411
      %s414 = sadd.s32 %s413, 1
      %p417 = scmp.eq.s32.totalorder %s38, 1
      %p418 = scmp.ne.s32.totalorder %s413, %s415
      %p419 = scmp.eq.s32.totalorder %s38, 0
      %p420 = por %p418, %p419
      %p421 = scmp.ne.s32.totalorder %s413, %s415
      %p422 = scmp.eq.s32.totalorder %s43, 1
      %p423 = por %p421, %p422
      %p424 = scmp.ne.s32.totalorder %s415, %s416
      %p425 = scmp.eq.s32.totalorder %s43, 0
      %p426 = por %p424, %p425
      %p427 = scmp.ne.s32.totalorder %s415, %s416
      %p428 = scmp.eq.s32.totalorder %s44, 1
      %p429 = por %p427, %p428
      %p431 = scmp.ne.s32.totalorder %s416, %s430
      %p432 = scmp.eq.s32.totalorder %s44, 0
      %p433 = por %p431, %p432
      %s435 = sadd.s32 %s434, 1
      %p438 = scmp.eq.s32.totalorder %s38, 1
      %p439 = scmp.ne.s32.totalorder %s434, %s436
      %p440 = scmp.eq.s32.totalorder %s38, 0
      %p441 = por %p439, %p440
      %p442 = scmp.ne.s32.totalorder %s434, %s436
      %p443 = scmp.eq.s32.totalorder %s43, 1
      %p444 = por %p442, %p443
      %p445 = scmp.ne.s32.totalorder %s436, %s437
      %p446 = scmp.eq.s32.totalorder %s43, 0
      %p447 = por %p445, %p446
      %p448 = scmp.ne.s32.totalorder %s436, %s437
      %p449 = scmp.eq.s32.totalorder %s44, 1
      %p450 = por %p448, %p449
      %p452 = scmp.ne.s32.totalorder %s437, %s451
      %p453 = scmp.eq.s32.totalorder %s44, 0
      %p454 = por %p452, %p453
      %s456 = sadd.s32 %s455, 1
      %p459 = scmp.eq.s32.totalorder %s38, 1
      %p460 = scmp.ne.s32.totalorder %s455, %s457
      %p461 = scmp.eq.s32.totalorder %s38, 0
      %p462 = por %p460, %p461
      %p463 = scmp.ne.s32.totalorder %s455, %s457
      %p464 = scmp.eq.s32.totalorder %s43, 1
      %p465 = por %p463, %p464
      %p466 = scmp.ne.s32.totalorder %s457, %s458
      %p467 = scmp.eq.s32.totalorder %s43, 0
      %p468 = por %p466, %p467
      %p469 = scmp.ne.s32.totalorder %s457, %s458
      %p470 = scmp.eq.s32.totalorder %s44, 1
      %p471 = por %p469, %p470
      %p473 = scmp.ne.s32.totalorder %s458, %s472
      %p474 = scmp.eq.s32.totalorder %s44, 0
      %p475 = por %p473, %p474
      %s476 = ssub.s32 %s38, %s45
      %p477 = scmp.eq.s32.totalorder %s476, 0
      %s479 = sadd.s32 %s478, 1
      %s480 = scalar_select %p477, %s478, %s479
      %p483 = pneg %p477
      %p484 = scmp.eq.s32.totalorder %s38, 1
      %p485 = por %p483, %p484
      %p486 = scmp.ne.s32.totalorder %s478, %s481
      %p487 = scmp.eq.s32.totalorder %s38, 0
      %p488 = por %p486, %p487
      %p489 = scmp.ne.s32.totalorder %s478, %s481
      %p490 = scmp.eq.s32.totalorder %s43, 1
      %p491 = por %p489, %p490
      %p492 = scmp.ne.s32.totalorder %s481, %s482
      %p493 = scmp.eq.s32.totalorder %s43, 0
      %p494 = por %p492, %p493
      %p495 = scmp.ne.s32.totalorder %s481, %s482
      %p496 = scmp.eq.s32.totalorder %s44, 1
      %p497 = por %p495, %p496
      %p499 = scmp.ne.s32.totalorder %s482, %s498
      %p500 = scmp.eq.s32.totalorder %s44, 0
      %p501 = por %p499, %p500
      %s502 = ssub.s32 %s38, %s45
      %p503 = scmp.eq.s32.totalorder %s502, 0
      %s505 = sadd.s32 %s504, 1
      %s506 = scalar_select %p503, %s504, %s505
      %p509 = pneg %p503
      %p510 = scmp.eq.s32.totalorder %s38, 1
      %p511 = por %p509, %p510
      %p512 = scmp.ne.s32.totalorder %s504, %s507
      %p513 = scmp.eq.s32.totalorder %s38, 0
      %p514 = por %p512, %p513
      %p515 = scmp.ne.s32.totalorder %s504, %s507
      %p516 = scmp.eq.s32.totalorder %s43, 1
      %p517 = por %p515, %p516
      %p518 = scmp.ne.s32.totalorder %s507, %s508
      %p519 = scmp.eq.s32.totalorder %s43, 0
      %p520 = por %p518, %p519
      %p521 = scmp.ne.s32.totalorder %s507, %s508
      %p522 = scmp.eq.s32.totalorder %s44, 1
      %p523 = por %p521, %p522
      %p525 = scmp.ne.s32.totalorder %s508, %s524
      %p526 = scmp.eq.s32.totalorder %s44, 0
      %p527 = por %p525, %p526
      %p528 = scmp.le.s32.totalorder 1, %s38
      %p529 = scmp.lt.s32.totalorder %s38, 3
      %p530 = pnand %p528, %p529
      %p531 = pneg %p530
      // Predicated region
      $region9: #{self_han_layer.1} parent=5 // pred_check
        _
      $region10: #{self_han_layer.1} parent=5 // pred_check_branch
        %533 = sbr.rel (%p530) target = $region12
      $region11: #{self_han_layer.1} parent=5 // pred_region
        %s534 = ssub.s32 %s38, 1
        // Predicated region
        $region13: #{self_han_layer.1} parent=11 // pred_check
          %p535 = pneg %p111
        $region14: #{self_han_layer.1} parent=11 // pred_check_branch
          %537 = sbr.rel (%p535) target = $region16
        $region15: #{self_han_layer.1} parent=11 // pred_region
          %s539 = ssub.s32 49152, 49152
          %540 = vsyncadd [#allocation3], %s539
          %s541 = sshll.u32 [#allocation2], 4
          %s542 = int_to_ptr.vmem [resolvable:$true] %s541
          %547 = dma.hbm_to_vmem [thread:$0]  %s2, 49152, %s542, [#allocation3], 768, 768, 48
        $region16: #{self_han_layer.1} parent=11 // pred_fallthru
          _
        // Predicated region
        $region17: #{self_han_layer.1} parent=11 // pred_check
          %p548 = pneg %p132
        $region18: #{self_han_layer.1} parent=11 // pred_check_branch
          %550 = sbr.rel (%p548) target = $region20
        $region19: #{self_han_layer.1} parent=11 // pred_region
          %s552 = ssub.s32 192, 192
          %553 = vsyncadd [#allocation5], %s552
          %s555 = sshll.u32 [#allocation4], 4
          %s556 = int_to_ptr.vmem [resolvable:$true] %s555
          %558 = dma.hbm_to_vmem [thread:$0]  %s3, 192, %s556, [#allocation5]
        $region20: #{self_han_layer.1} parent=11 // pred_fallthru
          _
        // Predicated region
        $region21: #{self_han_layer.1} parent=11 // pred_check
          %p559 = pneg %p153
        $region22: #{self_han_layer.1} parent=11 // pred_check_branch
          %561 = sbr.rel (%p559) target = $region24
        $region23: #{self_han_layer.1} parent=11 // pred_region
          %s563 = ssub.s32 16384, 16384
          %564 = vsyncadd [#allocation5], %s563
          %s565 = sshll.u32 [#allocation6], 4
          %s566 = int_to_ptr.vmem [resolvable:$true] %s565
          %571 = dma.hbm_to_vmem [thread:$0]  %s4, 16384, %s566, [#allocation5], 256, 256, 16
        $region24: #{self_han_layer.1} parent=11 // pred_fallthru
          _
        // Predicated region
        $region25: #{self_han_layer.1} parent=11 // pred_check
          %p572 = pneg %p174
        $region26: #{self_han_layer.1} parent=11 // pred_check_branch
          %574 = sbr.rel (%p572) target = $region28
        $region27: #{self_han_layer.1} parent=11 // pred_region
          %s576 = ssub.s32 64, 64
          %577 = vsyncadd [#allocation8], %s576
          %s579 = sshll.u32 [#allocation7], 4
          %s580 = int_to_ptr.vmem [resolvable:$true] %s579
          %582 = dma.hbm_to_vmem [thread:$0]  %s5, 64, %s580, [#allocation8]
        $region28: #{self_han_layer.1} parent=11 // pred_fallthru
          _
        // Predicated region
        $region29: #{self_han_layer.1} parent=11 // pred_check
          %p583 = pneg %p195
        $region30: #{self_han_layer.1} parent=11 // pred_check_branch
          %585 = sbr.rel (%p583) target = $region32
        $region31: #{self_han_layer.1} parent=11 // pred_region
          %s587 = ssub.s32 16384, 16384
          %588 = vsyncadd [#allocation8], %s587
          %s589 = sshll.u32 [#allocation9], 4
          %s590 = int_to_ptr.vmem [resolvable:$true] %s589
          %595 = dma.hbm_to_vmem [thread:$0]  %s6, 16384, %s590, [#allocation8], 256, 256, 16
        $region32: #{self_han_layer.1} parent=11 // pred_fallthru
          _
        // Predicated region
        $region33: #{self_han_layer.1} parent=11 // pred_check
          %p596 = pneg %p216
        $region34: #{self_han_layer.1} parent=11 // pred_check_branch
          %598 = sbr.rel (%p596) target = $region36
        $region35: #{self_han_layer.1} parent=11 // pred_region
          %s600 = ssub.s32 64, 64
          %601 = vsyncadd [#allocation11], %s600
          %s603 = sshll.u32 [#allocation10], 4
          %s604 = int_to_ptr.vmem [resolvable:$true] %s603
          %606 = dma.hbm_to_vmem [thread:$0]  %s7, 64, %s604, [#allocation11]
        $region36: #{self_han_layer.1} parent=11 // pred_fallthru
          _
        // Predicated region
        $region37: #{self_han_layer.1} parent=11 // pred_check
          %p607 = pneg %p237
        $region38: #{self_han_layer.1} parent=11 // pred_check_branch
          %609 = sbr.rel (%p607) target = $region40
        $region39: #{self_han_layer.1} parent=11 // pred_region
          %s611 = ssub.s32 32768, 32768
          %612 = vsyncadd [#allocation11], %s611
          %s613 = sshll.u32 [#allocation12], 4
          %s614 = int_to_ptr.vmem [resolvable:$true] %s613
          %619 = dma.hbm_to_vmem [thread:$0]  %s8, 32768, %s614, [#allocation11], 512, 512, 32
        $region40: #{self_han_layer.1} parent=11 // pred_fallthru
          _
        // Predicated region
        $region41: #{self_han_layer.1} parent=11 // pred_check
          %p620 = pneg %p258
        $region42: #{self_han_layer.1} parent=11 // pred_check_branch
          %622 = sbr.rel (%p620) target = $region44
        $region43: #{self_han_layer.1} parent=11 // pred_region
          %s624 = ssub.s32 128, 128
          %625 = vsyncadd [#allocation14], %s624
          %s627 = sshll.u32 [#allocation13], 4
          %s628 = int_to_ptr.vmem [resolvable:$true] %s627
          %630 = dma.hbm_to_vmem [thread:$0]  %s9, 128, %s628, [#allocation14]
        $region44: #{self_han_layer.1} parent=11 // pred_fallthru
          _
        // Predicated region
        $region45: #{self_han_layer.1} parent=11 // pred_check
          %p631 = pneg %p279
        $region46: #{self_han_layer.1} parent=11 // pred_check_branch
          %633 = sbr.rel (%p631) target = $region48
        $region47: #{self_han_layer.1} parent=11 // pred_region
          %s635 = ssub.s32 16384, 16384
          %636 = vsyncadd [#allocation14], %s635
          %s637 = sshll.u32 [#allocation15], 4
          %s638 = int_to_ptr.vmem [resolvable:$true] %s637
          %643 = dma.hbm_to_vmem [thread:$0]  %s10, 16384, %s638, [#allocation14], 256, 256, 16
        $region48: #{self_han_layer.1} parent=11 // pred_fallthru
          _
        // Predicated region
        $region49: #{self_han_layer.1} parent=11 // pred_check
          %p644 = pneg %p300
        $region50: #{self_han_layer.1} parent=11 // pred_check_branch
          %646 = sbr.rel (%p644) target = $region52
        $region51: #{self_han_layer.1} parent=11 // pred_region
          %s648 = ssub.s32 64, 64
          %649 = vsyncadd [#allocation17], %s648
          %s651 = sshll.u32 [#allocation16], 4
          %s652 = int_to_ptr.vmem [resolvable:$true] %s651
          %654 = dma.hbm_to_vmem [thread:$0]  %s11, 64, %s652, [#allocation17]
        $region52: #{self_han_layer.1} parent=11 // pred_fallthru
          _
        // Predicated region
        $region53: #{self_han_layer.1} parent=11 // pred_check
          %p655 = pneg %p321
        $region54: #{self_han_layer.1} parent=11 // pred_check_branch
          %657 = sbr.rel (%p655) target = $region56
        $region55: #{self_han_layer.1} parent=11 // pred_region
          %s659 = ssub.s32 16384, 16384
          %660 = vsyncadd [#allocation17], %s659
          %s661 = sshll.u32 [#allocation18], 4
          %s662 = int_to_ptr.vmem [resolvable:$true] %s661
          %667 = dma.hbm_to_vmem [thread:$0]  %s12, 16384, %s662, [#allocation17], 256, 256, 16
        $region56: #{self_han_layer.1} parent=11 // pred_fallthru
          _
        // Predicated region
        $region57: #{self_han_layer.1} parent=11 // pred_check
          %p668 = pneg %p342
        $region58: #{self_han_layer.1} parent=11 // pred_check_branch
          %670 = sbr.rel (%p668) target = $region60
        $region59: #{self_han_layer.1} parent=11 // pred_region
          %s672 = ssub.s32 64, 64
          %673 = vsyncadd [#allocation20], %s672
          %s675 = sshll.u32 [#allocation19], 4
          %s676 = int_to_ptr.vmem [resolvable:$true] %s675
          %678 = dma.hbm_to_vmem [thread:$0]  %s13, 64, %s676, [#allocation20]
        $region60: #{self_han_layer.1} parent=11 // pred_fallthru
          _
        // Predicated region
        $region61: #{self_han_layer.1} parent=11 // pred_check
          %p679 = pneg %p363
        $region62: #{self_han_layer.1} parent=11 // pred_check_branch
          %681 = sbr.rel (%p679) target = $region64
        $region63: #{self_han_layer.1} parent=11 // pred_region
          %s683 = ssub.s32 16384, 16384
          %684 = vsyncadd [#allocation20], %s683
          %s685 = sshll.u32 [#allocation21], 4
          %s686 = int_to_ptr.vmem [resolvable:$true] %s685
          %691 = dma.hbm_to_vmem [thread:$0]  %s14, 16384, %s686, [#allocation20], 256, 256, 16
        $region64: #{self_han_layer.1} parent=11 // pred_fallthru
          _
        // Predicated region
        $region65: #{self_han_layer.1} parent=11 // pred_check
          %p692 = pneg %p384
        $region66: #{self_han_layer.1} parent=11 // pred_check_branch
          %694 = sbr.rel (%p692) target = $region68
        $region67: #{self_han_layer.1} parent=11 // pred_region
          %s696 = ssub.s32 64, 64
          %697 = vsyncadd [#allocation23], %s696
          %s699 = sshll.u32 [#allocation22], 4
          %s700 = int_to_ptr.vmem [resolvable:$true] %s699
          %702 = dma.hbm_to_vmem [thread:$0]  %s15, 64, %s700, [#allocation23]
        $region68: #{self_han_layer.1} parent=11 // pred_fallthru
          _
        // Predicated region
        $region69: #{self_han_layer.1} parent=11 // pred_check
          %p703 = pneg %p405
        $region70: #{self_han_layer.1} parent=11 // pred_check_branch
          %705 = sbr.rel (%p703) target = $region72
        $region71: #{self_han_layer.1} parent=11 // pred_region
          %s707 = ssub.s32 64, 64
          %708 = vsyncadd [#allocation23], %s707
          %s710 = sshll.u32 [#allocation24], 4
          %s711 = int_to_ptr.vmem [resolvable:$true] %s710
          %713 = dma.hbm_to_vmem [thread:$0]  %s16, 64, %s711, [#allocation23]
        $region72: #{self_han_layer.1} parent=11 // pred_fallthru
          _
        // Predicated region
        $region73: #{self_han_layer.1} parent=11 // pred_check
          %p714 = pneg %p426
        $region74: #{self_han_layer.1} parent=11 // pred_check_branch
          %716 = sbr.rel (%p714) target = $region76
        $region75: #{self_han_layer.1} parent=11 // pred_region
          %s718 = ssub.s32 64, 64
          %719 = vsyncadd [#allocation26], %s718
          %s721 = sshll.u32 [#allocation25], 4
          %s722 = int_to_ptr.vmem [resolvable:$true] %s721
          %724 = dma.hbm_to_vmem [thread:$0]  %s17, 64, %s722, [#allocation26]
        $region76: #{self_han_layer.1} parent=11 // pred_fallthru
          _
        // Predicated region
        $region77: #{self_han_layer.1} parent=11 // pred_check
          %p725 = pneg %p447
        $region78: #{self_han_layer.1} parent=11 // pred_check_branch
          %727 = sbr.rel (%p725) target = $region80
        $region79: #{self_han_layer.1} parent=11 // pred_region
          %s729 = ssub.s32 64, 64
          %730 = vsyncadd [#allocation26], %s729
          %s732 = sshll.u32 [#allocation27], 4
          %s733 = int_to_ptr.vmem [resolvable:$true] %s732
          %735 = dma.hbm_to_vmem [thread:$0]  %s18, 64, %s733, [#allocation26]
        $region80: #{self_han_layer.1} parent=11 // pred_fallthru
          _
        // Predicated region
        $region81: #{self_han_layer.1} parent=11 // pred_check
          %p736 = pneg %p468
        $region82: #{self_han_layer.1} parent=11 // pred_check_branch
          %738 = sbr.rel (%p736) target = $region84
        $region83: #{self_han_layer.1} parent=11 // pred_region
          %s740 = ssub.s32 64, 64
          %741 = vsyncadd [#allocation29], %s740
          %s743 = sshll.u32 [#allocation28], 4
          %s744 = int_to_ptr.vmem [resolvable:$true] %s743
          %746 = dma.hbm_to_vmem [thread:$0]  %s19, 64, %s744, [#allocation29]
        $region84: #{self_han_layer.1} parent=11 // pred_fallthru
          _
      $region12: #{self_han_layer.1} parent=5 // pred_fallthru
        _
      %p747 = scmp.lt.s32.totalorder %s38, 2
      // Predicated region
      $region85: #{self_han_layer.1} parent=5 // pred_check
        %p748 = pneg %p747
      $region86: #{self_han_layer.1} parent=5 // pred_check_branch
        %750 = sbr.rel (%p748) target = $region88
      $region87: #{self_han_layer.1} parent=5 // pred_region
        // Predicated region
        $region89: #{self_han_layer.1} parent=87 // pred_check
          %p751 = pneg %p58
        $region90: #{self_han_layer.1} parent=87 // pred_check_branch
          %753 = sbr.rel (%p751) target = $region92
        $region91: #{self_han_layer.1} parent=87 // pred_region
          %p754 = scmp.lt.s32.totalorder %s38, 1
          %s755 = scalar_select %p754, %s38, 1
          %s756 = smul.addr %s755, 8
          %s757 = smul.addr %s756, 8
          %s758 = scalar_lea.vmem %s0, %s757
        $region92: #{self_han_layer.1} parent=87 // pred_fallthru
          _
        // Predicated region
        $region93: #{self_han_layer.1} parent=87 // pred_check
          %p759 = pneg %p84
        $region94: #{self_han_layer.1} parent=87 // pred_check_branch
          %761 = sbr.rel (%p759) target = $region96
        $region95: #{self_han_layer.1} parent=87 // pred_region
          %p762 = scmp.lt.s32.totalorder %s38, 1
          %s763 = scalar_select %p762, %s38, 1
          %s764 = smul.addr %s763, 8
          %s765 = smul.addr %s764, 8
          %s766 = scalar_lea.vmem %s1, %s765
        $region96: #{self_han_layer.1} parent=87 // pred_fallthru
          _
      $region88: #{self_han_layer.1} parent=5 // pred_fallthru
        _
      %p767 = scmp.le.s32.totalorder 1, %s38
      %p768 = scmp.lt.s32.totalorder %s38, 3
      %p769 = pnand %p767, %p768
      %p770 = pneg %p769
      // Predicated region
      $region97: #{self_han_layer.1} parent=5 // pred_check
        _
      $region98: #{self_han_layer.1} parent=5 // pred_check_branch
        %772 = sbr.rel (%p769) target = $region100
      $region99: #{self_han_layer.1} parent=5 // pred_region
        %s773 = ssub.s32 %s38, 1
        // Predicated region
        $region101: #{self_han_layer.1} parent=99 // pred_check
          %p774 = pneg %p111
        $region102: #{self_han_layer.1} parent=99 // pred_check_branch
          %776 = sbr.rel (%p774) target = $region104
        $region103: #{self_han_layer.1} parent=99 // pred_region
          %777 = dma.done [#allocation3], 49152
        $region104: #{self_han_layer.1} parent=99 // pred_fallthru
          _
        // Predicated region
        $region105: #{self_han_layer.1} parent=99 // pred_check
          %p778 = pneg %p132
        $region106: #{self_han_layer.1} parent=99 // pred_check_branch
          %780 = sbr.rel (%p778) target = $region108
        $region107: #{self_han_layer.1} parent=99 // pred_region
          %781 = dma.done [#allocation5], 192
        $region108: #{self_han_layer.1} parent=99 // pred_fallthru
          _
        // Predicated region
        $region109: #{self_han_layer.1} parent=99 // pred_check
          %p782 = pneg %p153
        $region110: #{self_han_layer.1} parent=99 // pred_check_branch
          %784 = sbr.rel (%p782) target = $region112
        $region111: #{self_han_layer.1} parent=99 // pred_region
          %785 = dma.done [#allocation5], 16384
        $region112: #{self_han_layer.1} parent=99 // pred_fallthru
          _
        // Predicated region
        $region113: #{self_han_layer.1} parent=99 // pred_check
          %p786 = pneg %p174
        $region114: #{self_han_layer.1} parent=99 // pred_check_branch
          %788 = sbr.rel (%p786) target = $region116
        $region115: #{self_han_layer.1} parent=99 // pred_region
          %789 = dma.done [#allocation8], 64
        $region116: #{self_han_layer.1} parent=99 // pred_fallthru
          _
        // Predicated region
        $region117: #{self_han_layer.1} parent=99 // pred_check
          %p790 = pneg %p195
        $region118: #{self_han_layer.1} parent=99 // pred_check_branch
          %792 = sbr.rel (%p790) target = $region120
        $region119: #{self_han_layer.1} parent=99 // pred_region
          %793 = dma.done [#allocation8], 16384
        $region120: #{self_han_layer.1} parent=99 // pred_fallthru
          _
        // Predicated region
        $region121: #{self_han_layer.1} parent=99 // pred_check
          %p794 = pneg %p216
        $region122: #{self_han_layer.1} parent=99 // pred_check_branch
          %796 = sbr.rel (%p794) target = $region124
        $region123: #{self_han_layer.1} parent=99 // pred_region
          %797 = dma.done [#allocation11], 64
        $region124: #{self_han_layer.1} parent=99 // pred_fallthru
          _
        // Predicated region
        $region125: #{self_han_layer.1} parent=99 // pred_check
          %p798 = pneg %p237
        $region126: #{self_han_layer.1} parent=99 // pred_check_branch
          %800 = sbr.rel (%p798) target = $region128
        $region127: #{self_han_layer.1} parent=99 // pred_region
          %801 = dma.done [#allocation11], 32768
        $region128: #{self_han_layer.1} parent=99 // pred_fallthru
          _
        // Predicated region
        $region129: #{self_han_layer.1} parent=99 // pred_check
          %p802 = pneg %p258
        $region130: #{self_han_layer.1} parent=99 // pred_check_branch
          %804 = sbr.rel (%p802) target = $region132
        $region131: #{self_han_layer.1} parent=99 // pred_region
          %805 = dma.done [#allocation14], 128
        $region132: #{self_han_layer.1} parent=99 // pred_fallthru
          _
        // Predicated region
        $region133: #{self_han_layer.1} parent=99 // pred_check
          %p806 = pneg %p279
        $region134: #{self_han_layer.1} parent=99 // pred_check_branch
          %808 = sbr.rel (%p806) target = $region136
        $region135: #{self_han_layer.1} parent=99 // pred_region
          %809 = dma.done [#allocation14], 16384
        $region136: #{self_han_layer.1} parent=99 // pred_fallthru
          _
        // Predicated region
        $region137: #{self_han_layer.1} parent=99 // pred_check
          %p810 = pneg %p300
        $region138: #{self_han_layer.1} parent=99 // pred_check_branch
          %812 = sbr.rel (%p810) target = $region140
        $region139: #{self_han_layer.1} parent=99 // pred_region
          %813 = dma.done [#allocation17], 64
        $region140: #{self_han_layer.1} parent=99 // pred_fallthru
          _
        // Predicated region
        $region141: #{self_han_layer.1} parent=99 // pred_check
          %p814 = pneg %p321
        $region142: #{self_han_layer.1} parent=99 // pred_check_branch
          %816 = sbr.rel (%p814) target = $region144
        $region143: #{self_han_layer.1} parent=99 // pred_region
          %817 = dma.done [#allocation17], 16384
        $region144: #{self_han_layer.1} parent=99 // pred_fallthru
          _
        // Predicated region
        $region145: #{self_han_layer.1} parent=99 // pred_check
          %p818 = pneg %p342
        $region146: #{self_han_layer.1} parent=99 // pred_check_branch
          %820 = sbr.rel (%p818) target = $region148
        $region147: #{self_han_layer.1} parent=99 // pred_region
          %821 = dma.done [#allocation20], 64
        $region148: #{self_han_layer.1} parent=99 // pred_fallthru
          _
        // Predicated region
        $region149: #{self_han_layer.1} parent=99 // pred_check
          %p822 = pneg %p363
        $region150: #{self_han_layer.1} parent=99 // pred_check_branch
          %824 = sbr.rel (%p822) target = $region152
        $region151: #{self_han_layer.1} parent=99 // pred_region
          %825 = dma.done [#allocation20], 16384
        $region152: #{self_han_layer.1} parent=99 // pred_fallthru
          _
        // Predicated region
        $region153: #{self_han_layer.1} parent=99 // pred_check
          %p826 = pneg %p384
        $region154: #{self_han_layer.1} parent=99 // pred_check_branch
          %828 = sbr.rel (%p826) target = $region156
        $region155: #{self_han_layer.1} parent=99 // pred_region
          %829 = dma.done [#allocation23], 64
        $region156: #{self_han_layer.1} parent=99 // pred_fallthru
          _
        // Predicated region
        $region157: #{self_han_layer.1} parent=99 // pred_check
          %p830 = pneg %p405
        $region158: #{self_han_layer.1} parent=99 // pred_check_branch
          %832 = sbr.rel (%p830) target = $region160
        $region159: #{self_han_layer.1} parent=99 // pred_region
          %833 = dma.done [#allocation23], 64
        $region160: #{self_han_layer.1} parent=99 // pred_fallthru
          _
        // Predicated region
        $region161: #{self_han_layer.1} parent=99 // pred_check
          %p834 = pneg %p426
        $region162: #{self_han_layer.1} parent=99 // pred_check_branch
          %836 = sbr.rel (%p834) target = $region164
        $region163: #{self_han_layer.1} parent=99 // pred_region
          %837 = dma.done [#allocation26], 64
        $region164: #{self_han_layer.1} parent=99 // pred_fallthru
          _
        // Predicated region
        $region165: #{self_han_layer.1} parent=99 // pred_check
          %p838 = pneg %p447
        $region166: #{self_han_layer.1} parent=99 // pred_check_branch
          %840 = sbr.rel (%p838) target = $region168
        $region167: #{self_han_layer.1} parent=99 // pred_region
          %841 = dma.done [#allocation26], 64
        $region168: #{self_han_layer.1} parent=99 // pred_fallthru
          _
        // Predicated region
        $region169: #{self_han_layer.1} parent=99 // pred_check
          %p842 = pneg %p468
        $region170: #{self_han_layer.1} parent=99 // pred_check_branch
          %844 = sbr.rel (%p842) target = $region172
        $region171: #{self_han_layer.1} parent=99 // pred_region
          %845 = dma.done [#allocation29], 64
        $region172: #{self_han_layer.1} parent=99 // pred_fallthru
          _
        %p846 = scmp.lt.s32.totalorder %s43, 1
        %s847 = scalar_select %p846, %s43, 1
        %s848 = smul.addr %s847, 8
        %s849 = smul.addr %s848, 8
        %s850 = scalar_lea.vmem %s0, %s849
        %p851 = pneg %p64
        %p852 = pneg %p61
        %p853 = scmp.lt.s32.totalorder %s43, 1
        %s854 = scalar_select %p853, %s43, 1
        %s855 = smul.addr %s854, 8
        %s856 = smul.addr %s855, 8
        %s857 = scalar_lea.vmem %s1, %s856
        %p858 = pneg %p90
        %p859 = pneg %p87
        %p860 = pneg %p111
        %p861 = pneg %p108
        %p862 = pneg %p132
        %p863 = pneg %p129
        %p864 = pneg %p153
        %p865 = pneg %p150
        %p866 = pneg %p174
        %p867 = pneg %p171
        %p868 = pneg %p195
        %p869 = pneg %p192
        %p870 = pneg %p216
        %p871 = pneg %p213
        %p872 = pneg %p237
        %p873 = pneg %p234
        %p874 = pneg %p258
        %p875 = pneg %p255
        %p876 = pneg %p279
        %p877 = pneg %p276
        %p878 = pneg %p300
        %p879 = pneg %p297
        %p880 = pneg %p321
        %p881 = pneg %p318
        %p882 = pneg %p342
        %p883 = pneg %p339
        %p884 = pneg %p363
        %p885 = pneg %p360
        %p886 = pneg %p384
        %p887 = pneg %p381
        %p888 = pneg %p405
        %p889 = pneg %p402
        %p890 = pneg %p426
        %p891 = pneg %p423
        %p892 = pneg %p447
        %p893 = pneg %p444
        %p894 = pneg %p468
        %p895 = pneg %p465
        %p896 = pneg %p494
        %p897 = pneg %p491
        %p898 = scmp.lt.s32.totalorder %s43, 1
        %s899 = scalar_select %p898, %s43, 1
        %s900 = smul.addr %s899, 8
        %s901 = smul.addr %s900, 8
        %s902 = scalar_lea.vmem %s20, %s901
        %p903 = pneg %p520
        %p904 = pneg %p517
        %p905 = scmp.lt.s32.totalorder %s43, 1
        %s906 = scalar_select %p905, %s43, 1
        %s907 = smul.addr %s906, 2
        %s908 = smul.addr %s907, 8
        %s909 = scalar_lea.vmem %s21, %s908
        %p910 = scmp.lt.s32.totalorder %s43, 1
        %s911 = scalar_select %p910, %s43, 1
        %s912 = smul.addr %s911, 8
        %s913 = smul.addr %s912, 8
        %s914 = scalar_lea.vmem %s0, %s913
        %p915 = scmp.lt.s32.totalorder %s43, 1
        %s916 = scalar_select %p915, %s43, 1
        %s917 = smul.addr %s916, 8
        %s918 = smul.addr %s917, 8
        %s919 = scalar_lea.vmem %s1, %s918
        %p920 = scmp.lt.s32.totalorder %s43, 1
        %s921 = scalar_select %p920, %s43, 1
        %s922 = smul.addr %s921, 8
        %s923 = smul.addr %s922, 8
        %s924 = scalar_lea.vmem %s20, %s923
        %p925 = scmp.lt.s32.totalorder %s43, 1
        %s926 = scalar_select %p925, %s43, 1
        %s927 = smul.addr %s926, 2
        %s928 = smul.addr %s927, 8
        %s929 = scalar_lea.vmem %s21, %s928
        %v931 = vld [vmem:[%s914] sm:$0xff]
        %v932 = vld [vmem:[%s914 + $0x8] sm:$0xff]
        %v933 = vld [vmem:[%s914 + $0x10] sm:$0xff]
        %v934 = vld [vmem:[%s914 + $0x18] sm:$0xff]
        %v935 = vld [vmem:[%s914 + $0x20] sm:$0x3]
        %v936 = vld [vmem:[%s914 + $0x28] sm:$0x3]
        %v937 = vld [vmem:[%s914 + $0x30] sm:$0x3]
        %v938 = vld [vmem:[%s914 + $0x38] sm:$0x3]
        %v939 = vpack.c.bf16 %v935, %v931
        %v940 = vpack.c.bf16 %v936, %v932
        %v941 = vpack.c.bf16 %v937, %v933
        %v942 = vpack.c.bf16 %v938, %v934
        %v943 = vld [vmem:[#allocation2] sm:$0xff]
        %v944 = vld [vmem:[#allocation2 + $0x8] sm:$0xff]
        %v945 = vld [vmem:[#allocation2 + $0x10] sm:$0xff]
        %v946 = vld [vmem:[#allocation2 + $0x18] sm:$0xff]
        %v947 = vld [vmem:[#allocation2 + $0x20] sm:$0xff]
        %v948 = vld [vmem:[#allocation2 + $0x28] sm:$0xff]
        %v949 = vld [vmem:[#allocation2 + $0x30] sm:$0xff]
        %v950 = vld [vmem:[#allocation2 + $0x38] sm:$0xff]
        %v951 = vld [vmem:[#allocation2 + $0x40] sm:$0xff]
        %v952 = vld [vmem:[#allocation2 + $0x48] sm:$0xff]
        %v953 = vld [vmem:[#allocation2 + $0x50] sm:$0xff]
        %v954 = vld [vmem:[#allocation2 + $0x58] sm:$0xff]
        %v955 = vld [vmem:[#allocation2 + $0x60] sm:$0xff]
        %v956 = vld [vmem:[#allocation2 + $0x68] sm:$0xff]
        %v957 = vld [vmem:[#allocation2 + $0x70] sm:$0xff]
        %v958 = vld [vmem:[#allocation2 + $0x78] sm:$0xff]
        %v959 = vld [vmem:[#allocation2 + $0x80] sm:$0xff]
        %v960 = vld [vmem:[#allocation2 + $0x88] sm:$0xff]
        %v961 = vld [vmem:[#allocation2 + $0x90] sm:$0xff]
        %v962 = vld [vmem:[#allocation2 + $0x98] sm:$0xff]
        %v963 = vld [vmem:[#allocation2 + $0xa0] sm:$0xff]
        %v964 = vld [vmem:[#allocation2 + $0xa8] sm:$0xff]
        %v965 = vld [vmem:[#allocation2 + $0xb0] sm:$0xff]
        %v966 = vld [vmem:[#allocation2 + $0xb8] sm:$0xff]
        %v967 = vld [vmem:[#allocation2 + $0xc0] sm:$0xff]
        %v968 = vld [vmem:[#allocation2 + $0xc8] sm:$0xff]
        %v969 = vld [vmem:[#allocation2 + $0xd0] sm:$0xff]
        %v970 = vld [vmem:[#allocation2 + $0xd8] sm:$0xff]
        %v971 = vld [vmem:[#allocation2 + $0xe0] sm:$0xff]
        %v972 = vld [vmem:[#allocation2 + $0xe8] sm:$0xff]
        %v973 = vld [vmem:[#allocation2 + $0xf0] sm:$0xff]
        %v974 = vld [vmem:[#allocation2 + $0xf8] sm:$0xff]
        %v975 = vld [vmem:[#allocation2 + $0x100] sm:$0xff]
        %v976 = vld [vmem:[#allocation2 + $0x108] sm:$0xff]
        %v977 = vld [vmem:[#allocation2 + $0x110] sm:$0xff]
        %v978 = vld [vmem:[#allocation2 + $0x118] sm:$0xff]
        %v979 = vld [vmem:[#allocation2 + $0x120] sm:$0xff]
        %v980 = vld [vmem:[#allocation2 + $0x128] sm:$0xff]
        %v981 = vld [vmem:[#allocation2 + $0x130] sm:$0xff]
        %v982 = vld [vmem:[#allocation2 + $0x138] sm:$0xff]
        %v983 = vld [vmem:[#allocation2 + $0x140] sm:$0xff]
        %v984 = vld [vmem:[#allocation2 + $0x148] sm:$0xff]
        %v985 = vld [vmem:[#allocation2 + $0x150] sm:$0xff]
        %v986 = vld [vmem:[#allocation2 + $0x158] sm:$0xff]
        %v987 = vld [vmem:[#allocation2 + $0x160] sm:$0xff]
        %v988 = vld [vmem:[#allocation2 + $0x168] sm:$0xff]
        %v989 = vld [vmem:[#allocation2 + $0x170] sm:$0xff]
        %v990 = vld [vmem:[#allocation2 + $0x178] sm:$0xff]
        %v991 = vld [vmem:[#allocation2 + $0x180] sm:$0xff]
        %v992 = vld [vmem:[#allocation2 + $0x188] sm:$0xff]
        %v993 = vld [vmem:[#allocation2 + $0x190] sm:$0xff]
        %v994 = vld [vmem:[#allocation2 + $0x198] sm:$0xff]
        %v995 = vld [vmem:[#allocation2 + $0x1a0] sm:$0xff]
        %v996 = vld [vmem:[#allocation2 + $0x1a8] sm:$0xff]
        %v997 = vld [vmem:[#allocation2 + $0x1b0] sm:$0xff]
        %v998 = vld [vmem:[#allocation2 + $0x1b8] sm:$0xff]
        %v999 = vld [vmem:[#allocation2 + $0x1c0] sm:$0xff]
        %v1000 = vld [vmem:[#allocation2 + $0x1c8] sm:$0xff]
        %v1001 = vld [vmem:[#allocation2 + $0x1d0] sm:$0xff]
        %v1002 = vld [vmem:[#allocation2 + $0x1d8] sm:$0xff]
        %v1003 = vld [vmem:[#allocation2 + $0x1e0] sm:$0xff]
        %v1004 = vld [vmem:[#allocation2 + $0x1e8] sm:$0xff]
        %v1005 = vld [vmem:[#allocation2 + $0x1f0] sm:$0xff]
        %v1006 = vld [vmem:[#allocation2 + $0x1f8] sm:$0xff]
        %v1007 = vld [vmem:[#allocation2 + $0x200] sm:$0xff]
        %v1008 = vld [vmem:[#allocation2 + $0x208] sm:$0xff]
        %v1009 = vld [vmem:[#allocation2 + $0x210] sm:$0xff]
        %v1010 = vld [vmem:[#allocation2 + $0x218] sm:$0xff]
        %v1011 = vld [vmem:[#allocation2 + $0x220] sm:$0xff]
        %v1012 = vld [vmem:[#allocation2 + $0x228] sm:$0xff]
        %v1013 = vld [vmem:[#allocation2 + $0x230] sm:$0xff]
        %v1014 = vld [vmem:[#allocation2 + $0x238] sm:$0xff]
        %v1015 = vld [vmem:[#allocation2 + $0x240] sm:$0xff]
        %v1016 = vld [vmem:[#allocation2 + $0x248] sm:$0xff]
        %v1017 = vld [vmem:[#allocation2 + $0x250] sm:$0xff]
        %v1018 = vld [vmem:[#allocation2 + $0x258] sm:$0xff]
        %v1019 = vld [vmem:[#allocation2 + $0x260] sm:$0xff]
        %v1020 = vld [vmem:[#allocation2 + $0x268] sm:$0xff]
        %v1021 = vld [vmem:[#allocation2 + $0x270] sm:$0xff]
        %v1022 = vld [vmem:[#allocation2 + $0x278] sm:$0xff]
        %v1023 = vld [vmem:[#allocation2 + $0x280] sm:$0xff]
        %v1024 = vld [vmem:[#allocation2 + $0x288] sm:$0xff]
        %v1025 = vld [vmem:[#allocation2 + $0x290] sm:$0xff]
        %v1026 = vld [vmem:[#allocation2 + $0x298] sm:$0xff]
        %v1027 = vld [vmem:[#allocation2 + $0x2a0] sm:$0xff]
        %v1028 = vld [vmem:[#allocation2 + $0x2a8] sm:$0xff]
        %v1029 = vld [vmem:[#allocation2 + $0x2b0] sm:$0xff]
        %v1030 = vld [vmem:[#allocation2 + $0x2b8] sm:$0xff]
        %v1031 = vld [vmem:[#allocation2 + $0x2c0] sm:$0xff]
        %v1032 = vld [vmem:[#allocation2 + $0x2c8] sm:$0xff]
        %v1033 = vld [vmem:[#allocation2 + $0x2d0] sm:$0xff]
        %v1034 = vld [vmem:[#allocation2 + $0x2d8] sm:$0xff]
        %v1035 = vld [vmem:[#allocation2 + $0x2e0] sm:$0xff]
        %v1036 = vld [vmem:[#allocation2 + $0x2e8] sm:$0xff]
        %v1037 = vld [vmem:[#allocation2 + $0x2f0] sm:$0xff]
        %v1038 = vld [vmem:[#allocation2 + $0x2f8] sm:$0xff]
        %v1039 = vld [vmem:[#allocation2 + $0x300] sm:$0xff]
        %v1040 = vld [vmem:[#allocation2 + $0x308] sm:$0xff]
        %v1041 = vld [vmem:[#allocation2 + $0x310] sm:$0xff]
        %v1042 = vld [vmem:[#allocation2 + $0x318] sm:$0xff]
        %v1043 = vld [vmem:[#allocation2 + $0x320] sm:$0xff]
        %v1044 = vld [vmem:[#allocation2 + $0x328] sm:$0xff]
        %v1045 = vld [vmem:[#allocation2 + $0x330] sm:$0xff]
        %v1046 = vld [vmem:[#allocation2 + $0x338] sm:$0xff]
        %v1047 = vld [vmem:[#allocation2 + $0x340] sm:$0xff]
        %v1048 = vld [vmem:[#allocation2 + $0x348] sm:$0xff]
        %v1049 = vld [vmem:[#allocation2 + $0x350] sm:$0xff]
        %v1050 = vld [vmem:[#allocation2 + $0x358] sm:$0xff]
        %v1051 = vld [vmem:[#allocation2 + $0x360] sm:$0xff]
        %v1052 = vld [vmem:[#allocation2 + $0x368] sm:$0xff]
        %v1053 = vld [vmem:[#allocation2 + $0x370] sm:$0xff]
        %v1054 = vld [vmem:[#allocation2 + $0x378] sm:$0xff]
        %v1055 = vld [vmem:[#allocation2 + $0x380] sm:$0xff]
        %v1056 = vld [vmem:[#allocation2 + $0x388] sm:$0xff]
        %v1057 = vld [vmem:[#allocation2 + $0x390] sm:$0xff]
        %v1058 = vld [vmem:[#allocation2 + $0x398] sm:$0xff]
        %v1059 = vld [vmem:[#allocation2 + $0x3a0] sm:$0xff]
        %v1060 = vld [vmem:[#allocation2 + $0x3a8] sm:$0xff]
        %v1061 = vld [vmem:[#allocation2 + $0x3b0] sm:$0xff]
        %v1062 = vld [vmem:[#allocation2 + $0x3b8] sm:$0xff]
        %v1063 = vld [vmem:[#allocation2 + $0x3c0] sm:$0xff]
        %v1064 = vld [vmem:[#allocation2 + $0x3c8] sm:$0xff]
        %v1065 = vld [vmem:[#allocation2 + $0x3d0] sm:$0xff]
        %v1066 = vld [vmem:[#allocation2 + $0x3d8] sm:$0xff]
        %v1067 = vld [vmem:[#allocation2 + $0x3e0] sm:$0xff]
        %v1068 = vld [vmem:[#allocation2 + $0x3e8] sm:$0xff]
        %v1069 = vld [vmem:[#allocation2 + $0x3f0] sm:$0xff]
        %v1070 = vld [vmem:[#allocation2 + $0x3f8] sm:$0xff]
        %v1071 = vld [vmem:[#allocation2 + $0x400] sm:$0xff]
        %v1072 = vld [vmem:[#allocation2 + $0x408] sm:$0xff]
        %v1073 = vld [vmem:[#allocation2 + $0x410] sm:$0xff]
        %v1074 = vld [vmem:[#allocation2 + $0x418] sm:$0xff]
        %v1075 = vld [vmem:[#allocation2 + $0x420] sm:$0xff]
        %v1076 = vld [vmem:[#allocation2 + $0x428] sm:$0xff]
        %v1077 = vld [vmem:[#allocation2 + $0x430] sm:$0xff]
        %v1078 = vld [vmem:[#allocation2 + $0x438] sm:$0xff]
        %v1079 = vld [vmem:[#allocation2 + $0x440] sm:$0xff]
        %v1080 = vld [vmem:[#allocation2 + $0x448] sm:$0xff]
        %v1081 = vld [vmem:[#allocation2 + $0x450] sm:$0xff]
        %v1082 = vld [vmem:[#allocation2 + $0x458] sm:$0xff]
        %v1083 = vld [vmem:[#allocation2 + $0x460] sm:$0xff]
        %v1084 = vld [vmem:[#allocation2 + $0x468] sm:$0xff]
        %v1085 = vld [vmem:[#allocation2 + $0x470] sm:$0xff]
        %v1086 = vld [vmem:[#allocation2 + $0x478] sm:$0xff]
        %v1087 = vld [vmem:[#allocation2 + $0x480] sm:$0xff]
        %v1088 = vld [vmem:[#allocation2 + $0x488] sm:$0xff]
        %v1089 = vld [vmem:[#allocation2 + $0x490] sm:$0xff]
        %v1090 = vld [vmem:[#allocation2 + $0x498] sm:$0xff]
        %v1091 = vld [vmem:[#allocation2 + $0x4a0] sm:$0xff]
        %v1092 = vld [vmem:[#allocation2 + $0x4a8] sm:$0xff]
        %v1093 = vld [vmem:[#allocation2 + $0x4b0] sm:$0xff]
        %v1094 = vld [vmem:[#allocation2 + $0x4b8] sm:$0xff]
        %v1095 = vld [vmem:[#allocation2 + $0x4c0] sm:$0xff]
        %v1096 = vld [vmem:[#allocation2 + $0x4c8] sm:$0xff]
        %v1097 = vld [vmem:[#allocation2 + $0x4d0] sm:$0xff]
        %v1098 = vld [vmem:[#allocation2 + $0x4d8] sm:$0xff]
        %v1099 = vld [vmem:[#allocation2 + $0x4e0] sm:$0xff]
        %v1100 = vld [vmem:[#allocation2 + $0x4e8] sm:$0xff]
        %v1101 = vld [vmem:[#allocation2 + $0x4f0] sm:$0xff]
        %v1102 = vld [vmem:[#allocation2 + $0x4f8] sm:$0xff]
        %v1103 = vld [vmem:[#allocation2 + $0x500] sm:$0xff]
        %v1104 = vld [vmem:[#allocation2 + $0x508] sm:$0xff]
        %v1105 = vld [vmem:[#allocation2 + $0x510] sm:$0xff]
        %v1106 = vld [vmem:[#allocation2 + $0x518] sm:$0xff]
        %v1107 = vld [vmem:[#allocation2 + $0x520] sm:$0xff]
        %v1108 = vld [vmem:[#allocation2 + $0x528] sm:$0xff]
        %v1109 = vld [vmem:[#allocation2 + $0x530] sm:$0xff]
        %v1110 = vld [vmem:[#allocation2 + $0x538] sm:$0xff]
        %v1111 = vld [vmem:[#allocation2 + $0x540] sm:$0xff]
        %v1112 = vld [vmem:[#allocation2 + $0x548] sm:$0xff]
        %v1113 = vld [vmem:[#allocation2 + $0x550] sm:$0xff]
        %v1114 = vld [vmem:[#allocation2 + $0x558] sm:$0xff]
        %v1115 = vld [vmem:[#allocation2 + $0x560] sm:$0xff]
        %v1116 = vld [vmem:[#allocation2 + $0x568] sm:$0xff]
        %v1117 = vld [vmem:[#allocation2 + $0x570] sm:$0xff]
        %v1118 = vld [vmem:[#allocation2 + $0x578] sm:$0xff]
        %v1119 = vld [vmem:[#allocation2 + $0x580] sm:$0xff]
        %v1120 = vld [vmem:[#allocation2 + $0x588] sm:$0xff]
        %v1121 = vld [vmem:[#allocation2 + $0x590] sm:$0xff]
        %v1122 = vld [vmem:[#allocation2 + $0x598] sm:$0xff]
        %v1123 = vld [vmem:[#allocation2 + $0x5a0] sm:$0xff]
        %v1124 = vld [vmem:[#allocation2 + $0x5a8] sm:$0xff]
        %v1125 = vld [vmem:[#allocation2 + $0x5b0] sm:$0xff]
        %v1126 = vld [vmem:[#allocation2 + $0x5b8] sm:$0xff]
        %v1127 = vld [vmem:[#allocation2 + $0x5c0] sm:$0xff]
        %v1128 = vld [vmem:[#allocation2 + $0x5c8] sm:$0xff]
        %v1129 = vld [vmem:[#allocation2 + $0x5d0] sm:$0xff]
        %v1130 = vld [vmem:[#allocation2 + $0x5d8] sm:$0xff]
        %v1131 = vld [vmem:[#allocation2 + $0x5e0] sm:$0xff]
        %v1132 = vld [vmem:[#allocation2 + $0x5e8] sm:$0xff]
        %v1133 = vld [vmem:[#allocation2 + $0x5f0] sm:$0xff]
        %v1134 = vld [vmem:[#allocation2 + $0x5f8] sm:$0xff]
        %v1135 = vld [vmem:[#allocation2 + $0x600] sm:$0xff]
        %v1136 = vld [vmem:[#allocation2 + $0x608] sm:$0xff]
        %v1137 = vld [vmem:[#allocation2 + $0x610] sm:$0xff]
        %v1138 = vld [vmem:[#allocation2 + $0x618] sm:$0xff]
        %v1139 = vld [vmem:[#allocation2 + $0x620] sm:$0xff]
        %v1140 = vld [vmem:[#allocation2 + $0x628] sm:$0xff]
        %v1141 = vld [vmem:[#allocation2 + $0x630] sm:$0xff]
        %v1142 = vld [vmem:[#allocation2 + $0x638] sm:$0xff]
        %v1143 = vld [vmem:[#allocation2 + $0x640] sm:$0xff]
        %v1144 = vld [vmem:[#allocation2 + $0x648] sm:$0xff]
        %v1145 = vld [vmem:[#allocation2 + $0x650] sm:$0xff]
        %v1146 = vld [vmem:[#allocation2 + $0x658] sm:$0xff]
        %v1147 = vld [vmem:[#allocation2 + $0x660] sm:$0xff]
        %v1148 = vld [vmem:[#allocation2 + $0x668] sm:$0xff]
        %v1149 = vld [vmem:[#allocation2 + $0x670] sm:$0xff]
        %v1150 = vld [vmem:[#allocation2 + $0x678] sm:$0xff]
        %v1151 = vld [vmem:[#allocation2 + $0x680] sm:$0xff]
        %v1152 = vld [vmem:[#allocation2 + $0x688] sm:$0xff]
        %v1153 = vld [vmem:[#allocation2 + $0x690] sm:$0xff]
        %v1154 = vld [vmem:[#allocation2 + $0x698] sm:$0xff]
        %v1155 = vld [vmem:[#allocation2 + $0x6a0] sm:$0xff]
        %v1156 = vld [vmem:[#allocation2 + $0x6a8] sm:$0xff]
        %v1157 = vld [vmem:[#allocation2 + $0x6b0] sm:$0xff]
        %v1158 = vld [vmem:[#allocation2 + $0x6b8] sm:$0xff]
        %v1159 = vld [vmem:[#allocation2 + $0x6c0] sm:$0xff]
        %v1160 = vld [vmem:[#allocation2 + $0x6c8] sm:$0xff]
        %v1161 = vld [vmem:[#allocation2 + $0x6d0] sm:$0xff]
        %v1162 = vld [vmem:[#allocation2 + $0x6d8] sm:$0xff]
        %v1163 = vld [vmem:[#allocation2 + $0x6e0] sm:$0xff]
        %v1164 = vld [vmem:[#allocation2 + $0x6e8] sm:$0xff]
        %v1165 = vld [vmem:[#allocation2 + $0x6f0] sm:$0xff]
        %v1166 = vld [vmem:[#allocation2 + $0x6f8] sm:$0xff]
        %v1167 = vld [vmem:[#allocation2 + $0x700] sm:$0xff]
        %v1168 = vld [vmem:[#allocation2 + $0x708] sm:$0xff]
        %v1169 = vld [vmem:[#allocation2 + $0x710] sm:$0xff]
        %v1170 = vld [vmem:[#allocation2 + $0x718] sm:$0xff]
        %v1171 = vld [vmem:[#allocation2 + $0x720] sm:$0xff]
        %v1172 = vld [vmem:[#allocation2 + $0x728] sm:$0xff]
        %v1173 = vld [vmem:[#allocation2 + $0x730] sm:$0xff]
        %v1174 = vld [vmem:[#allocation2 + $0x738] sm:$0xff]
        %v1175 = vld [vmem:[#allocation2 + $0x740] sm:$0xff]
        %v1176 = vld [vmem:[#allocation2 + $0x748] sm:$0xff]
        %v1177 = vld [vmem:[#allocation2 + $0x750] sm:$0xff]
        %v1178 = vld [vmem:[#allocation2 + $0x758] sm:$0xff]
        %v1179 = vld [vmem:[#allocation2 + $0x760] sm:$0xff]
        %v1180 = vld [vmem:[#allocation2 + $0x768] sm:$0xff]
        %v1181 = vld [vmem:[#allocation2 + $0x770] sm:$0xff]
        %v1182 = vld [vmem:[#allocation2 + $0x778] sm:$0xff]
        %v1183 = vld [vmem:[#allocation2 + $0x780] sm:$0xff]
        %v1184 = vld [vmem:[#allocation2 + $0x788] sm:$0xff]
        %v1185 = vld [vmem:[#allocation2 + $0x790] sm:$0xff]
        %v1186 = vld [vmem:[#allocation2 + $0x798] sm:$0xff]
        %v1187 = vld [vmem:[#allocation2 + $0x7a0] sm:$0xff]
        %v1188 = vld [vmem:[#allocation2 + $0x7a8] sm:$0xff]
        %v1189 = vld [vmem:[#allocation2 + $0x7b0] sm:$0xff]
        %v1190 = vld [vmem:[#allocation2 + $0x7b8] sm:$0xff]
        %v1191 = vld [vmem:[#allocation2 + $0x7c0] sm:$0xff]
        %v1192 = vld [vmem:[#allocation2 + $0x7c8] sm:$0xff]
        %v1193 = vld [vmem:[#allocation2 + $0x7d0] sm:$0xff]
        %v1194 = vld [vmem:[#allocation2 + $0x7d8] sm:$0xff]
        %v1195 = vld [vmem:[#allocation2 + $0x7e0] sm:$0xff]
        %v1196 = vld [vmem:[#allocation2 + $0x7e8] sm:$0xff]
        %v1197 = vld [vmem:[#allocation2 + $0x7f0] sm:$0xff]
        %v1198 = vld [vmem:[#allocation2 + $0x7f8] sm:$0xff]
        %v1199 = vld [vmem:[#allocation2 + $0x800] sm:$0xff]
        %v1200 = vld [vmem:[#allocation2 + $0x808] sm:$0xff]
        %v1201 = vld [vmem:[#allocation2 + $0x810] sm:$0xff]
        %v1202 = vld [vmem:[#allocation2 + $0x818] sm:$0xff]
        %v1203 = vld [vmem:[#allocation2 + $0x820] sm:$0xff]
        %v1204 = vld [vmem:[#allocation2 + $0x828] sm:$0xff]
        %v1205 = vld [vmem:[#allocation2 + $0x830] sm:$0xff]
        %v1206 = vld [vmem:[#allocation2 + $0x838] sm:$0xff]
        %v1207 = vld [vmem:[#allocation2 + $0x840] sm:$0xff]
        %v1208 = vld [vmem:[#allocation2 + $0x848] sm:$0xff]
        %v1209 = vld [vmem:[#allocation2 + $0x850] sm:$0xff]
        %v1210 = vld [vmem:[#allocation2 + $0x858] sm:$0xff]
        %v1211 = vld [vmem:[#allocation2 + $0x860] sm:$0xff]
        %v1212 = vld [vmem:[#allocation2 + $0x868] sm:$0xff]
        %v1213 = vld [vmem:[#allocation2 + $0x870] sm:$0xff]
        %v1214 = vld [vmem:[#allocation2 + $0x878] sm:$0xff]
        %v1215 = vld [vmem:[#allocation2 + $0x880] sm:$0xff]
        %v1216 = vld [vmem:[#allocation2 + $0x888] sm:$0xff]
        %v1217 = vld [vmem:[#allocation2 + $0x890] sm:$0xff]
        %v1218 = vld [vmem:[#allocation2 + $0x898] sm:$0xff]
        %v1219 = vld [vmem:[#allocation2 + $0x8a0] sm:$0xff]
        %v1220 = vld [vmem:[#allocation2 + $0x8a8] sm:$0xff]
        %v1221 = vld [vmem:[#allocation2 + $0x8b0] sm:$0xff]
        %v1222 = vld [vmem:[#allocation2 + $0x8b8] sm:$0xff]
        %v1223 = vld [vmem:[#allocation2 + $0x8c0] sm:$0xff]
        %v1224 = vld [vmem:[#allocation2 + $0x8c8] sm:$0xff]
        %v1225 = vld [vmem:[#allocation2 + $0x8d0] sm:$0xff]
        %v1226 = vld [vmem:[#allocation2 + $0x8d8] sm:$0xff]
        %v1227 = vld [vmem:[#allocation2 + $0x8e0] sm:$0xff]
        %v1228 = vld [vmem:[#allocation2 + $0x8e8] sm:$0xff]
        %v1229 = vld [vmem:[#allocation2 + $0x8f0] sm:$0xff]
        %v1230 = vld [vmem:[#allocation2 + $0x8f8] sm:$0xff]
        %v1231 = vld [vmem:[#allocation2 + $0x900] sm:$0xff]
        %v1232 = vld [vmem:[#allocation2 + $0x908] sm:$0xff]
        %v1233 = vld [vmem:[#allocation2 + $0x910] sm:$0xff]
        %v1234 = vld [vmem:[#allocation2 + $0x918] sm:$0xff]
        %v1235 = vld [vmem:[#allocation2 + $0x920] sm:$0xff]
        %v1236 = vld [vmem:[#allocation2 + $0x928] sm:$0xff]
        %v1237 = vld [vmem:[#allocation2 + $0x930] sm:$0xff]
        %v1238 = vld [vmem:[#allocation2 + $0x938] sm:$0xff]
        %v1239 = vld [vmem:[#allocation2 + $0x940] sm:$0xff]
        %v1240 = vld [vmem:[#allocation2 + $0x948] sm:$0xff]
        %v1241 = vld [vmem:[#allocation2 + $0x950] sm:$0xff]
        %v1242 = vld [vmem:[#allocation2 + $0x958] sm:$0xff]
        %v1243 = vld [vmem:[#allocation2 + $0x960] sm:$0xff]
        %v1244 = vld [vmem:[#allocation2 + $0x968] sm:$0xff]
        %v1245 = vld [vmem:[#allocation2 + $0x970] sm:$0xff]
        %v1246 = vld [vmem:[#allocation2 + $0x978] sm:$0xff]
        %v1247 = vld [vmem:[#allocation2 + $0x980] sm:$0xff]
        %v1248 = vld [vmem:[#allocation2 + $0x988] sm:$0xff]
        %v1249 = vld [vmem:[#allocation2 + $0x990] sm:$0xff]
        %v1250 = vld [vmem:[#allocation2 + $0x998] sm:$0xff]
        %v1251 = vld [vmem:[#allocation2 + $0x9a0] sm:$0xff]
        %v1252 = vld [vmem:[#allocation2 + $0x9a8] sm:$0xff]
        %v1253 = vld [vmem:[#allocation2 + $0x9b0] sm:$0xff]
        %v1254 = vld [vmem:[#allocation2 + $0x9b8] sm:$0xff]
        %v1255 = vld [vmem:[#allocation2 + $0x9c0] sm:$0xff]
        %v1256 = vld [vmem:[#allocation2 + $0x9c8] sm:$0xff]
        %v1257 = vld [vmem:[#allocation2 + $0x9d0] sm:$0xff]
        %v1258 = vld [vmem:[#allocation2 + $0x9d8] sm:$0xff]
        %v1259 = vld [vmem:[#allocation2 + $0x9e0] sm:$0xff]
        %v1260 = vld [vmem:[#allocation2 + $0x9e8] sm:$0xff]
        %v1261 = vld [vmem:[#allocation2 + $0x9f0] sm:$0xff]
        %v1262 = vld [vmem:[#allocation2 + $0x9f8] sm:$0xff]
        %v1263 = vld [vmem:[#allocation2 + $0xa00] sm:$0xff]
        %v1264 = vld [vmem:[#allocation2 + $0xa08] sm:$0xff]
        %v1265 = vld [vmem:[#allocation2 + $0xa10] sm:$0xff]
        %v1266 = vld [vmem:[#allocation2 + $0xa18] sm:$0xff]
        %v1267 = vld [vmem:[#allocation2 + $0xa20] sm:$0xff]
        %v1268 = vld [vmem:[#allocation2 + $0xa28] sm:$0xff]
        %v1269 = vld [vmem:[#allocation2 + $0xa30] sm:$0xff]
        %v1270 = vld [vmem:[#allocation2 + $0xa38] sm:$0xff]
        %v1271 = vld [vmem:[#allocation2 + $0xa40] sm:$0xff]
        %v1272 = vld [vmem:[#allocation2 + $0xa48] sm:$0xff]
        %v1273 = vld [vmem:[#allocation2 + $0xa50] sm:$0xff]
        %v1274 = vld [vmem:[#allocation2 + $0xa58] sm:$0xff]
        %v1275 = vld [vmem:[#allocation2 + $0xa60] sm:$0xff]
        %v1276 = vld [vmem:[#allocation2 + $0xa68] sm:$0xff]
        %v1277 = vld [vmem:[#allocation2 + $0xa70] sm:$0xff]
        %v1278 = vld [vmem:[#allocation2 + $0xa78] sm:$0xff]
        %v1279 = vld [vmem:[#allocation2 + $0xa80] sm:$0xff]
        %v1280 = vld [vmem:[#allocation2 + $0xa88] sm:$0xff]
        %v1281 = vld [vmem:[#allocation2 + $0xa90] sm:$0xff]
        %v1282 = vld [vmem:[#allocation2 + $0xa98] sm:$0xff]
        %v1283 = vld [vmem:[#allocation2 + $0xaa0] sm:$0xff]
        %v1284 = vld [vmem:[#allocation2 + $0xaa8] sm:$0xff]
        %v1285 = vld [vmem:[#allocation2 + $0xab0] sm:$0xff]
        %v1286 = vld [vmem:[#allocation2 + $0xab8] sm:$0xff]
        %v1287 = vld [vmem:[#allocation2 + $0xac0] sm:$0xff]
        %v1288 = vld [vmem:[#allocation2 + $0xac8] sm:$0xff]
        %v1289 = vld [vmem:[#allocation2 + $0xad0] sm:$0xff]
        %v1290 = vld [vmem:[#allocation2 + $0xad8] sm:$0xff]
        %v1291 = vld [vmem:[#allocation2 + $0xae0] sm:$0xff]
        %v1292 = vld [vmem:[#allocation2 + $0xae8] sm:$0xff]
        %v1293 = vld [vmem:[#allocation2 + $0xaf0] sm:$0xff]
        %v1294 = vld [vmem:[#allocation2 + $0xaf8] sm:$0xff]
        %v1295 = vld [vmem:[#allocation2 + $0xb00] sm:$0xff]
        %v1296 = vld [vmem:[#allocation2 + $0xb08] sm:$0xff]
        %v1297 = vld [vmem:[#allocation2 + $0xb10] sm:$0xff]
        %v1298 = vld [vmem:[#allocation2 + $0xb18] sm:$0xff]
        %v1299 = vld [vmem:[#allocation2 + $0xb20] sm:$0xff]
        %v1300 = vld [vmem:[#allocation2 + $0xb28] sm:$0xff]
        %v1301 = vld [vmem:[#allocation2 + $0xb30] sm:$0xff]
        %v1302 = vld [vmem:[#allocation2 + $0xb38] sm:$0xff]
        %v1303 = vld [vmem:[#allocation2 + $0xb40] sm:$0xff]
        %v1304 = vld [vmem:[#allocation2 + $0xb48] sm:$0xff]
        %v1305 = vld [vmem:[#allocation2 + $0xb50] sm:$0xff]
        %v1306 = vld [vmem:[#allocation2 + $0xb58] sm:$0xff]
        %v1307 = vld [vmem:[#allocation2 + $0xb60] sm:$0xff]
        %v1308 = vld [vmem:[#allocation2 + $0xb68] sm:$0xff]
        %v1309 = vld [vmem:[#allocation2 + $0xb70] sm:$0xff]
        %v1310 = vld [vmem:[#allocation2 + $0xb78] sm:$0xff]
        %v1311 = vld [vmem:[#allocation2 + $0xb80] sm:$0xff]
        %v1312 = vld [vmem:[#allocation2 + $0xb88] sm:$0xff]
        %v1313 = vld [vmem:[#allocation2 + $0xb90] sm:$0xff]
        %v1314 = vld [vmem:[#allocation2 + $0xb98] sm:$0xff]
        %v1315 = vld [vmem:[#allocation2 + $0xba0] sm:$0xff]
        %v1316 = vld [vmem:[#allocation2 + $0xba8] sm:$0xff]
        %v1317 = vld [vmem:[#allocation2 + $0xbb0] sm:$0xff]
        %v1318 = vld [vmem:[#allocation2 + $0xbb8] sm:$0xff]
        %v1319 = vld [vmem:[#allocation2 + $0xbc0] sm:$0xff]
        %v1320 = vld [vmem:[#allocation2 + $0xbc8] sm:$0xff]
        %v1321 = vld [vmem:[#allocation2 + $0xbd0] sm:$0xff]
        %v1322 = vld [vmem:[#allocation2 + $0xbd8] sm:$0xff]
        %v1323 = vld [vmem:[#allocation2 + $0xbe0] sm:$0xff]
        %v1324 = vld [vmem:[#allocation2 + $0xbe8] sm:$0xff]
        %v1325 = vld [vmem:[#allocation2 + $0xbf0] sm:$0xff]
        %v1326 = vld [vmem:[#allocation2 + $0xbf8] sm:$0xff]
        %v1327 = vld [vmem:[#allocation4] sm:$0xff]
        %v1328 = vld [vmem:[#allocation4 + $0x8] sm:$0xf]
        %v1331 = vlaneseq
        %v1332 = vshrl.u32 %v1331, 7
        %v1333 = vsub.s32 0, %v1332
        %v1334 = vrot.slane %v1327, %v1333
        %v1335 = vlaneseq
        %v1336 = vshrl.u32 %v1335, 7
        %v1337 = vsub.s32 1, %v1336
        %v1338 = vrot.slane %v1327, %v1337
        %v1339 = vlaneseq
        %v1340 = vshrl.u32 %v1339, 7
        %v1341 = vsub.s32 2, %v1340
        %v1342 = vrot.slane %v1327, %v1341
        %v1343 = vlaneseq
        %v1344 = vshrl.u32 %v1343, 7
        %v1345 = vsub.s32 3, %v1344
        %v1346 = vrot.slane %v1327, %v1345
        %v1347 = vlaneseq
        %v1348 = vshrl.u32 %v1347, 7
        %v1349 = vsub.s32 4, %v1348
        %v1350 = vrot.slane %v1327, %v1349
        %v1351 = vlaneseq
        %v1352 = vshrl.u32 %v1351, 7
        %v1353 = vsub.s32 5, %v1352
        %v1354 = vrot.slane %v1327, %v1353
        %v1355 = vlaneseq
        %v1356 = vshrl.u32 %v1355, 7
        %v1357 = vsub.s32 6, %v1356
        %v1358 = vrot.slane %v1327, %v1357
        %v1359 = vlaneseq
        %v1360 = vshrl.u32 %v1359, 7
        %v1361 = vsub.s32 7, %v1360
        %v1362 = vrot.slane %v1327, %v1361
        %v1363 = vlaneseq
        %v1364 = vshrl.u32 %v1363, 7
        %v1365 = vsub.s32 0, %v1364
        %v1366 = vrot.slane %v1328, %v1365
        %v1367 = vlaneseq
        %v1368 = vshrl.u32 %v1367, 7
        %v1369 = vsub.s32 1, %v1368
        %v1370 = vrot.slane %v1328, %v1369
        %v1371 = vlaneseq
        %v1372 = vshrl.u32 %v1371, 7
        %v1373 = vsub.s32 2, %v1372
        %v1374 = vrot.slane %v1328, %v1373
        %v1375 = vlaneseq
        %v1376 = vshrl.u32 %v1375, 7
        %v1377 = vsub.s32 3, %v1376
        %v1378 = vrot.slane %v1328, %v1377
        %v1775 = vunpack.c.l.b16 %v943
        %v1776 = vunpack.c.h.b16 %v943
        %v1777 = vunpack.c.l.b16 %v944
        %v1778 = vunpack.c.h.b16 %v944
        %v1779 = vunpack.c.l.b16 %v945
        %v1780 = vunpack.c.h.b16 %v945
        %v1781 = vunpack.c.l.b16 %v946
        %v1782 = vunpack.c.h.b16 %v946
        %v1783 = vunpack.c.l.b16 %v947
        %v1784 = vunpack.c.h.b16 %v947
        %v1785 = vunpack.c.l.b16 %v948
        %v1786 = vunpack.c.h.b16 %v948
        %v1787 = vunpack.c.l.b16 %v949
        %v1788 = vunpack.c.h.b16 %v949
        %v1789 = vunpack.c.l.b16 %v950
        %v1790 = vunpack.c.h.b16 %v950
        %v1791 = vunpack.c.l.b16 %v951
        %v1792 = vunpack.c.h.b16 %v951
        %v1793 = vunpack.c.l.b16 %v952
        %v1794 = vunpack.c.h.b16 %v952
        %v1795 = vunpack.c.l.b16 %v953
        %v1796 = vunpack.c.h.b16 %v953
        %v1797 = vunpack.c.l.b16 %v954
        %v1798 = vunpack.c.h.b16 %v954
        %v1799 = vunpack.c.l.b16 %v955
        %v1800 = vunpack.c.h.b16 %v955
        %v1801 = vunpack.c.l.b16 %v956
        %v1802 = vunpack.c.h.b16 %v956
        %v1803 = vunpack.c.l.b16 %v957
        %v1804 = vunpack.c.h.b16 %v957
        %v1805 = vunpack.c.l.b16 %v958
        %v1806 = vunpack.c.h.b16 %v958
        %v1807 = vunpack.c.l.b16 %v959
        %v1808 = vunpack.c.h.b16 %v959
        %v1809 = vunpack.c.l.b16 %v960
        %v1810 = vunpack.c.h.b16 %v960
        %v1811 = vunpack.c.l.b16 %v961
        %v1812 = vunpack.c.h.b16 %v961
        %v1813 = vunpack.c.l.b16 %v962
        %v1814 = vunpack.c.h.b16 %v962
        %v1815 = vunpack.c.l.b16 %v963
        %v1816 = vunpack.c.h.b16 %v963
        %v1817 = vunpack.c.l.b16 %v964
        %v1818 = vunpack.c.h.b16 %v964
        %v1819 = vunpack.c.l.b16 %v965
        %v1820 = vunpack.c.h.b16 %v965
        %v1821 = vunpack.c.l.b16 %v966
        %v1822 = vunpack.c.h.b16 %v966
        %v1823 = vunpack.c.l.b16 %v967
        %v1824 = vunpack.c.h.b16 %v967
        %v1825 = vunpack.c.l.b16 %v968
        %v1826 = vunpack.c.h.b16 %v968
        %v1827 = vunpack.c.l.b16 %v969
        %v1828 = vunpack.c.h.b16 %v969
        %v1829 = vunpack.c.l.b16 %v970
        %v1830 = vunpack.c.h.b16 %v970
        %v1831 = vunpack.c.l.b16 %v971
        %v1832 = vunpack.c.h.b16 %v971
        %v1833 = vunpack.c.l.b16 %v972
        %v1834 = vunpack.c.h.b16 %v972
        %v1835 = vunpack.c.l.b16 %v973
        %v1836 = vunpack.c.h.b16 %v973
        %v1837 = vunpack.c.l.b16 %v974
        %v1838 = vunpack.c.h.b16 %v974
        %v1839 = vunpack.c.l.b16 %v975
        %v1840 = vunpack.c.h.b16 %v975
        %v1841 = vunpack.c.l.b16 %v976
        %v1842 = vunpack.c.h.b16 %v976
        %v1843 = vunpack.c.l.b16 %v977
        %v1844 = vunpack.c.h.b16 %v977
        %v1845 = vunpack.c.l.b16 %v978
        %v1846 = vunpack.c.h.b16 %v978
        %v1847 = vunpack.c.l.b16 %v979
        %v1848 = vunpack.c.h.b16 %v979
        %v1849 = vunpack.c.l.b16 %v980
        %v1850 = vunpack.c.h.b16 %v980
        %v1851 = vunpack.c.l.b16 %v981
        %v1852 = vunpack.c.h.b16 %v981
        %v1853 = vunpack.c.l.b16 %v982
        %v1854 = vunpack.c.h.b16 %v982
        %v1855 = vunpack.c.l.b16 %v983
        %v1856 = vunpack.c.h.b16 %v983
        %v1857 = vunpack.c.l.b16 %v984
        %v1858 = vunpack.c.h.b16 %v984
        %v1859 = vunpack.c.l.b16 %v985
        %v1860 = vunpack.c.h.b16 %v985
        %v1861 = vunpack.c.l.b16 %v986
        %v1862 = vunpack.c.h.b16 %v986
        %v1863 = vunpack.c.l.b16 %v987
        %v1864 = vunpack.c.h.b16 %v987
        %v1865 = vunpack.c.l.b16 %v988
        %v1866 = vunpack.c.h.b16 %v988
        %v1867 = vunpack.c.l.b16 %v989
        %v1868 = vunpack.c.h.b16 %v989
        %v1869 = vunpack.c.l.b16 %v990
        %v1870 = vunpack.c.h.b16 %v990
        %v1871 = vunpack.c.l.b16 %v991
        %v1872 = vunpack.c.h.b16 %v991
        %v1873 = vunpack.c.l.b16 %v992
        %v1874 = vunpack.c.h.b16 %v992
        %v1875 = vunpack.c.l.b16 %v993
        %v1876 = vunpack.c.h.b16 %v993
        %v1877 = vunpack.c.l.b16 %v994
        %v1878 = vunpack.c.h.b16 %v994
        %v1879 = vunpack.c.l.b16 %v995
        %v1880 = vunpack.c.h.b16 %v995
        %v1881 = vunpack.c.l.b16 %v996
        %v1882 = vunpack.c.h.b16 %v996
        %v1883 = vunpack.c.l.b16 %v997
        %v1884 = vunpack.c.h.b16 %v997
        %v1885 = vunpack.c.l.b16 %v998
        %v1886 = vunpack.c.h.b16 %v998
        %v1887 = vunpack.c.l.b16 %v999
        %v1888 = vunpack.c.h.b16 %v999
        %v1889 = vunpack.c.l.b16 %v1000
        %v1890 = vunpack.c.h.b16 %v1000
        %v1891 = vunpack.c.l.b16 %v1001
        %v1892 = vunpack.c.h.b16 %v1001
        %v1893 = vunpack.c.l.b16 %v1002
        %v1894 = vunpack.c.h.b16 %v1002
        %v1895 = vunpack.c.l.b16 %v1003
        %v1896 = vunpack.c.h.b16 %v1003
        %v1897 = vunpack.c.l.b16 %v1004
        %v1898 = vunpack.c.h.b16 %v1004
        %v1899 = vunpack.c.l.b16 %v1005
        %v1900 = vunpack.c.h.b16 %v1005
        %v1901 = vunpack.c.l.b16 %v1006
        %v1902 = vunpack.c.h.b16 %v1006
        %v1903 = vunpack.c.l.b16 %v1007
        %v1904 = vunpack.c.h.b16 %v1007
        %v1905 = vunpack.c.l.b16 %v1008
        %v1906 = vunpack.c.h.b16 %v1008
        %v1907 = vunpack.c.l.b16 %v1009
        %v1908 = vunpack.c.h.b16 %v1009
        %v1909 = vunpack.c.l.b16 %v1010
        %v1910 = vunpack.c.h.b16 %v1010
        %v1911 = vunpack.c.l.b16 %v1011
        %v1912 = vunpack.c.h.b16 %v1011
        %v1913 = vunpack.c.l.b16 %v1012
        %v1914 = vunpack.c.h.b16 %v1012
        %v1915 = vunpack.c.l.b16 %v1013
        %v1916 = vunpack.c.h.b16 %v1013
        %v1917 = vunpack.c.l.b16 %v1014
        %v1918 = vunpack.c.h.b16 %v1014
        %v1919 = vunpack.c.l.b16 %v1015
        %v1920 = vunpack.c.h.b16 %v1015
        %v1921 = vunpack.c.l.b16 %v1016
        %v1922 = vunpack.c.h.b16 %v1016
        %v1923 = vunpack.c.l.b16 %v1017
        %v1924 = vunpack.c.h.b16 %v1017
        %v1925 = vunpack.c.l.b16 %v1018
        %v1926 = vunpack.c.h.b16 %v1018
        %v1927 = vunpack.c.l.b16 %v1019
        %v1928 = vunpack.c.h.b16 %v1019
        %v1929 = vunpack.c.l.b16 %v1020
        %v1930 = vunpack.c.h.b16 %v1020
        %v1931 = vunpack.c.l.b16 %v1021
        %v1932 = vunpack.c.h.b16 %v1021
        %v1933 = vunpack.c.l.b16 %v1022
        %v1934 = vunpack.c.h.b16 %v1022
        %v1935 = vunpack.c.l.b16 %v1023
        %v1936 = vunpack.c.h.b16 %v1023
        %v1937 = vunpack.c.l.b16 %v1024
        %v1938 = vunpack.c.h.b16 %v1024
        %v1939 = vunpack.c.l.b16 %v1025
        %v1940 = vunpack.c.h.b16 %v1025
        %v1941 = vunpack.c.l.b16 %v1026
        %v1942 = vunpack.c.h.b16 %v1026
        %v1943 = vunpack.c.l.b16 %v1027
        %v1944 = vunpack.c.h.b16 %v1027
        %v1945 = vunpack.c.l.b16 %v1028
        %v1946 = vunpack.c.h.b16 %v1028
        %v1947 = vunpack.c.l.b16 %v1029
        %v1948 = vunpack.c.h.b16 %v1029
        %v1949 = vunpack.c.l.b16 %v1030
        %v1950 = vunpack.c.h.b16 %v1030
        %v1951 = vunpack.c.l.b16 %v1031
        %v1952 = vunpack.c.h.b16 %v1031
        %v1953 = vunpack.c.l.b16 %v1032
        %v1954 = vunpack.c.h.b16 %v1032
        %v1955 = vunpack.c.l.b16 %v1033
        %v1956 = vunpack.c.h.b16 %v1033
        %v1957 = vunpack.c.l.b16 %v1034
        %v1958 = vunpack.c.h.b16 %v1034
        %v1959 = vunpack.c.l.b16 %v1035
        %v1960 = vunpack.c.h.b16 %v1035
        %v1961 = vunpack.c.l.b16 %v1036
        %v1962 = vunpack.c.h.b16 %v1036
        %v1963 = vunpack.c.l.b16 %v1037
        %v1964 = vunpack.c.h.b16 %v1037
        %v1965 = vunpack.c.l.b16 %v1038
        %v1966 = vunpack.c.h.b16 %v1038
        %v1967 = vunpack.c.l.b16 %v1039
        %v1968 = vunpack.c.h.b16 %v1039
        %v1969 = vunpack.c.l.b16 %v1040
        %v1970 = vunpack.c.h.b16 %v1040
        %v1971 = vunpack.c.l.b16 %v1041
        %v1972 = vunpack.c.h.b16 %v1041
        %v1973 = vunpack.c.l.b16 %v1042
        %v1974 = vunpack.c.h.b16 %v1042
        %v1975 = vunpack.c.l.b16 %v1043
        %v1976 = vunpack.c.h.b16 %v1043
        %v1977 = vunpack.c.l.b16 %v1044
        %v1978 = vunpack.c.h.b16 %v1044
        %v1979 = vunpack.c.l.b16 %v1045
        %v1980 = vunpack.c.h.b16 %v1045
        %v1981 = vunpack.c.l.b16 %v1046
        %v1982 = vunpack.c.h.b16 %v1046
        %v1983 = vunpack.c.l.b16 %v1047
        %v1984 = vunpack.c.h.b16 %v1047
        %v1985 = vunpack.c.l.b16 %v1048
        %v1986 = vunpack.c.h.b16 %v1048
        %v1987 = vunpack.c.l.b16 %v1049
        %v1988 = vunpack.c.h.b16 %v1049
        %v1989 = vunpack.c.l.b16 %v1050
        %v1990 = vunpack.c.h.b16 %v1050
        %v1991 = vunpack.c.l.b16 %v1051
        %v1992 = vunpack.c.h.b16 %v1051
        %v1993 = vunpack.c.l.b16 %v1052
        %v1994 = vunpack.c.h.b16 %v1052
        %v1995 = vunpack.c.l.b16 %v1053
        %v1996 = vunpack.c.h.b16 %v1053
        %v1997 = vunpack.c.l.b16 %v1054
        %v1998 = vunpack.c.h.b16 %v1054
        %v1999 = vunpack.c.l.b16 %v1055
        %v2000 = vunpack.c.h.b16 %v1055
        %v2001 = vunpack.c.l.b16 %v1056
        %v2002 = vunpack.c.h.b16 %v1056
        %v2003 = vunpack.c.l.b16 %v1057
        %v2004 = vunpack.c.h.b16 %v1057
        %v2005 = vunpack.c.l.b16 %v1058
        %v2006 = vunpack.c.h.b16 %v1058
        %v2007 = vunpack.c.l.b16 %v1059
        %v2008 = vunpack.c.h.b16 %v1059
        %v2009 = vunpack.c.l.b16 %v1060
        %v2010 = vunpack.c.h.b16 %v1060
        %v2011 = vunpack.c.l.b16 %v1061
        %v2012 = vunpack.c.h.b16 %v1061
        %v2013 = vunpack.c.l.b16 %v1062
        %v2014 = vunpack.c.h.b16 %v1062
        %v2015 = vunpack.c.l.b16 %v1063
        %v2016 = vunpack.c.h.b16 %v1063
        %v2017 = vunpack.c.l.b16 %v1064
        %v2018 = vunpack.c.h.b16 %v1064
        %v2019 = vunpack.c.l.b16 %v1065
        %v2020 = vunpack.c.h.b16 %v1065
        %v2021 = vunpack.c.l.b16 %v1066
        %v2022 = vunpack.c.h.b16 %v1066
        %v2023 = vunpack.c.l.b16 %v1067
        %v2024 = vunpack.c.h.b16 %v1067
        %v2025 = vunpack.c.l.b16 %v1068
        %v2026 = vunpack.c.h.b16 %v1068
        %v2027 = vunpack.c.l.b16 %v1069
        %v2028 = vunpack.c.h.b16 %v1069
        %v2029 = vunpack.c.l.b16 %v1070
        %v2030 = vunpack.c.h.b16 %v1070
        %v2031 = vunpack.c.l.b16 %v1071
        %v2032 = vunpack.c.h.b16 %v1071
        %v2033 = vunpack.c.l.b16 %v1072
        %v2034 = vunpack.c.h.b16 %v1072
        %v2035 = vunpack.c.l.b16 %v1073
        %v2036 = vunpack.c.h.b16 %v1073
        %v2037 = vunpack.c.l.b16 %v1074
        %v2038 = vunpack.c.h.b16 %v1074
        %v2039 = vunpack.c.l.b16 %v1075
        %v2040 = vunpack.c.h.b16 %v1075
        %v2041 = vunpack.c.l.b16 %v1076
        %v2042 = vunpack.c.h.b16 %v1076
        %v2043 = vunpack.c.l.b16 %v1077
        %v2044 = vunpack.c.h.b16 %v1077
        %v2045 = vunpack.c.l.b16 %v1078
        %v2046 = vunpack.c.h.b16 %v1078
        %v2047 = vunpack.c.l.b16 %v1079
        %v2048 = vunpack.c.h.b16 %v1079
        %v2049 = vunpack.c.l.b16 %v1080
        %v2050 = vunpack.c.h.b16 %v1080
        %v2051 = vunpack.c.l.b16 %v1081
        %v2052 = vunpack.c.h.b16 %v1081
        %v2053 = vunpack.c.l.b16 %v1082
        %v2054 = vunpack.c.h.b16 %v1082
        %v2055 = vunpack.c.l.b16 %v1083
        %v2056 = vunpack.c.h.b16 %v1083
        %v2057 = vunpack.c.l.b16 %v1084
        %v2058 = vunpack.c.h.b16 %v1084
        %v2059 = vunpack.c.l.b16 %v1085
        %v2060 = vunpack.c.h.b16 %v1085
        %v2061 = vunpack.c.l.b16 %v1086
        %v2062 = vunpack.c.h.b16 %v1086
        %v2063 = vunpack.c.l.b16 %v1087
        %v2064 = vunpack.c.h.b16 %v1087
        %v2065 = vunpack.c.l.b16 %v1088
        %v2066 = vunpack.c.h.b16 %v1088
        %v2067 = vunpack.c.l.b16 %v1089
        %v2068 = vunpack.c.h.b16 %v1089
        %v2069 = vunpack.c.l.b16 %v1090
        %v2070 = vunpack.c.h.b16 %v1090
        %v2071 = vunpack.c.l.b16 %v1091
        %v2072 = vunpack.c.h.b16 %v1091
        %v2073 = vunpack.c.l.b16 %v1092
        %v2074 = vunpack.c.h.b16 %v1092
        %v2075 = vunpack.c.l.b16 %v1093
        %v2076 = vunpack.c.h.b16 %v1093
        %v2077 = vunpack.c.l.b16 %v1094
        %v2078 = vunpack.c.h.b16 %v1094
        %v2079 = vunpack.c.l.b16 %v1095
        %v2080 = vunpack.c.h.b16 %v1095
        %v2081 = vunpack.c.l.b16 %v1096
        %v2082 = vunpack.c.h.b16 %v1096
        %v2083 = vunpack.c.l.b16 %v1097
        %v2084 = vunpack.c.h.b16 %v1097
        %v2085 = vunpack.c.l.b16 %v1098
        %v2086 = vunpack.c.h.b16 %v1098
        %v2087 = vunpack.c.l.b16 %v1099
        %v2088 = vunpack.c.h.b16 %v1099
        %v2089 = vunpack.c.l.b16 %v1100
        %v2090 = vunpack.c.h.b16 %v1100
        %v2091 = vunpack.c.l.b16 %v1101
        %v2092 = vunpack.c.h.b16 %v1101
        %v2093 = vunpack.c.l.b16 %v1102
        %v2094 = vunpack.c.h.b16 %v1102
        %v2095 = vunpack.c.l.b16 %v1103
        %v2096 = vunpack.c.h.b16 %v1103
        %v2097 = vunpack.c.l.b16 %v1104
        %v2098 = vunpack.c.h.b16 %v1104
        %v2099 = vunpack.c.l.b16 %v1105
        %v2100 = vunpack.c.h.b16 %v1105
        %v2101 = vunpack.c.l.b16 %v1106
        %v2102 = vunpack.c.h.b16 %v1106
        %v2103 = vunpack.c.l.b16 %v1107
        %v2104 = vunpack.c.h.b16 %v1107
        %v2105 = vunpack.c.l.b16 %v1108
        %v2106 = vunpack.c.h.b16 %v1108
        %v2107 = vunpack.c.l.b16 %v1109
        %v2108 = vunpack.c.h.b16 %v1109
        %v2109 = vunpack.c.l.b16 %v1110
        %v2110 = vunpack.c.h.b16 %v1110
        %v2111 = vunpack.c.l.b16 %v1111
        %v2112 = vunpack.c.h.b16 %v1111
        %v2113 = vunpack.c.l.b16 %v1112
        %v2114 = vunpack.c.h.b16 %v1112
        %v2115 = vunpack.c.l.b16 %v1113
        %v2116 = vunpack.c.h.b16 %v1113
        %v2117 = vunpack.c.l.b16 %v1114
        %v2118 = vunpack.c.h.b16 %v1114
        %v2119 = vunpack.c.l.b16 %v1115
        %v2120 = vunpack.c.h.b16 %v1115
        %v2121 = vunpack.c.l.b16 %v1116
        %v2122 = vunpack.c.h.b16 %v1116
        %v2123 = vunpack.c.l.b16 %v1117
        %v2124 = vunpack.c.h.b16 %v1117
        %v2125 = vunpack.c.l.b16 %v1118
        %v2126 = vunpack.c.h.b16 %v1118
        %v2127 = vunpack.c.l.b16 %v1119
        %v2128 = vunpack.c.h.b16 %v1119
        %v2129 = vunpack.c.l.b16 %v1120
        %v2130 = vunpack.c.h.b16 %v1120
        %v2131 = vunpack.c.l.b16 %v1121
        %v2132 = vunpack.c.h.b16 %v1121
        %v2133 = vunpack.c.l.b16 %v1122
        %v2134 = vunpack.c.h.b16 %v1122
        %v2135 = vunpack.c.l.b16 %v1123
        %v2136 = vunpack.c.h.b16 %v1123
        %v2137 = vunpack.c.l.b16 %v1124
        %v2138 = vunpack.c.h.b16 %v1124
        %v2139 = vunpack.c.l.b16 %v1125
        %v2140 = vunpack.c.h.b16 %v1125
        %v2141 = vunpack.c.l.b16 %v1126
        %v2142 = vunpack.c.h.b16 %v1126
        %v2143 = vunpack.c.l.b16 %v1127
        %v2144 = vunpack.c.h.b16 %v1127
        %v2145 = vunpack.c.l.b16 %v1128
        %v2146 = vunpack.c.h.b16 %v1128
        %v2147 = vunpack.c.l.b16 %v1129
        %v2148 = vunpack.c.h.b16 %v1129
        %v2149 = vunpack.c.l.b16 %v1130
        %v2150 = vunpack.c.h.b16 %v1130
        %v2151 = vunpack.c.l.b16 %v1131
        %v2152 = vunpack.c.h.b16 %v1131
        %v2153 = vunpack.c.l.b16 %v1132
        %v2154 = vunpack.c.h.b16 %v1132
        %v2155 = vunpack.c.l.b16 %v1133
        %v2156 = vunpack.c.h.b16 %v1133
        %v2157 = vunpack.c.l.b16 %v1134
        %v2158 = vunpack.c.h.b16 %v1134
        %v2159 = vunpack.c.l.b16 %v1135
        %v2160 = vunpack.c.h.b16 %v1135
        %v2161 = vunpack.c.l.b16 %v1136
        %v2162 = vunpack.c.h.b16 %v1136
        %v2163 = vunpack.c.l.b16 %v1137
        %v2164 = vunpack.c.h.b16 %v1137
        %v2165 = vunpack.c.l.b16 %v1138
        %v2166 = vunpack.c.h.b16 %v1138
        %v2167 = vunpack.c.l.b16 %v1139
        %v2168 = vunpack.c.h.b16 %v1139
        %v2169 = vunpack.c.l.b16 %v1140
        %v2170 = vunpack.c.h.b16 %v1140
        %v2171 = vunpack.c.l.b16 %v1141
        %v2172 = vunpack.c.h.b16 %v1141
        %v2173 = vunpack.c.l.b16 %v1142
        %v2174 = vunpack.c.h.b16 %v1142
        %v2175 = vunpack.c.l.b16 %v1143
        %v2176 = vunpack.c.h.b16 %v1143
        %v2177 = vunpack.c.l.b16 %v1144
        %v2178 = vunpack.c.h.b16 %v1144
        %v2179 = vunpack.c.l.b16 %v1145
        %v2180 = vunpack.c.h.b16 %v1145
        %v2181 = vunpack.c.l.b16 %v1146
        %v2182 = vunpack.c.h.b16 %v1146
        %v2183 = vunpack.c.l.b16 %v1147
        %v2184 = vunpack.c.h.b16 %v1147
        %v2185 = vunpack.c.l.b16 %v1148
        %v2186 = vunpack.c.h.b16 %v1148
        %v2187 = vunpack.c.l.b16 %v1149
        %v2188 = vunpack.c.h.b16 %v1149
        %v2189 = vunpack.c.l.b16 %v1150
        %v2190 = vunpack.c.h.b16 %v1150
        %v2191 = vunpack.c.l.b16 %v1151
        %v2192 = vunpack.c.h.b16 %v1151
        %v2193 = vunpack.c.l.b16 %v1152
        %v2194 = vunpack.c.h.b16 %v1152
        %v2195 = vunpack.c.l.b16 %v1153
        %v2196 = vunpack.c.h.b16 %v1153
        %v2197 = vunpack.c.l.b16 %v1154
        %v2198 = vunpack.c.h.b16 %v1154
        %v2199 = vunpack.c.l.b16 %v1155
        %v2200 = vunpack.c.h.b16 %v1155
        %v2201 = vunpack.c.l.b16 %v1156
        %v2202 = vunpack.c.h.b16 %v1156
        %v2203 = vunpack.c.l.b16 %v1157
        %v2204 = vunpack.c.h.b16 %v1157
        %v2205 = vunpack.c.l.b16 %v1158
        %v2206 = vunpack.c.h.b16 %v1158
        %v2207 = vunpack.c.l.b16 %v1159
        %v2208 = vunpack.c.h.b16 %v1159
        %v2209 = vunpack.c.l.b16 %v1160
        %v2210 = vunpack.c.h.b16 %v1160
        %v2211 = vunpack.c.l.b16 %v1161
        %v2212 = vunpack.c.h.b16 %v1161
        %v2213 = vunpack.c.l.b16 %v1162
        %v2214 = vunpack.c.h.b16 %v1162
        %v2215 = vunpack.c.l.b16 %v1163
        %v2216 = vunpack.c.h.b16 %v1163
        %v2217 = vunpack.c.l.b16 %v1164
        %v2218 = vunpack.c.h.b16 %v1164
        %v2219 = vunpack.c.l.b16 %v1165
        %v2220 = vunpack.c.h.b16 %v1165
        %v2221 = vunpack.c.l.b16 %v1166
        %v2222 = vunpack.c.h.b16 %v1166
        %v2223 = vunpack.c.l.b16 %v1167
        %v2224 = vunpack.c.h.b16 %v1167
        %v2225 = vunpack.c.l.b16 %v1168
        %v2226 = vunpack.c.h.b16 %v1168
        %v2227 = vunpack.c.l.b16 %v1169
        %v2228 = vunpack.c.h.b16 %v1169
        %v2229 = vunpack.c.l.b16 %v1170
        %v2230 = vunpack.c.h.b16 %v1170
        %v2231 = vunpack.c.l.b16 %v1171
        %v2232 = vunpack.c.h.b16 %v1171
        %v2233 = vunpack.c.l.b16 %v1172
        %v2234 = vunpack.c.h.b16 %v1172
        %v2235 = vunpack.c.l.b16 %v1173
        %v2236 = vunpack.c.h.b16 %v1173
        %v2237 = vunpack.c.l.b16 %v1174
        %v2238 = vunpack.c.h.b16 %v1174
        %v2239 = vunpack.c.l.b16 %v1175
        %v2240 = vunpack.c.h.b16 %v1175
        %v2241 = vunpack.c.l.b16 %v1176
        %v2242 = vunpack.c.h.b16 %v1176
        %v2243 = vunpack.c.l.b16 %v1177
        %v2244 = vunpack.c.h.b16 %v1177
        %v2245 = vunpack.c.l.b16 %v1178
        %v2246 = vunpack.c.h.b16 %v1178
        %v2247 = vunpack.c.l.b16 %v1179
        %v2248 = vunpack.c.h.b16 %v1179
        %v2249 = vunpack.c.l.b16 %v1180
        %v2250 = vunpack.c.h.b16 %v1180
        %v2251 = vunpack.c.l.b16 %v1181
        %v2252 = vunpack.c.h.b16 %v1181
        %v2253 = vunpack.c.l.b16 %v1182
        %v2254 = vunpack.c.h.b16 %v1182
        %v2255 = vunpack.c.l.b16 %v1183
        %v2256 = vunpack.c.h.b16 %v1183
        %v2257 = vunpack.c.l.b16 %v1184
        %v2258 = vunpack.c.h.b16 %v1184
        %v2259 = vunpack.c.l.b16 %v1185
        %v2260 = vunpack.c.h.b16 %v1185
        %v2261 = vunpack.c.l.b16 %v1186
        %v2262 = vunpack.c.h.b16 %v1186
        %v2263 = vunpack.c.l.b16 %v1187
        %v2264 = vunpack.c.h.b16 %v1187
        %v2265 = vunpack.c.l.b16 %v1188
        %v2266 = vunpack.c.h.b16 %v1188
        %v2267 = vunpack.c.l.b16 %v1189
        %v2268 = vunpack.c.h.b16 %v1189
        %v2269 = vunpack.c.l.b16 %v1190
        %v2270 = vunpack.c.h.b16 %v1190
        %v2271 = vunpack.c.l.b16 %v1191
        %v2272 = vunpack.c.h.b16 %v1191
        %v2273 = vunpack.c.l.b16 %v1192
        %v2274 = vunpack.c.h.b16 %v1192
        %v2275 = vunpack.c.l.b16 %v1193
        %v2276 = vunpack.c.h.b16 %v1193
        %v2277 = vunpack.c.l.b16 %v1194
        %v2278 = vunpack.c.h.b16 %v1194
        %v2279 = vunpack.c.l.b16 %v1195
        %v2280 = vunpack.c.h.b16 %v1195
        %v2281 = vunpack.c.l.b16 %v1196
        %v2282 = vunpack.c.h.b16 %v1196
        %v2283 = vunpack.c.l.b16 %v1197
        %v2284 = vunpack.c.h.b16 %v1197
        %v2285 = vunpack.c.l.b16 %v1198
        %v2286 = vunpack.c.h.b16 %v1198
        %v2287 = vunpack.c.l.b16 %v1199
        %v2288 = vunpack.c.h.b16 %v1199
        %v2289 = vunpack.c.l.b16 %v1200
        %v2290 = vunpack.c.h.b16 %v1200
        %v2291 = vunpack.c.l.b16 %v1201
        %v2292 = vunpack.c.h.b16 %v1201
        %v2293 = vunpack.c.l.b16 %v1202
        %v2294 = vunpack.c.h.b16 %v1202
        %v2295 = vunpack.c.l.b16 %v1203
        %v2296 = vunpack.c.h.b16 %v1203
        %v2297 = vunpack.c.l.b16 %v1204
        %v2298 = vunpack.c.h.b16 %v1204
        %v2299 = vunpack.c.l.b16 %v1205
        %v2300 = vunpack.c.h.b16 %v1205
        %v2301 = vunpack.c.l.b16 %v1206
        %v2302 = vunpack.c.h.b16 %v1206
        %v2303 = vunpack.c.l.b16 %v1207
        %v2304 = vunpack.c.h.b16 %v1207
        %v2305 = vunpack.c.l.b16 %v1208
        %v2306 = vunpack.c.h.b16 %v1208
        %v2307 = vunpack.c.l.b16 %v1209
        %v2308 = vunpack.c.h.b16 %v1209
        %v2309 = vunpack.c.l.b16 %v1210
        %v2310 = vunpack.c.h.b16 %v1210
        %v2311 = vunpack.c.l.b16 %v1211
        %v2312 = vunpack.c.h.b16 %v1211
        %v2313 = vunpack.c.l.b16 %v1212
        %v2314 = vunpack.c.h.b16 %v1212
        %v2315 = vunpack.c.l.b16 %v1213
        %v2316 = vunpack.c.h.b16 %v1213
        %v2317 = vunpack.c.l.b16 %v1214
        %v2318 = vunpack.c.h.b16 %v1214
        %v2319 = vunpack.c.l.b16 %v1215
        %v2320 = vunpack.c.h.b16 %v1215
        %v2321 = vunpack.c.l.b16 %v1216
        %v2322 = vunpack.c.h.b16 %v1216
        %v2323 = vunpack.c.l.b16 %v1217
        %v2324 = vunpack.c.h.b16 %v1217
        %v2325 = vunpack.c.l.b16 %v1218
        %v2326 = vunpack.c.h.b16 %v1218
        %v2327 = vunpack.c.l.b16 %v1219
        %v2328 = vunpack.c.h.b16 %v1219
        %v2329 = vunpack.c.l.b16 %v1220
        %v2330 = vunpack.c.h.b16 %v1220
        %v2331 = vunpack.c.l.b16 %v1221
        %v2332 = vunpack.c.h.b16 %v1221
        %v2333 = vunpack.c.l.b16 %v1222
        %v2334 = vunpack.c.h.b16 %v1222
        %v2335 = vunpack.c.l.b16 %v1223
        %v2336 = vunpack.c.h.b16 %v1223
        %v2337 = vunpack.c.l.b16 %v1224
        %v2338 = vunpack.c.h.b16 %v1224
        %v2339 = vunpack.c.l.b16 %v1225
        %v2340 = vunpack.c.h.b16 %v1225
        %v2341 = vunpack.c.l.b16 %v1226
        %v2342 = vunpack.c.h.b16 %v1226
        %v2343 = vunpack.c.l.b16 %v1227
        %v2344 = vunpack.c.h.b16 %v1227
        %v2345 = vunpack.c.l.b16 %v1228
        %v2346 = vunpack.c.h.b16 %v1228
        %v2347 = vunpack.c.l.b16 %v1229
        %v2348 = vunpack.c.h.b16 %v1229
        %v2349 = vunpack.c.l.b16 %v1230
        %v2350 = vunpack.c.h.b16 %v1230
        %v2351 = vunpack.c.l.b16 %v1231
        %v2352 = vunpack.c.h.b16 %v1231
        %v2353 = vunpack.c.l.b16 %v1232
        %v2354 = vunpack.c.h.b16 %v1232
        %v2355 = vunpack.c.l.b16 %v1233
        %v2356 = vunpack.c.h.b16 %v1233
        %v2357 = vunpack.c.l.b16 %v1234
        %v2358 = vunpack.c.h.b16 %v1234
        %v2359 = vunpack.c.l.b16 %v1235
        %v2360 = vunpack.c.h.b16 %v1235
        %v2361 = vunpack.c.l.b16 %v1236
        %v2362 = vunpack.c.h.b16 %v1236
        %v2363 = vunpack.c.l.b16 %v1237
        %v2364 = vunpack.c.h.b16 %v1237
        %v2365 = vunpack.c.l.b16 %v1238
        %v2366 = vunpack.c.h.b16 %v1238
        %v2367 = vunpack.c.l.b16 %v1239
        %v2368 = vunpack.c.h.b16 %v1239
        %v2369 = vunpack.c.l.b16 %v1240
        %v2370 = vunpack.c.h.b16 %v1240
        %v2371 = vunpack.c.l.b16 %v1241
        %v2372 = vunpack.c.h.b16 %v1241
        %v2373 = vunpack.c.l.b16 %v1242
        %v2374 = vunpack.c.h.b16 %v1242
        %v2375 = vunpack.c.l.b16 %v1243
        %v2376 = vunpack.c.h.b16 %v1243
        %v2377 = vunpack.c.l.b16 %v1244
        %v2378 = vunpack.c.h.b16 %v1244
        %v2379 = vunpack.c.l.b16 %v1245
        %v2380 = vunpack.c.h.b16 %v1245
        %v2381 = vunpack.c.l.b16 %v1246
        %v2382 = vunpack.c.h.b16 %v1246
        %v2383 = vunpack.c.l.b16 %v1247
        %v2384 = vunpack.c.h.b16 %v1247
        %v2385 = vunpack.c.l.b16 %v1248
        %v2386 = vunpack.c.h.b16 %v1248
        %v2387 = vunpack.c.l.b16 %v1249
        %v2388 = vunpack.c.h.b16 %v1249
        %v2389 = vunpack.c.l.b16 %v1250
        %v2390 = vunpack.c.h.b16 %v1250
        %v2391 = vunpack.c.l.b16 %v1251
        %v2392 = vunpack.c.h.b16 %v1251
        %v2393 = vunpack.c.l.b16 %v1252
        %v2394 = vunpack.c.h.b16 %v1252
        %v2395 = vunpack.c.l.b16 %v1253
        %v2396 = vunpack.c.h.b16 %v1253
        %v2397 = vunpack.c.l.b16 %v1254
        %v2398 = vunpack.c.h.b16 %v1254
        %v2399 = vunpack.c.l.b16 %v1255
        %v2400 = vunpack.c.h.b16 %v1255
        %v2401 = vunpack.c.l.b16 %v1256
        %v2402 = vunpack.c.h.b16 %v1256
        %v2403 = vunpack.c.l.b16 %v1257
        %v2404 = vunpack.c.h.b16 %v1257
        %v2405 = vunpack.c.l.b16 %v1258
        %v2406 = vunpack.c.h.b16 %v1258
        %v2407 = vunpack.c.l.b16 %v1259
        %v2408 = vunpack.c.h.b16 %v1259
        %v2409 = vunpack.c.l.b16 %v1260
        %v2410 = vunpack.c.h.b16 %v1260
        %v2411 = vunpack.c.l.b16 %v1261
        %v2412 = vunpack.c.h.b16 %v1261
        %v2413 = vunpack.c.l.b16 %v1262
        %v2414 = vunpack.c.h.b16 %v1262
        %v2415 = vunpack.c.l.b16 %v1263
        %v2416 = vunpack.c.h.b16 %v1263
        %v2417 = vunpack.c.l.b16 %v1264
        %v2418 = vunpack.c.h.b16 %v1264
        %v2419 = vunpack.c.l.b16 %v1265
        %v2420 = vunpack.c.h.b16 %v1265
        %v2421 = vunpack.c.l.b16 %v1266
        %v2422 = vunpack.c.h.b16 %v1266
        %v2423 = vunpack.c.l.b16 %v1267
        %v2424 = vunpack.c.h.b16 %v1267
        %v2425 = vunpack.c.l.b16 %v1268
        %v2426 = vunpack.c.h.b16 %v1268
        %v2427 = vunpack.c.l.b16 %v1269
        %v2428 = vunpack.c.h.b16 %v1269
        %v2429 = vunpack.c.l.b16 %v1270
        %v2430 = vunpack.c.h.b16 %v1270
        %v2431 = vunpack.c.l.b16 %v1271
        %v2432 = vunpack.c.h.b16 %v1271
        %v2433 = vunpack.c.l.b16 %v1272
        %v2434 = vunpack.c.h.b16 %v1272
        %v2435 = vunpack.c.l.b16 %v1273
        %v2436 = vunpack.c.h.b16 %v1273
        %v2437 = vunpack.c.l.b16 %v1274
        %v2438 = vunpack.c.h.b16 %v1274
        %v2439 = vunpack.c.l.b16 %v1275
        %v2440 = vunpack.c.h.b16 %v1275
        %v2441 = vunpack.c.l.b16 %v1276
        %v2442 = vunpack.c.h.b16 %v1276
        %v2443 = vunpack.c.l.b16 %v1277
        %v2444 = vunpack.c.h.b16 %v1277
        %v2445 = vunpack.c.l.b16 %v1278
        %v2446 = vunpack.c.h.b16 %v1278
        %v2447 = vunpack.c.l.b16 %v1279
        %v2448 = vunpack.c.h.b16 %v1279
        %v2449 = vunpack.c.l.b16 %v1280
        %v2450 = vunpack.c.h.b16 %v1280
        %v2451 = vunpack.c.l.b16 %v1281
        %v2452 = vunpack.c.h.b16 %v1281
        %v2453 = vunpack.c.l.b16 %v1282
        %v2454 = vunpack.c.h.b16 %v1282
        %v2455 = vunpack.c.l.b16 %v1283
        %v2456 = vunpack.c.h.b16 %v1283
        %v2457 = vunpack.c.l.b16 %v1284
        %v2458 = vunpack.c.h.b16 %v1284
        %v2459 = vunpack.c.l.b16 %v1285
        %v2460 = vunpack.c.h.b16 %v1285
        %v2461 = vunpack.c.l.b16 %v1286
        %v2462 = vunpack.c.h.b16 %v1286
        %v2463 = vunpack.c.l.b16 %v1287
        %v2464 = vunpack.c.h.b16 %v1287
        %v2465 = vunpack.c.l.b16 %v1288
        %v2466 = vunpack.c.h.b16 %v1288
        %v2467 = vunpack.c.l.b16 %v1289
        %v2468 = vunpack.c.h.b16 %v1289
        %v2469 = vunpack.c.l.b16 %v1290
        %v2470 = vunpack.c.h.b16 %v1290
        %v2471 = vunpack.c.l.b16 %v1291
        %v2472 = vunpack.c.h.b16 %v1291
        %v2473 = vunpack.c.l.b16 %v1292
        %v2474 = vunpack.c.h.b16 %v1292
        %v2475 = vunpack.c.l.b16 %v1293
        %v2476 = vunpack.c.h.b16 %v1293
        %v2477 = vunpack.c.l.b16 %v1294
        %v2478 = vunpack.c.h.b16 %v1294
        %v2479 = vunpack.c.l.b16 %v1295
        %v2480 = vunpack.c.h.b16 %v1295
        %v2481 = vunpack.c.l.b16 %v1296
        %v2482 = vunpack.c.h.b16 %v1296
        %v2483 = vunpack.c.l.b16 %v1297
        %v2484 = vunpack.c.h.b16 %v1297
        %v2485 = vunpack.c.l.b16 %v1298
        %v2486 = vunpack.c.h.b16 %v1298
        %v2487 = vunpack.c.l.b16 %v1299
        %v2488 = vunpack.c.h.b16 %v1299
        %v2489 = vunpack.c.l.b16 %v1300
        %v2490 = vunpack.c.h.b16 %v1300
        %v2491 = vunpack.c.l.b16 %v1301
        %v2492 = vunpack.c.h.b16 %v1301
        %v2493 = vunpack.c.l.b16 %v1302
        %v2494 = vunpack.c.h.b16 %v1302
        %v2495 = vunpack.c.l.b16 %v1303
        %v2496 = vunpack.c.h.b16 %v1303
        %v2497 = vunpack.c.l.b16 %v1304
        %v2498 = vunpack.c.h.b16 %v1304
        %v2499 = vunpack.c.l.b16 %v1305
        %v2500 = vunpack.c.h.b16 %v1305
        %v2501 = vunpack.c.l.b16 %v1306
        %v2502 = vunpack.c.h.b16 %v1306
        %v2503 = vunpack.c.l.b16 %v1307
        %v2504 = vunpack.c.h.b16 %v1307
        %v2505 = vunpack.c.l.b16 %v1308
        %v2506 = vunpack.c.h.b16 %v1308
        %v2507 = vunpack.c.l.b16 %v1309
        %v2508 = vunpack.c.h.b16 %v1309
        %v2509 = vunpack.c.l.b16 %v1310
        %v2510 = vunpack.c.h.b16 %v1310
        %v2511 = vunpack.c.l.b16 %v1311
        %v2512 = vunpack.c.h.b16 %v1311
        %v2513 = vunpack.c.l.b16 %v1312
        %v2514 = vunpack.c.h.b16 %v1312
        %v2515 = vunpack.c.l.b16 %v1313
        %v2516 = vunpack.c.h.b16 %v1313
        %v2517 = vunpack.c.l.b16 %v1314
        %v2518 = vunpack.c.h.b16 %v1314
        %v2519 = vunpack.c.l.b16 %v1315
        %v2520 = vunpack.c.h.b16 %v1315
        %v2521 = vunpack.c.l.b16 %v1316
        %v2522 = vunpack.c.h.b16 %v1316
        %v2523 = vunpack.c.l.b16 %v1317
        %v2524 = vunpack.c.h.b16 %v1317
        %v2525 = vunpack.c.l.b16 %v1318
        %v2526 = vunpack.c.h.b16 %v1318
        %v2527 = vunpack.c.l.b16 %v1319
        %v2528 = vunpack.c.h.b16 %v1319
        %v2529 = vunpack.c.l.b16 %v1320
        %v2530 = vunpack.c.h.b16 %v1320
        %v2531 = vunpack.c.l.b16 %v1321
        %v2532 = vunpack.c.h.b16 %v1321
        %v2533 = vunpack.c.l.b16 %v1322
        %v2534 = vunpack.c.h.b16 %v1322
        %v2535 = vunpack.c.l.b16 %v1323
        %v2536 = vunpack.c.h.b16 %v1323
        %v2537 = vunpack.c.l.b16 %v1324
        %v2538 = vunpack.c.h.b16 %v1324
        %v2539 = vunpack.c.l.b16 %v1325
        %v2540 = vunpack.c.h.b16 %v1325
        %v2541 = vunpack.c.l.b16 %v1326
        %v2542 = vunpack.c.h.b16 %v1326
        %v2543 = vpack.c.b16 %v1787, %v1775
        %v2544 = vpack.c.b16 %v1788, %v1776
        %v2545 = vpack.c.b16 %v1789, %v1777
        %v2546 = vpack.c.b16 %v1790, %v1778
        %v2547 = vpack.c.b16 %v1791, %v1779
        %v2548 = vpack.c.b16 %v1792, %v1780
        %v2549 = vpack.c.b16 %v1793, %v1781
        %v2550 = vpack.c.b16 %v1794, %v1782
        %v2551 = vpack.c.b16 %v1795, %v1783
        %v2552 = vpack.c.b16 %v1796, %v1784
        %v2553 = vpack.c.b16 %v1797, %v1785
        %v2554 = vpack.c.b16 %v1798, %v1786
        %v2555 = vpack.c.b16 %v1811, %v1799
        %v2556 = vpack.c.b16 %v1812, %v1800
        %v2557 = vpack.c.b16 %v1813, %v1801
        %v2558 = vpack.c.b16 %v1814, %v1802
        %v2559 = vpack.c.b16 %v1815, %v1803
        %v2560 = vpack.c.b16 %v1816, %v1804
        %v2561 = vpack.c.b16 %v1817, %v1805
        %v2562 = vpack.c.b16 %v1818, %v1806
        %v2563 = vpack.c.b16 %v1819, %v1807
        %v2564 = vpack.c.b16 %v1820, %v1808
        %v2565 = vpack.c.b16 %v1821, %v1809
        %v2566 = vpack.c.b16 %v1822, %v1810
        %v2567 = vpack.c.b16 %v1835, %v1823
        %v2568 = vpack.c.b16 %v1836, %v1824
        %v2569 = vpack.c.b16 %v1837, %v1825
        %v2570 = vpack.c.b16 %v1838, %v1826
        %v2571 = vpack.c.b16 %v1839, %v1827
        %v2572 = vpack.c.b16 %v1840, %v1828
        %v2573 = vpack.c.b16 %v1841, %v1829
        %v2574 = vpack.c.b16 %v1842, %v1830
        %v2575 = vpack.c.b16 %v1843, %v1831
        %v2576 = vpack.c.b16 %v1844, %v1832
        %v2577 = vpack.c.b16 %v1845, %v1833
        %v2578 = vpack.c.b16 %v1846, %v1834
        %v2579 = vpack.c.b16 %v1859, %v1847
        %v2580 = vpack.c.b16 %v1860, %v1848
        %v2581 = vpack.c.b16 %v1861, %v1849
        %v2582 = vpack.c.b16 %v1862, %v1850
        %v2583 = vpack.c.b16 %v1863, %v1851
        %v2584 = vpack.c.b16 %v1864, %v1852
        %v2585 = vpack.c.b16 %v1865, %v1853
        %v2586 = vpack.c.b16 %v1866, %v1854
        %v2587 = vpack.c.b16 %v1867, %v1855
        %v2588 = vpack.c.b16 %v1868, %v1856
        %v2589 = vpack.c.b16 %v1869, %v1857
        %v2590 = vpack.c.b16 %v1870, %v1858
        %v2591 = vpack.c.b16 %v1883, %v1871
        %v2592 = vpack.c.b16 %v1884, %v1872
        %v2593 = vpack.c.b16 %v1885, %v1873
        %v2594 = vpack.c.b16 %v1886, %v1874
        %v2595 = vpack.c.b16 %v1887, %v1875
        %v2596 = vpack.c.b16 %v1888, %v1876
        %v2597 = vpack.c.b16 %v1889, %v1877
        %v2598 = vpack.c.b16 %v1890, %v1878
        %v2599 = vpack.c.b16 %v1891, %v1879
        %v2600 = vpack.c.b16 %v1892, %v1880
        %v2601 = vpack.c.b16 %v1893, %v1881
        %v2602 = vpack.c.b16 %v1894, %v1882
        %v2603 = vpack.c.b16 %v1907, %v1895
        %v2604 = vpack.c.b16 %v1908, %v1896
        %v2605 = vpack.c.b16 %v1909, %v1897
        %v2606 = vpack.c.b16 %v1910, %v1898
        %v2607 = vpack.c.b16 %v1911, %v1899
        %v2608 = vpack.c.b16 %v1912, %v1900
        %v2609 = vpack.c.b16 %v1913, %v1901
        %v2610 = vpack.c.b16 %v1914, %v1902
        %v2611 = vpack.c.b16 %v1915, %v1903
        %v2612 = vpack.c.b16 %v1916, %v1904
        %v2613 = vpack.c.b16 %v1917, %v1905
        %v2614 = vpack.c.b16 %v1918, %v1906
        %v2615 = vpack.c.b16 %v1931, %v1919
        %v2616 = vpack.c.b16 %v1932, %v1920
        %v2617 = vpack.c.b16 %v1933, %v1921
        %v2618 = vpack.c.b16 %v1934, %v1922
        %v2619 = vpack.c.b16 %v1935, %v1923
        %v2620 = vpack.c.b16 %v1936, %v1924
        %v2621 = vpack.c.b16 %v1937, %v1925
        %v2622 = vpack.c.b16 %v1938, %v1926
        %v2623 = vpack.c.b16 %v1939, %v1927
        %v2624 = vpack.c.b16 %v1940, %v1928
        %v2625 = vpack.c.b16 %v1941, %v1929
        %v2626 = vpack.c.b16 %v1942, %v1930
        %v2627 = vpack.c.b16 %v1955, %v1943
        %v2628 = vpack.c.b16 %v1956, %v1944
        %v2629 = vpack.c.b16 %v1957, %v1945
        %v2630 = vpack.c.b16 %v1958, %v1946
        %v2631 = vpack.c.b16 %v1959, %v1947
        %v2632 = vpack.c.b16 %v1960, %v1948
        %v2633 = vpack.c.b16 %v1961, %v1949
        %v2634 = vpack.c.b16 %v1962, %v1950
        %v2635 = vpack.c.b16 %v1963, %v1951
        %v2636 = vpack.c.b16 %v1964, %v1952
        %v2637 = vpack.c.b16 %v1965, %v1953
        %v2638 = vpack.c.b16 %v1966, %v1954
        %v2639 = vpack.c.b16 %v1979, %v1967
        %v2640 = vpack.c.b16 %v1980, %v1968
        %v2641 = vpack.c.b16 %v1981, %v1969
        %v2642 = vpack.c.b16 %v1982, %v1970
        %v2643 = vpack.c.b16 %v1983, %v1971
        %v2644 = vpack.c.b16 %v1984, %v1972
        %v2645 = vpack.c.b16 %v1985, %v1973
        %v2646 = vpack.c.b16 %v1986, %v1974
        %v2647 = vpack.c.b16 %v1987, %v1975
        %v2648 = vpack.c.b16 %v1988, %v1976
        %v2649 = vpack.c.b16 %v1989, %v1977
        %v2650 = vpack.c.b16 %v1990, %v1978
        %v2651 = vpack.c.b16 %v2003, %v1991
        %v2652 = vpack.c.b16 %v2004, %v1992
        %v2653 = vpack.c.b16 %v2005, %v1993
        %v2654 = vpack.c.b16 %v2006, %v1994
        %v2655 = vpack.c.b16 %v2007, %v1995
        %v2656 = vpack.c.b16 %v2008, %v1996
        %v2657 = vpack.c.b16 %v2009, %v1997
        %v2658 = vpack.c.b16 %v2010, %v1998
        %v2659 = vpack.c.b16 %v2011, %v1999
        %v2660 = vpack.c.b16 %v2012, %v2000
        %v2661 = vpack.c.b16 %v2013, %v2001
        %v2662 = vpack.c.b16 %v2014, %v2002
        %v2663 = vpack.c.b16 %v2027, %v2015
        %v2664 = vpack.c.b16 %v2028, %v2016
        %v2665 = vpack.c.b16 %v2029, %v2017
        %v2666 = vpack.c.b16 %v2030, %v2018
        %v2667 = vpack.c.b16 %v2031, %v2019
        %v2668 = vpack.c.b16 %v2032, %v2020
        %v2669 = vpack.c.b16 %v2033, %v2021
        %v2670 = vpack.c.b16 %v2034, %v2022
        %v2671 = vpack.c.b16 %v2035, %v2023
        %v2672 = vpack.c.b16 %v2036, %v2024
        %v2673 = vpack.c.b16 %v2037, %v2025
        %v2674 = vpack.c.b16 %v2038, %v2026
        %v2675 = vpack.c.b16 %v2051, %v2039
        %v2676 = vpack.c.b16 %v2052, %v2040
        %v2677 = vpack.c.b16 %v2053, %v2041
        %v2678 = vpack.c.b16 %v2054, %v2042
        %v2679 = vpack.c.b16 %v2055, %v2043
        %v2680 = vpack.c.b16 %v2056, %v2044
        %v2681 = vpack.c.b16 %v2057, %v2045
        %v2682 = vpack.c.b16 %v2058, %v2046
        %v2683 = vpack.c.b16 %v2059, %v2047
        %v2684 = vpack.c.b16 %v2060, %v2048
        %v2685 = vpack.c.b16 %v2061, %v2049
        %v2686 = vpack.c.b16 %v2062, %v2050
        %v2687 = vpack.c.b16 %v2075, %v2063
        %v2688 = vpack.c.b16 %v2076, %v2064
        %v2689 = vpack.c.b16 %v2077, %v2065
        %v2690 = vpack.c.b16 %v2078, %v2066
        %v2691 = vpack.c.b16 %v2079, %v2067
        %v2692 = vpack.c.b16 %v2080, %v2068
        %v2693 = vpack.c.b16 %v2081, %v2069
        %v2694 = vpack.c.b16 %v2082, %v2070
        %v2695 = vpack.c.b16 %v2083, %v2071
        %v2696 = vpack.c.b16 %v2084, %v2072
        %v2697 = vpack.c.b16 %v2085, %v2073
        %v2698 = vpack.c.b16 %v2086, %v2074
        %v2699 = vpack.c.b16 %v2099, %v2087
        %v2700 = vpack.c.b16 %v2100, %v2088
        %v2701 = vpack.c.b16 %v2101, %v2089
        %v2702 = vpack.c.b16 %v2102, %v2090
        %v2703 = vpack.c.b16 %v2103, %v2091
        %v2704 = vpack.c.b16 %v2104, %v2092
        %v2705 = vpack.c.b16 %v2105, %v2093
        %v2706 = vpack.c.b16 %v2106, %v2094
        %v2707 = vpack.c.b16 %v2107, %v2095
        %v2708 = vpack.c.b16 %v2108, %v2096
        %v2709 = vpack.c.b16 %v2109, %v2097
        %v2710 = vpack.c.b16 %v2110, %v2098
        %v2711 = vpack.c.b16 %v2123, %v2111
        %v2712 = vpack.c.b16 %v2124, %v2112
        %v2713 = vpack.c.b16 %v2125, %v2113
        %v2714 = vpack.c.b16 %v2126, %v2114
        %v2715 = vpack.c.b16 %v2127, %v2115
        %v2716 = vpack.c.b16 %v2128, %v2116
        %v2717 = vpack.c.b16 %v2129, %v2117
        %v2718 = vpack.c.b16 %v2130, %v2118
        %v2719 = vpack.c.b16 %v2131, %v2119
        %v2720 = vpack.c.b16 %v2132, %v2120
        %v2721 = vpack.c.b16 %v2133, %v2121
        %v2722 = vpack.c.b16 %v2134, %v2122
        %v2723 = vpack.c.b16 %v2147, %v2135
        %v2724 = vpack.c.b16 %v2148, %v2136
        %v2725 = vpack.c.b16 %v2149, %v2137
        %v2726 = vpack.c.b16 %v2150, %v2138
        %v2727 = vpack.c.b16 %v2151, %v2139
        %v2728 = vpack.c.b16 %v2152, %v2140
        %v2729 = vpack.c.b16 %v2153, %v2141
        %v2730 = vpack.c.b16 %v2154, %v2142
        %v2731 = vpack.c.b16 %v2155, %v2143
        %v2732 = vpack.c.b16 %v2156, %v2144
        %v2733 = vpack.c.b16 %v2157, %v2145
        %v2734 = vpack.c.b16 %v2158, %v2146
        %v2735 = vpack.c.b16 %v2171, %v2159
        %v2736 = vpack.c.b16 %v2172, %v2160
        %v2737 = vpack.c.b16 %v2173, %v2161
        %v2738 = vpack.c.b16 %v2174, %v2162
        %v2739 = vpack.c.b16 %v2175, %v2163
        %v2740 = vpack.c.b16 %v2176, %v2164
        %v2741 = vpack.c.b16 %v2177, %v2165
        %v2742 = vpack.c.b16 %v2178, %v2166
        %v2743 = vpack.c.b16 %v2179, %v2167
        %v2744 = vpack.c.b16 %v2180, %v2168
        %v2745 = vpack.c.b16 %v2181, %v2169
        %v2746 = vpack.c.b16 %v2182, %v2170
        %v2747 = vpack.c.b16 %v2195, %v2183
        %v2748 = vpack.c.b16 %v2196, %v2184
        %v2749 = vpack.c.b16 %v2197, %v2185
        %v2750 = vpack.c.b16 %v2198, %v2186
        %v2751 = vpack.c.b16 %v2199, %v2187
        %v2752 = vpack.c.b16 %v2200, %v2188
        %v2753 = vpack.c.b16 %v2201, %v2189
        %v2754 = vpack.c.b16 %v2202, %v2190
        %v2755 = vpack.c.b16 %v2203, %v2191
        %v2756 = vpack.c.b16 %v2204, %v2192
        %v2757 = vpack.c.b16 %v2205, %v2193
        %v2758 = vpack.c.b16 %v2206, %v2194
        %v2759 = vpack.c.b16 %v2219, %v2207
        %v2760 = vpack.c.b16 %v2220, %v2208
        %v2761 = vpack.c.b16 %v2221, %v2209
        %v2762 = vpack.c.b16 %v2222, %v2210
        %v2763 = vpack.c.b16 %v2223, %v2211
        %v2764 = vpack.c.b16 %v2224, %v2212
        %v2765 = vpack.c.b16 %v2225, %v2213
        %v2766 = vpack.c.b16 %v2226, %v2214
        %v2767 = vpack.c.b16 %v2227, %v2215
        %v2768 = vpack.c.b16 %v2228, %v2216
        %v2769 = vpack.c.b16 %v2229, %v2217
        %v2770 = vpack.c.b16 %v2230, %v2218
        %v2771 = vpack.c.b16 %v2243, %v2231
        %v2772 = vpack.c.b16 %v2244, %v2232
        %v2773 = vpack.c.b16 %v2245, %v2233
        %v2774 = vpack.c.b16 %v2246, %v2234
        %v2775 = vpack.c.b16 %v2247, %v2235
        %v2776 = vpack.c.b16 %v2248, %v2236
        %v2777 = vpack.c.b16 %v2249, %v2237
        %v2778 = vpack.c.b16 %v2250, %v2238
        %v2779 = vpack.c.b16 %v2251, %v2239
        %v2780 = vpack.c.b16 %v2252, %v2240
        %v2781 = vpack.c.b16 %v2253, %v2241
        %v2782 = vpack.c.b16 %v2254, %v2242
        %v2783 = vpack.c.b16 %v2267, %v2255
        %v2784 = vpack.c.b16 %v2268, %v2256
        %v2785 = vpack.c.b16 %v2269, %v2257
        %v2786 = vpack.c.b16 %v2270, %v2258
        %v2787 = vpack.c.b16 %v2271, %v2259
        %v2788 = vpack.c.b16 %v2272, %v2260
        %v2789 = vpack.c.b16 %v2273, %v2261
        %v2790 = vpack.c.b16 %v2274, %v2262
        %v2791 = vpack.c.b16 %v2275, %v2263
        %v2792 = vpack.c.b16 %v2276, %v2264
        %v2793 = vpack.c.b16 %v2277, %v2265
        %v2794 = vpack.c.b16 %v2278, %v2266
        %v2795 = vpack.c.b16 %v2291, %v2279
        %v2796 = vpack.c.b16 %v2292, %v2280
        %v2797 = vpack.c.b16 %v2293, %v2281
        %v2798 = vpack.c.b16 %v2294, %v2282
        %v2799 = vpack.c.b16 %v2295, %v2283
        %v2800 = vpack.c.b16 %v2296, %v2284
        %v2801 = vpack.c.b16 %v2297, %v2285
        %v2802 = vpack.c.b16 %v2298, %v2286
        %v2803 = vpack.c.b16 %v2299, %v2287
        %v2804 = vpack.c.b16 %v2300, %v2288
        %v2805 = vpack.c.b16 %v2301, %v2289
        %v2806 = vpack.c.b16 %v2302, %v2290
        %v2807 = vpack.c.b16 %v2315, %v2303
        %v2808 = vpack.c.b16 %v2316, %v2304
        %v2809 = vpack.c.b16 %v2317, %v2305
        %v2810 = vpack.c.b16 %v2318, %v2306
        %v2811 = vpack.c.b16 %v2319, %v2307
        %v2812 = vpack.c.b16 %v2320, %v2308
        %v2813 = vpack.c.b16 %v2321, %v2309
        %v2814 = vpack.c.b16 %v2322, %v2310
        %v2815 = vpack.c.b16 %v2323, %v2311
        %v2816 = vpack.c.b16 %v2324, %v2312
        %v2817 = vpack.c.b16 %v2325, %v2313
        %v2818 = vpack.c.b16 %v2326, %v2314
        %v2819 = vpack.c.b16 %v2339, %v2327
        %v2820 = vpack.c.b16 %v2340, %v2328
        %v2821 = vpack.c.b16 %v2341, %v2329
        %v2822 = vpack.c.b16 %v2342, %v2330
        %v2823 = vpack.c.b16 %v2343, %v2331
        %v2824 = vpack.c.b16 %v2344, %v2332
        %v2825 = vpack.c.b16 %v2345, %v2333
        %v2826 = vpack.c.b16 %v2346, %v2334
        %v2827 = vpack.c.b16 %v2347, %v2335
        %v2828 = vpack.c.b16 %v2348, %v2336
        %v2829 = vpack.c.b16 %v2349, %v2337
        %v2830 = vpack.c.b16 %v2350, %v2338
        %v2831 = vpack.c.b16 %v2363, %v2351
        %v2832 = vpack.c.b16 %v2364, %v2352
        %v2833 = vpack.c.b16 %v2365, %v2353
        %v2834 = vpack.c.b16 %v2366, %v2354
        %v2835 = vpack.c.b16 %v2367, %v2355
        %v2836 = vpack.c.b16 %v2368, %v2356
        %v2837 = vpack.c.b16 %v2369, %v2357
        %v2838 = vpack.c.b16 %v2370, %v2358
        %v2839 = vpack.c.b16 %v2371, %v2359
        %v2840 = vpack.c.b16 %v2372, %v2360
        %v2841 = vpack.c.b16 %v2373, %v2361
        %v2842 = vpack.c.b16 %v2374, %v2362
        %v2843 = vpack.c.b16 %v2387, %v2375
        %v2844 = vpack.c.b16 %v2388, %v2376
        %v2845 = vpack.c.b16 %v2389, %v2377
        %v2846 = vpack.c.b16 %v2390, %v2378
        %v2847 = vpack.c.b16 %v2391, %v2379
        %v2848 = vpack.c.b16 %v2392, %v2380
        %v2849 = vpack.c.b16 %v2393, %v2381
        %v2850 = vpack.c.b16 %v2394, %v2382
        %v2851 = vpack.c.b16 %v2395, %v2383
        %v2852 = vpack.c.b16 %v2396, %v2384
        %v2853 = vpack.c.b16 %v2397, %v2385
        %v2854 = vpack.c.b16 %v2398, %v2386
        %v2855 = vpack.c.b16 %v2411, %v2399
        %v2856 = vpack.c.b16 %v2412, %v2400
        %v2857 = vpack.c.b16 %v2413, %v2401
        %v2858 = vpack.c.b16 %v2414, %v2402
        %v2859 = vpack.c.b16 %v2415, %v2403
        %v2860 = vpack.c.b16 %v2416, %v2404
        %v2861 = vpack.c.b16 %v2417, %v2405
        %v2862 = vpack.c.b16 %v2418, %v2406
        %v2863 = vpack.c.b16 %v2419, %v2407
        %v2864 = vpack.c.b16 %v2420, %v2408
        %v2865 = vpack.c.b16 %v2421, %v2409
        %v2866 = vpack.c.b16 %v2422, %v2410
        %v2867 = vpack.c.b16 %v2435, %v2423
        %v2868 = vpack.c.b16 %v2436, %v2424
        %v2869 = vpack.c.b16 %v2437, %v2425
        %v2870 = vpack.c.b16 %v2438, %v2426
        %v2871 = vpack.c.b16 %v2439, %v2427
        %v2872 = vpack.c.b16 %v2440, %v2428
        %v2873 = vpack.c.b16 %v2441, %v2429
        %v2874 = vpack.c.b16 %v2442, %v2430
        %v2875 = vpack.c.b16 %v2443, %v2431
        %v2876 = vpack.c.b16 %v2444, %v2432
        %v2877 = vpack.c.b16 %v2445, %v2433
        %v2878 = vpack.c.b16 %v2446, %v2434
        %v2879 = vpack.c.b16 %v2459, %v2447
        %v2880 = vpack.c.b16 %v2460, %v2448
        %v2881 = vpack.c.b16 %v2461, %v2449
        %v2882 = vpack.c.b16 %v2462, %v2450
        %v2883 = vpack.c.b16 %v2463, %v2451
        %v2884 = vpack.c.b16 %v2464, %v2452
        %v2885 = vpack.c.b16 %v2465, %v2453
        %v2886 = vpack.c.b16 %v2466, %v2454
        %v2887 = vpack.c.b16 %v2467, %v2455
        %v2888 = vpack.c.b16 %v2468, %v2456
        %v2889 = vpack.c.b16 %v2469, %v2457
        %v2890 = vpack.c.b16 %v2470, %v2458
        %v2891 = vpack.c.b16 %v2483, %v2471
        %v2892 = vpack.c.b16 %v2484, %v2472
        %v2893 = vpack.c.b16 %v2485, %v2473
        %v2894 = vpack.c.b16 %v2486, %v2474
        %v2895 = vpack.c.b16 %v2487, %v2475
        %v2896 = vpack.c.b16 %v2488, %v2476
        %v2897 = vpack.c.b16 %v2489, %v2477
        %v2898 = vpack.c.b16 %v2490, %v2478
        %v2899 = vpack.c.b16 %v2491, %v2479
        %v2900 = vpack.c.b16 %v2492, %v2480
        %v2901 = vpack.c.b16 %v2493, %v2481
        %v2902 = vpack.c.b16 %v2494, %v2482
        %v2903 = vpack.c.b16 %v2507, %v2495
        %v2904 = vpack.c.b16 %v2508, %v2496
        %v2905 = vpack.c.b16 %v2509, %v2497
        %v2906 = vpack.c.b16 %v2510, %v2498
        %v2907 = vpack.c.b16 %v2511, %v2499
        %v2908 = vpack.c.b16 %v2512, %v2500
        %v2909 = vpack.c.b16 %v2513, %v2501
        %v2910 = vpack.c.b16 %v2514, %v2502
        %v2911 = vpack.c.b16 %v2515, %v2503
        %v2912 = vpack.c.b16 %v2516, %v2504
        %v2913 = vpack.c.b16 %v2517, %v2505
        %v2914 = vpack.c.b16 %v2518, %v2506
        %v2915 = vpack.c.b16 %v2531, %v2519
        %v2916 = vpack.c.b16 %v2532, %v2520
        %v2917 = vpack.c.b16 %v2533, %v2521
        %v2918 = vpack.c.b16 %v2534, %v2522
        %v2919 = vpack.c.b16 %v2535, %v2523
        %v2920 = vpack.c.b16 %v2536, %v2524
        %v2921 = vpack.c.b16 %v2537, %v2525
        %v2922 = vpack.c.b16 %v2538, %v2526
        %v2923 = vpack.c.b16 %v2539, %v2527
        %v2924 = vpack.c.b16 %v2540, %v2528
        %v2925 = vpack.c.b16 %v2541, %v2529
        %v2926 = vpack.c.b16 %v2542, %v2530
        %3311 = vmatprep.subr.bf16.mxu0 %v2628
        %3312 = vmatpush1.bf16.msra.mxu0 %v2627
        %3313 = vmatprep.subr.bf16.mxu0 %v2616
        %3314 = vmatpush1.bf16.msra.mxu0 %v2615
        %3315 = vmatprep.subr.bf16.mxu0 %v2604
        %3316 = vmatpush1.bf16.msra.mxu0 %v2603
        %3317 = vmatprep.subr.bf16.mxu0 %v2592
        %3318 = vmatpush1.bf16.msra.mxu0 %v2591
        %3319 = vmatprep.subr.bf16.mxu0 %v2580
        %3320 = vmatpush1.bf16.msra.mxu0 %v2579
        %3321 = vmatprep.subr.bf16.mxu0 %v2568
        %3322 = vmatpush1.bf16.msra.mxu0 %v2567
        %3323 = vmatprep.subr.bf16.mxu0 %v2556
        %3324 = vmatpush1.bf16.msra.mxu0 %v2555
        %3325 = vmatprep.subr.bf16.mxu0 %v2544
        %3326 = vmatpush1.bf16.msra.mxu0 %v2543
        %3327 = vmatprep.subr.bf16.mxu0 %v2724
        %3328 = vmatpush2.bf16.msra.mxu0 %v2723
        %3329 = vmatprep.subr.bf16.mxu0 %v2712
        %3330 = vmatpush2.bf16.msra.mxu0 %v2711
        %3331 = vmatprep.subr.bf16.mxu0 %v2700
        %3332 = vmatpush2.bf16.msra.mxu0 %v2699
        %3333 = vmatprep.subr.bf16.mxu0 %v2688
        %3334 = vmatpush2.bf16.msra.mxu0 %v2687
        %3335 = vmatprep.subr.bf16.mxu0 %v2676
        %3336 = vmatpush2.bf16.msra.mxu0 %v2675
        %3337 = vmatprep.subr.bf16.mxu0 %v2664
        %3338 = vmatpush2.bf16.msra.mxu0 %v2663
        %3339 = vmatprep.subr.bf16.mxu0 %v2652
        %3340 = vmatpush2.bf16.msra.mxu0 %v2651
        %3341 = vmatprep.subr.bf16.mxu0 %v2640
        %3342 = vmatpush2.bf16.msra.mxu0 %v2639
        %3343 = vmatprep.mubr.bf16.mxu0 %v940
        %3344 = vmatmul.mubr.bf16.gmra.mxu0 %v939
        %v3345 = vpop.f32.mrf.mxu0
        %v3346 = vadd.f32 %v1334, %v3345
        %v3347 = vpop.f32.mrf.mxu0
        %v3348 = vadd.f32 %v1338, %v3347
        %v3349 = vpop.f32.mrf.mxu0
        %v3350 = vadd.f32 %v1334, %v3349
        %v3351 = vpop.f32.mrf.mxu0
        %v3352 = vadd.f32 %v1338, %v3351
        %3353 = vdwg.mxu0
        %3354 = vmatprep.subr.bf16.mxu0 %v2820
        %3355 = vmatpush1.bf16.msra.mxu0 %v2819
        %3356 = vmatprep.subr.bf16.mxu0 %v2808
        %3357 = vmatpush1.bf16.msra.mxu0 %v2807
        %3358 = vmatprep.subr.bf16.mxu0 %v2796
        %3359 = vmatpush1.bf16.msra.mxu0 %v2795
        %3360 = vmatprep.subr.bf16.mxu0 %v2784
        %3361 = vmatpush1.bf16.msra.mxu0 %v2783
        %3362 = vmatprep.subr.bf16.mxu0 %v2772
        %3363 = vmatpush1.bf16.msra.mxu0 %v2771
        %3364 = vmatprep.subr.bf16.mxu0 %v2760
        %3365 = vmatpush1.bf16.msra.mxu0 %v2759
        %3366 = vmatprep.subr.bf16.mxu0 %v2748
        %3367 = vmatpush1.bf16.msra.mxu0 %v2747
        %3368 = vmatprep.subr.bf16.mxu0 %v2736
        %3369 = vmatpush1.bf16.msra.mxu0 %v2735
        %3370 = vmatprep.subr.bf16.mxu0 %v2916
        %3371 = vmatpush2.bf16.msra.mxu0 %v2915
        %3372 = vmatprep.subr.bf16.mxu0 %v2904
        %3373 = vmatpush2.bf16.msra.mxu0 %v2903
        %3374 = vmatprep.subr.bf16.mxu0 %v2892
        %3375 = vmatpush2.bf16.msra.mxu0 %v2891
        %3376 = vmatprep.subr.bf16.mxu0 %v2880
        %3377 = vmatpush2.bf16.msra.mxu0 %v2879
        %3378 = vmatprep.subr.bf16.mxu0 %v2868
        %3379 = vmatpush2.bf16.msra.mxu0 %v2867
        %3380 = vmatprep.subr.bf16.mxu0 %v2856
        %3381 = vmatpush2.bf16.msra.mxu0 %v2855
        %3382 = vmatprep.subr.bf16.mxu0 %v2844
        %3383 = vmatpush2.bf16.msra.mxu0 %v2843
        %3384 = vmatprep.subr.bf16.mxu0 %v2832
        %3385 = vmatpush2.bf16.msra.mxu0 %v2831
        %3386 = vmatprep.mubr.bf16.mxu0 %v942
        %3387 = vmatmul.mubr.bf16.gmra.mxu0 %v941
        %v3388 = vpop.f32.mrf.mxu0
        %v3389 = vadd.f32 %v3346, %v3388
        %v3390 = vpop.f32.mrf.mxu0
        %v3391 = vadd.f32 %v3348, %v3390
        %v3392 = vpop.f32.mrf.mxu0
        %v3393 = vadd.f32 %v3350, %v3392
        %v3394 = vpop.f32.mrf.mxu0
        %v3395 = vadd.f32 %v3352, %v3394
        %3396 = vdwg.mxu0
        %3397 = vmatprep.subr.bf16.mxu0 %v2630
        %3398 = vmatpush1.bf16.msra.mxu0 %v2629
        %3399 = vmatprep.subr.bf16.mxu0 %v2618
        %3400 = vmatpush1.bf16.msra.mxu0 %v2617
        %3401 = vmatprep.subr.bf16.mxu0 %v2606
        %3402 = vmatpush1.bf16.msra.mxu0 %v2605
        %3403 = vmatprep.subr.bf16.mxu0 %v2594
        %3404 = vmatpush1.bf16.msra.mxu0 %v2593
        %3405 = vmatprep.subr.bf16.mxu0 %v2582
        %3406 = vmatpush1.bf16.msra.mxu0 %v2581
        %3407 = vmatprep.subr.bf16.mxu0 %v2570
        %3408 = vmatpush1.bf16.msra.mxu0 %v2569
        %3409 = vmatprep.subr.bf16.mxu0 %v2558
        %3410 = vmatpush1.bf16.msra.mxu0 %v2557
        %3411 = vmatprep.subr.bf16.mxu0 %v2546
        %3412 = vmatpush1.bf16.msra.mxu0 %v2545
        %3413 = vmatprep.subr.bf16.mxu0 %v2726
        %3414 = vmatpush2.bf16.msra.mxu0 %v2725
        %3415 = vmatprep.subr.bf16.mxu0 %v2714
        %3416 = vmatpush2.bf16.msra.mxu0 %v2713
        %3417 = vmatprep.subr.bf16.mxu0 %v2702
        %3418 = vmatpush2.bf16.msra.mxu0 %v2701
        %3419 = vmatprep.subr.bf16.mxu0 %v2690
        %3420 = vmatpush2.bf16.msra.mxu0 %v2689
        %3421 = vmatprep.subr.bf16.mxu0 %v2678
        %3422 = vmatpush2.bf16.msra.mxu0 %v2677
        %3423 = vmatprep.subr.bf16.mxu0 %v2666
        %3424 = vmatpush2.bf16.msra.mxu0 %v2665
        %3425 = vmatprep.subr.bf16.mxu0 %v2654
        %3426 = vmatpush2.bf16.msra.mxu0 %v2653
        %3427 = vmatprep.subr.bf16.mxu0 %v2642
        %3428 = vmatpush2.bf16.msra.mxu0 %v2641
        %3429 = vmatprep.mubr.bf16.mxu0 %v940
        %3430 = vmatmul.mubr.bf16.gmra.mxu0 %v939
        %v3431 = vpop.f32.mrf.mxu0
        %v3432 = vadd.f32 %v1342, %v3431
        %v3433 = vpop.f32.mrf.mxu0
        %v3434 = vadd.f32 %v1346, %v3433
        %v3435 = vpop.f32.mrf.mxu0
        %v3436 = vadd.f32 %v1342, %v3435
        %v3437 = vpop.f32.mrf.mxu0
        %v3438 = vadd.f32 %v1346, %v3437
        %3439 = vdwg.mxu0
        %3440 = vmatprep.subr.bf16.mxu0 %v2822
        %3441 = vmatpush1.bf16.msra.mxu0 %v2821
        %3442 = vmatprep.subr.bf16.mxu0 %v2810
        %3443 = vmatpush1.bf16.msra.mxu0 %v2809
        %3444 = vmatprep.subr.bf16.mxu0 %v2798
        %3445 = vmatpush1.bf16.msra.mxu0 %v2797
        %3446 = vmatprep.subr.bf16.mxu0 %v2786
        %3447 = vmatpush1.bf16.msra.mxu0 %v2785
        %3448 = vmatprep.subr.bf16.mxu0 %v2774
        %3449 = vmatpush1.bf16.msra.mxu0 %v2773
        %3450 = vmatprep.subr.bf16.mxu0 %v2762
        %3451 = vmatpush1.bf16.msra.mxu0 %v2761
        %3452 = vmatprep.subr.bf16.mxu0 %v2750
        %3453 = vmatpush1.bf16.msra.mxu0 %v2749
        %3454 = vmatprep.subr.bf16.mxu0 %v2738
        %3455 = vmatpush1.bf16.msra.mxu0 %v2737
        %3456 = vmatprep.subr.bf16.mxu0 %v2918
        %3457 = vmatpush2.bf16.msra.mxu0 %v2917
        %3458 = vmatprep.subr.bf16.mxu0 %v2906
        %3459 = vmatpush2.bf16.msra.mxu0 %v2905
        %3460 = vmatprep.subr.bf16.mxu0 %v2894
        %3461 = vmatpush2.bf16.msra.mxu0 %v2893
        %3462 = vmatprep.subr.bf16.mxu0 %v2882
        %3463 = vmatpush2.bf16.msra.mxu0 %v2881
        %3464 = vmatprep.subr.bf16.mxu0 %v2870
        %3465 = vmatpush2.bf16.msra.mxu0 %v2869
        %3466 = vmatprep.subr.bf16.mxu0 %v2858
        %3467 = vmatpush2.bf16.msra.mxu0 %v2857
        %3468 = vmatprep.subr.bf16.mxu0 %v2846
        %3469 = vmatpush2.bf16.msra.mxu0 %v2845
        %3470 = vmatprep.subr.bf16.mxu0 %v2834
        %3471 = vmatpush2.bf16.msra.mxu0 %v2833
        %3472 = vmatprep.mubr.bf16.mxu0 %v942
        %3473 = vmatmul.mubr.bf16.gmra.mxu0 %v941
        %v3474 = vpop.f32.mrf.mxu0
        %v3475 = vadd.f32 %v3432, %v3474
        %v3476 = vpop.f32.mrf.mxu0
        %v3477 = vadd.f32 %v3434, %v3476
        %v3478 = vpop.f32.mrf.mxu0
        %v3479 = vadd.f32 %v3436, %v3478
        %v3480 = vpop.f32.mrf.mxu0
        %v3481 = vadd.f32 %v3438, %v3480
        %3482 = vdwg.mxu0
        %3483 = vmatprep.subr.bf16.mxu0 %v2632
        %3484 = vmatpush1.bf16.msra.mxu0 %v2631
        %3485 = vmatprep.subr.bf16.mxu0 %v2620
        %3486 = vmatpush1.bf16.msra.mxu0 %v2619
        %3487 = vmatprep.subr.bf16.mxu0 %v2608
        %3488 = vmatpush1.bf16.msra.mxu0 %v2607
        %3489 = vmatprep.subr.bf16.mxu0 %v2596
        %3490 = vmatpush1.bf16.msra.mxu0 %v2595
        %3491 = vmatprep.subr.bf16.mxu0 %v2584
        %3492 = vmatpush1.bf16.msra.mxu0 %v2583
        %3493 = vmatprep.subr.bf16.mxu0 %v2572
        %3494 = vmatpush1.bf16.msra.mxu0 %v2571
        %3495 = vmatprep.subr.bf16.mxu0 %v2560
        %3496 = vmatpush1.bf16.msra.mxu0 %v2559
        %3497 = vmatprep.subr.bf16.mxu0 %v2548
        %3498 = vmatpush1.bf16.msra.mxu0 %v2547
        %3499 = vmatprep.subr.bf16.mxu0 %v2728
        %3500 = vmatpush2.bf16.msra.mxu0 %v2727
        %3501 = vmatprep.subr.bf16.mxu0 %v2716
        %3502 = vmatpush2.bf16.msra.mxu0 %v2715
        %3503 = vmatprep.subr.bf16.mxu0 %v2704
        %3504 = vmatpush2.bf16.msra.mxu0 %v2703
        %3505 = vmatprep.subr.bf16.mxu0 %v2692
        %3506 = vmatpush2.bf16.msra.mxu0 %v2691
        %3507 = vmatprep.subr.bf16.mxu0 %v2680
        %3508 = vmatpush2.bf16.msra.mxu0 %v2679
        %3509 = vmatprep.subr.bf16.mxu0 %v2668
        %3510 = vmatpush2.bf16.msra.mxu0 %v2667
        %3511 = vmatprep.subr.bf16.mxu0 %v2656
        %3512 = vmatpush2.bf16.msra.mxu0 %v2655
        %3513 = vmatprep.subr.bf16.mxu0 %v2644
        %3514 = vmatpush2.bf16.msra.mxu0 %v2643
        %3515 = vmatprep.mubr.bf16.mxu0 %v940
        %3516 = vmatmul.mubr.bf16.gmra.mxu0 %v939
        %v3517 = vpop.f32.mrf.mxu0
        %v3518 = vadd.f32 %v1350, %v3517
        %v3519 = vpop.f32.mrf.mxu0
        %v3520 = vadd.f32 %v1354, %v3519
        %v3521 = vpop.f32.mrf.mxu0
        %v3522 = vadd.f32 %v1350, %v3521
        %v3523 = vpop.f32.mrf.mxu0
        %v3524 = vadd.f32 %v1354, %v3523
        %3525 = vdwg.mxu0
        %3526 = vmatprep.subr.bf16.mxu0 %v2824
        %3527 = vmatpush1.bf16.msra.mxu0 %v2823
        %3528 = vmatprep.subr.bf16.mxu0 %v2812
        %3529 = vmatpush1.bf16.msra.mxu0 %v2811
        %3530 = vmatprep.subr.bf16.mxu0 %v2800
        %3531 = vmatpush1.bf16.msra.mxu0 %v2799
        %3532 = vmatprep.subr.bf16.mxu0 %v2788
        %3533 = vmatpush1.bf16.msra.mxu0 %v2787
        %3534 = vmatprep.subr.bf16.mxu0 %v2776
        %3535 = vmatpush1.bf16.msra.mxu0 %v2775
        %3536 = vmatprep.subr.bf16.mxu0 %v2764
        %3537 = vmatpush1.bf16.msra.mxu0 %v2763
        %3538 = vmatprep.subr.bf16.mxu0 %v2752
        %3539 = vmatpush1.bf16.msra.mxu0 %v2751
        %3540 = vmatprep.subr.bf16.mxu0 %v2740
        %3541 = vmatpush1.bf16.msra.mxu0 %v2739
        %3542 = vmatprep.subr.bf16.mxu0 %v2920
        %3543 = vmatpush2.bf16.msra.mxu0 %v2919
        %3544 = vmatprep.subr.bf16.mxu0 %v2908
        %3545 = vmatpush2.bf16.msra.mxu0 %v2907
        %3546 = vmatprep.subr.bf16.mxu0 %v2896
        %3547 = vmatpush2.bf16.msra.mxu0 %v2895
        %3548 = vmatprep.subr.bf16.mxu0 %v2884
        %3549 = vmatpush2.bf16.msra.mxu0 %v2883
        %3550 = vmatprep.subr.bf16.mxu0 %v2872
        %3551 = vmatpush2.bf16.msra.mxu0 %v2871
        %3552 = vmatprep.subr.bf16.mxu0 %v2860
        %3553 = vmatpush2.bf16.msra.mxu0 %v2859
        %3554 = vmatprep.subr.bf16.mxu0 %v2848
        %3555 = vmatpush2.bf16.msra.mxu0 %v2847
        %3556 = vmatprep.subr.bf16.mxu0 %v2836
        %3557 = vmatpush2.bf16.msra.mxu0 %v2835
        %3558 = vmatprep.mubr.bf16.mxu0 %v942
        %3559 = vmatmul.mubr.bf16.gmra.mxu0 %v941
        %v3560 = vpop.f32.mrf.mxu0
        %v3561 = vadd.f32 %v3518, %v3560
        %v3562 = vpop.f32.mrf.mxu0
        %v3563 = vadd.f32 %v3520, %v3562
        %v3564 = vpop.f32.mrf.mxu0
        %v3565 = vadd.f32 %v3522, %v3564
        %v3566 = vpop.f32.mrf.mxu0
        %v3567 = vadd.f32 %v3524, %v3566
        %3568 = vdwg.mxu0
        %3569 = vmatprep.subr.bf16.mxu0 %v2634
        %3570 = vmatpush1.bf16.msra.mxu0 %v2633
        %3571 = vmatprep.subr.bf16.mxu0 %v2622
        %3572 = vmatpush1.bf16.msra.mxu0 %v2621
        %3573 = vmatprep.subr.bf16.mxu0 %v2610
        %3574 = vmatpush1.bf16.msra.mxu0 %v2609
        %3575 = vmatprep.subr.bf16.mxu0 %v2598
        %3576 = vmatpush1.bf16.msra.mxu0 %v2597
        %3577 = vmatprep.subr.bf16.mxu0 %v2586
        %3578 = vmatpush1.bf16.msra.mxu0 %v2585
        %3579 = vmatprep.subr.bf16.mxu0 %v2574
        %3580 = vmatpush1.bf16.msra.mxu0 %v2573
        %3581 = vmatprep.subr.bf16.mxu0 %v2562
        %3582 = vmatpush1.bf16.msra.mxu0 %v2561
        %3583 = vmatprep.subr.bf16.mxu0 %v2550
        %3584 = vmatpush1.bf16.msra.mxu0 %v2549
        %3585 = vmatprep.subr.bf16.mxu0 %v2730
        %3586 = vmatpush2.bf16.msra.mxu0 %v2729
        %3587 = vmatprep.subr.bf16.mxu0 %v2718
        %3588 = vmatpush2.bf16.msra.mxu0 %v2717
        %3589 = vmatprep.subr.bf16.mxu0 %v2706
        %3590 = vmatpush2.bf16.msra.mxu0 %v2705
        %3591 = vmatprep.subr.bf16.mxu0 %v2694
        %3592 = vmatpush2.bf16.msra.mxu0 %v2693
        %3593 = vmatprep.subr.bf16.mxu0 %v2682
        %3594 = vmatpush2.bf16.msra.mxu0 %v2681
        %3595 = vmatprep.subr.bf16.mxu0 %v2670
        %3596 = vmatpush2.bf16.msra.mxu0 %v2669
        %3597 = vmatprep.subr.bf16.mxu0 %v2658
        %3598 = vmatpush2.bf16.msra.mxu0 %v2657
        %3599 = vmatprep.subr.bf16.mxu0 %v2646
        %3600 = vmatpush2.bf16.msra.mxu0 %v2645
        %3601 = vmatprep.mubr.bf16.mxu0 %v940
        %3602 = vmatmul.mubr.bf16.gmra.mxu0 %v939
        %v3603 = vpop.f32.mrf.mxu0
        %v3604 = vadd.f32 %v1358, %v3603
        %v3605 = vpop.f32.mrf.mxu0
        %v3606 = vadd.f32 %v1362, %v3605
        %v3607 = vpop.f32.mrf.mxu0
        %v3608 = vadd.f32 %v1358, %v3607
        %v3609 = vpop.f32.mrf.mxu0
        %v3610 = vadd.f32 %v1362, %v3609
        %3611 = vdwg.mxu0
        %3612 = vmatprep.subr.bf16.mxu0 %v2826
        %3613 = vmatpush1.bf16.msra.mxu0 %v2825
        %3614 = vmatprep.subr.bf16.mxu0 %v2814
        %3615 = vmatpush1.bf16.msra.mxu0 %v2813
        %3616 = vmatprep.subr.bf16.mxu0 %v2802
        %3617 = vmatpush1.bf16.msra.mxu0 %v2801
        %3618 = vmatprep.subr.bf16.mxu0 %v2790
        %3619 = vmatpush1.bf16.msra.mxu0 %v2789
        %3620 = vmatprep.subr.bf16.mxu0 %v2778
        %3621 = vmatpush1.bf16.msra.mxu0 %v2777
        %3622 = vmatprep.subr.bf16.mxu0 %v2766
        %3623 = vmatpush1.bf16.msra.mxu0 %v2765
        %3624 = vmatprep.subr.bf16.mxu0 %v2754
        %3625 = vmatpush1.bf16.msra.mxu0 %v2753
        %3626 = vmatprep.subr.bf16.mxu0 %v2742
        %3627 = vmatpush1.bf16.msra.mxu0 %v2741
        %3628 = vmatprep.subr.bf16.mxu0 %v2922
        %3629 = vmatpush2.bf16.msra.mxu0 %v2921
        %3630 = vmatprep.subr.bf16.mxu0 %v2910
        %3631 = vmatpush2.bf16.msra.mxu0 %v2909
        %3632 = vmatprep.subr.bf16.mxu0 %v2898
        %3633 = vmatpush2.bf16.msra.mxu0 %v2897
        %3634 = vmatprep.subr.bf16.mxu0 %v2886
        %3635 = vmatpush2.bf16.msra.mxu0 %v2885
        %3636 = vmatprep.subr.bf16.mxu0 %v2874
        %3637 = vmatpush2.bf16.msra.mxu0 %v2873
        %3638 = vmatprep.subr.bf16.mxu0 %v2862
        %3639 = vmatpush2.bf16.msra.mxu0 %v2861
        %3640 = vmatprep.subr.bf16.mxu0 %v2850
        %3641 = vmatpush2.bf16.msra.mxu0 %v2849
        %3642 = vmatprep.subr.bf16.mxu0 %v2838
        %3643 = vmatpush2.bf16.msra.mxu0 %v2837
        %3644 = vmatprep.mubr.bf16.mxu0 %v942
        %3645 = vmatmul.mubr.bf16.gmra.mxu0 %v941
        %v3646 = vpop.f32.mrf.mxu0
        %v3647 = vadd.f32 %v3604, %v3646
        %v3648 = vpop.f32.mrf.mxu0
        %v3649 = vadd.f32 %v3606, %v3648
        %v3650 = vpop.f32.mrf.mxu0
        %v3651 = vadd.f32 %v3608, %v3650
        %v3652 = vpop.f32.mrf.mxu0
        %v3653 = vadd.f32 %v3610, %v3652
        %3654 = vdwg.mxu0
        %3655 = vmatprep.subr.bf16.mxu0 %v2636
        %3656 = vmatpush1.bf16.msra.mxu0 %v2635
        %3657 = vmatprep.subr.bf16.mxu0 %v2624
        %3658 = vmatpush1.bf16.msra.mxu0 %v2623
        %3659 = vmatprep.subr.bf16.mxu0 %v2612
        %3660 = vmatpush1.bf16.msra.mxu0 %v2611
        %3661 = vmatprep.subr.bf16.mxu0 %v2600
        %3662 = vmatpush1.bf16.msra.mxu0 %v2599
        %3663 = vmatprep.subr.bf16.mxu0 %v2588
        %3664 = vmatpush1.bf16.msra.mxu0 %v2587
        %3665 = vmatprep.subr.bf16.mxu0 %v2576
        %3666 = vmatpush1.bf16.msra.mxu0 %v2575
        %3667 = vmatprep.subr.bf16.mxu0 %v2564
        %3668 = vmatpush1.bf16.msra.mxu0 %v2563
        %3669 = vmatprep.subr.bf16.mxu0 %v2552
        %3670 = vmatpush1.bf16.msra.mxu0 %v2551
        %3671 = vmatprep.subr.bf16.mxu0 %v2732
        %3672 = vmatpush2.bf16.msra.mxu0 %v2731
        %3673 = vmatprep.subr.bf16.mxu0 %v2720
        %3674 = vmatpush2.bf16.msra.mxu0 %v2719
        %3675 = vmatprep.subr.bf16.mxu0 %v2708
        %3676 = vmatpush2.bf16.msra.mxu0 %v2707
        %3677 = vmatprep.subr.bf16.mxu0 %v2696
        %3678 = vmatpush2.bf16.msra.mxu0 %v2695
        %3679 = vmatprep.subr.bf16.mxu0 %v2684
        %3680 = vmatpush2.bf16.msra.mxu0 %v2683
        %3681 = vmatprep.subr.bf16.mxu0 %v2672
        %3682 = vmatpush2.bf16.msra.mxu0 %v2671
        %3683 = vmatprep.subr.bf16.mxu0 %v2660
        %3684 = vmatpush2.bf16.msra.mxu0 %v2659
        %3685 = vmatprep.subr.bf16.mxu0 %v2648
        %3686 = vmatpush2.bf16.msra.mxu0 %v2647
        %3687 = vmatprep.mubr.bf16.mxu0 %v940
        %3688 = vmatmul.mubr.bf16.gmra.mxu0 %v939
        %v3689 = vpop.f32.mrf.mxu0
        %v3690 = vadd.f32 %v1366, %v3689
        %v3691 = vpop.f32.mrf.mxu0
        %v3692 = vadd.f32 %v1370, %v3691
        %v3693 = vpop.f32.mrf.mxu0
        %v3694 = vadd.f32 %v1366, %v3693
        %v3695 = vpop.f32.mrf.mxu0
        %v3696 = vadd.f32 %v1370, %v3695
        %3697 = vdwg.mxu0
        %3698 = vmatprep.subr.bf16.mxu0 %v2828
        %3699 = vmatpush1.bf16.msra.mxu0 %v2827
        %3700 = vmatprep.subr.bf16.mxu0 %v2816
        %3701 = vmatpush1.bf16.msra.mxu0 %v2815
        %3702 = vmatprep.subr.bf16.mxu0 %v2804
        %3703 = vmatpush1.bf16.msra.mxu0 %v2803
        %3704 = vmatprep.subr.bf16.mxu0 %v2792
        %3705 = vmatpush1.bf16.msra.mxu0 %v2791
        %3706 = vmatprep.subr.bf16.mxu0 %v2780
        %3707 = vmatpush1.bf16.msra.mxu0 %v2779
        %3708 = vmatprep.subr.bf16.mxu0 %v2768
        %3709 = vmatpush1.bf16.msra.mxu0 %v2767
        %3710 = vmatprep.subr.bf16.mxu0 %v2756
        %3711 = vmatpush1.bf16.msra.mxu0 %v2755
        %3712 = vmatprep.subr.bf16.mxu0 %v2744
        %3713 = vmatpush1.bf16.msra.mxu0 %v2743
        %3714 = vmatprep.subr.bf16.mxu0 %v2924
        %3715 = vmatpush2.bf16.msra.mxu0 %v2923
        %3716 = vmatprep.subr.bf16.mxu0 %v2912
        %3717 = vmatpush2.bf16.msra.mxu0 %v2911
        %3718 = vmatprep.subr.bf16.mxu0 %v2900
        %3719 = vmatpush2.bf16.msra.mxu0 %v2899
        %3720 = vmatprep.subr.bf16.mxu0 %v2888
        %3721 = vmatpush2.bf16.msra.mxu0 %v2887
        %3722 = vmatprep.subr.bf16.mxu0 %v2876
        %3723 = vmatpush2.bf16.msra.mxu0 %v2875
        %3724 = vmatprep.subr.bf16.mxu0 %v2864
        %3725 = vmatpush2.bf16.msra.mxu0 %v2863
        %3726 = vmatprep.subr.bf16.mxu0 %v2852
        %3727 = vmatpush2.bf16.msra.mxu0 %v2851
        %3728 = vmatprep.subr.bf16.mxu0 %v2840
        %3729 = vmatpush2.bf16.msra.mxu0 %v2839
        %3730 = vmatprep.mubr.bf16.mxu0 %v942
        %3731 = vmatmul.mubr.bf16.gmra.mxu0 %v941
        %v3732 = vpop.f32.mrf.mxu0
        %v3733 = vadd.f32 %v3690, %v3732
        %v3734 = vpop.f32.mrf.mxu0
        %v3735 = vadd.f32 %v3692, %v3734
        %v3736 = vpop.f32.mrf.mxu0
        %v3737 = vadd.f32 %v3694, %v3736
        %v3738 = vpop.f32.mrf.mxu0
        %v3739 = vadd.f32 %v3696, %v3738
        %3740 = vdwg.mxu0
        %3741 = vmatprep.subr.bf16.mxu0 %v2638
        %3742 = vmatpush1.bf16.msra.mxu0 %v2637
        %3743 = vmatprep.subr.bf16.mxu0 %v2626
        %3744 = vmatpush1.bf16.msra.mxu0 %v2625
        %3745 = vmatprep.subr.bf16.mxu0 %v2614
        %3746 = vmatpush1.bf16.msra.mxu0 %v2613
        %3747 = vmatprep.subr.bf16.mxu0 %v2602
        %3748 = vmatpush1.bf16.msra.mxu0 %v2601
        %3749 = vmatprep.subr.bf16.mxu0 %v2590
        %3750 = vmatpush1.bf16.msra.mxu0 %v2589
        %3751 = vmatprep.subr.bf16.mxu0 %v2578
        %3752 = vmatpush1.bf16.msra.mxu0 %v2577
        %3753 = vmatprep.subr.bf16.mxu0 %v2566
        %3754 = vmatpush1.bf16.msra.mxu0 %v2565
        %3755 = vmatprep.subr.bf16.mxu0 %v2554
        %3756 = vmatpush1.bf16.msra.mxu0 %v2553
        %3757 = vmatprep.subr.bf16.mxu0 %v2734
        %3758 = vmatpush2.bf16.msra.mxu0 %v2733
        %3759 = vmatprep.subr.bf16.mxu0 %v2722
        %3760 = vmatpush2.bf16.msra.mxu0 %v2721
        %3761 = vmatprep.subr.bf16.mxu0 %v2710
        %3762 = vmatpush2.bf16.msra.mxu0 %v2709
        %3763 = vmatprep.subr.bf16.mxu0 %v2698
        %3764 = vmatpush2.bf16.msra.mxu0 %v2697
        %3765 = vmatprep.subr.bf16.mxu0 %v2686
        %3766 = vmatpush2.bf16.msra.mxu0 %v2685
        %3767 = vmatprep.subr.bf16.mxu0 %v2674
        %3768 = vmatpush2.bf16.msra.mxu0 %v2673
        %3769 = vmatprep.subr.bf16.mxu0 %v2662
        %3770 = vmatpush2.bf16.msra.mxu0 %v2661
        %3771 = vmatprep.subr.bf16.mxu0 %v2650
        %3772 = vmatpush2.bf16.msra.mxu0 %v2649
        %3773 = vmatprep.mubr.bf16.mxu0 %v940
        %3774 = vmatmul.mubr.bf16.gmra.mxu0 %v939
        %v3775 = vpop.f32.mrf.mxu0
        %v3776 = vadd.f32 %v1374, %v3775
        %v3777 = vpop.f32.mrf.mxu0
        %v3778 = vadd.f32 %v1378, %v3777
        %v3779 = vpop.f32.mrf.mxu0
        %v3780 = vadd.f32 %v1374, %v3779
        %v3781 = vpop.f32.mrf.mxu0
        %v3782 = vadd.f32 %v1378, %v3781
        %3783 = vdwg.mxu0
        %3784 = vmatprep.subr.bf16.mxu0 %v2830
        %3785 = vmatpush1.bf16.msra.mxu0 %v2829
        %3786 = vmatprep.subr.bf16.mxu0 %v2818
        %3787 = vmatpush1.bf16.msra.mxu0 %v2817
        %3788 = vmatprep.subr.bf16.mxu0 %v2806
        %3789 = vmatpush1.bf16.msra.mxu0 %v2805
        %3790 = vmatprep.subr.bf16.mxu0 %v2794
        %3791 = vmatpush1.bf16.msra.mxu0 %v2793
        %3792 = vmatprep.subr.bf16.mxu0 %v2782
        %3793 = vmatpush1.bf16.msra.mxu0 %v2781
        %3794 = vmatprep.subr.bf16.mxu0 %v2770
        %3795 = vmatpush1.bf16.msra.mxu0 %v2769
        %3796 = vmatprep.subr.bf16.mxu0 %v2758
        %3797 = vmatpush1.bf16.msra.mxu0 %v2757
        %3798 = vmatprep.subr.bf16.mxu0 %v2746
        %3799 = vmatpush1.bf16.msra.mxu0 %v2745
        %3800 = vmatprep.subr.bf16.mxu0 %v2926
        %3801 = vmatpush2.bf16.msra.mxu0 %v2925
        %3802 = vmatprep.subr.bf16.mxu0 %v2914
        %3803 = vmatpush2.bf16.msra.mxu0 %v2913
        %3804 = vmatprep.subr.bf16.mxu0 %v2902
        %3805 = vmatpush2.bf16.msra.mxu0 %v2901
        %3806 = vmatprep.subr.bf16.mxu0 %v2890
        %3807 = vmatpush2.bf16.msra.mxu0 %v2889
        %3808 = vmatprep.subr.bf16.mxu0 %v2878
        %3809 = vmatpush2.bf16.msra.mxu0 %v2877
        %3810 = vmatprep.subr.bf16.mxu0 %v2866
        %3811 = vmatpush2.bf16.msra.mxu0 %v2865
        %3812 = vmatprep.subr.bf16.mxu0 %v2854
        %3813 = vmatpush2.bf16.msra.mxu0 %v2853
        %3814 = vmatprep.subr.bf16.mxu0 %v2842
        %3815 = vmatpush2.bf16.msra.mxu0 %v2841
        %3816 = vmatprep.mubr.bf16.mxu0 %v942
        %3817 = vmatmul.mubr.bf16.gmra.mxu0 %v941
        %v3818 = vpop.f32.mrf.mxu0
        %v3819 = vadd.f32 %v3776, %v3818
        %v3820 = vpop.f32.mrf.mxu0
        %v3821 = vadd.f32 %v3778, %v3820
        %v3822 = vpop.f32.mrf.mxu0
        %v3823 = vadd.f32 %v3780, %v3822
        %v3824 = vpop.f32.mrf.mxu0
        %v3825 = vadd.f32 %v3782, %v3824
        %3826 = vdwg.mxu0
        %v3827 = vpack.c.bf16 %v3393, %v3389
        %v3828 = vpack.c.bf16 %v3395, %v3391
        %v3829 = vpack.c.bf16 %v3479, %v3475
        %v3830 = vpack.c.bf16 %v3481, %v3477
        %v3831 = vpack.c.bf16 %v3565, %v3561
        %v3832 = vpack.c.bf16 %v3567, %v3563
        %v3833 = vpack.c.bf16 %v3651, %v3647
        %v3834 = vpack.c.bf16 %v3653, %v3649
        %v3835 = vpack.c.bf16 %v3737, %v3733
        %v3836 = vpack.c.bf16 %v3739, %v3735
        %v3837 = vpack.c.bf16 %v3823, %v3819
        %v3838 = vpack.c.bf16 %v3825, %v3821
        %3839 = vmatprep.subr.bf16.mxu0 0
        %3840 = vmatpush1.bf16.xpose.msra.mxu0 0
        %3841 = vmatprep.subr.bf16.mxu0 0
        %3842 = vmatpush1.bf16.xpose.msra.mxu0 0
        %3843 = vmatprep.subr.bf16.mxu0 0
        %3844 = vmatpush1.bf16.xpose.msra.mxu0 0
        %3845 = vmatprep.subr.bf16.mxu0 0
        %3846 = vmatpush1.bf16.xpose.msra.mxu0 0
        %3847 = vmatprep.subr.bf16.mxu0 0
        %3848 = vmatpush1.bf16.xpose.msra.mxu0 0
        %3849 = vmatprep.subr.bf16.mxu0 0
        %3850 = vmatpush1.bf16.xpose.msra.mxu0 0
        %3851 = vmatprep.subr.bf16.mxu0 0
        %3852 = vmatpush1.bf16.xpose.msra.mxu0 0
        %3853 = vmatprep.subr.bf16.mxu0 %v3832
        %3854 = vmatpush1.bf16.xpose.msra.mxu0 %v3831
        %3855 = vmatprep.subr.bf16.mxu0 0
        %3856 = vmatpush2.bf16.xpose.msra.mxu0 0
        %3857 = vmatprep.subr.bf16.mxu0 0
        %3858 = vmatpush2.bf16.xpose.msra.mxu0 0
        %3859 = vmatprep.subr.bf16.mxu0 0
        %3860 = vmatpush2.bf16.xpose.msra.mxu0 0
        %3861 = vmatprep.subr.bf16.mxu0 0
        %3862 = vmatpush2.bf16.xpose.msra.mxu0 0
        %3863 = vmatprep.subr.bf16.mxu0 0
        %3864 = vmatpush2.bf16.xpose.msra.mxu0 0
        %3865 = vmatprep.subr.bf16.mxu0 0
        %3866 = vmatpush2.bf16.xpose.msra.mxu0 0
        %3867 = vmatprep.subr.bf16.mxu0 0
        %3868 = vmatpush2.bf16.xpose.msra.mxu0 0
        %3869 = vmatprep.subr.bf16.mxu0 0
        %3870 = vmatpush2.bf16.xpose.msra.mxu0 0
        %3871 = vmatprep.mubr.bf16.mxu0 %v3828
        %3872 = vmatmul.mubr.bf16.gmra.mxu0 %v3827
        %v3873 = vpop.f32.mrf.mxu0
        %v3874 = vadd.f32 0.0, %v3873
        %v3875 = vpop.f32.mrf.mxu0
        %v3876 = vpop.f32.mrf.mxu0
        %v3877 = vadd.f32 0.0, %v3876
        %v3878 = vpop.f32.mrf.mxu0
        %3879 = vdwg.mxu0
        %3880 = vmatprep.subr.bf16.mxu0 0
        %3881 = vmatpush1.bf16.xpose.msra.mxu0 0
        %3882 = vmatprep.subr.bf16.mxu0 0
        %3883 = vmatpush1.bf16.xpose.msra.mxu0 0
        %3884 = vmatprep.subr.bf16.mxu0 0
        %3885 = vmatpush1.bf16.xpose.msra.mxu0 0
        %3886 = vmatprep.subr.bf16.mxu0 0
        %3887 = vmatpush1.bf16.xpose.msra.mxu0 0
        %3888 = vmatprep.subr.bf16.mxu0 0
        %3889 = vmatpush1.bf16.xpose.msra.mxu0 0
        %3890 = vmatprep.subr.bf16.mxu0 0
        %3891 = vmatpush1.bf16.xpose.msra.mxu0 0
        %3892 = vmatprep.subr.bf16.mxu0 0
        %3893 = vmatpush1.bf16.xpose.msra.mxu0 0
        %3894 = vmatprep.subr.bf16.mxu0 %v3834
        %3895 = vmatpush1.bf16.xpose.msra.mxu0 %v3833
        %3896 = vmatprep.subr.bf16.mxu0 0
        %3897 = vmatpush2.bf16.xpose.msra.mxu0 0
        %3898 = vmatprep.subr.bf16.mxu0 0
        %3899 = vmatpush2.bf16.xpose.msra.mxu0 0
        %3900 = vmatprep.subr.bf16.mxu0 0
        %3901 = vmatpush2.bf16.xpose.msra.mxu0 0
        %3902 = vmatprep.subr.bf16.mxu0 0
        %3903 = vmatpush2.bf16.xpose.msra.mxu0 0
        %3904 = vmatprep.subr.bf16.mxu0 0
        %3905 = vmatpush2.bf16.xpose.msra.mxu0 0
        %3906 = vmatprep.subr.bf16.mxu0 0
        %3907 = vmatpush2.bf16.xpose.msra.mxu0 0
        %3908 = vmatprep.subr.bf16.mxu0 0
        %3909 = vmatpush2.bf16.xpose.msra.mxu0 0
        %3910 = vmatprep.subr.bf16.mxu0 0
        %3911 = vmatpush2.bf16.xpose.msra.mxu0 0
        %3912 = vmatprep.mubr.bf16.mxu0 %v3830
        %3913 = vmatmul.mubr.bf16.gmra.mxu0 %v3829
        %v3914 = vpop.f32.mrf.mxu0
        %v3915 = vadd.f32 %v3874, %v3914
        %v3916 = vpop.f32.mrf.mxu0
        %v3917 = vpop.f32.mrf.mxu0
        %v3918 = vadd.f32 %v3877, %v3917
        %v3919 = vpop.f32.mrf.mxu0
        %3920 = vdwg.mxu0
        %v3921 = vmul.f32 %v3915, 0.044194173
        %v3922 = vmul.f32 %v3918, 0.044194173
        %vm3923 = vcmask 80896
        %v3924 = vsel %vm3923, %v3921, -inf
        %3925 = vmax.xlane.f32.xlu0 %v3924
        %v3926 = vpop.xlane.xlu0 %3925
        %vm3927 = vcmask 74752
        %v3928 = vsel %vm3927, %v3922, -inf
        %3929 = vmax.xlane.f32.xlu0 %v3928
        %v3930 = vpop.xlane.xlu0 %3929
        %v3931 = vsub.f32 %v3921, %v3926
        %v3932 = vsub.f32 %v3922, %v3930
        %v3933 = vmul.f32 %v3931, 1.442695
        %v3934 = vpow.pop %v3933
        %v3935 = vmul.f32 %v3932, 1.442695
        %v3936 = vpow.pop %v3935
        %v3937 = vsel %vm3923, %v3934, 0.0
        %3938 = vadd.xlane.f32.xlu0 %v3937
        %v3939 = vpop.xlane.xlu0 %3938
        %v3940 = vsel %vm3927, %v3936, 0.0
        %3941 = vadd.xlane.f32.xlu0 %v3940
        %v3942 = vpop.xlane.xlu0 %3941
        %v3943 = vrcp.pop %v3939
        %v3944 = vrcp.pop %v3942
        %v3945 = vmul.f32 %v3934, %v3943
        %v3946 = vmul.f32 %v3936, %v3944
        %v3947 = vadd.f32 %v3945, 0.0
        %v3948 = vadd.f32 %v3946, 0.0
        %v3949 = vpack.c.bf16 %v3946, %v3945
        %v3951 = vsel %vm3923, %v3949, 0
        %vm3953 = vcmask 1044480
        %v3955 = vsel %vm3953, %v3835, 0
        %v3958 = vsel %vm3953, %v3836, 0
        %v3961 = vsel %vm3953, %v3837, 0
        %v3964 = vsel %vm3953, %v3838, 0
        %3966 = vmatprep.subr.bf16.mxu0 0
        %3967 = vmatpush1.bf16.msra.mxu0 0
        %3968 = vmatprep.subr.bf16.mxu0 0
        %3969 = vmatpush1.bf16.msra.mxu0 0
        %3970 = vmatprep.subr.bf16.mxu0 0
        %3971 = vmatpush1.bf16.msra.mxu0 0
        %3972 = vmatprep.subr.bf16.mxu0 0
        %3973 = vmatpush1.bf16.msra.mxu0 0
        %3974 = vmatprep.subr.bf16.mxu0 0
        %3975 = vmatpush1.bf16.msra.mxu0 0
        %3976 = vmatprep.subr.bf16.mxu0 0
        %3977 = vmatpush1.bf16.msra.mxu0 0
        %3978 = vmatprep.subr.bf16.mxu0 0
        %3979 = vmatpush1.bf16.msra.mxu0 0
        %3980 = vmatprep.subr.bf16.mxu0 %v3958
        %3981 = vmatpush1.bf16.msra.mxu0 %v3955
        %3982 = vmatprep.subr.bf16.mxu0 0
        %3983 = vmatpush2.bf16.msra.mxu0 0
        %3984 = vmatprep.subr.bf16.mxu0 0
        %3985 = vmatpush2.bf16.msra.mxu0 0
        %3986 = vmatprep.subr.bf16.mxu0 0
        %3987 = vmatpush2.bf16.msra.mxu0 0
        %3988 = vmatprep.subr.bf16.mxu0 0
        %3989 = vmatpush2.bf16.msra.mxu0 0
        %3990 = vmatprep.subr.bf16.mxu0 0
        %3991 = vmatpush2.bf16.msra.mxu0 0
        %3992 = vmatprep.subr.bf16.mxu0 0
        %3993 = vmatpush2.bf16.msra.mxu0 0
        %3994 = vmatprep.subr.bf16.mxu0 0
        %3995 = vmatpush2.bf16.msra.mxu0 0
        %3996 = vmatprep.subr.bf16.mxu0 0
        %3997 = vmatpush2.bf16.msra.mxu0 0
        %3998 = vmatprep.mubr.bf16.mxu0 0
        %3999 = vmatmul.mubr.bf16.gmra.mxu0 %v3951
        %v4000 = vpop.f32.mrf.mxu0
        %v4001 = vadd.f32 0.0, %v4000
        %v4002 = vpop.f32.mrf.mxu0
        %v4003 = vadd.f32 0.0, %v4002
        %v4004 = vpop.f32.mrf.mxu0
        %v4005 = vadd.f32 0.0, %v4004
        %v4006 = vpop.f32.mrf.mxu0
        %v4007 = vadd.f32 0.0, %v4006
        %4008 = vdwg.mxu0
        %4009 = vmatprep.subr.bf16.mxu0 0
        %4010 = vmatpush1.bf16.msra.mxu0 0
        %4011 = vmatprep.subr.bf16.mxu0 0
        %4012 = vmatpush1.bf16.msra.mxu0 0
        %4013 = vmatprep.subr.bf16.mxu0 0
        %4014 = vmatpush1.bf16.msra.mxu0 0
        %4015 = vmatprep.subr.bf16.mxu0 0
        %4016 = vmatpush1.bf16.msra.mxu0 0
        %4017 = vmatprep.subr.bf16.mxu0 0
        %4018 = vmatpush1.bf16.msra.mxu0 0
        %4019 = vmatprep.subr.bf16.mxu0 0
        %4020 = vmatpush1.bf16.msra.mxu0 0
        %4021 = vmatprep.subr.bf16.mxu0 0
        %4022 = vmatpush1.bf16.msra.mxu0 0
        %4023 = vmatprep.subr.bf16.mxu0 %v3964
        %4024 = vmatpush1.bf16.msra.mxu0 %v3961
        %4025 = vmatprep.subr.bf16.mxu0 0
        %4026 = vmatpush2.bf16.msra.mxu0 0
        %4027 = vmatprep.subr.bf16.mxu0 0
        %4028 = vmatpush2.bf16.msra.mxu0 0
        %4029 = vmatprep.subr.bf16.mxu0 0
        %4030 = vmatpush2.bf16.msra.mxu0 0
        %4031 = vmatprep.subr.bf16.mxu0 0
        %4032 = vmatpush2.bf16.msra.mxu0 0
        %4033 = vmatprep.subr.bf16.mxu0 0
        %4034 = vmatpush2.bf16.msra.mxu0 0
        %4035 = vmatprep.subr.bf16.mxu0 0
        %4036 = vmatpush2.bf16.msra.mxu0 0
        %4037 = vmatprep.subr.bf16.mxu0 0
        %4038 = vmatpush2.bf16.msra.mxu0 0
        %4039 = vmatprep.subr.bf16.mxu0 0
        %4040 = vmatpush2.bf16.msra.mxu0 0
        %4041 = vmatprep.mubr.bf16.mxu0 0
        %4042 = vmatmul.mubr.bf16.gmra.mxu0 %v3951
        %v4043 = vpop.f32.mrf.mxu0
        %v4044 = vadd.f32 0.0, %v4043
        %v4045 = vpop.f32.mrf.mxu0
        %v4046 = vadd.f32 0.0, %v4045
        %v4047 = vpop.f32.mrf.mxu0
        %v4048 = vadd.f32 0.0, %v4047
        %v4049 = vpop.f32.mrf.mxu0
        %v4050 = vadd.f32 0.0, %v4049
        %4051 = vdwg.mxu0
        %v4052 = vpack.c.bf16 %v4005, %v4001
        %v4053 = vpack.c.bf16 %v4007, %v4003
        %v4054 = vpack.c.bf16 %v4048, %v4044
        %v4055 = vpack.c.bf16 %v4050, %v4046
        %v4056 = vld [vmem:[#allocation6] sm:$0xff]
        %v4057 = vld [vmem:[#allocation6 + $0x8] sm:$0xff]
        %v4058 = vld [vmem:[#allocation6 + $0x10] sm:$0xff]
        %v4059 = vld [vmem:[#allocation6 + $0x18] sm:$0xff]
        %v4060 = vld [vmem:[#allocation6 + $0x20] sm:$0xff]
        %v4061 = vld [vmem:[#allocation6 + $0x28] sm:$0xff]
        %v4062 = vld [vmem:[#allocation6 + $0x30] sm:$0xff]
        %v4063 = vld [vmem:[#allocation6 + $0x38] sm:$0xff]
        %v4064 = vld [vmem:[#allocation6 + $0x40] sm:$0xff]
        %v4065 = vld [vmem:[#allocation6 + $0x48] sm:$0xff]
        %v4066 = vld [vmem:[#allocation6 + $0x50] sm:$0xff]
        %v4067 = vld [vmem:[#allocation6 + $0x58] sm:$0xff]
        %v4068 = vld [vmem:[#allocation6 + $0x60] sm:$0xff]
        %v4069 = vld [vmem:[#allocation6 + $0x68] sm:$0xff]
        %v4070 = vld [vmem:[#allocation6 + $0x70] sm:$0xff]
        %v4071 = vld [vmem:[#allocation6 + $0x78] sm:$0xff]
        %v4072 = vld [vmem:[#allocation6 + $0x80] sm:$0xff]
        %v4073 = vld [vmem:[#allocation6 + $0x88] sm:$0xff]
        %v4074 = vld [vmem:[#allocation6 + $0x90] sm:$0xff]
        %v4075 = vld [vmem:[#allocation6 + $0x98] sm:$0xff]
        %v4076 = vld [vmem:[#allocation6 + $0xa0] sm:$0xff]
        %v4077 = vld [vmem:[#allocation6 + $0xa8] sm:$0xff]
        %v4078 = vld [vmem:[#allocation6 + $0xb0] sm:$0xff]
        %v4079 = vld [vmem:[#allocation6 + $0xb8] sm:$0xff]
        %v4080 = vld [vmem:[#allocation6 + $0xc0] sm:$0xff]
        %v4081 = vld [vmem:[#allocation6 + $0xc8] sm:$0xff]
        %v4082 = vld [vmem:[#allocation6 + $0xd0] sm:$0xff]
        %v4083 = vld [vmem:[#allocation6 + $0xd8] sm:$0xff]
        %v4084 = vld [vmem:[#allocation6 + $0xe0] sm:$0xff]
        %v4085 = vld [vmem:[#allocation6 + $0xe8] sm:$0xff]
        %v4086 = vld [vmem:[#allocation6 + $0xf0] sm:$0xff]
        %v4087 = vld [vmem:[#allocation6 + $0xf8] sm:$0xff]
        %v4088 = vld [vmem:[#allocation6 + $0x100] sm:$0xff]
        %v4089 = vld [vmem:[#allocation6 + $0x108] sm:$0xff]
        %v4090 = vld [vmem:[#allocation6 + $0x110] sm:$0xff]
        %v4091 = vld [vmem:[#allocation6 + $0x118] sm:$0xff]
        %v4092 = vld [vmem:[#allocation6 + $0x120] sm:$0xff]
        %v4093 = vld [vmem:[#allocation6 + $0x128] sm:$0xff]
        %v4094 = vld [vmem:[#allocation6 + $0x130] sm:$0xff]
        %v4095 = vld [vmem:[#allocation6 + $0x138] sm:$0xff]
        %v4096 = vld [vmem:[#allocation6 + $0x140] sm:$0xff]
        %v4097 = vld [vmem:[#allocation6 + $0x148] sm:$0xff]
        %v4098 = vld [vmem:[#allocation6 + $0x150] sm:$0xff]
        %v4099 = vld [vmem:[#allocation6 + $0x158] sm:$0xff]
        %v4100 = vld [vmem:[#allocation6 + $0x160] sm:$0xff]
        %v4101 = vld [vmem:[#allocation6 + $0x168] sm:$0xff]
        %v4102 = vld [vmem:[#allocation6 + $0x170] sm:$0xff]
        %v4103 = vld [vmem:[#allocation6 + $0x178] sm:$0xff]
        %v4104 = vld [vmem:[#allocation6 + $0x180] sm:$0xff]
        %v4105 = vld [vmem:[#allocation6 + $0x188] sm:$0xff]
        %v4106 = vld [vmem:[#allocation6 + $0x190] sm:$0xff]
        %v4107 = vld [vmem:[#allocation6 + $0x198] sm:$0xff]
        %v4108 = vld [vmem:[#allocation6 + $0x1a0] sm:$0xff]
        %v4109 = vld [vmem:[#allocation6 + $0x1a8] sm:$0xff]
        %v4110 = vld [vmem:[#allocation6 + $0x1b0] sm:$0xff]
        %v4111 = vld [vmem:[#allocation6 + $0x1b8] sm:$0xff]
        %v4112 = vld [vmem:[#allocation6 + $0x1c0] sm:$0xff]
        %v4113 = vld [vmem:[#allocation6 + $0x1c8] sm:$0xff]
        %v4114 = vld [vmem:[#allocation6 + $0x1d0] sm:$0xff]
        %v4115 = vld [vmem:[#allocation6 + $0x1d8] sm:$0xff]
        %v4116 = vld [vmem:[#allocation6 + $0x1e0] sm:$0xff]
        %v4117 = vld [vmem:[#allocation6 + $0x1e8] sm:$0xff]
        %v4118 = vld [vmem:[#allocation6 + $0x1f0] sm:$0xff]
        %v4119 = vld [vmem:[#allocation6 + $0x1f8] sm:$0xff]
        %v4120 = vld [vmem:[#allocation6 + $0x200] sm:$0xff]
        %v4121 = vld [vmem:[#allocation6 + $0x208] sm:$0xff]
        %v4122 = vld [vmem:[#allocation6 + $0x210] sm:$0xff]
        %v4123 = vld [vmem:[#allocation6 + $0x218] sm:$0xff]
        %v4124 = vld [vmem:[#allocation6 + $0x220] sm:$0xff]
        %v4125 = vld [vmem:[#allocation6 + $0x228] sm:$0xff]
        %v4126 = vld [vmem:[#allocation6 + $0x230] sm:$0xff]
        %v4127 = vld [vmem:[#allocation6 + $0x238] sm:$0xff]
        %v4128 = vld [vmem:[#allocation6 + $0x240] sm:$0xff]
        %v4129 = vld [vmem:[#allocation6 + $0x248] sm:$0xff]
        %v4130 = vld [vmem:[#allocation6 + $0x250] sm:$0xff]
        %v4131 = vld [vmem:[#allocation6 + $0x258] sm:$0xff]
        %v4132 = vld [vmem:[#allocation6 + $0x260] sm:$0xff]
        %v4133 = vld [vmem:[#allocation6 + $0x268] sm:$0xff]
        %v4134 = vld [vmem:[#allocation6 + $0x270] sm:$0xff]
        %v4135 = vld [vmem:[#allocation6 + $0x278] sm:$0xff]
        %v4136 = vld [vmem:[#allocation6 + $0x280] sm:$0xff]
        %v4137 = vld [vmem:[#allocation6 + $0x288] sm:$0xff]
        %v4138 = vld [vmem:[#allocation6 + $0x290] sm:$0xff]
        %v4139 = vld [vmem:[#allocation6 + $0x298] sm:$0xff]
        %v4140 = vld [vmem:[#allocation6 + $0x2a0] sm:$0xff]
        %v4141 = vld [vmem:[#allocation6 + $0x2a8] sm:$0xff]
        %v4142 = vld [vmem:[#allocation6 + $0x2b0] sm:$0xff]
        %v4143 = vld [vmem:[#allocation6 + $0x2b8] sm:$0xff]
        %v4144 = vld [vmem:[#allocation6 + $0x2c0] sm:$0xff]
        %v4145 = vld [vmem:[#allocation6 + $0x2c8] sm:$0xff]
        %v4146 = vld [vmem:[#allocation6 + $0x2d0] sm:$0xff]
        %v4147 = vld [vmem:[#allocation6 + $0x2d8] sm:$0xff]
        %v4148 = vld [vmem:[#allocation6 + $0x2e0] sm:$0xff]
        %v4149 = vld [vmem:[#allocation6 + $0x2e8] sm:$0xff]
        %v4150 = vld [vmem:[#allocation6 + $0x2f0] sm:$0xff]
        %v4151 = vld [vmem:[#allocation6 + $0x2f8] sm:$0xff]
        %v4152 = vld [vmem:[#allocation6 + $0x300] sm:$0xff]
        %v4153 = vld [vmem:[#allocation6 + $0x308] sm:$0xff]
        %v4154 = vld [vmem:[#allocation6 + $0x310] sm:$0xff]
        %v4155 = vld [vmem:[#allocation6 + $0x318] sm:$0xff]
        %v4156 = vld [vmem:[#allocation6 + $0x320] sm:$0xff]
        %v4157 = vld [vmem:[#allocation6 + $0x328] sm:$0xff]
        %v4158 = vld [vmem:[#allocation6 + $0x330] sm:$0xff]
        %v4159 = vld [vmem:[#allocation6 + $0x338] sm:$0xff]
        %v4160 = vld [vmem:[#allocation6 + $0x340] sm:$0xff]
        %v4161 = vld [vmem:[#allocation6 + $0x348] sm:$0xff]
        %v4162 = vld [vmem:[#allocation6 + $0x350] sm:$0xff]
        %v4163 = vld [vmem:[#allocation6 + $0x358] sm:$0xff]
        %v4164 = vld [vmem:[#allocation6 + $0x360] sm:$0xff]
        %v4165 = vld [vmem:[#allocation6 + $0x368] sm:$0xff]
        %v4166 = vld [vmem:[#allocation6 + $0x370] sm:$0xff]
        %v4167 = vld [vmem:[#allocation6 + $0x378] sm:$0xff]
        %v4168 = vld [vmem:[#allocation6 + $0x380] sm:$0xff]
        %v4169 = vld [vmem:[#allocation6 + $0x388] sm:$0xff]
        %v4170 = vld [vmem:[#allocation6 + $0x390] sm:$0xff]
        %v4171 = vld [vmem:[#allocation6 + $0x398] sm:$0xff]
        %v4172 = vld [vmem:[#allocation6 + $0x3a0] sm:$0xff]
        %v4173 = vld [vmem:[#allocation6 + $0x3a8] sm:$0xff]
        %v4174 = vld [vmem:[#allocation6 + $0x3b0] sm:$0xff]
        %v4175 = vld [vmem:[#allocation6 + $0x3b8] sm:$0xff]
        %v4176 = vld [vmem:[#allocation6 + $0x3c0] sm:$0xff]
        %v4177 = vld [vmem:[#allocation6 + $0x3c8] sm:$0xff]
        %v4178 = vld [vmem:[#allocation6 + $0x3d0] sm:$0xff]
        %v4179 = vld [vmem:[#allocation6 + $0x3d8] sm:$0xff]
        %v4180 = vld [vmem:[#allocation6 + $0x3e0] sm:$0xff]
        %v4181 = vld [vmem:[#allocation6 + $0x3e8] sm:$0xff]
        %v4182 = vld [vmem:[#allocation6 + $0x3f0] sm:$0xff]
        %v4183 = vld [vmem:[#allocation6 + $0x3f8] sm:$0xff]
        %v4184 = vld [vmem:[#allocation7] sm:$0xf]
        %v4186 = vlaneseq
        %v4187 = vshrl.u32 %v4186, 7
        %v4188 = vsub.s32 0, %v4187
        %v4189 = vrot.slane %v4184, %v4188
        %v4190 = vlaneseq
        %v4191 = vshrl.u32 %v4190, 7
        %v4192 = vsub.s32 1, %v4191
        %v4193 = vrot.slane %v4184, %v4192
        %v4194 = vlaneseq
        %v4195 = vshrl.u32 %v4194, 7
        %v4196 = vsub.s32 2, %v4195
        %v4197 = vrot.slane %v4184, %v4196
        %v4198 = vlaneseq
        %v4199 = vshrl.u32 %v4198, 7
        %v4200 = vsub.s32 3, %v4199
        %v4201 = vrot.slane %v4184, %v4200
        %v4334 = vunpack.c.l.b16 %v4056
        %v4335 = vunpack.c.h.b16 %v4056
        %v4336 = vunpack.c.l.b16 %v4057
        %v4337 = vunpack.c.h.b16 %v4057
        %v4338 = vunpack.c.l.b16 %v4058
        %v4339 = vunpack.c.h.b16 %v4058
        %v4340 = vunpack.c.l.b16 %v4059
        %v4341 = vunpack.c.h.b16 %v4059
        %v4342 = vunpack.c.l.b16 %v4060
        %v4343 = vunpack.c.h.b16 %v4060
        %v4344 = vunpack.c.l.b16 %v4061
        %v4345 = vunpack.c.h.b16 %v4061
        %v4346 = vunpack.c.l.b16 %v4062
        %v4347 = vunpack.c.h.b16 %v4062
        %v4348 = vunpack.c.l.b16 %v4063
        %v4349 = vunpack.c.h.b16 %v4063
        %v4350 = vunpack.c.l.b16 %v4064
        %v4351 = vunpack.c.h.b16 %v4064
        %v4352 = vunpack.c.l.b16 %v4065
        %v4353 = vunpack.c.h.b16 %v4065
        %v4354 = vunpack.c.l.b16 %v4066
        %v4355 = vunpack.c.h.b16 %v4066
        %v4356 = vunpack.c.l.b16 %v4067
        %v4357 = vunpack.c.h.b16 %v4067
        %v4358 = vunpack.c.l.b16 %v4068
        %v4359 = vunpack.c.h.b16 %v4068
        %v4360 = vunpack.c.l.b16 %v4069
        %v4361 = vunpack.c.h.b16 %v4069
        %v4362 = vunpack.c.l.b16 %v4070
        %v4363 = vunpack.c.h.b16 %v4070
        %v4364 = vunpack.c.l.b16 %v4071
        %v4365 = vunpack.c.h.b16 %v4071
        %v4366 = vunpack.c.l.b16 %v4072
        %v4367 = vunpack.c.h.b16 %v4072
        %v4368 = vunpack.c.l.b16 %v4073
        %v4369 = vunpack.c.h.b16 %v4073
        %v4370 = vunpack.c.l.b16 %v4074
        %v4371 = vunpack.c.h.b16 %v4074
        %v4372 = vunpack.c.l.b16 %v4075
        %v4373 = vunpack.c.h.b16 %v4075
        %v4374 = vunpack.c.l.b16 %v4076
        %v4375 = vunpack.c.h.b16 %v4076
        %v4376 = vunpack.c.l.b16 %v4077
        %v4377 = vunpack.c.h.b16 %v4077
        %v4378 = vunpack.c.l.b16 %v4078
        %v4379 = vunpack.c.h.b16 %v4078
        %v4380 = vunpack.c.l.b16 %v4079
        %v4381 = vunpack.c.h.b16 %v4079
        %v4382 = vunpack.c.l.b16 %v4080
        %v4383 = vunpack.c.h.b16 %v4080
        %v4384 = vunpack.c.l.b16 %v4081
        %v4385 = vunpack.c.h.b16 %v4081
        %v4386 = vunpack.c.l.b16 %v4082
        %v4387 = vunpack.c.h.b16 %v4082
        %v4388 = vunpack.c.l.b16 %v4083
        %v4389 = vunpack.c.h.b16 %v4083
        %v4390 = vunpack.c.l.b16 %v4084
        %v4391 = vunpack.c.h.b16 %v4084
        %v4392 = vunpack.c.l.b16 %v4085
        %v4393 = vunpack.c.h.b16 %v4085
        %v4394 = vunpack.c.l.b16 %v4086
        %v4395 = vunpack.c.h.b16 %v4086
        %v4396 = vunpack.c.l.b16 %v4087
        %v4397 = vunpack.c.h.b16 %v4087
        %v4398 = vunpack.c.l.b16 %v4088
        %v4399 = vunpack.c.h.b16 %v4088
        %v4400 = vunpack.c.l.b16 %v4089
        %v4401 = vunpack.c.h.b16 %v4089
        %v4402 = vunpack.c.l.b16 %v4090
        %v4403 = vunpack.c.h.b16 %v4090
        %v4404 = vunpack.c.l.b16 %v4091
        %v4405 = vunpack.c.h.b16 %v4091
        %v4406 = vunpack.c.l.b16 %v4092
        %v4407 = vunpack.c.h.b16 %v4092
        %v4408 = vunpack.c.l.b16 %v4093
        %v4409 = vunpack.c.h.b16 %v4093
        %v4410 = vunpack.c.l.b16 %v4094
        %v4411 = vunpack.c.h.b16 %v4094
        %v4412 = vunpack.c.l.b16 %v4095
        %v4413 = vunpack.c.h.b16 %v4095
        %v4414 = vunpack.c.l.b16 %v4096
        %v4415 = vunpack.c.h.b16 %v4096
        %v4416 = vunpack.c.l.b16 %v4097
        %v4417 = vunpack.c.h.b16 %v4097
        %v4418 = vunpack.c.l.b16 %v4098
        %v4419 = vunpack.c.h.b16 %v4098
        %v4420 = vunpack.c.l.b16 %v4099
        %v4421 = vunpack.c.h.b16 %v4099
        %v4422 = vunpack.c.l.b16 %v4100
        %v4423 = vunpack.c.h.b16 %v4100
        %v4424 = vunpack.c.l.b16 %v4101
        %v4425 = vunpack.c.h.b16 %v4101
        %v4426 = vunpack.c.l.b16 %v4102
        %v4427 = vunpack.c.h.b16 %v4102
        %v4428 = vunpack.c.l.b16 %v4103
        %v4429 = vunpack.c.h.b16 %v4103
        %v4430 = vunpack.c.l.b16 %v4104
        %v4431 = vunpack.c.h.b16 %v4104
        %v4432 = vunpack.c.l.b16 %v4105
        %v4433 = vunpack.c.h.b16 %v4105
        %v4434 = vunpack.c.l.b16 %v4106
        %v4435 = vunpack.c.h.b16 %v4106
        %v4436 = vunpack.c.l.b16 %v4107
        %v4437 = vunpack.c.h.b16 %v4107
        %v4438 = vunpack.c.l.b16 %v4108
        %v4439 = vunpack.c.h.b16 %v4108
        %v4440 = vunpack.c.l.b16 %v4109
        %v4441 = vunpack.c.h.b16 %v4109
        %v4442 = vunpack.c.l.b16 %v4110
        %v4443 = vunpack.c.h.b16 %v4110
        %v4444 = vunpack.c.l.b16 %v4111
        %v4445 = vunpack.c.h.b16 %v4111
        %v4446 = vunpack.c.l.b16 %v4112
        %v4447 = vunpack.c.h.b16 %v4112
        %v4448 = vunpack.c.l.b16 %v4113
        %v4449 = vunpack.c.h.b16 %v4113
        %v4450 = vunpack.c.l.b16 %v4114
        %v4451 = vunpack.c.h.b16 %v4114
        %v4452 = vunpack.c.l.b16 %v4115
        %v4453 = vunpack.c.h.b16 %v4115
        %v4454 = vunpack.c.l.b16 %v4116
        %v4455 = vunpack.c.h.b16 %v4116
        %v4456 = vunpack.c.l.b16 %v4117
        %v4457 = vunpack.c.h.b16 %v4117
        %v4458 = vunpack.c.l.b16 %v4118
        %v4459 = vunpack.c.h.b16 %v4118
        %v4460 = vunpack.c.l.b16 %v4119
        %v4461 = vunpack.c.h.b16 %v4119
        %v4462 = vunpack.c.l.b16 %v4120
        %v4463 = vunpack.c.h.b16 %v4120
        %v4464 = vunpack.c.l.b16 %v4121
        %v4465 = vunpack.c.h.b16 %v4121
        %v4466 = vunpack.c.l.b16 %v4122
        %v4467 = vunpack.c.h.b16 %v4122
        %v4468 = vunpack.c.l.b16 %v4123
        %v4469 = vunpack.c.h.b16 %v4123
        %v4470 = vunpack.c.l.b16 %v4124
        %v4471 = vunpack.c.h.b16 %v4124
        %v4472 = vunpack.c.l.b16 %v4125
        %v4473 = vunpack.c.h.b16 %v4125
        %v4474 = vunpack.c.l.b16 %v4126
        %v4475 = vunpack.c.h.b16 %v4126
        %v4476 = vunpack.c.l.b16 %v4127
        %v4477 = vunpack.c.h.b16 %v4127
        %v4478 = vunpack.c.l.b16 %v4128
        %v4479 = vunpack.c.h.b16 %v4128
        %v4480 = vunpack.c.l.b16 %v4129
        %v4481 = vunpack.c.h.b16 %v4129
        %v4482 = vunpack.c.l.b16 %v4130
        %v4483 = vunpack.c.h.b16 %v4130
        %v4484 = vunpack.c.l.b16 %v4131
        %v4485 = vunpack.c.h.b16 %v4131
        %v4486 = vunpack.c.l.b16 %v4132
        %v4487 = vunpack.c.h.b16 %v4132
        %v4488 = vunpack.c.l.b16 %v4133
        %v4489 = vunpack.c.h.b16 %v4133
        %v4490 = vunpack.c.l.b16 %v4134
        %v4491 = vunpack.c.h.b16 %v4134
        %v4492 = vunpack.c.l.b16 %v4135
        %v4493 = vunpack.c.h.b16 %v4135
        %v4494 = vunpack.c.l.b16 %v4136
        %v4495 = vunpack.c.h.b16 %v4136
        %v4496 = vunpack.c.l.b16 %v4137
        %v4497 = vunpack.c.h.b16 %v4137
        %v4498 = vunpack.c.l.b16 %v4138
        %v4499 = vunpack.c.h.b16 %v4138
        %v4500 = vunpack.c.l.b16 %v4139
        %v4501 = vunpack.c.h.b16 %v4139
        %v4502 = vunpack.c.l.b16 %v4140
        %v4503 = vunpack.c.h.b16 %v4140
        %v4504 = vunpack.c.l.b16 %v4141
        %v4505 = vunpack.c.h.b16 %v4141
        %v4506 = vunpack.c.l.b16 %v4142
        %v4507 = vunpack.c.h.b16 %v4142
        %v4508 = vunpack.c.l.b16 %v4143
        %v4509 = vunpack.c.h.b16 %v4143
        %v4510 = vunpack.c.l.b16 %v4144
        %v4511 = vunpack.c.h.b16 %v4144
        %v4512 = vunpack.c.l.b16 %v4145
        %v4513 = vunpack.c.h.b16 %v4145
        %v4514 = vunpack.c.l.b16 %v4146
        %v4515 = vunpack.c.h.b16 %v4146
        %v4516 = vunpack.c.l.b16 %v4147
        %v4517 = vunpack.c.h.b16 %v4147
        %v4518 = vunpack.c.l.b16 %v4148
        %v4519 = vunpack.c.h.b16 %v4148
        %v4520 = vunpack.c.l.b16 %v4149
        %v4521 = vunpack.c.h.b16 %v4149
        %v4522 = vunpack.c.l.b16 %v4150
        %v4523 = vunpack.c.h.b16 %v4150
        %v4524 = vunpack.c.l.b16 %v4151
        %v4525 = vunpack.c.h.b16 %v4151
        %v4526 = vunpack.c.l.b16 %v4152
        %v4527 = vunpack.c.h.b16 %v4152
        %v4528 = vunpack.c.l.b16 %v4153
        %v4529 = vunpack.c.h.b16 %v4153
        %v4530 = vunpack.c.l.b16 %v4154
        %v4531 = vunpack.c.h.b16 %v4154
        %v4532 = vunpack.c.l.b16 %v4155
        %v4533 = vunpack.c.h.b16 %v4155
        %v4534 = vunpack.c.l.b16 %v4156
        %v4535 = vunpack.c.h.b16 %v4156
        %v4536 = vunpack.c.l.b16 %v4157
        %v4537 = vunpack.c.h.b16 %v4157
        %v4538 = vunpack.c.l.b16 %v4158
        %v4539 = vunpack.c.h.b16 %v4158
        %v4540 = vunpack.c.l.b16 %v4159
        %v4541 = vunpack.c.h.b16 %v4159
        %v4542 = vunpack.c.l.b16 %v4160
        %v4543 = vunpack.c.h.b16 %v4160
        %v4544 = vunpack.c.l.b16 %v4161
        %v4545 = vunpack.c.h.b16 %v4161
        %v4546 = vunpack.c.l.b16 %v4162
        %v4547 = vunpack.c.h.b16 %v4162
        %v4548 = vunpack.c.l.b16 %v4163
        %v4549 = vunpack.c.h.b16 %v4163
        %v4550 = vunpack.c.l.b16 %v4164
        %v4551 = vunpack.c.h.b16 %v4164
        %v4552 = vunpack.c.l.b16 %v4165
        %v4553 = vunpack.c.h.b16 %v4165
        %v4554 = vunpack.c.l.b16 %v4166
        %v4555 = vunpack.c.h.b16 %v4166
        %v4556 = vunpack.c.l.b16 %v4167
        %v4557 = vunpack.c.h.b16 %v4167
        %v4558 = vunpack.c.l.b16 %v4168
        %v4559 = vunpack.c.h.b16 %v4168
        %v4560 = vunpack.c.l.b16 %v4169
        %v4561 = vunpack.c.h.b16 %v4169
        %v4562 = vunpack.c.l.b16 %v4170
        %v4563 = vunpack.c.h.b16 %v4170
        %v4564 = vunpack.c.l.b16 %v4171
        %v4565 = vunpack.c.h.b16 %v4171
        %v4566 = vunpack.c.l.b16 %v4172
        %v4567 = vunpack.c.h.b16 %v4172
        %v4568 = vunpack.c.l.b16 %v4173
        %v4569 = vunpack.c.h.b16 %v4173
        %v4570 = vunpack.c.l.b16 %v4174
        %v4571 = vunpack.c.h.b16 %v4174
        %v4572 = vunpack.c.l.b16 %v4175
        %v4573 = vunpack.c.h.b16 %v4175
        %v4574 = vunpack.c.l.b16 %v4176
        %v4575 = vunpack.c.h.b16 %v4176
        %v4576 = vunpack.c.l.b16 %v4177
        %v4577 = vunpack.c.h.b16 %v4177
        %v4578 = vunpack.c.l.b16 %v4178
        %v4579 = vunpack.c.h.b16 %v4178
        %v4580 = vunpack.c.l.b16 %v4179
        %v4581 = vunpack.c.h.b16 %v4179
        %v4582 = vunpack.c.l.b16 %v4180
        %v4583 = vunpack.c.h.b16 %v4180
        %v4584 = vunpack.c.l.b16 %v4181
        %v4585 = vunpack.c.h.b16 %v4181
        %v4586 = vunpack.c.l.b16 %v4182
        %v4587 = vunpack.c.h.b16 %v4182
        %v4588 = vunpack.c.l.b16 %v4183
        %v4589 = vunpack.c.h.b16 %v4183
        %v4590 = vpack.c.b16 %v4338, %v4334
        %v4591 = vpack.c.b16 %v4339, %v4335
        %v4592 = vpack.c.b16 %v4340, %v4336
        %v4593 = vpack.c.b16 %v4341, %v4337
        %v4594 = vpack.c.b16 %v4346, %v4342
        %v4595 = vpack.c.b16 %v4347, %v4343
        %v4596 = vpack.c.b16 %v4348, %v4344
        %v4597 = vpack.c.b16 %v4349, %v4345
        %v4598 = vpack.c.b16 %v4354, %v4350
        %v4599 = vpack.c.b16 %v4355, %v4351
        %v4600 = vpack.c.b16 %v4356, %v4352
        %v4601 = vpack.c.b16 %v4357, %v4353
        %v4602 = vpack.c.b16 %v4362, %v4358
        %v4603 = vpack.c.b16 %v4363, %v4359
        %v4604 = vpack.c.b16 %v4364, %v4360
        %v4605 = vpack.c.b16 %v4365, %v4361
        %v4606 = vpack.c.b16 %v4370, %v4366
        %v4607 = vpack.c.b16 %v4371, %v4367
        %v4608 = vpack.c.b16 %v4372, %v4368
        %v4609 = vpack.c.b16 %v4373, %v4369
        %v4610 = vpack.c.b16 %v4378, %v4374
        %v4611 = vpack.c.b16 %v4379, %v4375
        %v4612 = vpack.c.b16 %v4380, %v4376
        %v4613 = vpack.c.b16 %v4381, %v4377
        %v4614 = vpack.c.b16 %v4386, %v4382
        %v4615 = vpack.c.b16 %v4387, %v4383
        %v4616 = vpack.c.b16 %v4388, %v4384
        %v4617 = vpack.c.b16 %v4389, %v4385
        %v4618 = vpack.c.b16 %v4394, %v4390
        %v4619 = vpack.c.b16 %v4395, %v4391
        %v4620 = vpack.c.b16 %v4396, %v4392
        %v4621 = vpack.c.b16 %v4397, %v4393
        %v4622 = vpack.c.b16 %v4402, %v4398
        %v4623 = vpack.c.b16 %v4403, %v4399
        %v4624 = vpack.c.b16 %v4404, %v4400
        %v4625 = vpack.c.b16 %v4405, %v4401
        %v4626 = vpack.c.b16 %v4410, %v4406
        %v4627 = vpack.c.b16 %v4411, %v4407
        %v4628 = vpack.c.b16 %v4412, %v4408
        %v4629 = vpack.c.b16 %v4413, %v4409
        %v4630 = vpack.c.b16 %v4418, %v4414
        %v4631 = vpack.c.b16 %v4419, %v4415
        %v4632 = vpack.c.b16 %v4420, %v4416
        %v4633 = vpack.c.b16 %v4421, %v4417
        %v4634 = vpack.c.b16 %v4426, %v4422
        %v4635 = vpack.c.b16 %v4427, %v4423
        %v4636 = vpack.c.b16 %v4428, %v4424
        %v4637 = vpack.c.b16 %v4429, %v4425
        %v4638 = vpack.c.b16 %v4434, %v4430
        %v4639 = vpack.c.b16 %v4435, %v4431
        %v4640 = vpack.c.b16 %v4436, %v4432
        %v4641 = vpack.c.b16 %v4437, %v4433
        %v4642 = vpack.c.b16 %v4442, %v4438
        %v4643 = vpack.c.b16 %v4443, %v4439
        %v4644 = vpack.c.b16 %v4444, %v4440
        %v4645 = vpack.c.b16 %v4445, %v4441
        %v4646 = vpack.c.b16 %v4450, %v4446
        %v4647 = vpack.c.b16 %v4451, %v4447
        %v4648 = vpack.c.b16 %v4452, %v4448
        %v4649 = vpack.c.b16 %v4453, %v4449
        %v4650 = vpack.c.b16 %v4458, %v4454
        %v4651 = vpack.c.b16 %v4459, %v4455
        %v4652 = vpack.c.b16 %v4460, %v4456
        %v4653 = vpack.c.b16 %v4461, %v4457
        %v4654 = vpack.c.b16 %v4466, %v4462
        %v4655 = vpack.c.b16 %v4467, %v4463
        %v4656 = vpack.c.b16 %v4468, %v4464
        %v4657 = vpack.c.b16 %v4469, %v4465
        %v4658 = vpack.c.b16 %v4474, %v4470
        %v4659 = vpack.c.b16 %v4475, %v4471
        %v4660 = vpack.c.b16 %v4476, %v4472
        %v4661 = vpack.c.b16 %v4477, %v4473
        %v4662 = vpack.c.b16 %v4482, %v4478
        %v4663 = vpack.c.b16 %v4483, %v4479
        %v4664 = vpack.c.b16 %v4484, %v4480
        %v4665 = vpack.c.b16 %v4485, %v4481
        %v4666 = vpack.c.b16 %v4490, %v4486
        %v4667 = vpack.c.b16 %v4491, %v4487
        %v4668 = vpack.c.b16 %v4492, %v4488
        %v4669 = vpack.c.b16 %v4493, %v4489
        %v4670 = vpack.c.b16 %v4498, %v4494
        %v4671 = vpack.c.b16 %v4499, %v4495
        %v4672 = vpack.c.b16 %v4500, %v4496
        %v4673 = vpack.c.b16 %v4501, %v4497
        %v4674 = vpack.c.b16 %v4506, %v4502
        %v4675 = vpack.c.b16 %v4507, %v4503
        %v4676 = vpack.c.b16 %v4508, %v4504
        %v4677 = vpack.c.b16 %v4509, %v4505
        %v4678 = vpack.c.b16 %v4514, %v4510
        %v4679 = vpack.c.b16 %v4515, %v4511
        %v4680 = vpack.c.b16 %v4516, %v4512
        %v4681 = vpack.c.b16 %v4517, %v4513
        %v4682 = vpack.c.b16 %v4522, %v4518
        %v4683 = vpack.c.b16 %v4523, %v4519
        %v4684 = vpack.c.b16 %v4524, %v4520
        %v4685 = vpack.c.b16 %v4525, %v4521
        %v4686 = vpack.c.b16 %v4530, %v4526
        %v4687 = vpack.c.b16 %v4531, %v4527
        %v4688 = vpack.c.b16 %v4532, %v4528
        %v4689 = vpack.c.b16 %v4533, %v4529
        %v4690 = vpack.c.b16 %v4538, %v4534
        %v4691 = vpack.c.b16 %v4539, %v4535
        %v4692 = vpack.c.b16 %v4540, %v4536
        %v4693 = vpack.c.b16 %v4541, %v4537
        %v4694 = vpack.c.b16 %v4546, %v4542
        %v4695 = vpack.c.b16 %v4547, %v4543
        %v4696 = vpack.c.b16 %v4548, %v4544
        %v4697 = vpack.c.b16 %v4549, %v4545
        %v4698 = vpack.c.b16 %v4554, %v4550
        %v4699 = vpack.c.b16 %v4555, %v4551
        %v4700 = vpack.c.b16 %v4556, %v4552
        %v4701 = vpack.c.b16 %v4557, %v4553
        %v4702 = vpack.c.b16 %v4562, %v4558
        %v4703 = vpack.c.b16 %v4563, %v4559
        %v4704 = vpack.c.b16 %v4564, %v4560
        %v4705 = vpack.c.b16 %v4565, %v4561
        %v4706 = vpack.c.b16 %v4570, %v4566
        %v4707 = vpack.c.b16 %v4571, %v4567
        %v4708 = vpack.c.b16 %v4572, %v4568
        %v4709 = vpack.c.b16 %v4573, %v4569
        %v4710 = vpack.c.b16 %v4578, %v4574
        %v4711 = vpack.c.b16 %v4579, %v4575
        %v4712 = vpack.c.b16 %v4580, %v4576
        %v4713 = vpack.c.b16 %v4581, %v4577
        %v4714 = vpack.c.b16 %v4586, %v4582
        %v4715 = vpack.c.b16 %v4587, %v4583
        %v4716 = vpack.c.b16 %v4588, %v4584
        %v4717 = vpack.c.b16 %v4589, %v4585
        %4846 = vmatprep.subr.bf16.mxu0 %v4619
        %4847 = vmatpush1.bf16.msra.mxu0 %v4618
        %4848 = vmatprep.subr.bf16.mxu0 %v4615
        %4849 = vmatpush1.bf16.msra.mxu0 %v4614
        %4850 = vmatprep.subr.bf16.mxu0 %v4611
        %4851 = vmatpush1.bf16.msra.mxu0 %v4610
        %4852 = vmatprep.subr.bf16.mxu0 %v4607
        %4853 = vmatpush1.bf16.msra.mxu0 %v4606
        %4854 = vmatprep.subr.bf16.mxu0 %v4603
        %4855 = vmatpush1.bf16.msra.mxu0 %v4602
        %4856 = vmatprep.subr.bf16.mxu0 %v4599
        %4857 = vmatpush1.bf16.msra.mxu0 %v4598
        %4858 = vmatprep.subr.bf16.mxu0 %v4595
        %4859 = vmatpush1.bf16.msra.mxu0 %v4594
        %4860 = vmatprep.subr.bf16.mxu0 %v4591
        %4861 = vmatpush1.bf16.msra.mxu0 %v4590
        %4862 = vmatprep.subr.bf16.mxu0 %v4651
        %4863 = vmatpush2.bf16.msra.mxu0 %v4650
        %4864 = vmatprep.subr.bf16.mxu0 %v4647
        %4865 = vmatpush2.bf16.msra.mxu0 %v4646
        %4866 = vmatprep.subr.bf16.mxu0 %v4643
        %4867 = vmatpush2.bf16.msra.mxu0 %v4642
        %4868 = vmatprep.subr.bf16.mxu0 %v4639
        %4869 = vmatpush2.bf16.msra.mxu0 %v4638
        %4870 = vmatprep.subr.bf16.mxu0 %v4635
        %4871 = vmatpush2.bf16.msra.mxu0 %v4634
        %4872 = vmatprep.subr.bf16.mxu0 %v4631
        %4873 = vmatpush2.bf16.msra.mxu0 %v4630
        %4874 = vmatprep.subr.bf16.mxu0 %v4627
        %4875 = vmatpush2.bf16.msra.mxu0 %v4626
        %4876 = vmatprep.subr.bf16.mxu0 %v4623
        %4877 = vmatpush2.bf16.msra.mxu0 %v4622
        %4878 = vmatprep.mubr.bf16.mxu0 %v4053
        %4879 = vmatmul.mubr.bf16.gmra.mxu0 %v4052
        %v4880 = vpop.f32.mrf.mxu0
        %v4881 = vadd.f32 %v4189, %v4880
        %v4882 = vpop.f32.mrf.mxu0
        %v4883 = vadd.f32 %v4193, %v4882
        %v4884 = vpop.f32.mrf.mxu0
        %v4885 = vadd.f32 %v4189, %v4884
        %v4886 = vpop.f32.mrf.mxu0
        %v4887 = vadd.f32 %v4193, %v4886
        %4888 = vdwg.mxu0
        %4889 = vmatprep.subr.bf16.mxu0 %v4683
        %4890 = vmatpush1.bf16.msra.mxu0 %v4682
        %4891 = vmatprep.subr.bf16.mxu0 %v4679
        %4892 = vmatpush1.bf16.msra.mxu0 %v4678
        %4893 = vmatprep.subr.bf16.mxu0 %v4675
        %4894 = vmatpush1.bf16.msra.mxu0 %v4674
        %4895 = vmatprep.subr.bf16.mxu0 %v4671
        %4896 = vmatpush1.bf16.msra.mxu0 %v4670
        %4897 = vmatprep.subr.bf16.mxu0 %v4667
        %4898 = vmatpush1.bf16.msra.mxu0 %v4666
        %4899 = vmatprep.subr.bf16.mxu0 %v4663
        %4900 = vmatpush1.bf16.msra.mxu0 %v4662
        %4901 = vmatprep.subr.bf16.mxu0 %v4659
        %4902 = vmatpush1.bf16.msra.mxu0 %v4658
        %4903 = vmatprep.subr.bf16.mxu0 %v4655
        %4904 = vmatpush1.bf16.msra.mxu0 %v4654
        %4905 = vmatprep.subr.bf16.mxu0 %v4715
        %4906 = vmatpush2.bf16.msra.mxu0 %v4714
        %4907 = vmatprep.subr.bf16.mxu0 %v4711
        %4908 = vmatpush2.bf16.msra.mxu0 %v4710
        %4909 = vmatprep.subr.bf16.mxu0 %v4707
        %4910 = vmatpush2.bf16.msra.mxu0 %v4706
        %4911 = vmatprep.subr.bf16.mxu0 %v4703
        %4912 = vmatpush2.bf16.msra.mxu0 %v4702
        %4913 = vmatprep.subr.bf16.mxu0 %v4699
        %4914 = vmatpush2.bf16.msra.mxu0 %v4698
        %4915 = vmatprep.subr.bf16.mxu0 %v4695
        %4916 = vmatpush2.bf16.msra.mxu0 %v4694
        %4917 = vmatprep.subr.bf16.mxu0 %v4691
        %4918 = vmatpush2.bf16.msra.mxu0 %v4690
        %4919 = vmatprep.subr.bf16.mxu0 %v4687
        %4920 = vmatpush2.bf16.msra.mxu0 %v4686
        %4921 = vmatprep.mubr.bf16.mxu0 %v4055
        %4922 = vmatmul.mubr.bf16.gmra.mxu0 %v4054
        %v4923 = vpop.f32.mrf.mxu0
        %v4924 = vadd.f32 %v4881, %v4923
        %v4925 = vpop.f32.mrf.mxu0
        %v4926 = vadd.f32 %v4883, %v4925
        %v4927 = vpop.f32.mrf.mxu0
        %v4928 = vadd.f32 %v4885, %v4927
        %v4929 = vpop.f32.mrf.mxu0
        %v4930 = vadd.f32 %v4887, %v4929
        %4931 = vdwg.mxu0
        %4932 = vmatprep.subr.bf16.mxu0 %v4621
        %4933 = vmatpush1.bf16.msra.mxu0 %v4620
        %4934 = vmatprep.subr.bf16.mxu0 %v4617
        %4935 = vmatpush1.bf16.msra.mxu0 %v4616
        %4936 = vmatprep.subr.bf16.mxu0 %v4613
        %4937 = vmatpush1.bf16.msra.mxu0 %v4612
        %4938 = vmatprep.subr.bf16.mxu0 %v4609
        %4939 = vmatpush1.bf16.msra.mxu0 %v4608
        %4940 = vmatprep.subr.bf16.mxu0 %v4605
        %4941 = vmatpush1.bf16.msra.mxu0 %v4604
        %4942 = vmatprep.subr.bf16.mxu0 %v4601
        %4943 = vmatpush1.bf16.msra.mxu0 %v4600
        %4944 = vmatprep.subr.bf16.mxu0 %v4597
        %4945 = vmatpush1.bf16.msra.mxu0 %v4596
        %4946 = vmatprep.subr.bf16.mxu0 %v4593
        %4947 = vmatpush1.bf16.msra.mxu0 %v4592
        %4948 = vmatprep.subr.bf16.mxu0 %v4653
        %4949 = vmatpush2.bf16.msra.mxu0 %v4652
        %4950 = vmatprep.subr.bf16.mxu0 %v4649
        %4951 = vmatpush2.bf16.msra.mxu0 %v4648
        %4952 = vmatprep.subr.bf16.mxu0 %v4645
        %4953 = vmatpush2.bf16.msra.mxu0 %v4644
        %4954 = vmatprep.subr.bf16.mxu0 %v4641
        %4955 = vmatpush2.bf16.msra.mxu0 %v4640
        %4956 = vmatprep.subr.bf16.mxu0 %v4637
        %4957 = vmatpush2.bf16.msra.mxu0 %v4636
        %4958 = vmatprep.subr.bf16.mxu0 %v4633
        %4959 = vmatpush2.bf16.msra.mxu0 %v4632
        %4960 = vmatprep.subr.bf16.mxu0 %v4629
        %4961 = vmatpush2.bf16.msra.mxu0 %v4628
        %4962 = vmatprep.subr.bf16.mxu0 %v4625
        %4963 = vmatpush2.bf16.msra.mxu0 %v4624
        %4964 = vmatprep.mubr.bf16.mxu0 %v4053
        %4965 = vmatmul.mubr.bf16.gmra.mxu0 %v4052
        %v4966 = vpop.f32.mrf.mxu0
        %v4967 = vadd.f32 %v4197, %v4966
        %v4968 = vpop.f32.mrf.mxu0
        %v4969 = vadd.f32 %v4201, %v4968
        %v4970 = vpop.f32.mrf.mxu0
        %v4971 = vadd.f32 %v4197, %v4970
        %v4972 = vpop.f32.mrf.mxu0
        %v4973 = vadd.f32 %v4201, %v4972
        %4974 = vdwg.mxu0
        %4975 = vmatprep.subr.bf16.mxu0 %v4685
        %4976 = vmatpush1.bf16.msra.mxu0 %v4684
        %4977 = vmatprep.subr.bf16.mxu0 %v4681
        %4978 = vmatpush1.bf16.msra.mxu0 %v4680
        %4979 = vmatprep.subr.bf16.mxu0 %v4677
        %4980 = vmatpush1.bf16.msra.mxu0 %v4676
        %4981 = vmatprep.subr.bf16.mxu0 %v4673
        %4982 = vmatpush1.bf16.msra.mxu0 %v4672
        %4983 = vmatprep.subr.bf16.mxu0 %v4669
        %4984 = vmatpush1.bf16.msra.mxu0 %v4668
        %4985 = vmatprep.subr.bf16.mxu0 %v4665
        %4986 = vmatpush1.bf16.msra.mxu0 %v4664
        %4987 = vmatprep.subr.bf16.mxu0 %v4661
        %4988 = vmatpush1.bf16.msra.mxu0 %v4660
        %4989 = vmatprep.subr.bf16.mxu0 %v4657
        %4990 = vmatpush1.bf16.msra.mxu0 %v4656
        %4991 = vmatprep.subr.bf16.mxu0 %v4717
        %4992 = vmatpush2.bf16.msra.mxu0 %v4716
        %4993 = vmatprep.subr.bf16.mxu0 %v4713
        %4994 = vmatpush2.bf16.msra.mxu0 %v4712
        %4995 = vmatprep.subr.bf16.mxu0 %v4709
        %4996 = vmatpush2.bf16.msra.mxu0 %v4708
        %4997 = vmatprep.subr.bf16.mxu0 %v4705
        %4998 = vmatpush2.bf16.msra.mxu0 %v4704
        %4999 = vmatprep.subr.bf16.mxu0 %v4701
        %5000 = vmatpush2.bf16.msra.mxu0 %v4700
        %5001 = vmatprep.subr.bf16.mxu0 %v4697
        %5002 = vmatpush2.bf16.msra.mxu0 %v4696
        %5003 = vmatprep.subr.bf16.mxu0 %v4693
        %5004 = vmatpush2.bf16.msra.mxu0 %v4692
        %5005 = vmatprep.subr.bf16.mxu0 %v4689
        %5006 = vmatpush2.bf16.msra.mxu0 %v4688
        %5007 = vmatprep.mubr.bf16.mxu0 %v4055
        %5008 = vmatmul.mubr.bf16.gmra.mxu0 %v4054
        %v5009 = vpop.f32.mrf.mxu0
        %v5010 = vadd.f32 %v4967, %v5009
        %v5011 = vpop.f32.mrf.mxu0
        %v5012 = vadd.f32 %v4969, %v5011
        %v5013 = vpop.f32.mrf.mxu0
        %v5014 = vadd.f32 %v4971, %v5013
        %v5015 = vpop.f32.mrf.mxu0
        %v5016 = vadd.f32 %v4973, %v5015
        %5017 = vdwg.mxu0
        %v5018 = vadd.f32 %v931, %v4924
        %v5019 = vadd.f32 %v932, %v4926
        %v5020 = vadd.f32 %v933, %v5010
        %v5021 = vadd.f32 %v934, %v5012
        %v5022 = vadd.f32 %v935, %v4928
        %v5023 = vadd.f32 %v936, %v4930
        %v5024 = vadd.f32 %v937, %v5014
        %v5025 = vadd.f32 %v938, %v5016
        %v5026 = vld [vmem:[%s919] sm:$0xff]
        %v5027 = vld [vmem:[%s919 + $0x8] sm:$0xff]
        %v5028 = vld [vmem:[%s919 + $0x10] sm:$0xff]
        %v5029 = vld [vmem:[%s919 + $0x18] sm:$0xff]
        %v5030 = vld [vmem:[%s919 + $0x20] sm:$0x3]
        %v5031 = vld [vmem:[%s919 + $0x28] sm:$0x3]
        %v5032 = vld [vmem:[%s919 + $0x30] sm:$0x3]
        %v5033 = vld [vmem:[%s919 + $0x38] sm:$0x3]
        %v5034 = vpack.c.bf16 %v5030, %v5026
        %v5035 = vpack.c.bf16 %v5031, %v5027
        %v5036 = vpack.c.bf16 %v5032, %v5028
        %v5037 = vpack.c.bf16 %v5033, %v5029
        %v5038 = vld [vmem:[#allocation9] sm:$0xff]
        %v5039 = vld [vmem:[#allocation9 + $0x8] sm:$0xff]
        %v5040 = vld [vmem:[#allocation9 + $0x10] sm:$0xff]
        %v5041 = vld [vmem:[#allocation9 + $0x18] sm:$0xff]
        %v5042 = vld [vmem:[#allocation9 + $0x20] sm:$0xff]
        %v5043 = vld [vmem:[#allocation9 + $0x28] sm:$0xff]
        %v5044 = vld [vmem:[#allocation9 + $0x30] sm:$0xff]
        %v5045 = vld [vmem:[#allocation9 + $0x38] sm:$0xff]
        %v5046 = vld [vmem:[#allocation9 + $0x40] sm:$0xff]
        %v5047 = vld [vmem:[#allocation9 + $0x48] sm:$0xff]
        %v5048 = vld [vmem:[#allocation9 + $0x50] sm:$0xff]
        %v5049 = vld [vmem:[#allocation9 + $0x58] sm:$0xff]
        %v5050 = vld [vmem:[#allocation9 + $0x60] sm:$0xff]
        %v5051 = vld [vmem:[#allocation9 + $0x68] sm:$0xff]
        %v5052 = vld [vmem:[#allocation9 + $0x70] sm:$0xff]
        %v5053 = vld [vmem:[#allocation9 + $0x78] sm:$0xff]
        %v5054 = vld [vmem:[#allocation9 + $0x80] sm:$0xff]
        %v5055 = vld [vmem:[#allocation9 + $0x88] sm:$0xff]
        %v5056 = vld [vmem:[#allocation9 + $0x90] sm:$0xff]
        %v5057 = vld [vmem:[#allocation9 + $0x98] sm:$0xff]
        %v5058 = vld [vmem:[#allocation9 + $0xa0] sm:$0xff]
        %v5059 = vld [vmem:[#allocation9 + $0xa8] sm:$0xff]
        %v5060 = vld [vmem:[#allocation9 + $0xb0] sm:$0xff]
        %v5061 = vld [vmem:[#allocation9 + $0xb8] sm:$0xff]
        %v5062 = vld [vmem:[#allocation9 + $0xc0] sm:$0xff]
        %v5063 = vld [vmem:[#allocation9 + $0xc8] sm:$0xff]
        %v5064 = vld [vmem:[#allocation9 + $0xd0] sm:$0xff]
        %v5065 = vld [vmem:[#allocation9 + $0xd8] sm:$0xff]
        %v5066 = vld [vmem:[#allocation9 + $0xe0] sm:$0xff]
        %v5067 = vld [vmem:[#allocation9 + $0xe8] sm:$0xff]
        %v5068 = vld [vmem:[#allocation9 + $0xf0] sm:$0xff]
        %v5069 = vld [vmem:[#allocation9 + $0xf8] sm:$0xff]
        %v5070 = vld [vmem:[#allocation9 + $0x100] sm:$0xff]
        %v5071 = vld [vmem:[#allocation9 + $0x108] sm:$0xff]
        %v5072 = vld [vmem:[#allocation9 + $0x110] sm:$0xff]
        %v5073 = vld [vmem:[#allocation9 + $0x118] sm:$0xff]
        %v5074 = vld [vmem:[#allocation9 + $0x120] sm:$0xff]
        %v5075 = vld [vmem:[#allocation9 + $0x128] sm:$0xff]
        %v5076 = vld [vmem:[#allocation9 + $0x130] sm:$0xff]
        %v5077 = vld [vmem:[#allocation9 + $0x138] sm:$0xff]
        %v5078 = vld [vmem:[#allocation9 + $0x140] sm:$0xff]
        %v5079 = vld [vmem:[#allocation9 + $0x148] sm:$0xff]
        %v5080 = vld [vmem:[#allocation9 + $0x150] sm:$0xff]
        %v5081 = vld [vmem:[#allocation9 + $0x158] sm:$0xff]
        %v5082 = vld [vmem:[#allocation9 + $0x160] sm:$0xff]
        %v5083 = vld [vmem:[#allocation9 + $0x168] sm:$0xff]
        %v5084 = vld [vmem:[#allocation9 + $0x170] sm:$0xff]
        %v5085 = vld [vmem:[#allocation9 + $0x178] sm:$0xff]
        %v5086 = vld [vmem:[#allocation9 + $0x180] sm:$0xff]
        %v5087 = vld [vmem:[#allocation9 + $0x188] sm:$0xff]
        %v5088 = vld [vmem:[#allocation9 + $0x190] sm:$0xff]
        %v5089 = vld [vmem:[#allocation9 + $0x198] sm:$0xff]
        %v5090 = vld [vmem:[#allocation9 + $0x1a0] sm:$0xff]
        %v5091 = vld [vmem:[#allocation9 + $0x1a8] sm:$0xff]
        %v5092 = vld [vmem:[#allocation9 + $0x1b0] sm:$0xff]
        %v5093 = vld [vmem:[#allocation9 + $0x1b8] sm:$0xff]
        %v5094 = vld [vmem:[#allocation9 + $0x1c0] sm:$0xff]
        %v5095 = vld [vmem:[#allocation9 + $0x1c8] sm:$0xff]
        %v5096 = vld [vmem:[#allocation9 + $0x1d0] sm:$0xff]
        %v5097 = vld [vmem:[#allocation9 + $0x1d8] sm:$0xff]
        %v5098 = vld [vmem:[#allocation9 + $0x1e0] sm:$0xff]
        %v5099 = vld [vmem:[#allocation9 + $0x1e8] sm:$0xff]
        %v5100 = vld [vmem:[#allocation9 + $0x1f0] sm:$0xff]
        %v5101 = vld [vmem:[#allocation9 + $0x1f8] sm:$0xff]
        %v5102 = vld [vmem:[#allocation9 + $0x200] sm:$0xff]
        %v5103 = vld [vmem:[#allocation9 + $0x208] sm:$0xff]
        %v5104 = vld [vmem:[#allocation9 + $0x210] sm:$0xff]
        %v5105 = vld [vmem:[#allocation9 + $0x218] sm:$0xff]
        %v5106 = vld [vmem:[#allocation9 + $0x220] sm:$0xff]
        %v5107 = vld [vmem:[#allocation9 + $0x228] sm:$0xff]
        %v5108 = vld [vmem:[#allocation9 + $0x230] sm:$0xff]
        %v5109 = vld [vmem:[#allocation9 + $0x238] sm:$0xff]
        %v5110 = vld [vmem:[#allocation9 + $0x240] sm:$0xff]
        %v5111 = vld [vmem:[#allocation9 + $0x248] sm:$0xff]
        %v5112 = vld [vmem:[#allocation9 + $0x250] sm:$0xff]
        %v5113 = vld [vmem:[#allocation9 + $0x258] sm:$0xff]
        %v5114 = vld [vmem:[#allocation9 + $0x260] sm:$0xff]
        %v5115 = vld [vmem:[#allocation9 + $0x268] sm:$0xff]
        %v5116 = vld [vmem:[#allocation9 + $0x270] sm:$0xff]
        %v5117 = vld [vmem:[#allocation9 + $0x278] sm:$0xff]
        %v5118 = vld [vmem:[#allocation9 + $0x280] sm:$0xff]
        %v5119 = vld [vmem:[#allocation9 + $0x288] sm:$0xff]
        %v5120 = vld [vmem:[#allocation9 + $0x290] sm:$0xff]
        %v5121 = vld [vmem:[#allocation9 + $0x298] sm:$0xff]
        %v5122 = vld [vmem:[#allocation9 + $0x2a0] sm:$0xff]
        %v5123 = vld [vmem:[#allocation9 + $0x2a8] sm:$0xff]
        %v5124 = vld [vmem:[#allocation9 + $0x2b0] sm:$0xff]
        %v5125 = vld [vmem:[#allocation9 + $0x2b8] sm:$0xff]
        %v5126 = vld [vmem:[#allocation9 + $0x2c0] sm:$0xff]
        %v5127 = vld [vmem:[#allocation9 + $0x2c8] sm:$0xff]
        %v5128 = vld [vmem:[#allocation9 + $0x2d0] sm:$0xff]
        %v5129 = vld [vmem:[#allocation9 + $0x2d8] sm:$0xff]
        %v5130 = vld [vmem:[#allocation9 + $0x2e0] sm:$0xff]
        %v5131 = vld [vmem:[#allocation9 + $0x2e8] sm:$0xff]
        %v5132 = vld [vmem:[#allocation9 + $0x2f0] sm:$0xff]
        %v5133 = vld [vmem:[#allocation9 + $0x2f8] sm:$0xff]
        %v5134 = vld [vmem:[#allocation9 + $0x300] sm:$0xff]
        %v5135 = vld [vmem:[#allocation9 + $0x308] sm:$0xff]
        %v5136 = vld [vmem:[#allocation9 + $0x310] sm:$0xff]
        %v5137 = vld [vmem:[#allocation9 + $0x318] sm:$0xff]
        %v5138 = vld [vmem:[#allocation9 + $0x320] sm:$0xff]
        %v5139 = vld [vmem:[#allocation9 + $0x328] sm:$0xff]
        %v5140 = vld [vmem:[#allocation9 + $0x330] sm:$0xff]
        %v5141 = vld [vmem:[#allocation9 + $0x338] sm:$0xff]
        %v5142 = vld [vmem:[#allocation9 + $0x340] sm:$0xff]
        %v5143 = vld [vmem:[#allocation9 + $0x348] sm:$0xff]
        %v5144 = vld [vmem:[#allocation9 + $0x350] sm:$0xff]
        %v5145 = vld [vmem:[#allocation9 + $0x358] sm:$0xff]
        %v5146 = vld [vmem:[#allocation9 + $0x360] sm:$0xff]
        %v5147 = vld [vmem:[#allocation9 + $0x368] sm:$0xff]
        %v5148 = vld [vmem:[#allocation9 + $0x370] sm:$0xff]
        %v5149 = vld [vmem:[#allocation9 + $0x378] sm:$0xff]
        %v5150 = vld [vmem:[#allocation9 + $0x380] sm:$0xff]
        %v5151 = vld [vmem:[#allocation9 + $0x388] sm:$0xff]
        %v5152 = vld [vmem:[#allocation9 + $0x390] sm:$0xff]
        %v5153 = vld [vmem:[#allocation9 + $0x398] sm:$0xff]
        %v5154 = vld [vmem:[#allocation9 + $0x3a0] sm:$0xff]
        %v5155 = vld [vmem:[#allocation9 + $0x3a8] sm:$0xff]
        %v5156 = vld [vmem:[#allocation9 + $0x3b0] sm:$0xff]
        %v5157 = vld [vmem:[#allocation9 + $0x3b8] sm:$0xff]
        %v5158 = vld [vmem:[#allocation9 + $0x3c0] sm:$0xff]
        %v5159 = vld [vmem:[#allocation9 + $0x3c8] sm:$0xff]
        %v5160 = vld [vmem:[#allocation9 + $0x3d0] sm:$0xff]
        %v5161 = vld [vmem:[#allocation9 + $0x3d8] sm:$0xff]
        %v5162 = vld [vmem:[#allocation9 + $0x3e0] sm:$0xff]
        %v5163 = vld [vmem:[#allocation9 + $0x3e8] sm:$0xff]
        %v5164 = vld [vmem:[#allocation9 + $0x3f0] sm:$0xff]
        %v5165 = vld [vmem:[#allocation9 + $0x3f8] sm:$0xff]
        %v5166 = vld [vmem:[#allocation10] sm:$0xf]
        %v5168 = vlaneseq
        %v5169 = vshrl.u32 %v5168, 7
        %v5170 = vsub.s32 0, %v5169
        %v5171 = vrot.slane %v5166, %v5170
        %v5172 = vlaneseq
        %v5173 = vshrl.u32 %v5172, 7
        %v5174 = vsub.s32 1, %v5173
        %v5175 = vrot.slane %v5166, %v5174
        %v5176 = vlaneseq
        %v5177 = vshrl.u32 %v5176, 7
        %v5178 = vsub.s32 2, %v5177
        %v5179 = vrot.slane %v5166, %v5178
        %v5180 = vlaneseq
        %v5181 = vshrl.u32 %v5180, 7
        %v5182 = vsub.s32 3, %v5181
        %v5183 = vrot.slane %v5166, %v5182
        %v5316 = vunpack.c.l.b16 %v5038
        %v5317 = vunpack.c.h.b16 %v5038
        %v5318 = vunpack.c.l.b16 %v5039
        %v5319 = vunpack.c.h.b16 %v5039
        %v5320 = vunpack.c.l.b16 %v5040
        %v5321 = vunpack.c.h.b16 %v5040
        %v5322 = vunpack.c.l.b16 %v5041
        %v5323 = vunpack.c.h.b16 %v5041
        %v5324 = vunpack.c.l.b16 %v5042
        %v5325 = vunpack.c.h.b16 %v5042
        %v5326 = vunpack.c.l.b16 %v5043
        %v5327 = vunpack.c.h.b16 %v5043
        %v5328 = vunpack.c.l.b16 %v5044
        %v5329 = vunpack.c.h.b16 %v5044
        %v5330 = vunpack.c.l.b16 %v5045
        %v5331 = vunpack.c.h.b16 %v5045
        %v5332 = vunpack.c.l.b16 %v5046
        %v5333 = vunpack.c.h.b16 %v5046
        %v5334 = vunpack.c.l.b16 %v5047
        %v5335 = vunpack.c.h.b16 %v5047
        %v5336 = vunpack.c.l.b16 %v5048
        %v5337 = vunpack.c.h.b16 %v5048
        %v5338 = vunpack.c.l.b16 %v5049
        %v5339 = vunpack.c.h.b16 %v5049
        %v5340 = vunpack.c.l.b16 %v5050
        %v5341 = vunpack.c.h.b16 %v5050
        %v5342 = vunpack.c.l.b16 %v5051
        %v5343 = vunpack.c.h.b16 %v5051
        %v5344 = vunpack.c.l.b16 %v5052
        %v5345 = vunpack.c.h.b16 %v5052
        %v5346 = vunpack.c.l.b16 %v5053
        %v5347 = vunpack.c.h.b16 %v5053
        %v5348 = vunpack.c.l.b16 %v5054
        %v5349 = vunpack.c.h.b16 %v5054
        %v5350 = vunpack.c.l.b16 %v5055
        %v5351 = vunpack.c.h.b16 %v5055
        %v5352 = vunpack.c.l.b16 %v5056
        %v5353 = vunpack.c.h.b16 %v5056
        %v5354 = vunpack.c.l.b16 %v5057
        %v5355 = vunpack.c.h.b16 %v5057
        %v5356 = vunpack.c.l.b16 %v5058
        %v5357 = vunpack.c.h.b16 %v5058
        %v5358 = vunpack.c.l.b16 %v5059
        %v5359 = vunpack.c.h.b16 %v5059
        %v5360 = vunpack.c.l.b16 %v5060
        %v5361 = vunpack.c.h.b16 %v5060
        %v5362 = vunpack.c.l.b16 %v5061
        %v5363 = vunpack.c.h.b16 %v5061
        %v5364 = vunpack.c.l.b16 %v5062
        %v5365 = vunpack.c.h.b16 %v5062
        %v5366 = vunpack.c.l.b16 %v5063
        %v5367 = vunpack.c.h.b16 %v5063
        %v5368 = vunpack.c.l.b16 %v5064
        %v5369 = vunpack.c.h.b16 %v5064
        %v5370 = vunpack.c.l.b16 %v5065
        %v5371 = vunpack.c.h.b16 %v5065
        %v5372 = vunpack.c.l.b16 %v5066
        %v5373 = vunpack.c.h.b16 %v5066
        %v5374 = vunpack.c.l.b16 %v5067
        %v5375 = vunpack.c.h.b16 %v5067
        %v5376 = vunpack.c.l.b16 %v5068
        %v5377 = vunpack.c.h.b16 %v5068
        %v5378 = vunpack.c.l.b16 %v5069
        %v5379 = vunpack.c.h.b16 %v5069
        %v5380 = vunpack.c.l.b16 %v5070
        %v5381 = vunpack.c.h.b16 %v5070
        %v5382 = vunpack.c.l.b16 %v5071
        %v5383 = vunpack.c.h.b16 %v5071
        %v5384 = vunpack.c.l.b16 %v5072
        %v5385 = vunpack.c.h.b16 %v5072
        %v5386 = vunpack.c.l.b16 %v5073
        %v5387 = vunpack.c.h.b16 %v5073
        %v5388 = vunpack.c.l.b16 %v5074
        %v5389 = vunpack.c.h.b16 %v5074
        %v5390 = vunpack.c.l.b16 %v5075
        %v5391 = vunpack.c.h.b16 %v5075
        %v5392 = vunpack.c.l.b16 %v5076
        %v5393 = vunpack.c.h.b16 %v5076
        %v5394 = vunpack.c.l.b16 %v5077
        %v5395 = vunpack.c.h.b16 %v5077
        %v5396 = vunpack.c.l.b16 %v5078
        %v5397 = vunpack.c.h.b16 %v5078
        %v5398 = vunpack.c.l.b16 %v5079
        %v5399 = vunpack.c.h.b16 %v5079
        %v5400 = vunpack.c.l.b16 %v5080
        %v5401 = vunpack.c.h.b16 %v5080
        %v5402 = vunpack.c.l.b16 %v5081
        %v5403 = vunpack.c.h.b16 %v5081
        %v5404 = vunpack.c.l.b16 %v5082
        %v5405 = vunpack.c.h.b16 %v5082
        %v5406 = vunpack.c.l.b16 %v5083
        %v5407 = vunpack.c.h.b16 %v5083
        %v5408 = vunpack.c.l.b16 %v5084
        %v5409 = vunpack.c.h.b16 %v5084
        %v5410 = vunpack.c.l.b16 %v5085
        %v5411 = vunpack.c.h.b16 %v5085
        %v5412 = vunpack.c.l.b16 %v5086
        %v5413 = vunpack.c.h.b16 %v5086
        %v5414 = vunpack.c.l.b16 %v5087
        %v5415 = vunpack.c.h.b16 %v5087
        %v5416 = vunpack.c.l.b16 %v5088
        %v5417 = vunpack.c.h.b16 %v5088
        %v5418 = vunpack.c.l.b16 %v5089
        %v5419 = vunpack.c.h.b16 %v5089
        %v5420 = vunpack.c.l.b16 %v5090
        %v5421 = vunpack.c.h.b16 %v5090
        %v5422 = vunpack.c.l.b16 %v5091
        %v5423 = vunpack.c.h.b16 %v5091
        %v5424 = vunpack.c.l.b16 %v5092
        %v5425 = vunpack.c.h.b16 %v5092
        %v5426 = vunpack.c.l.b16 %v5093
        %v5427 = vunpack.c.h.b16 %v5093
        %v5428 = vunpack.c.l.b16 %v5094
        %v5429 = vunpack.c.h.b16 %v5094
        %v5430 = vunpack.c.l.b16 %v5095
        %v5431 = vunpack.c.h.b16 %v5095
        %v5432 = vunpack.c.l.b16 %v5096
        %v5433 = vunpack.c.h.b16 %v5096
        %v5434 = vunpack.c.l.b16 %v5097
        %v5435 = vunpack.c.h.b16 %v5097
        %v5436 = vunpack.c.l.b16 %v5098
        %v5437 = vunpack.c.h.b16 %v5098
        %v5438 = vunpack.c.l.b16 %v5099
        %v5439 = vunpack.c.h.b16 %v5099
        %v5440 = vunpack.c.l.b16 %v5100
        %v5441 = vunpack.c.h.b16 %v5100
        %v5442 = vunpack.c.l.b16 %v5101
        %v5443 = vunpack.c.h.b16 %v5101
        %v5444 = vunpack.c.l.b16 %v5102
        %v5445 = vunpack.c.h.b16 %v5102
        %v5446 = vunpack.c.l.b16 %v5103
        %v5447 = vunpack.c.h.b16 %v5103
        %v5448 = vunpack.c.l.b16 %v5104
        %v5449 = vunpack.c.h.b16 %v5104
        %v5450 = vunpack.c.l.b16 %v5105
        %v5451 = vunpack.c.h.b16 %v5105
        %v5452 = vunpack.c.l.b16 %v5106
        %v5453 = vunpack.c.h.b16 %v5106
        %v5454 = vunpack.c.l.b16 %v5107
        %v5455 = vunpack.c.h.b16 %v5107
        %v5456 = vunpack.c.l.b16 %v5108
        %v5457 = vunpack.c.h.b16 %v5108
        %v5458 = vunpack.c.l.b16 %v5109
        %v5459 = vunpack.c.h.b16 %v5109
        %v5460 = vunpack.c.l.b16 %v5110
        %v5461 = vunpack.c.h.b16 %v5110
        %v5462 = vunpack.c.l.b16 %v5111
        %v5463 = vunpack.c.h.b16 %v5111
        %v5464 = vunpack.c.l.b16 %v5112
        %v5465 = vunpack.c.h.b16 %v5112
        %v5466 = vunpack.c.l.b16 %v5113
        %v5467 = vunpack.c.h.b16 %v5113
        %v5468 = vunpack.c.l.b16 %v5114
        %v5469 = vunpack.c.h.b16 %v5114
        %v5470 = vunpack.c.l.b16 %v5115
        %v5471 = vunpack.c.h.b16 %v5115
        %v5472 = vunpack.c.l.b16 %v5116
        %v5473 = vunpack.c.h.b16 %v5116
        %v5474 = vunpack.c.l.b16 %v5117
        %v5475 = vunpack.c.h.b16 %v5117
        %v5476 = vunpack.c.l.b16 %v5118
        %v5477 = vunpack.c.h.b16 %v5118
        %v5478 = vunpack.c.l.b16 %v5119
        %v5479 = vunpack.c.h.b16 %v5119
        %v5480 = vunpack.c.l.b16 %v5120
        %v5481 = vunpack.c.h.b16 %v5120
        %v5482 = vunpack.c.l.b16 %v5121
        %v5483 = vunpack.c.h.b16 %v5121
        %v5484 = vunpack.c.l.b16 %v5122
        %v5485 = vunpack.c.h.b16 %v5122
        %v5486 = vunpack.c.l.b16 %v5123
        %v5487 = vunpack.c.h.b16 %v5123
        %v5488 = vunpack.c.l.b16 %v5124
        %v5489 = vunpack.c.h.b16 %v5124
        %v5490 = vunpack.c.l.b16 %v5125
        %v5491 = vunpack.c.h.b16 %v5125
        %v5492 = vunpack.c.l.b16 %v5126
        %v5493 = vunpack.c.h.b16 %v5126
        %v5494 = vunpack.c.l.b16 %v5127
        %v5495 = vunpack.c.h.b16 %v5127
        %v5496 = vunpack.c.l.b16 %v5128
        %v5497 = vunpack.c.h.b16 %v5128
        %v5498 = vunpack.c.l.b16 %v5129
        %v5499 = vunpack.c.h.b16 %v5129
        %v5500 = vunpack.c.l.b16 %v5130
        %v5501 = vunpack.c.h.b16 %v5130
        %v5502 = vunpack.c.l.b16 %v5131
        %v5503 = vunpack.c.h.b16 %v5131
        %v5504 = vunpack.c.l.b16 %v5132
        %v5505 = vunpack.c.h.b16 %v5132
        %v5506 = vunpack.c.l.b16 %v5133
        %v5507 = vunpack.c.h.b16 %v5133
        %v5508 = vunpack.c.l.b16 %v5134
        %v5509 = vunpack.c.h.b16 %v5134
        %v5510 = vunpack.c.l.b16 %v5135
        %v5511 = vunpack.c.h.b16 %v5135
        %v5512 = vunpack.c.l.b16 %v5136
        %v5513 = vunpack.c.h.b16 %v5136
        %v5514 = vunpack.c.l.b16 %v5137
        %v5515 = vunpack.c.h.b16 %v5137
        %v5516 = vunpack.c.l.b16 %v5138
        %v5517 = vunpack.c.h.b16 %v5138
        %v5518 = vunpack.c.l.b16 %v5139
        %v5519 = vunpack.c.h.b16 %v5139
        %v5520 = vunpack.c.l.b16 %v5140
        %v5521 = vunpack.c.h.b16 %v5140
        %v5522 = vunpack.c.l.b16 %v5141
        %v5523 = vunpack.c.h.b16 %v5141
        %v5524 = vunpack.c.l.b16 %v5142
        %v5525 = vunpack.c.h.b16 %v5142
        %v5526 = vunpack.c.l.b16 %v5143
        %v5527 = vunpack.c.h.b16 %v5143
        %v5528 = vunpack.c.l.b16 %v5144
        %v5529 = vunpack.c.h.b16 %v5144
        %v5530 = vunpack.c.l.b16 %v5145
        %v5531 = vunpack.c.h.b16 %v5145
        %v5532 = vunpack.c.l.b16 %v5146
        %v5533 = vunpack.c.h.b16 %v5146
        %v5534 = vunpack.c.l.b16 %v5147
        %v5535 = vunpack.c.h.b16 %v5147
        %v5536 = vunpack.c.l.b16 %v5148
        %v5537 = vunpack.c.h.b16 %v5148
        %v5538 = vunpack.c.l.b16 %v5149
        %v5539 = vunpack.c.h.b16 %v5149
        %v5540 = vunpack.c.l.b16 %v5150
        %v5541 = vunpack.c.h.b16 %v5150
        %v5542 = vunpack.c.l.b16 %v5151
        %v5543 = vunpack.c.h.b16 %v5151
        %v5544 = vunpack.c.l.b16 %v5152
        %v5545 = vunpack.c.h.b16 %v5152
        %v5546 = vunpack.c.l.b16 %v5153
        %v5547 = vunpack.c.h.b16 %v5153
        %v5548 = vunpack.c.l.b16 %v5154
        %v5549 = vunpack.c.h.b16 %v5154
        %v5550 = vunpack.c.l.b16 %v5155
        %v5551 = vunpack.c.h.b16 %v5155
        %v5552 = vunpack.c.l.b16 %v5156
        %v5553 = vunpack.c.h.b16 %v5156
        %v5554 = vunpack.c.l.b16 %v5157
        %v5555 = vunpack.c.h.b16 %v5157
        %v5556 = vunpack.c.l.b16 %v5158
        %v5557 = vunpack.c.h.b16 %v5158
        %v5558 = vunpack.c.l.b16 %v5159
        %v5559 = vunpack.c.h.b16 %v5159
        %v5560 = vunpack.c.l.b16 %v5160
        %v5561 = vunpack.c.h.b16 %v5160
        %v5562 = vunpack.c.l.b16 %v5161
        %v5563 = vunpack.c.h.b16 %v5161
        %v5564 = vunpack.c.l.b16 %v5162
        %v5565 = vunpack.c.h.b16 %v5162
        %v5566 = vunpack.c.l.b16 %v5163
        %v5567 = vunpack.c.h.b16 %v5163
        %v5568 = vunpack.c.l.b16 %v5164
        %v5569 = vunpack.c.h.b16 %v5164
        %v5570 = vunpack.c.l.b16 %v5165
        %v5571 = vunpack.c.h.b16 %v5165
        %v5572 = vpack.c.b16 %v5320, %v5316
        %v5573 = vpack.c.b16 %v5321, %v5317
        %v5574 = vpack.c.b16 %v5322, %v5318
        %v5575 = vpack.c.b16 %v5323, %v5319
        %v5576 = vpack.c.b16 %v5328, %v5324
        %v5577 = vpack.c.b16 %v5329, %v5325
        %v5578 = vpack.c.b16 %v5330, %v5326
        %v5579 = vpack.c.b16 %v5331, %v5327
        %v5580 = vpack.c.b16 %v5336, %v5332
        %v5581 = vpack.c.b16 %v5337, %v5333
        %v5582 = vpack.c.b16 %v5338, %v5334
        %v5583 = vpack.c.b16 %v5339, %v5335
        %v5584 = vpack.c.b16 %v5344, %v5340
        %v5585 = vpack.c.b16 %v5345, %v5341
        %v5586 = vpack.c.b16 %v5346, %v5342
        %v5587 = vpack.c.b16 %v5347, %v5343
        %v5588 = vpack.c.b16 %v5352, %v5348
        %v5589 = vpack.c.b16 %v5353, %v5349
        %v5590 = vpack.c.b16 %v5354, %v5350
        %v5591 = vpack.c.b16 %v5355, %v5351
        %v5592 = vpack.c.b16 %v5360, %v5356
        %v5593 = vpack.c.b16 %v5361, %v5357
        %v5594 = vpack.c.b16 %v5362, %v5358
        %v5595 = vpack.c.b16 %v5363, %v5359
        %v5596 = vpack.c.b16 %v5368, %v5364
        %v5597 = vpack.c.b16 %v5369, %v5365
        %v5598 = vpack.c.b16 %v5370, %v5366
        %v5599 = vpack.c.b16 %v5371, %v5367
        %v5600 = vpack.c.b16 %v5376, %v5372
        %v5601 = vpack.c.b16 %v5377, %v5373
        %v5602 = vpack.c.b16 %v5378, %v5374
        %v5603 = vpack.c.b16 %v5379, %v5375
        %v5604 = vpack.c.b16 %v5384, %v5380
        %v5605 = vpack.c.b16 %v5385, %v5381
        %v5606 = vpack.c.b16 %v5386, %v5382
        %v5607 = vpack.c.b16 %v5387, %v5383
        %v5608 = vpack.c.b16 %v5392, %v5388
        %v5609 = vpack.c.b16 %v5393, %v5389
        %v5610 = vpack.c.b16 %v5394, %v5390
        %v5611 = vpack.c.b16 %v5395, %v5391
        %v5612 = vpack.c.b16 %v5400, %v5396
        %v5613 = vpack.c.b16 %v5401, %v5397
        %v5614 = vpack.c.b16 %v5402, %v5398
        %v5615 = vpack.c.b16 %v5403, %v5399
        %v5616 = vpack.c.b16 %v5408, %v5404
        %v5617 = vpack.c.b16 %v5409, %v5405
        %v5618 = vpack.c.b16 %v5410, %v5406
        %v5619 = vpack.c.b16 %v5411, %v5407
        %v5620 = vpack.c.b16 %v5416, %v5412
        %v5621 = vpack.c.b16 %v5417, %v5413
        %v5622 = vpack.c.b16 %v5418, %v5414
        %v5623 = vpack.c.b16 %v5419, %v5415
        %v5624 = vpack.c.b16 %v5424, %v5420
        %v5625 = vpack.c.b16 %v5425, %v5421
        %v5626 = vpack.c.b16 %v5426, %v5422
        %v5627 = vpack.c.b16 %v5427, %v5423
        %v5628 = vpack.c.b16 %v5432, %v5428
        %v5629 = vpack.c.b16 %v5433, %v5429
        %v5630 = vpack.c.b16 %v5434, %v5430
        %v5631 = vpack.c.b16 %v5435, %v5431
        %v5632 = vpack.c.b16 %v5440, %v5436
        %v5633 = vpack.c.b16 %v5441, %v5437
        %v5634 = vpack.c.b16 %v5442, %v5438
        %v5635 = vpack.c.b16 %v5443, %v5439
        %v5636 = vpack.c.b16 %v5448, %v5444
        %v5637 = vpack.c.b16 %v5449, %v5445
        %v5638 = vpack.c.b16 %v5450, %v5446
        %v5639 = vpack.c.b16 %v5451, %v5447
        %v5640 = vpack.c.b16 %v5456, %v5452
        %v5641 = vpack.c.b16 %v5457, %v5453
        %v5642 = vpack.c.b16 %v5458, %v5454
        %v5643 = vpack.c.b16 %v5459, %v5455
        %v5644 = vpack.c.b16 %v5464, %v5460
        %v5645 = vpack.c.b16 %v5465, %v5461
        %v5646 = vpack.c.b16 %v5466, %v5462
        %v5647 = vpack.c.b16 %v5467, %v5463
        %v5648 = vpack.c.b16 %v5472, %v5468
        %v5649 = vpack.c.b16 %v5473, %v5469
        %v5650 = vpack.c.b16 %v5474, %v5470
        %v5651 = vpack.c.b16 %v5475, %v5471
        %v5652 = vpack.c.b16 %v5480, %v5476
        %v5653 = vpack.c.b16 %v5481, %v5477
        %v5654 = vpack.c.b16 %v5482, %v5478
        %v5655 = vpack.c.b16 %v5483, %v5479
        %v5656 = vpack.c.b16 %v5488, %v5484
        %v5657 = vpack.c.b16 %v5489, %v5485
        %v5658 = vpack.c.b16 %v5490, %v5486
        %v5659 = vpack.c.b16 %v5491, %v5487
        %v5660 = vpack.c.b16 %v5496, %v5492
        %v5661 = vpack.c.b16 %v5497, %v5493
        %v5662 = vpack.c.b16 %v5498, %v5494
        %v5663 = vpack.c.b16 %v5499, %v5495
        %v5664 = vpack.c.b16 %v5504, %v5500
        %v5665 = vpack.c.b16 %v5505, %v5501
        %v5666 = vpack.c.b16 %v5506, %v5502
        %v5667 = vpack.c.b16 %v5507, %v5503
        %v5668 = vpack.c.b16 %v5512, %v5508
        %v5669 = vpack.c.b16 %v5513, %v5509
        %v5670 = vpack.c.b16 %v5514, %v5510
        %v5671 = vpack.c.b16 %v5515, %v5511
        %v5672 = vpack.c.b16 %v5520, %v5516
        %v5673 = vpack.c.b16 %v5521, %v5517
        %v5674 = vpack.c.b16 %v5522, %v5518
        %v5675 = vpack.c.b16 %v5523, %v5519
        %v5676 = vpack.c.b16 %v5528, %v5524
        %v5677 = vpack.c.b16 %v5529, %v5525
        %v5678 = vpack.c.b16 %v5530, %v5526
        %v5679 = vpack.c.b16 %v5531, %v5527
        %v5680 = vpack.c.b16 %v5536, %v5532
        %v5681 = vpack.c.b16 %v5537, %v5533
        %v5682 = vpack.c.b16 %v5538, %v5534
        %v5683 = vpack.c.b16 %v5539, %v5535
        %v5684 = vpack.c.b16 %v5544, %v5540
        %v5685 = vpack.c.b16 %v5545, %v5541
        %v5686 = vpack.c.b16 %v5546, %v5542
        %v5687 = vpack.c.b16 %v5547, %v5543
        %v5688 = vpack.c.b16 %v5552, %v5548
        %v5689 = vpack.c.b16 %v5553, %v5549
        %v5690 = vpack.c.b16 %v5554, %v5550
        %v5691 = vpack.c.b16 %v5555, %v5551
        %v5692 = vpack.c.b16 %v5560, %v5556
        %v5693 = vpack.c.b16 %v5561, %v5557
        %v5694 = vpack.c.b16 %v5562, %v5558
        %v5695 = vpack.c.b16 %v5563, %v5559
        %v5696 = vpack.c.b16 %v5568, %v5564
        %v5697 = vpack.c.b16 %v5569, %v5565
        %v5698 = vpack.c.b16 %v5570, %v5566
        %v5699 = vpack.c.b16 %v5571, %v5567
        %5828 = vmatprep.subr.bf16.mxu0 %v5601
        %5829 = vmatpush1.bf16.msra.mxu0 %v5600
        %5830 = vmatprep.subr.bf16.mxu0 %v5597
        %5831 = vmatpush1.bf16.msra.mxu0 %v5596
        %5832 = vmatprep.subr.bf16.mxu0 %v5593
        %5833 = vmatpush1.bf16.msra.mxu0 %v5592
        %5834 = vmatprep.subr.bf16.mxu0 %v5589
        %5835 = vmatpush1.bf16.msra.mxu0 %v5588
        %5836 = vmatprep.subr.bf16.mxu0 %v5585
        %5837 = vmatpush1.bf16.msra.mxu0 %v5584
        %5838 = vmatprep.subr.bf16.mxu0 %v5581
        %5839 = vmatpush1.bf16.msra.mxu0 %v5580
        %5840 = vmatprep.subr.bf16.mxu0 %v5577
        %5841 = vmatpush1.bf16.msra.mxu0 %v5576
        %5842 = vmatprep.subr.bf16.mxu0 %v5573
        %5843 = vmatpush1.bf16.msra.mxu0 %v5572
        %5844 = vmatprep.subr.bf16.mxu0 %v5633
        %5845 = vmatpush2.bf16.msra.mxu0 %v5632
        %5846 = vmatprep.subr.bf16.mxu0 %v5629
        %5847 = vmatpush2.bf16.msra.mxu0 %v5628
        %5848 = vmatprep.subr.bf16.mxu0 %v5625
        %5849 = vmatpush2.bf16.msra.mxu0 %v5624
        %5850 = vmatprep.subr.bf16.mxu0 %v5621
        %5851 = vmatpush2.bf16.msra.mxu0 %v5620
        %5852 = vmatprep.subr.bf16.mxu0 %v5617
        %5853 = vmatpush2.bf16.msra.mxu0 %v5616
        %5854 = vmatprep.subr.bf16.mxu0 %v5613
        %5855 = vmatpush2.bf16.msra.mxu0 %v5612
        %5856 = vmatprep.subr.bf16.mxu0 %v5609
        %5857 = vmatpush2.bf16.msra.mxu0 %v5608
        %5858 = vmatprep.subr.bf16.mxu0 %v5605
        %5859 = vmatpush2.bf16.msra.mxu0 %v5604
        %5860 = vmatprep.mubr.bf16.mxu0 %v940
        %5861 = vmatmul.mubr.bf16.gmra.mxu0 %v939
        %v5862 = vpop.f32.mrf.mxu0
        %v5863 = vadd.f32 %v5171, %v5862
        %v5864 = vpop.f32.mrf.mxu0
        %v5865 = vadd.f32 %v5175, %v5864
        %v5866 = vpop.f32.mrf.mxu0
        %v5867 = vadd.f32 %v5171, %v5866
        %v5868 = vpop.f32.mrf.mxu0
        %v5869 = vadd.f32 %v5175, %v5868
        %5870 = vdwg.mxu0
        %5871 = vmatprep.subr.bf16.mxu0 %v5665
        %5872 = vmatpush1.bf16.msra.mxu0 %v5664
        %5873 = vmatprep.subr.bf16.mxu0 %v5661
        %5874 = vmatpush1.bf16.msra.mxu0 %v5660
        %5875 = vmatprep.subr.bf16.mxu0 %v5657
        %5876 = vmatpush1.bf16.msra.mxu0 %v5656
        %5877 = vmatprep.subr.bf16.mxu0 %v5653
        %5878 = vmatpush1.bf16.msra.mxu0 %v5652
        %5879 = vmatprep.subr.bf16.mxu0 %v5649
        %5880 = vmatpush1.bf16.msra.mxu0 %v5648
        %5881 = vmatprep.subr.bf16.mxu0 %v5645
        %5882 = vmatpush1.bf16.msra.mxu0 %v5644
        %5883 = vmatprep.subr.bf16.mxu0 %v5641
        %5884 = vmatpush1.bf16.msra.mxu0 %v5640
        %5885 = vmatprep.subr.bf16.mxu0 %v5637
        %5886 = vmatpush1.bf16.msra.mxu0 %v5636
        %5887 = vmatprep.subr.bf16.mxu0 %v5697
        %5888 = vmatpush2.bf16.msra.mxu0 %v5696
        %5889 = vmatprep.subr.bf16.mxu0 %v5693
        %5890 = vmatpush2.bf16.msra.mxu0 %v5692
        %5891 = vmatprep.subr.bf16.mxu0 %v5689
        %5892 = vmatpush2.bf16.msra.mxu0 %v5688
        %5893 = vmatprep.subr.bf16.mxu0 %v5685
        %5894 = vmatpush2.bf16.msra.mxu0 %v5684
        %5895 = vmatprep.subr.bf16.mxu0 %v5681
        %5896 = vmatpush2.bf16.msra.mxu0 %v5680
        %5897 = vmatprep.subr.bf16.mxu0 %v5677
        %5898 = vmatpush2.bf16.msra.mxu0 %v5676
        %5899 = vmatprep.subr.bf16.mxu0 %v5673
        %5900 = vmatpush2.bf16.msra.mxu0 %v5672
        %5901 = vmatprep.subr.bf16.mxu0 %v5669
        %5902 = vmatpush2.bf16.msra.mxu0 %v5668
        %5903 = vmatprep.mubr.bf16.mxu0 %v942
        %5904 = vmatmul.mubr.bf16.gmra.mxu0 %v941
        %v5905 = vpop.f32.mrf.mxu0
        %v5906 = vadd.f32 %v5863, %v5905
        %v5907 = vpop.f32.mrf.mxu0
        %v5908 = vadd.f32 %v5865, %v5907
        %v5909 = vpop.f32.mrf.mxu0
        %v5910 = vadd.f32 %v5867, %v5909
        %v5911 = vpop.f32.mrf.mxu0
        %v5912 = vadd.f32 %v5869, %v5911
        %5913 = vdwg.mxu0
        %5914 = vmatprep.subr.bf16.mxu0 %v5603
        %5915 = vmatpush1.bf16.msra.mxu0 %v5602
        %5916 = vmatprep.subr.bf16.mxu0 %v5599
        %5917 = vmatpush1.bf16.msra.mxu0 %v5598
        %5918 = vmatprep.subr.bf16.mxu0 %v5595
        %5919 = vmatpush1.bf16.msra.mxu0 %v5594
        %5920 = vmatprep.subr.bf16.mxu0 %v5591
        %5921 = vmatpush1.bf16.msra.mxu0 %v5590
        %5922 = vmatprep.subr.bf16.mxu0 %v5587
        %5923 = vmatpush1.bf16.msra.mxu0 %v5586
        %5924 = vmatprep.subr.bf16.mxu0 %v5583
        %5925 = vmatpush1.bf16.msra.mxu0 %v5582
        %5926 = vmatprep.subr.bf16.mxu0 %v5579
        %5927 = vmatpush1.bf16.msra.mxu0 %v5578
        %5928 = vmatprep.subr.bf16.mxu0 %v5575
        %5929 = vmatpush1.bf16.msra.mxu0 %v5574
        %5930 = vmatprep.subr.bf16.mxu0 %v5635
        %5931 = vmatpush2.bf16.msra.mxu0 %v5634
        %5932 = vmatprep.subr.bf16.mxu0 %v5631
        %5933 = vmatpush2.bf16.msra.mxu0 %v5630
        %5934 = vmatprep.subr.bf16.mxu0 %v5627
        %5935 = vmatpush2.bf16.msra.mxu0 %v5626
        %5936 = vmatprep.subr.bf16.mxu0 %v5623
        %5937 = vmatpush2.bf16.msra.mxu0 %v5622
        %5938 = vmatprep.subr.bf16.mxu0 %v5619
        %5939 = vmatpush2.bf16.msra.mxu0 %v5618
        %5940 = vmatprep.subr.bf16.mxu0 %v5615
        %5941 = vmatpush2.bf16.msra.mxu0 %v5614
        %5942 = vmatprep.subr.bf16.mxu0 %v5611
        %5943 = vmatpush2.bf16.msra.mxu0 %v5610
        %5944 = vmatprep.subr.bf16.mxu0 %v5607
        %5945 = vmatpush2.bf16.msra.mxu0 %v5606
        %5946 = vmatprep.mubr.bf16.mxu0 %v940
        %5947 = vmatmul.mubr.bf16.gmra.mxu0 %v939
        %v5948 = vpop.f32.mrf.mxu0
        %v5949 = vadd.f32 %v5179, %v5948
        %v5950 = vpop.f32.mrf.mxu0
        %v5951 = vadd.f32 %v5183, %v5950
        %v5952 = vpop.f32.mrf.mxu0
        %v5953 = vadd.f32 %v5179, %v5952
        %v5954 = vpop.f32.mrf.mxu0
        %v5955 = vadd.f32 %v5183, %v5954
        %5956 = vdwg.mxu0
        %5957 = vmatprep.subr.bf16.mxu0 %v5667
        %5958 = vmatpush1.bf16.msra.mxu0 %v5666
        %5959 = vmatprep.subr.bf16.mxu0 %v5663
        %5960 = vmatpush1.bf16.msra.mxu0 %v5662
        %5961 = vmatprep.subr.bf16.mxu0 %v5659
        %5962 = vmatpush1.bf16.msra.mxu0 %v5658
        %5963 = vmatprep.subr.bf16.mxu0 %v5655
        %5964 = vmatpush1.bf16.msra.mxu0 %v5654
        %5965 = vmatprep.subr.bf16.mxu0 %v5651
        %5966 = vmatpush1.bf16.msra.mxu0 %v5650
        %5967 = vmatprep.subr.bf16.mxu0 %v5647
        %5968 = vmatpush1.bf16.msra.mxu0 %v5646
        %5969 = vmatprep.subr.bf16.mxu0 %v5643
        %5970 = vmatpush1.bf16.msra.mxu0 %v5642
        %5971 = vmatprep.subr.bf16.mxu0 %v5639
        %5972 = vmatpush1.bf16.msra.mxu0 %v5638
        %5973 = vmatprep.subr.bf16.mxu0 %v5699
        %5974 = vmatpush2.bf16.msra.mxu0 %v5698
        %5975 = vmatprep.subr.bf16.mxu0 %v5695
        %5976 = vmatpush2.bf16.msra.mxu0 %v5694
        %5977 = vmatprep.subr.bf16.mxu0 %v5691
        %5978 = vmatpush2.bf16.msra.mxu0 %v5690
        %5979 = vmatprep.subr.bf16.mxu0 %v5687
        %5980 = vmatpush2.bf16.msra.mxu0 %v5686
        %5981 = vmatprep.subr.bf16.mxu0 %v5683
        %5982 = vmatpush2.bf16.msra.mxu0 %v5682
        %5983 = vmatprep.subr.bf16.mxu0 %v5679
        %5984 = vmatpush2.bf16.msra.mxu0 %v5678
        %5985 = vmatprep.subr.bf16.mxu0 %v5675
        %5986 = vmatpush2.bf16.msra.mxu0 %v5674
        %5987 = vmatprep.subr.bf16.mxu0 %v5671
        %5988 = vmatpush2.bf16.msra.mxu0 %v5670
        %5989 = vmatprep.mubr.bf16.mxu0 %v942
        %5990 = vmatmul.mubr.bf16.gmra.mxu0 %v941
        %v5991 = vpop.f32.mrf.mxu0
        %v5992 = vadd.f32 %v5949, %v5991
        %v5993 = vpop.f32.mrf.mxu0
        %v5994 = vadd.f32 %v5951, %v5993
        %v5995 = vpop.f32.mrf.mxu0
        %v5996 = vadd.f32 %v5953, %v5995
        %v5997 = vpop.f32.mrf.mxu0
        %v5998 = vadd.f32 %v5955, %v5997
        %5999 = vdwg.mxu0
        %v6000 = vld [vmem:[#allocation12] sm:$0xff]
        %v6001 = vld [vmem:[#allocation12 + $0x8] sm:$0xff]
        %v6002 = vld [vmem:[#allocation12 + $0x10] sm:$0xff]
        %v6003 = vld [vmem:[#allocation12 + $0x18] sm:$0xff]
        %v6004 = vld [vmem:[#allocation12 + $0x20] sm:$0xff]
        %v6005 = vld [vmem:[#allocation12 + $0x28] sm:$0xff]
        %v6006 = vld [vmem:[#allocation12 + $0x30] sm:$0xff]
        %v6007 = vld [vmem:[#allocation12 + $0x38] sm:$0xff]
        %v6008 = vld [vmem:[#allocation12 + $0x40] sm:$0xff]
        %v6009 = vld [vmem:[#allocation12 + $0x48] sm:$0xff]
        %v6010 = vld [vmem:[#allocation12 + $0x50] sm:$0xff]
        %v6011 = vld [vmem:[#allocation12 + $0x58] sm:$0xff]
        %v6012 = vld [vmem:[#allocation12 + $0x60] sm:$0xff]
        %v6013 = vld [vmem:[#allocation12 + $0x68] sm:$0xff]
        %v6014 = vld [vmem:[#allocation12 + $0x70] sm:$0xff]
        %v6015 = vld [vmem:[#allocation12 + $0x78] sm:$0xff]
        %v6016 = vld [vmem:[#allocation12 + $0x80] sm:$0xff]
        %v6017 = vld [vmem:[#allocation12 + $0x88] sm:$0xff]
        %v6018 = vld [vmem:[#allocation12 + $0x90] sm:$0xff]
        %v6019 = vld [vmem:[#allocation12 + $0x98] sm:$0xff]
        %v6020 = vld [vmem:[#allocation12 + $0xa0] sm:$0xff]
        %v6021 = vld [vmem:[#allocation12 + $0xa8] sm:$0xff]
        %v6022 = vld [vmem:[#allocation12 + $0xb0] sm:$0xff]
        %v6023 = vld [vmem:[#allocation12 + $0xb8] sm:$0xff]
        %v6024 = vld [vmem:[#allocation12 + $0xc0] sm:$0xff]
        %v6025 = vld [vmem:[#allocation12 + $0xc8] sm:$0xff]
        %v6026 = vld [vmem:[#allocation12 + $0xd0] sm:$0xff]
        %v6027 = vld [vmem:[#allocation12 + $0xd8] sm:$0xff]
        %v6028 = vld [vmem:[#allocation12 + $0xe0] sm:$0xff]
        %v6029 = vld [vmem:[#allocation12 + $0xe8] sm:$0xff]
        %v6030 = vld [vmem:[#allocation12 + $0xf0] sm:$0xff]
        %v6031 = vld [vmem:[#allocation12 + $0xf8] sm:$0xff]
        %v6032 = vld [vmem:[#allocation12 + $0x100] sm:$0xff]
        %v6033 = vld [vmem:[#allocation12 + $0x108] sm:$0xff]
        %v6034 = vld [vmem:[#allocation12 + $0x110] sm:$0xff]
        %v6035 = vld [vmem:[#allocation12 + $0x118] sm:$0xff]
        %v6036 = vld [vmem:[#allocation12 + $0x120] sm:$0xff]
        %v6037 = vld [vmem:[#allocation12 + $0x128] sm:$0xff]
        %v6038 = vld [vmem:[#allocation12 + $0x130] sm:$0xff]
        %v6039 = vld [vmem:[#allocation12 + $0x138] sm:$0xff]
        %v6040 = vld [vmem:[#allocation12 + $0x140] sm:$0xff]
        %v6041 = vld [vmem:[#allocation12 + $0x148] sm:$0xff]
        %v6042 = vld [vmem:[#allocation12 + $0x150] sm:$0xff]
        %v6043 = vld [vmem:[#allocation12 + $0x158] sm:$0xff]
        %v6044 = vld [vmem:[#allocation12 + $0x160] sm:$0xff]
        %v6045 = vld [vmem:[#allocation12 + $0x168] sm:$0xff]
        %v6046 = vld [vmem:[#allocation12 + $0x170] sm:$0xff]
        %v6047 = vld [vmem:[#allocation12 + $0x178] sm:$0xff]
        %v6048 = vld [vmem:[#allocation12 + $0x180] sm:$0xff]
        %v6049 = vld [vmem:[#allocation12 + $0x188] sm:$0xff]
        %v6050 = vld [vmem:[#allocation12 + $0x190] sm:$0xff]
        %v6051 = vld [vmem:[#allocation12 + $0x198] sm:$0xff]
        %v6052 = vld [vmem:[#allocation12 + $0x1a0] sm:$0xff]
        %v6053 = vld [vmem:[#allocation12 + $0x1a8] sm:$0xff]
        %v6054 = vld [vmem:[#allocation12 + $0x1b0] sm:$0xff]
        %v6055 = vld [vmem:[#allocation12 + $0x1b8] sm:$0xff]
        %v6056 = vld [vmem:[#allocation12 + $0x1c0] sm:$0xff]
        %v6057 = vld [vmem:[#allocation12 + $0x1c8] sm:$0xff]
        %v6058 = vld [vmem:[#allocation12 + $0x1d0] sm:$0xff]
        %v6059 = vld [vmem:[#allocation12 + $0x1d8] sm:$0xff]
        %v6060 = vld [vmem:[#allocation12 + $0x1e0] sm:$0xff]
        %v6061 = vld [vmem:[#allocation12 + $0x1e8] sm:$0xff]
        %v6062 = vld [vmem:[#allocation12 + $0x1f0] sm:$0xff]
        %v6063 = vld [vmem:[#allocation12 + $0x1f8] sm:$0xff]
        %v6064 = vld [vmem:[#allocation12 + $0x200] sm:$0xff]
        %v6065 = vld [vmem:[#allocation12 + $0x208] sm:$0xff]
        %v6066 = vld [vmem:[#allocation12 + $0x210] sm:$0xff]
        %v6067 = vld [vmem:[#allocation12 + $0x218] sm:$0xff]
        %v6068 = vld [vmem:[#allocation12 + $0x220] sm:$0xff]
        %v6069 = vld [vmem:[#allocation12 + $0x228] sm:$0xff]
        %v6070 = vld [vmem:[#allocation12 + $0x230] sm:$0xff]
        %v6071 = vld [vmem:[#allocation12 + $0x238] sm:$0xff]
        %v6072 = vld [vmem:[#allocation12 + $0x240] sm:$0xff]
        %v6073 = vld [vmem:[#allocation12 + $0x248] sm:$0xff]
        %v6074 = vld [vmem:[#allocation12 + $0x250] sm:$0xff]
        %v6075 = vld [vmem:[#allocation12 + $0x258] sm:$0xff]
        %v6076 = vld [vmem:[#allocation12 + $0x260] sm:$0xff]
        %v6077 = vld [vmem:[#allocation12 + $0x268] sm:$0xff]
        %v6078 = vld [vmem:[#allocation12 + $0x270] sm:$0xff]
        %v6079 = vld [vmem:[#allocation12 + $0x278] sm:$0xff]
        %v6080 = vld [vmem:[#allocation12 + $0x280] sm:$0xff]
        %v6081 = vld [vmem:[#allocation12 + $0x288] sm:$0xff]
        %v6082 = vld [vmem:[#allocation12 + $0x290] sm:$0xff]
        %v6083 = vld [vmem:[#allocation12 + $0x298] sm:$0xff]
        %v6084 = vld [vmem:[#allocation12 + $0x2a0] sm:$0xff]
        %v6085 = vld [vmem:[#allocation12 + $0x2a8] sm:$0xff]
        %v6086 = vld [vmem:[#allocation12 + $0x2b0] sm:$0xff]
        %v6087 = vld [vmem:[#allocation12 + $0x2b8] sm:$0xff]
        %v6088 = vld [vmem:[#allocation12 + $0x2c0] sm:$0xff]
        %v6089 = vld [vmem:[#allocation12 + $0x2c8] sm:$0xff]
        %v6090 = vld [vmem:[#allocation12 + $0x2d0] sm:$0xff]
        %v6091 = vld [vmem:[#allocation12 + $0x2d8] sm:$0xff]
        %v6092 = vld [vmem:[#allocation12 + $0x2e0] sm:$0xff]
        %v6093 = vld [vmem:[#allocation12 + $0x2e8] sm:$0xff]
        %v6094 = vld [vmem:[#allocation12 + $0x2f0] sm:$0xff]
        %v6095 = vld [vmem:[#allocation12 + $0x2f8] sm:$0xff]
        %v6096 = vld [vmem:[#allocation12 + $0x300] sm:$0xff]
        %v6097 = vld [vmem:[#allocation12 + $0x308] sm:$0xff]
        %v6098 = vld [vmem:[#allocation12 + $0x310] sm:$0xff]
        %v6099 = vld [vmem:[#allocation12 + $0x318] sm:$0xff]
        %v6100 = vld [vmem:[#allocation12 + $0x320] sm:$0xff]
        %v6101 = vld [vmem:[#allocation12 + $0x328] sm:$0xff]
        %v6102 = vld [vmem:[#allocation12 + $0x330] sm:$0xff]
        %v6103 = vld [vmem:[#allocation12 + $0x338] sm:$0xff]
        %v6104 = vld [vmem:[#allocation12 + $0x340] sm:$0xff]
        %v6105 = vld [vmem:[#allocation12 + $0x348] sm:$0xff]
        %v6106 = vld [vmem:[#allocation12 + $0x350] sm:$0xff]
        %v6107 = vld [vmem:[#allocation12 + $0x358] sm:$0xff]
        %v6108 = vld [vmem:[#allocation12 + $0x360] sm:$0xff]
        %v6109 = vld [vmem:[#allocation12 + $0x368] sm:$0xff]
        %v6110 = vld [vmem:[#allocation12 + $0x370] sm:$0xff]
        %v6111 = vld [vmem:[#allocation12 + $0x378] sm:$0xff]
        %v6112 = vld [vmem:[#allocation12 + $0x380] sm:$0xff]
        %v6113 = vld [vmem:[#allocation12 + $0x388] sm:$0xff]
        %v6114 = vld [vmem:[#allocation12 + $0x390] sm:$0xff]
        %v6115 = vld [vmem:[#allocation12 + $0x398] sm:$0xff]
        %v6116 = vld [vmem:[#allocation12 + $0x3a0] sm:$0xff]
        %v6117 = vld [vmem:[#allocation12 + $0x3a8] sm:$0xff]
        %v6118 = vld [vmem:[#allocation12 + $0x3b0] sm:$0xff]
        %v6119 = vld [vmem:[#allocation12 + $0x3b8] sm:$0xff]
        %v6120 = vld [vmem:[#allocation12 + $0x3c0] sm:$0xff]
        %v6121 = vld [vmem:[#allocation12 + $0x3c8] sm:$0xff]
        %v6122 = vld [vmem:[#allocation12 + $0x3d0] sm:$0xff]
        %v6123 = vld [vmem:[#allocation12 + $0x3d8] sm:$0xff]
        %v6124 = vld [vmem:[#allocation12 + $0x3e0] sm:$0xff]
        %v6125 = vld [vmem:[#allocation12 + $0x3e8] sm:$0xff]
        %v6126 = vld [vmem:[#allocation12 + $0x3f0] sm:$0xff]
        %v6127 = vld [vmem:[#allocation12 + $0x3f8] sm:$0xff]
        %v6128 = vld [vmem:[#allocation12 + $0x400] sm:$0xff]
        %v6129 = vld [vmem:[#allocation12 + $0x408] sm:$0xff]
        %v6130 = vld [vmem:[#allocation12 + $0x410] sm:$0xff]
        %v6131 = vld [vmem:[#allocation12 + $0x418] sm:$0xff]
        %v6132 = vld [vmem:[#allocation12 + $0x420] sm:$0xff]
        %v6133 = vld [vmem:[#allocation12 + $0x428] sm:$0xff]
        %v6134 = vld [vmem:[#allocation12 + $0x430] sm:$0xff]
        %v6135 = vld [vmem:[#allocation12 + $0x438] sm:$0xff]
        %v6136 = vld [vmem:[#allocation12 + $0x440] sm:$0xff]
        %v6137 = vld [vmem:[#allocation12 + $0x448] sm:$0xff]
        %v6138 = vld [vmem:[#allocation12 + $0x450] sm:$0xff]
        %v6139 = vld [vmem:[#allocation12 + $0x458] sm:$0xff]
        %v6140 = vld [vmem:[#allocation12 + $0x460] sm:$0xff]
        %v6141 = vld [vmem:[#allocation12 + $0x468] sm:$0xff]
        %v6142 = vld [vmem:[#allocation12 + $0x470] sm:$0xff]
        %v6143 = vld [vmem:[#allocation12 + $0x478] sm:$0xff]
        %v6144 = vld [vmem:[#allocation12 + $0x480] sm:$0xff]
        %v6145 = vld [vmem:[#allocation12 + $0x488] sm:$0xff]
        %v6146 = vld [vmem:[#allocation12 + $0x490] sm:$0xff]
        %v6147 = vld [vmem:[#allocation12 + $0x498] sm:$0xff]
        %v6148 = vld [vmem:[#allocation12 + $0x4a0] sm:$0xff]
        %v6149 = vld [vmem:[#allocation12 + $0x4a8] sm:$0xff]
        %v6150 = vld [vmem:[#allocation12 + $0x4b0] sm:$0xff]
        %v6151 = vld [vmem:[#allocation12 + $0x4b8] sm:$0xff]
        %v6152 = vld [vmem:[#allocation12 + $0x4c0] sm:$0xff]
        %v6153 = vld [vmem:[#allocation12 + $0x4c8] sm:$0xff]
        %v6154 = vld [vmem:[#allocation12 + $0x4d0] sm:$0xff]
        %v6155 = vld [vmem:[#allocation12 + $0x4d8] sm:$0xff]
        %v6156 = vld [vmem:[#allocation12 + $0x4e0] sm:$0xff]
        %v6157 = vld [vmem:[#allocation12 + $0x4e8] sm:$0xff]
        %v6158 = vld [vmem:[#allocation12 + $0x4f0] sm:$0xff]
        %v6159 = vld [vmem:[#allocation12 + $0x4f8] sm:$0xff]
        %v6160 = vld [vmem:[#allocation12 + $0x500] sm:$0xff]
        %v6161 = vld [vmem:[#allocation12 + $0x508] sm:$0xff]
        %v6162 = vld [vmem:[#allocation12 + $0x510] sm:$0xff]
        %v6163 = vld [vmem:[#allocation12 + $0x518] sm:$0xff]
        %v6164 = vld [vmem:[#allocation12 + $0x520] sm:$0xff]
        %v6165 = vld [vmem:[#allocation12 + $0x528] sm:$0xff]
        %v6166 = vld [vmem:[#allocation12 + $0x530] sm:$0xff]
        %v6167 = vld [vmem:[#allocation12 + $0x538] sm:$0xff]
        %v6168 = vld [vmem:[#allocation12 + $0x540] sm:$0xff]
        %v6169 = vld [vmem:[#allocation12 + $0x548] sm:$0xff]
        %v6170 = vld [vmem:[#allocation12 + $0x550] sm:$0xff]
        %v6171 = vld [vmem:[#allocation12 + $0x558] sm:$0xff]
        %v6172 = vld [vmem:[#allocation12 + $0x560] sm:$0xff]
        %v6173 = vld [vmem:[#allocation12 + $0x568] sm:$0xff]
        %v6174 = vld [vmem:[#allocation12 + $0x570] sm:$0xff]
        %v6175 = vld [vmem:[#allocation12 + $0x578] sm:$0xff]
        %v6176 = vld [vmem:[#allocation12 + $0x580] sm:$0xff]
        %v6177 = vld [vmem:[#allocation12 + $0x588] sm:$0xff]
        %v6178 = vld [vmem:[#allocation12 + $0x590] sm:$0xff]
        %v6179 = vld [vmem:[#allocation12 + $0x598] sm:$0xff]
        %v6180 = vld [vmem:[#allocation12 + $0x5a0] sm:$0xff]
        %v6181 = vld [vmem:[#allocation12 + $0x5a8] sm:$0xff]
        %v6182 = vld [vmem:[#allocation12 + $0x5b0] sm:$0xff]
        %v6183 = vld [vmem:[#allocation12 + $0x5b8] sm:$0xff]
        %v6184 = vld [vmem:[#allocation12 + $0x5c0] sm:$0xff]
        %v6185 = vld [vmem:[#allocation12 + $0x5c8] sm:$0xff]
        %v6186 = vld [vmem:[#allocation12 + $0x5d0] sm:$0xff]
        %v6187 = vld [vmem:[#allocation12 + $0x5d8] sm:$0xff]
        %v6188 = vld [vmem:[#allocation12 + $0x5e0] sm:$0xff]
        %v6189 = vld [vmem:[#allocation12 + $0x5e8] sm:$0xff]
        %v6190 = vld [vmem:[#allocation12 + $0x5f0] sm:$0xff]
        %v6191 = vld [vmem:[#allocation12 + $0x5f8] sm:$0xff]
        %v6192 = vld [vmem:[#allocation12 + $0x600] sm:$0xff]
        %v6193 = vld [vmem:[#allocation12 + $0x608] sm:$0xff]
        %v6194 = vld [vmem:[#allocation12 + $0x610] sm:$0xff]
        %v6195 = vld [vmem:[#allocation12 + $0x618] sm:$0xff]
        %v6196 = vld [vmem:[#allocation12 + $0x620] sm:$0xff]
        %v6197 = vld [vmem:[#allocation12 + $0x628] sm:$0xff]
        %v6198 = vld [vmem:[#allocation12 + $0x630] sm:$0xff]
        %v6199 = vld [vmem:[#allocation12 + $0x638] sm:$0xff]
        %v6200 = vld [vmem:[#allocation12 + $0x640] sm:$0xff]
        %v6201 = vld [vmem:[#allocation12 + $0x648] sm:$0xff]
        %v6202 = vld [vmem:[#allocation12 + $0x650] sm:$0xff]
        %v6203 = vld [vmem:[#allocation12 + $0x658] sm:$0xff]
        %v6204 = vld [vmem:[#allocation12 + $0x660] sm:$0xff]
        %v6205 = vld [vmem:[#allocation12 + $0x668] sm:$0xff]
        %v6206 = vld [vmem:[#allocation12 + $0x670] sm:$0xff]
        %v6207 = vld [vmem:[#allocation12 + $0x678] sm:$0xff]
        %v6208 = vld [vmem:[#allocation12 + $0x680] sm:$0xff]
        %v6209 = vld [vmem:[#allocation12 + $0x688] sm:$0xff]
        %v6210 = vld [vmem:[#allocation12 + $0x690] sm:$0xff]
        %v6211 = vld [vmem:[#allocation12 + $0x698] sm:$0xff]
        %v6212 = vld [vmem:[#allocation12 + $0x6a0] sm:$0xff]
        %v6213 = vld [vmem:[#allocation12 + $0x6a8] sm:$0xff]
        %v6214 = vld [vmem:[#allocation12 + $0x6b0] sm:$0xff]
        %v6215 = vld [vmem:[#allocation12 + $0x6b8] sm:$0xff]
        %v6216 = vld [vmem:[#allocation12 + $0x6c0] sm:$0xff]
        %v6217 = vld [vmem:[#allocation12 + $0x6c8] sm:$0xff]
        %v6218 = vld [vmem:[#allocation12 + $0x6d0] sm:$0xff]
        %v6219 = vld [vmem:[#allocation12 + $0x6d8] sm:$0xff]
        %v6220 = vld [vmem:[#allocation12 + $0x6e0] sm:$0xff]
        %v6221 = vld [vmem:[#allocation12 + $0x6e8] sm:$0xff]
        %v6222 = vld [vmem:[#allocation12 + $0x6f0] sm:$0xff]
        %v6223 = vld [vmem:[#allocation12 + $0x6f8] sm:$0xff]
        %v6224 = vld [vmem:[#allocation12 + $0x700] sm:$0xff]
        %v6225 = vld [vmem:[#allocation12 + $0x708] sm:$0xff]
        %v6226 = vld [vmem:[#allocation12 + $0x710] sm:$0xff]
        %v6227 = vld [vmem:[#allocation12 + $0x718] sm:$0xff]
        %v6228 = vld [vmem:[#allocation12 + $0x720] sm:$0xff]
        %v6229 = vld [vmem:[#allocation12 + $0x728] sm:$0xff]
        %v6230 = vld [vmem:[#allocation12 + $0x730] sm:$0xff]
        %v6231 = vld [vmem:[#allocation12 + $0x738] sm:$0xff]
        %v6232 = vld [vmem:[#allocation12 + $0x740] sm:$0xff]
        %v6233 = vld [vmem:[#allocation12 + $0x748] sm:$0xff]
        %v6234 = vld [vmem:[#allocation12 + $0x750] sm:$0xff]
        %v6235 = vld [vmem:[#allocation12 + $0x758] sm:$0xff]
        %v6236 = vld [vmem:[#allocation12 + $0x760] sm:$0xff]
        %v6237 = vld [vmem:[#allocation12 + $0x768] sm:$0xff]
        %v6238 = vld [vmem:[#allocation12 + $0x770] sm:$0xff]
        %v6239 = vld [vmem:[#allocation12 + $0x778] sm:$0xff]
        %v6240 = vld [vmem:[#allocation12 + $0x780] sm:$0xff]
        %v6241 = vld [vmem:[#allocation12 + $0x788] sm:$0xff]
        %v6242 = vld [vmem:[#allocation12 + $0x790] sm:$0xff]
        %v6243 = vld [vmem:[#allocation12 + $0x798] sm:$0xff]
        %v6244 = vld [vmem:[#allocation12 + $0x7a0] sm:$0xff]
        %v6245 = vld [vmem:[#allocation12 + $0x7a8] sm:$0xff]
        %v6246 = vld [vmem:[#allocation12 + $0x7b0] sm:$0xff]
        %v6247 = vld [vmem:[#allocation12 + $0x7b8] sm:$0xff]
        %v6248 = vld [vmem:[#allocation12 + $0x7c0] sm:$0xff]
        %v6249 = vld [vmem:[#allocation12 + $0x7c8] sm:$0xff]
        %v6250 = vld [vmem:[#allocation12 + $0x7d0] sm:$0xff]
        %v6251 = vld [vmem:[#allocation12 + $0x7d8] sm:$0xff]
        %v6252 = vld [vmem:[#allocation12 + $0x7e0] sm:$0xff]
        %v6253 = vld [vmem:[#allocation12 + $0x7e8] sm:$0xff]
        %v6254 = vld [vmem:[#allocation12 + $0x7f0] sm:$0xff]
        %v6255 = vld [vmem:[#allocation12 + $0x7f8] sm:$0xff]
        %v6256 = vld [vmem:[#allocation13] sm:$0xff]
        %v6258 = vlaneseq
        %v6259 = vshrl.u32 %v6258, 7
        %v6260 = vsub.s32 0, %v6259
        %v6261 = vrot.slane %v6256, %v6260
        %v6262 = vlaneseq
        %v6263 = vshrl.u32 %v6262, 7
        %v6264 = vsub.s32 1, %v6263
        %v6265 = vrot.slane %v6256, %v6264
        %v6266 = vlaneseq
        %v6267 = vshrl.u32 %v6266, 7
        %v6268 = vsub.s32 2, %v6267
        %v6269 = vrot.slane %v6256, %v6268
        %v6270 = vlaneseq
        %v6271 = vshrl.u32 %v6270, 7
        %v6272 = vsub.s32 3, %v6271
        %v6273 = vrot.slane %v6256, %v6272
        %v6274 = vlaneseq
        %v6275 = vshrl.u32 %v6274, 7
        %v6276 = vsub.s32 4, %v6275
        %v6277 = vrot.slane %v6256, %v6276
        %v6278 = vlaneseq
        %v6279 = vshrl.u32 %v6278, 7
        %v6280 = vsub.s32 5, %v6279
        %v6281 = vrot.slane %v6256, %v6280
        %v6282 = vlaneseq
        %v6283 = vshrl.u32 %v6282, 7
        %v6284 = vsub.s32 6, %v6283
        %v6285 = vrot.slane %v6256, %v6284
        %v6286 = vlaneseq
        %v6287 = vshrl.u32 %v6286, 7
        %v6288 = vsub.s32 7, %v6287
        %v6289 = vrot.slane %v6256, %v6288
        %v6554 = vunpack.c.l.b16 %v6000
        %v6555 = vunpack.c.h.b16 %v6000
        %v6556 = vunpack.c.l.b16 %v6001
        %v6557 = vunpack.c.h.b16 %v6001
        %v6558 = vunpack.c.l.b16 %v6002
        %v6559 = vunpack.c.h.b16 %v6002
        %v6560 = vunpack.c.l.b16 %v6003
        %v6561 = vunpack.c.h.b16 %v6003
        %v6562 = vunpack.c.l.b16 %v6004
        %v6563 = vunpack.c.h.b16 %v6004
        %v6564 = vunpack.c.l.b16 %v6005
        %v6565 = vunpack.c.h.b16 %v6005
        %v6566 = vunpack.c.l.b16 %v6006
        %v6567 = vunpack.c.h.b16 %v6006
        %v6568 = vunpack.c.l.b16 %v6007
        %v6569 = vunpack.c.h.b16 %v6007
        %v6570 = vunpack.c.l.b16 %v6008
        %v6571 = vunpack.c.h.b16 %v6008
        %v6572 = vunpack.c.l.b16 %v6009
        %v6573 = vunpack.c.h.b16 %v6009
        %v6574 = vunpack.c.l.b16 %v6010
        %v6575 = vunpack.c.h.b16 %v6010
        %v6576 = vunpack.c.l.b16 %v6011
        %v6577 = vunpack.c.h.b16 %v6011
        %v6578 = vunpack.c.l.b16 %v6012
        %v6579 = vunpack.c.h.b16 %v6012
        %v6580 = vunpack.c.l.b16 %v6013
        %v6581 = vunpack.c.h.b16 %v6013
        %v6582 = vunpack.c.l.b16 %v6014
        %v6583 = vunpack.c.h.b16 %v6014
        %v6584 = vunpack.c.l.b16 %v6015
        %v6585 = vunpack.c.h.b16 %v6015
        %v6586 = vunpack.c.l.b16 %v6016
        %v6587 = vunpack.c.h.b16 %v6016
        %v6588 = vunpack.c.l.b16 %v6017
        %v6589 = vunpack.c.h.b16 %v6017
        %v6590 = vunpack.c.l.b16 %v6018
        %v6591 = vunpack.c.h.b16 %v6018
        %v6592 = vunpack.c.l.b16 %v6019
        %v6593 = vunpack.c.h.b16 %v6019
        %v6594 = vunpack.c.l.b16 %v6020
        %v6595 = vunpack.c.h.b16 %v6020
        %v6596 = vunpack.c.l.b16 %v6021
        %v6597 = vunpack.c.h.b16 %v6021
        %v6598 = vunpack.c.l.b16 %v6022
        %v6599 = vunpack.c.h.b16 %v6022
        %v6600 = vunpack.c.l.b16 %v6023
        %v6601 = vunpack.c.h.b16 %v6023
        %v6602 = vunpack.c.l.b16 %v6024
        %v6603 = vunpack.c.h.b16 %v6024
        %v6604 = vunpack.c.l.b16 %v6025
        %v6605 = vunpack.c.h.b16 %v6025
        %v6606 = vunpack.c.l.b16 %v6026
        %v6607 = vunpack.c.h.b16 %v6026
        %v6608 = vunpack.c.l.b16 %v6027
        %v6609 = vunpack.c.h.b16 %v6027
        %v6610 = vunpack.c.l.b16 %v6028
        %v6611 = vunpack.c.h.b16 %v6028
        %v6612 = vunpack.c.l.b16 %v6029
        %v6613 = vunpack.c.h.b16 %v6029
        %v6614 = vunpack.c.l.b16 %v6030
        %v6615 = vunpack.c.h.b16 %v6030
        %v6616 = vunpack.c.l.b16 %v6031
        %v6617 = vunpack.c.h.b16 %v6031
        %v6618 = vunpack.c.l.b16 %v6032
        %v6619 = vunpack.c.h.b16 %v6032
        %v6620 = vunpack.c.l.b16 %v6033
        %v6621 = vunpack.c.h.b16 %v6033
        %v6622 = vunpack.c.l.b16 %v6034
        %v6623 = vunpack.c.h.b16 %v6034
        %v6624 = vunpack.c.l.b16 %v6035
        %v6625 = vunpack.c.h.b16 %v6035
        %v6626 = vunpack.c.l.b16 %v6036
        %v6627 = vunpack.c.h.b16 %v6036
        %v6628 = vunpack.c.l.b16 %v6037
        %v6629 = vunpack.c.h.b16 %v6037
        %v6630 = vunpack.c.l.b16 %v6038
        %v6631 = vunpack.c.h.b16 %v6038
        %v6632 = vunpack.c.l.b16 %v6039
        %v6633 = vunpack.c.h.b16 %v6039
        %v6634 = vunpack.c.l.b16 %v6040
        %v6635 = vunpack.c.h.b16 %v6040
        %v6636 = vunpack.c.l.b16 %v6041
        %v6637 = vunpack.c.h.b16 %v6041
        %v6638 = vunpack.c.l.b16 %v6042
        %v6639 = vunpack.c.h.b16 %v6042
        %v6640 = vunpack.c.l.b16 %v6043
        %v6641 = vunpack.c.h.b16 %v6043
        %v6642 = vunpack.c.l.b16 %v6044
        %v6643 = vunpack.c.h.b16 %v6044
        %v6644 = vunpack.c.l.b16 %v6045
        %v6645 = vunpack.c.h.b16 %v6045
        %v6646 = vunpack.c.l.b16 %v6046
        %v6647 = vunpack.c.h.b16 %v6046
        %v6648 = vunpack.c.l.b16 %v6047
        %v6649 = vunpack.c.h.b16 %v6047
        %v6650 = vunpack.c.l.b16 %v6048
        %v6651 = vunpack.c.h.b16 %v6048
        %v6652 = vunpack.c.l.b16 %v6049
        %v6653 = vunpack.c.h.b16 %v6049
        %v6654 = vunpack.c.l.b16 %v6050
        %v6655 = vunpack.c.h.b16 %v6050
        %v6656 = vunpack.c.l.b16 %v6051
        %v6657 = vunpack.c.h.b16 %v6051
        %v6658 = vunpack.c.l.b16 %v6052
        %v6659 = vunpack.c.h.b16 %v6052
        %v6660 = vunpack.c.l.b16 %v6053
        %v6661 = vunpack.c.h.b16 %v6053
        %v6662 = vunpack.c.l.b16 %v6054
        %v6663 = vunpack.c.h.b16 %v6054
        %v6664 = vunpack.c.l.b16 %v6055
        %v6665 = vunpack.c.h.b16 %v6055
        %v6666 = vunpack.c.l.b16 %v6056
        %v6667 = vunpack.c.h.b16 %v6056
        %v6668 = vunpack.c.l.b16 %v6057
        %v6669 = vunpack.c.h.b16 %v6057
        %v6670 = vunpack.c.l.b16 %v6058
        %v6671 = vunpack.c.h.b16 %v6058
        %v6672 = vunpack.c.l.b16 %v6059
        %v6673 = vunpack.c.h.b16 %v6059
        %v6674 = vunpack.c.l.b16 %v6060
        %v6675 = vunpack.c.h.b16 %v6060
        %v6676 = vunpack.c.l.b16 %v6061
        %v6677 = vunpack.c.h.b16 %v6061
        %v6678 = vunpack.c.l.b16 %v6062
        %v6679 = vunpack.c.h.b16 %v6062
        %v6680 = vunpack.c.l.b16 %v6063
        %v6681 = vunpack.c.h.b16 %v6063
        %v6682 = vunpack.c.l.b16 %v6064
        %v6683 = vunpack.c.h.b16 %v6064
        %v6684 = vunpack.c.l.b16 %v6065
        %v6685 = vunpack.c.h.b16 %v6065
        %v6686 = vunpack.c.l.b16 %v6066
        %v6687 = vunpack.c.h.b16 %v6066
        %v6688 = vunpack.c.l.b16 %v6067
        %v6689 = vunpack.c.h.b16 %v6067
        %v6690 = vunpack.c.l.b16 %v6068
        %v6691 = vunpack.c.h.b16 %v6068
        %v6692 = vunpack.c.l.b16 %v6069
        %v6693 = vunpack.c.h.b16 %v6069
        %v6694 = vunpack.c.l.b16 %v6070
        %v6695 = vunpack.c.h.b16 %v6070
        %v6696 = vunpack.c.l.b16 %v6071
        %v6697 = vunpack.c.h.b16 %v6071
        %v6698 = vunpack.c.l.b16 %v6072
        %v6699 = vunpack.c.h.b16 %v6072
        %v6700 = vunpack.c.l.b16 %v6073
        %v6701 = vunpack.c.h.b16 %v6073
        %v6702 = vunpack.c.l.b16 %v6074
        %v6703 = vunpack.c.h.b16 %v6074
        %v6704 = vunpack.c.l.b16 %v6075
        %v6705 = vunpack.c.h.b16 %v6075
        %v6706 = vunpack.c.l.b16 %v6076
        %v6707 = vunpack.c.h.b16 %v6076
        %v6708 = vunpack.c.l.b16 %v6077
        %v6709 = vunpack.c.h.b16 %v6077
        %v6710 = vunpack.c.l.b16 %v6078
        %v6711 = vunpack.c.h.b16 %v6078
        %v6712 = vunpack.c.l.b16 %v6079
        %v6713 = vunpack.c.h.b16 %v6079
        %v6714 = vunpack.c.l.b16 %v6080
        %v6715 = vunpack.c.h.b16 %v6080
        %v6716 = vunpack.c.l.b16 %v6081
        %v6717 = vunpack.c.h.b16 %v6081
        %v6718 = vunpack.c.l.b16 %v6082
        %v6719 = vunpack.c.h.b16 %v6082
        %v6720 = vunpack.c.l.b16 %v6083
        %v6721 = vunpack.c.h.b16 %v6083
        %v6722 = vunpack.c.l.b16 %v6084
        %v6723 = vunpack.c.h.b16 %v6084
        %v6724 = vunpack.c.l.b16 %v6085
        %v6725 = vunpack.c.h.b16 %v6085
        %v6726 = vunpack.c.l.b16 %v6086
        %v6727 = vunpack.c.h.b16 %v6086
        %v6728 = vunpack.c.l.b16 %v6087
        %v6729 = vunpack.c.h.b16 %v6087
        %v6730 = vunpack.c.l.b16 %v6088
        %v6731 = vunpack.c.h.b16 %v6088
        %v6732 = vunpack.c.l.b16 %v6089
        %v6733 = vunpack.c.h.b16 %v6089
        %v6734 = vunpack.c.l.b16 %v6090
        %v6735 = vunpack.c.h.b16 %v6090
        %v6736 = vunpack.c.l.b16 %v6091
        %v6737 = vunpack.c.h.b16 %v6091
        %v6738 = vunpack.c.l.b16 %v6092
        %v6739 = vunpack.c.h.b16 %v6092
        %v6740 = vunpack.c.l.b16 %v6093
        %v6741 = vunpack.c.h.b16 %v6093
        %v6742 = vunpack.c.l.b16 %v6094
        %v6743 = vunpack.c.h.b16 %v6094
        %v6744 = vunpack.c.l.b16 %v6095
        %v6745 = vunpack.c.h.b16 %v6095
        %v6746 = vunpack.c.l.b16 %v6096
        %v6747 = vunpack.c.h.b16 %v6096
        %v6748 = vunpack.c.l.b16 %v6097
        %v6749 = vunpack.c.h.b16 %v6097
        %v6750 = vunpack.c.l.b16 %v6098
        %v6751 = vunpack.c.h.b16 %v6098
        %v6752 = vunpack.c.l.b16 %v6099
        %v6753 = vunpack.c.h.b16 %v6099
        %v6754 = vunpack.c.l.b16 %v6100
        %v6755 = vunpack.c.h.b16 %v6100
        %v6756 = vunpack.c.l.b16 %v6101
        %v6757 = vunpack.c.h.b16 %v6101
        %v6758 = vunpack.c.l.b16 %v6102
        %v6759 = vunpack.c.h.b16 %v6102
        %v6760 = vunpack.c.l.b16 %v6103
        %v6761 = vunpack.c.h.b16 %v6103
        %v6762 = vunpack.c.l.b16 %v6104
        %v6763 = vunpack.c.h.b16 %v6104
        %v6764 = vunpack.c.l.b16 %v6105
        %v6765 = vunpack.c.h.b16 %v6105
        %v6766 = vunpack.c.l.b16 %v6106
        %v6767 = vunpack.c.h.b16 %v6106
        %v6768 = vunpack.c.l.b16 %v6107
        %v6769 = vunpack.c.h.b16 %v6107
        %v6770 = vunpack.c.l.b16 %v6108
        %v6771 = vunpack.c.h.b16 %v6108
        %v6772 = vunpack.c.l.b16 %v6109
        %v6773 = vunpack.c.h.b16 %v6109
        %v6774 = vunpack.c.l.b16 %v6110
        %v6775 = vunpack.c.h.b16 %v6110
        %v6776 = vunpack.c.l.b16 %v6111
        %v6777 = vunpack.c.h.b16 %v6111
        %v6778 = vunpack.c.l.b16 %v6112
        %v6779 = vunpack.c.h.b16 %v6112
        %v6780 = vunpack.c.l.b16 %v6113
        %v6781 = vunpack.c.h.b16 %v6113
        %v6782 = vunpack.c.l.b16 %v6114
        %v6783 = vunpack.c.h.b16 %v6114
        %v6784 = vunpack.c.l.b16 %v6115
        %v6785 = vunpack.c.h.b16 %v6115
        %v6786 = vunpack.c.l.b16 %v6116
        %v6787 = vunpack.c.h.b16 %v6116
        %v6788 = vunpack.c.l.b16 %v6117
        %v6789 = vunpack.c.h.b16 %v6117
        %v6790 = vunpack.c.l.b16 %v6118
        %v6791 = vunpack.c.h.b16 %v6118
        %v6792 = vunpack.c.l.b16 %v6119
        %v6793 = vunpack.c.h.b16 %v6119
        %v6794 = vunpack.c.l.b16 %v6120
        %v6795 = vunpack.c.h.b16 %v6120
        %v6796 = vunpack.c.l.b16 %v6121
        %v6797 = vunpack.c.h.b16 %v6121
        %v6798 = vunpack.c.l.b16 %v6122
        %v6799 = vunpack.c.h.b16 %v6122
        %v6800 = vunpack.c.l.b16 %v6123
        %v6801 = vunpack.c.h.b16 %v6123
        %v6802 = vunpack.c.l.b16 %v6124
        %v6803 = vunpack.c.h.b16 %v6124
        %v6804 = vunpack.c.l.b16 %v6125
        %v6805 = vunpack.c.h.b16 %v6125
        %v6806 = vunpack.c.l.b16 %v6126
        %v6807 = vunpack.c.h.b16 %v6126
        %v6808 = vunpack.c.l.b16 %v6127
        %v6809 = vunpack.c.h.b16 %v6127
        %v6810 = vunpack.c.l.b16 %v6128
        %v6811 = vunpack.c.h.b16 %v6128
        %v6812 = vunpack.c.l.b16 %v6129
        %v6813 = vunpack.c.h.b16 %v6129
        %v6814 = vunpack.c.l.b16 %v6130
        %v6815 = vunpack.c.h.b16 %v6130
        %v6816 = vunpack.c.l.b16 %v6131
        %v6817 = vunpack.c.h.b16 %v6131
        %v6818 = vunpack.c.l.b16 %v6132
        %v6819 = vunpack.c.h.b16 %v6132
        %v6820 = vunpack.c.l.b16 %v6133
        %v6821 = vunpack.c.h.b16 %v6133
        %v6822 = vunpack.c.l.b16 %v6134
        %v6823 = vunpack.c.h.b16 %v6134
        %v6824 = vunpack.c.l.b16 %v6135
        %v6825 = vunpack.c.h.b16 %v6135
        %v6826 = vunpack.c.l.b16 %v6136
        %v6827 = vunpack.c.h.b16 %v6136
        %v6828 = vunpack.c.l.b16 %v6137
        %v6829 = vunpack.c.h.b16 %v6137
        %v6830 = vunpack.c.l.b16 %v6138
        %v6831 = vunpack.c.h.b16 %v6138
        %v6832 = vunpack.c.l.b16 %v6139
        %v6833 = vunpack.c.h.b16 %v6139
        %v6834 = vunpack.c.l.b16 %v6140
        %v6835 = vunpack.c.h.b16 %v6140
        %v6836 = vunpack.c.l.b16 %v6141
        %v6837 = vunpack.c.h.b16 %v6141
        %v6838 = vunpack.c.l.b16 %v6142
        %v6839 = vunpack.c.h.b16 %v6142
        %v6840 = vunpack.c.l.b16 %v6143
        %v6841 = vunpack.c.h.b16 %v6143
        %v6842 = vunpack.c.l.b16 %v6144
        %v6843 = vunpack.c.h.b16 %v6144
        %v6844 = vunpack.c.l.b16 %v6145
        %v6845 = vunpack.c.h.b16 %v6145
        %v6846 = vunpack.c.l.b16 %v6146
        %v6847 = vunpack.c.h.b16 %v6146
        %v6848 = vunpack.c.l.b16 %v6147
        %v6849 = vunpack.c.h.b16 %v6147
        %v6850 = vunpack.c.l.b16 %v6148
        %v6851 = vunpack.c.h.b16 %v6148
        %v6852 = vunpack.c.l.b16 %v6149
        %v6853 = vunpack.c.h.b16 %v6149
        %v6854 = vunpack.c.l.b16 %v6150
        %v6855 = vunpack.c.h.b16 %v6150
        %v6856 = vunpack.c.l.b16 %v6151
        %v6857 = vunpack.c.h.b16 %v6151
        %v6858 = vunpack.c.l.b16 %v6152
        %v6859 = vunpack.c.h.b16 %v6152
        %v6860 = vunpack.c.l.b16 %v6153
        %v6861 = vunpack.c.h.b16 %v6153
        %v6862 = vunpack.c.l.b16 %v6154
        %v6863 = vunpack.c.h.b16 %v6154
        %v6864 = vunpack.c.l.b16 %v6155
        %v6865 = vunpack.c.h.b16 %v6155
        %v6866 = vunpack.c.l.b16 %v6156
        %v6867 = vunpack.c.h.b16 %v6156
        %v6868 = vunpack.c.l.b16 %v6157
        %v6869 = vunpack.c.h.b16 %v6157
        %v6870 = vunpack.c.l.b16 %v6158
        %v6871 = vunpack.c.h.b16 %v6158
        %v6872 = vunpack.c.l.b16 %v6159
        %v6873 = vunpack.c.h.b16 %v6159
        %v6874 = vunpack.c.l.b16 %v6160
        %v6875 = vunpack.c.h.b16 %v6160
        %v6876 = vunpack.c.l.b16 %v6161
        %v6877 = vunpack.c.h.b16 %v6161
        %v6878 = vunpack.c.l.b16 %v6162
        %v6879 = vunpack.c.h.b16 %v6162
        %v6880 = vunpack.c.l.b16 %v6163
        %v6881 = vunpack.c.h.b16 %v6163
        %v6882 = vunpack.c.l.b16 %v6164
        %v6883 = vunpack.c.h.b16 %v6164
        %v6884 = vunpack.c.l.b16 %v6165
        %v6885 = vunpack.c.h.b16 %v6165
        %v6886 = vunpack.c.l.b16 %v6166
        %v6887 = vunpack.c.h.b16 %v6166
        %v6888 = vunpack.c.l.b16 %v6167
        %v6889 = vunpack.c.h.b16 %v6167
        %v6890 = vunpack.c.l.b16 %v6168
        %v6891 = vunpack.c.h.b16 %v6168
        %v6892 = vunpack.c.l.b16 %v6169
        %v6893 = vunpack.c.h.b16 %v6169
        %v6894 = vunpack.c.l.b16 %v6170
        %v6895 = vunpack.c.h.b16 %v6170
        %v6896 = vunpack.c.l.b16 %v6171
        %v6897 = vunpack.c.h.b16 %v6171
        %v6898 = vunpack.c.l.b16 %v6172
        %v6899 = vunpack.c.h.b16 %v6172
        %v6900 = vunpack.c.l.b16 %v6173
        %v6901 = vunpack.c.h.b16 %v6173
        %v6902 = vunpack.c.l.b16 %v6174
        %v6903 = vunpack.c.h.b16 %v6174
        %v6904 = vunpack.c.l.b16 %v6175
        %v6905 = vunpack.c.h.b16 %v6175
        %v6906 = vunpack.c.l.b16 %v6176
        %v6907 = vunpack.c.h.b16 %v6176
        %v6908 = vunpack.c.l.b16 %v6177
        %v6909 = vunpack.c.h.b16 %v6177
        %v6910 = vunpack.c.l.b16 %v6178
        %v6911 = vunpack.c.h.b16 %v6178
        %v6912 = vunpack.c.l.b16 %v6179
        %v6913 = vunpack.c.h.b16 %v6179
        %v6914 = vunpack.c.l.b16 %v6180
        %v6915 = vunpack.c.h.b16 %v6180
        %v6916 = vunpack.c.l.b16 %v6181
        %v6917 = vunpack.c.h.b16 %v6181
        %v6918 = vunpack.c.l.b16 %v6182
        %v6919 = vunpack.c.h.b16 %v6182
        %v6920 = vunpack.c.l.b16 %v6183
        %v6921 = vunpack.c.h.b16 %v6183
        %v6922 = vunpack.c.l.b16 %v6184
        %v6923 = vunpack.c.h.b16 %v6184
        %v6924 = vunpack.c.l.b16 %v6185
        %v6925 = vunpack.c.h.b16 %v6185
        %v6926 = vunpack.c.l.b16 %v6186
        %v6927 = vunpack.c.h.b16 %v6186
        %v6928 = vunpack.c.l.b16 %v6187
        %v6929 = vunpack.c.h.b16 %v6187
        %v6930 = vunpack.c.l.b16 %v6188
        %v6931 = vunpack.c.h.b16 %v6188
        %v6932 = vunpack.c.l.b16 %v6189
        %v6933 = vunpack.c.h.b16 %v6189
        %v6934 = vunpack.c.l.b16 %v6190
        %v6935 = vunpack.c.h.b16 %v6190
        %v6936 = vunpack.c.l.b16 %v6191
        %v6937 = vunpack.c.h.b16 %v6191
        %v6938 = vunpack.c.l.b16 %v6192
        %v6939 = vunpack.c.h.b16 %v6192
        %v6940 = vunpack.c.l.b16 %v6193
        %v6941 = vunpack.c.h.b16 %v6193
        %v6942 = vunpack.c.l.b16 %v6194
        %v6943 = vunpack.c.h.b16 %v6194
        %v6944 = vunpack.c.l.b16 %v6195
        %v6945 = vunpack.c.h.b16 %v6195
        %v6946 = vunpack.c.l.b16 %v6196
        %v6947 = vunpack.c.h.b16 %v6196
        %v6948 = vunpack.c.l.b16 %v6197
        %v6949 = vunpack.c.h.b16 %v6197
        %v6950 = vunpack.c.l.b16 %v6198
        %v6951 = vunpack.c.h.b16 %v6198
        %v6952 = vunpack.c.l.b16 %v6199
        %v6953 = vunpack.c.h.b16 %v6199
        %v6954 = vunpack.c.l.b16 %v6200
        %v6955 = vunpack.c.h.b16 %v6200
        %v6956 = vunpack.c.l.b16 %v6201
        %v6957 = vunpack.c.h.b16 %v6201
        %v6958 = vunpack.c.l.b16 %v6202
        %v6959 = vunpack.c.h.b16 %v6202
        %v6960 = vunpack.c.l.b16 %v6203
        %v6961 = vunpack.c.h.b16 %v6203
        %v6962 = vunpack.c.l.b16 %v6204
        %v6963 = vunpack.c.h.b16 %v6204
        %v6964 = vunpack.c.l.b16 %v6205
        %v6965 = vunpack.c.h.b16 %v6205
        %v6966 = vunpack.c.l.b16 %v6206
        %v6967 = vunpack.c.h.b16 %v6206
        %v6968 = vunpack.c.l.b16 %v6207
        %v6969 = vunpack.c.h.b16 %v6207
        %v6970 = vunpack.c.l.b16 %v6208
        %v6971 = vunpack.c.h.b16 %v6208
        %v6972 = vunpack.c.l.b16 %v6209
        %v6973 = vunpack.c.h.b16 %v6209
        %v6974 = vunpack.c.l.b16 %v6210
        %v6975 = vunpack.c.h.b16 %v6210
        %v6976 = vunpack.c.l.b16 %v6211
        %v6977 = vunpack.c.h.b16 %v6211
        %v6978 = vunpack.c.l.b16 %v6212
        %v6979 = vunpack.c.h.b16 %v6212
        %v6980 = vunpack.c.l.b16 %v6213
        %v6981 = vunpack.c.h.b16 %v6213
        %v6982 = vunpack.c.l.b16 %v6214
        %v6983 = vunpack.c.h.b16 %v6214
        %v6984 = vunpack.c.l.b16 %v6215
        %v6985 = vunpack.c.h.b16 %v6215
        %v6986 = vunpack.c.l.b16 %v6216
        %v6987 = vunpack.c.h.b16 %v6216
        %v6988 = vunpack.c.l.b16 %v6217
        %v6989 = vunpack.c.h.b16 %v6217
        %v6990 = vunpack.c.l.b16 %v6218
        %v6991 = vunpack.c.h.b16 %v6218
        %v6992 = vunpack.c.l.b16 %v6219
        %v6993 = vunpack.c.h.b16 %v6219
        %v6994 = vunpack.c.l.b16 %v6220
        %v6995 = vunpack.c.h.b16 %v6220
        %v6996 = vunpack.c.l.b16 %v6221
        %v6997 = vunpack.c.h.b16 %v6221
        %v6998 = vunpack.c.l.b16 %v6222
        %v6999 = vunpack.c.h.b16 %v6222
        %v7000 = vunpack.c.l.b16 %v6223
        %v7001 = vunpack.c.h.b16 %v6223
        %v7002 = vunpack.c.l.b16 %v6224
        %v7003 = vunpack.c.h.b16 %v6224
        %v7004 = vunpack.c.l.b16 %v6225
        %v7005 = vunpack.c.h.b16 %v6225
        %v7006 = vunpack.c.l.b16 %v6226
        %v7007 = vunpack.c.h.b16 %v6226
        %v7008 = vunpack.c.l.b16 %v6227
        %v7009 = vunpack.c.h.b16 %v6227
        %v7010 = vunpack.c.l.b16 %v6228
        %v7011 = vunpack.c.h.b16 %v6228
        %v7012 = vunpack.c.l.b16 %v6229
        %v7013 = vunpack.c.h.b16 %v6229
        %v7014 = vunpack.c.l.b16 %v6230
        %v7015 = vunpack.c.h.b16 %v6230
        %v7016 = vunpack.c.l.b16 %v6231
        %v7017 = vunpack.c.h.b16 %v6231
        %v7018 = vunpack.c.l.b16 %v6232
        %v7019 = vunpack.c.h.b16 %v6232
        %v7020 = vunpack.c.l.b16 %v6233
        %v7021 = vunpack.c.h.b16 %v6233
        %v7022 = vunpack.c.l.b16 %v6234
        %v7023 = vunpack.c.h.b16 %v6234
        %v7024 = vunpack.c.l.b16 %v6235
        %v7025 = vunpack.c.h.b16 %v6235
        %v7026 = vunpack.c.l.b16 %v6236
        %v7027 = vunpack.c.h.b16 %v6236
        %v7028 = vunpack.c.l.b16 %v6237
        %v7029 = vunpack.c.h.b16 %v6237
        %v7030 = vunpack.c.l.b16 %v6238
        %v7031 = vunpack.c.h.b16 %v6238
        %v7032 = vunpack.c.l.b16 %v6239
        %v7033 = vunpack.c.h.b16 %v6239
        %v7034 = vunpack.c.l.b16 %v6240
        %v7035 = vunpack.c.h.b16 %v6240
        %v7036 = vunpack.c.l.b16 %v6241
        %v7037 = vunpack.c.h.b16 %v6241
        %v7038 = vunpack.c.l.b16 %v6242
        %v7039 = vunpack.c.h.b16 %v6242
        %v7040 = vunpack.c.l.b16 %v6243
        %v7041 = vunpack.c.h.b16 %v6243
        %v7042 = vunpack.c.l.b16 %v6244
        %v7043 = vunpack.c.h.b16 %v6244
        %v7044 = vunpack.c.l.b16 %v6245
        %v7045 = vunpack.c.h.b16 %v6245
        %v7046 = vunpack.c.l.b16 %v6246
        %v7047 = vunpack.c.h.b16 %v6246
        %v7048 = vunpack.c.l.b16 %v6247
        %v7049 = vunpack.c.h.b16 %v6247
        %v7050 = vunpack.c.l.b16 %v6248
        %v7051 = vunpack.c.h.b16 %v6248
        %v7052 = vunpack.c.l.b16 %v6249
        %v7053 = vunpack.c.h.b16 %v6249
        %v7054 = vunpack.c.l.b16 %v6250
        %v7055 = vunpack.c.h.b16 %v6250
        %v7056 = vunpack.c.l.b16 %v6251
        %v7057 = vunpack.c.h.b16 %v6251
        %v7058 = vunpack.c.l.b16 %v6252
        %v7059 = vunpack.c.h.b16 %v6252
        %v7060 = vunpack.c.l.b16 %v6253
        %v7061 = vunpack.c.h.b16 %v6253
        %v7062 = vunpack.c.l.b16 %v6254
        %v7063 = vunpack.c.h.b16 %v6254
        %v7064 = vunpack.c.l.b16 %v6255
        %v7065 = vunpack.c.h.b16 %v6255
        %v7066 = vpack.c.b16 %v6562, %v6554
        %v7067 = vpack.c.b16 %v6563, %v6555
        %v7068 = vpack.c.b16 %v6564, %v6556
        %v7069 = vpack.c.b16 %v6565, %v6557
        %v7070 = vpack.c.b16 %v6566, %v6558
        %v7071 = vpack.c.b16 %v6567, %v6559
        %v7072 = vpack.c.b16 %v6568, %v6560
        %v7073 = vpack.c.b16 %v6569, %v6561
        %v7074 = vpack.c.b16 %v6578, %v6570
        %v7075 = vpack.c.b16 %v6579, %v6571
        %v7076 = vpack.c.b16 %v6580, %v6572
        %v7077 = vpack.c.b16 %v6581, %v6573
        %v7078 = vpack.c.b16 %v6582, %v6574
        %v7079 = vpack.c.b16 %v6583, %v6575
        %v7080 = vpack.c.b16 %v6584, %v6576
        %v7081 = vpack.c.b16 %v6585, %v6577
        %v7082 = vpack.c.b16 %v6594, %v6586
        %v7083 = vpack.c.b16 %v6595, %v6587
        %v7084 = vpack.c.b16 %v6596, %v6588
        %v7085 = vpack.c.b16 %v6597, %v6589
        %v7086 = vpack.c.b16 %v6598, %v6590
        %v7087 = vpack.c.b16 %v6599, %v6591
        %v7088 = vpack.c.b16 %v6600, %v6592
        %v7089 = vpack.c.b16 %v6601, %v6593
        %v7090 = vpack.c.b16 %v6610, %v6602
        %v7091 = vpack.c.b16 %v6611, %v6603
        %v7092 = vpack.c.b16 %v6612, %v6604
        %v7093 = vpack.c.b16 %v6613, %v6605
        %v7094 = vpack.c.b16 %v6614, %v6606
        %v7095 = vpack.c.b16 %v6615, %v6607
        %v7096 = vpack.c.b16 %v6616, %v6608
        %v7097 = vpack.c.b16 %v6617, %v6609
        %v7098 = vpack.c.b16 %v6626, %v6618
        %v7099 = vpack.c.b16 %v6627, %v6619
        %v7100 = vpack.c.b16 %v6628, %v6620
        %v7101 = vpack.c.b16 %v6629, %v6621
        %v7102 = vpack.c.b16 %v6630, %v6622
        %v7103 = vpack.c.b16 %v6631, %v6623
        %v7104 = vpack.c.b16 %v6632, %v6624
        %v7105 = vpack.c.b16 %v6633, %v6625
        %v7106 = vpack.c.b16 %v6642, %v6634
        %v7107 = vpack.c.b16 %v6643, %v6635
        %v7108 = vpack.c.b16 %v6644, %v6636
        %v7109 = vpack.c.b16 %v6645, %v6637
        %v7110 = vpack.c.b16 %v6646, %v6638
        %v7111 = vpack.c.b16 %v6647, %v6639
        %v7112 = vpack.c.b16 %v6648, %v6640
        %v7113 = vpack.c.b16 %v6649, %v6641
        %v7114 = vpack.c.b16 %v6658, %v6650
        %v7115 = vpack.c.b16 %v6659, %v6651
        %v7116 = vpack.c.b16 %v6660, %v6652
        %v7117 = vpack.c.b16 %v6661, %v6653
        %v7118 = vpack.c.b16 %v6662, %v6654
        %v7119 = vpack.c.b16 %v6663, %v6655
        %v7120 = vpack.c.b16 %v6664, %v6656
        %v7121 = vpack.c.b16 %v6665, %v6657
        %v7122 = vpack.c.b16 %v6674, %v6666
        %v7123 = vpack.c.b16 %v6675, %v6667
        %v7124 = vpack.c.b16 %v6676, %v6668
        %v7125 = vpack.c.b16 %v6677, %v6669
        %v7126 = vpack.c.b16 %v6678, %v6670
        %v7127 = vpack.c.b16 %v6679, %v6671
        %v7128 = vpack.c.b16 %v6680, %v6672
        %v7129 = vpack.c.b16 %v6681, %v6673
        %v7130 = vpack.c.b16 %v6690, %v6682
        %v7131 = vpack.c.b16 %v6691, %v6683
        %v7132 = vpack.c.b16 %v6692, %v6684
        %v7133 = vpack.c.b16 %v6693, %v6685
        %v7134 = vpack.c.b16 %v6694, %v6686
        %v7135 = vpack.c.b16 %v6695, %v6687
        %v7136 = vpack.c.b16 %v6696, %v6688
        %v7137 = vpack.c.b16 %v6697, %v6689
        %v7138 = vpack.c.b16 %v6706, %v6698
        %v7139 = vpack.c.b16 %v6707, %v6699
        %v7140 = vpack.c.b16 %v6708, %v6700
        %v7141 = vpack.c.b16 %v6709, %v6701
        %v7142 = vpack.c.b16 %v6710, %v6702
        %v7143 = vpack.c.b16 %v6711, %v6703
        %v7144 = vpack.c.b16 %v6712, %v6704
        %v7145 = vpack.c.b16 %v6713, %v6705
        %v7146 = vpack.c.b16 %v6722, %v6714
        %v7147 = vpack.c.b16 %v6723, %v6715
        %v7148 = vpack.c.b16 %v6724, %v6716
        %v7149 = vpack.c.b16 %v6725, %v6717
        %v7150 = vpack.c.b16 %v6726, %v6718
        %v7151 = vpack.c.b16 %v6727, %v6719
        %v7152 = vpack.c.b16 %v6728, %v6720
        %v7153 = vpack.c.b16 %v6729, %v6721
        %v7154 = vpack.c.b16 %v6738, %v6730
        %v7155 = vpack.c.b16 %v6739, %v6731
        %v7156 = vpack.c.b16 %v6740, %v6732
        %v7157 = vpack.c.b16 %v6741, %v6733
        %v7158 = vpack.c.b16 %v6742, %v6734
        %v7159 = vpack.c.b16 %v6743, %v6735
        %v7160 = vpack.c.b16 %v6744, %v6736
        %v7161 = vpack.c.b16 %v6745, %v6737
        %v7162 = vpack.c.b16 %v6754, %v6746
        %v7163 = vpack.c.b16 %v6755, %v6747
        %v7164 = vpack.c.b16 %v6756, %v6748
        %v7165 = vpack.c.b16 %v6757, %v6749
        %v7166 = vpack.c.b16 %v6758, %v6750
        %v7167 = vpack.c.b16 %v6759, %v6751
        %v7168 = vpack.c.b16 %v6760, %v6752
        %v7169 = vpack.c.b16 %v6761, %v6753
        %v7170 = vpack.c.b16 %v6770, %v6762
        %v7171 = vpack.c.b16 %v6771, %v6763
        %v7172 = vpack.c.b16 %v6772, %v6764
        %v7173 = vpack.c.b16 %v6773, %v6765
        %v7174 = vpack.c.b16 %v6774, %v6766
        %v7175 = vpack.c.b16 %v6775, %v6767
        %v7176 = vpack.c.b16 %v6776, %v6768
        %v7177 = vpack.c.b16 %v6777, %v6769
        %v7178 = vpack.c.b16 %v6786, %v6778
        %v7179 = vpack.c.b16 %v6787, %v6779
        %v7180 = vpack.c.b16 %v6788, %v6780
        %v7181 = vpack.c.b16 %v6789, %v6781
        %v7182 = vpack.c.b16 %v6790, %v6782
        %v7183 = vpack.c.b16 %v6791, %v6783
        %v7184 = vpack.c.b16 %v6792, %v6784
        %v7185 = vpack.c.b16 %v6793, %v6785
        %v7186 = vpack.c.b16 %v6802, %v6794
        %v7187 = vpack.c.b16 %v6803, %v6795
        %v7188 = vpack.c.b16 %v6804, %v6796
        %v7189 = vpack.c.b16 %v6805, %v6797
        %v7190 = vpack.c.b16 %v6806, %v6798
        %v7191 = vpack.c.b16 %v6807, %v6799
        %v7192 = vpack.c.b16 %v6808, %v6800
        %v7193 = vpack.c.b16 %v6809, %v6801
        %v7194 = vpack.c.b16 %v6818, %v6810
        %v7195 = vpack.c.b16 %v6819, %v6811
        %v7196 = vpack.c.b16 %v6820, %v6812
        %v7197 = vpack.c.b16 %v6821, %v6813
        %v7198 = vpack.c.b16 %v6822, %v6814
        %v7199 = vpack.c.b16 %v6823, %v6815
        %v7200 = vpack.c.b16 %v6824, %v6816
        %v7201 = vpack.c.b16 %v6825, %v6817
        %v7202 = vpack.c.b16 %v6834, %v6826
        %v7203 = vpack.c.b16 %v6835, %v6827
        %v7204 = vpack.c.b16 %v6836, %v6828
        %v7205 = vpack.c.b16 %v6837, %v6829
        %v7206 = vpack.c.b16 %v6838, %v6830
        %v7207 = vpack.c.b16 %v6839, %v6831
        %v7208 = vpack.c.b16 %v6840, %v6832
        %v7209 = vpack.c.b16 %v6841, %v6833
        %v7210 = vpack.c.b16 %v6850, %v6842
        %v7211 = vpack.c.b16 %v6851, %v6843
        %v7212 = vpack.c.b16 %v6852, %v6844
        %v7213 = vpack.c.b16 %v6853, %v6845
        %v7214 = vpack.c.b16 %v6854, %v6846
        %v7215 = vpack.c.b16 %v6855, %v6847
        %v7216 = vpack.c.b16 %v6856, %v6848
        %v7217 = vpack.c.b16 %v6857, %v6849
        %v7218 = vpack.c.b16 %v6866, %v6858
        %v7219 = vpack.c.b16 %v6867, %v6859
        %v7220 = vpack.c.b16 %v6868, %v6860
        %v7221 = vpack.c.b16 %v6869, %v6861
        %v7222 = vpack.c.b16 %v6870, %v6862
        %v7223 = vpack.c.b16 %v6871, %v6863
        %v7224 = vpack.c.b16 %v6872, %v6864
        %v7225 = vpack.c.b16 %v6873, %v6865
        %v7226 = vpack.c.b16 %v6882, %v6874
        %v7227 = vpack.c.b16 %v6883, %v6875
        %v7228 = vpack.c.b16 %v6884, %v6876
        %v7229 = vpack.c.b16 %v6885, %v6877
        %v7230 = vpack.c.b16 %v6886, %v6878
        %v7231 = vpack.c.b16 %v6887, %v6879
        %v7232 = vpack.c.b16 %v6888, %v6880
        %v7233 = vpack.c.b16 %v6889, %v6881
        %v7234 = vpack.c.b16 %v6898, %v6890
        %v7235 = vpack.c.b16 %v6899, %v6891
        %v7236 = vpack.c.b16 %v6900, %v6892
        %v7237 = vpack.c.b16 %v6901, %v6893
        %v7238 = vpack.c.b16 %v6902, %v6894
        %v7239 = vpack.c.b16 %v6903, %v6895
        %v7240 = vpack.c.b16 %v6904, %v6896
        %v7241 = vpack.c.b16 %v6905, %v6897
        %v7242 = vpack.c.b16 %v6914, %v6906
        %v7243 = vpack.c.b16 %v6915, %v6907
        %v7244 = vpack.c.b16 %v6916, %v6908
        %v7245 = vpack.c.b16 %v6917, %v6909
        %v7246 = vpack.c.b16 %v6918, %v6910
        %v7247 = vpack.c.b16 %v6919, %v6911
        %v7248 = vpack.c.b16 %v6920, %v6912
        %v7249 = vpack.c.b16 %v6921, %v6913
        %v7250 = vpack.c.b16 %v6930, %v6922
        %v7251 = vpack.c.b16 %v6931, %v6923
        %v7252 = vpack.c.b16 %v6932, %v6924
        %v7253 = vpack.c.b16 %v6933, %v6925
        %v7254 = vpack.c.b16 %v6934, %v6926
        %v7255 = vpack.c.b16 %v6935, %v6927
        %v7256 = vpack.c.b16 %v6936, %v6928
        %v7257 = vpack.c.b16 %v6937, %v6929
        %v7258 = vpack.c.b16 %v6946, %v6938
        %v7259 = vpack.c.b16 %v6947, %v6939
        %v7260 = vpack.c.b16 %v6948, %v6940
        %v7261 = vpack.c.b16 %v6949, %v6941
        %v7262 = vpack.c.b16 %v6950, %v6942
        %v7263 = vpack.c.b16 %v6951, %v6943
        %v7264 = vpack.c.b16 %v6952, %v6944
        %v7265 = vpack.c.b16 %v6953, %v6945
        %v7266 = vpack.c.b16 %v6962, %v6954
        %v7267 = vpack.c.b16 %v6963, %v6955
        %v7268 = vpack.c.b16 %v6964, %v6956
        %v7269 = vpack.c.b16 %v6965, %v6957
        %v7270 = vpack.c.b16 %v6966, %v6958
        %v7271 = vpack.c.b16 %v6967, %v6959
        %v7272 = vpack.c.b16 %v6968, %v6960
        %v7273 = vpack.c.b16 %v6969, %v6961
        %v7274 = vpack.c.b16 %v6978, %v6970
        %v7275 = vpack.c.b16 %v6979, %v6971
        %v7276 = vpack.c.b16 %v6980, %v6972
        %v7277 = vpack.c.b16 %v6981, %v6973
        %v7278 = vpack.c.b16 %v6982, %v6974
        %v7279 = vpack.c.b16 %v6983, %v6975
        %v7280 = vpack.c.b16 %v6984, %v6976
        %v7281 = vpack.c.b16 %v6985, %v6977
        %v7282 = vpack.c.b16 %v6994, %v6986
        %v7283 = vpack.c.b16 %v6995, %v6987
        %v7284 = vpack.c.b16 %v6996, %v6988
        %v7285 = vpack.c.b16 %v6997, %v6989
        %v7286 = vpack.c.b16 %v6998, %v6990
        %v7287 = vpack.c.b16 %v6999, %v6991
        %v7288 = vpack.c.b16 %v7000, %v6992
        %v7289 = vpack.c.b16 %v7001, %v6993
        %v7290 = vpack.c.b16 %v7010, %v7002
        %v7291 = vpack.c.b16 %v7011, %v7003
        %v7292 = vpack.c.b16 %v7012, %v7004
        %v7293 = vpack.c.b16 %v7013, %v7005
        %v7294 = vpack.c.b16 %v7014, %v7006
        %v7295 = vpack.c.b16 %v7015, %v7007
        %v7296 = vpack.c.b16 %v7016, %v7008
        %v7297 = vpack.c.b16 %v7017, %v7009
        %v7298 = vpack.c.b16 %v7026, %v7018
        %v7299 = vpack.c.b16 %v7027, %v7019
        %v7300 = vpack.c.b16 %v7028, %v7020
        %v7301 = vpack.c.b16 %v7029, %v7021
        %v7302 = vpack.c.b16 %v7030, %v7022
        %v7303 = vpack.c.b16 %v7031, %v7023
        %v7304 = vpack.c.b16 %v7032, %v7024
        %v7305 = vpack.c.b16 %v7033, %v7025
        %v7306 = vpack.c.b16 %v7042, %v7034
        %v7307 = vpack.c.b16 %v7043, %v7035
        %v7308 = vpack.c.b16 %v7044, %v7036
        %v7309 = vpack.c.b16 %v7045, %v7037
        %v7310 = vpack.c.b16 %v7046, %v7038
        %v7311 = vpack.c.b16 %v7047, %v7039
        %v7312 = vpack.c.b16 %v7048, %v7040
        %v7313 = vpack.c.b16 %v7049, %v7041
        %v7314 = vpack.c.b16 %v7058, %v7050
        %v7315 = vpack.c.b16 %v7059, %v7051
        %v7316 = vpack.c.b16 %v7060, %v7052
        %v7317 = vpack.c.b16 %v7061, %v7053
        %v7318 = vpack.c.b16 %v7062, %v7054
        %v7319 = vpack.c.b16 %v7063, %v7055
        %v7320 = vpack.c.b16 %v7064, %v7056
        %v7321 = vpack.c.b16 %v7065, %v7057
        %7578 = vmatprep.subr.bf16.mxu0 %v7123
        %7579 = vmatpush1.bf16.msra.mxu0 %v7122
        %7580 = vmatprep.subr.bf16.mxu0 %v7115
        %7581 = vmatpush1.bf16.msra.mxu0 %v7114
        %7582 = vmatprep.subr.bf16.mxu0 %v7107
        %7583 = vmatpush1.bf16.msra.mxu0 %v7106
        %7584 = vmatprep.subr.bf16.mxu0 %v7099
        %7585 = vmatpush1.bf16.msra.mxu0 %v7098
        %7586 = vmatprep.subr.bf16.mxu0 %v7091
        %7587 = vmatpush1.bf16.msra.mxu0 %v7090
        %7588 = vmatprep.subr.bf16.mxu0 %v7083
        %7589 = vmatpush1.bf16.msra.mxu0 %v7082
        %7590 = vmatprep.subr.bf16.mxu0 %v7075
        %7591 = vmatpush1.bf16.msra.mxu0 %v7074
        %7592 = vmatprep.subr.bf16.mxu0 %v7067
        %7593 = vmatpush1.bf16.msra.mxu0 %v7066
        %7594 = vmatprep.subr.bf16.mxu0 %v7187
        %7595 = vmatpush2.bf16.msra.mxu0 %v7186
        %7596 = vmatprep.subr.bf16.mxu0 %v7179
        %7597 = vmatpush2.bf16.msra.mxu0 %v7178
        %7598 = vmatprep.subr.bf16.mxu0 %v7171
        %7599 = vmatpush2.bf16.msra.mxu0 %v7170
        %7600 = vmatprep.subr.bf16.mxu0 %v7163
        %7601 = vmatpush2.bf16.msra.mxu0 %v7162
        %7602 = vmatprep.subr.bf16.mxu0 %v7155
        %7603 = vmatpush2.bf16.msra.mxu0 %v7154
        %7604 = vmatprep.subr.bf16.mxu0 %v7147
        %7605 = vmatpush2.bf16.msra.mxu0 %v7146
        %7606 = vmatprep.subr.bf16.mxu0 %v7139
        %7607 = vmatpush2.bf16.msra.mxu0 %v7138
        %7608 = vmatprep.subr.bf16.mxu0 %v7131
        %7609 = vmatpush2.bf16.msra.mxu0 %v7130
        %7610 = vmatprep.mubr.bf16.mxu0 %v5035
        %7611 = vmatmul.mubr.bf16.gmra.mxu0 %v5034
        %v7612 = vpop.f32.mrf.mxu0
        %v7613 = vadd.f32 %v6261, %v7612
        %v7614 = vpop.f32.mrf.mxu0
        %v7615 = vadd.f32 %v6265, %v7614
        %v7616 = vpop.f32.mrf.mxu0
        %v7617 = vadd.f32 %v6261, %v7616
        %v7618 = vpop.f32.mrf.mxu0
        %v7619 = vadd.f32 %v6265, %v7618
        %7620 = vdwg.mxu0
        %7621 = vmatprep.subr.bf16.mxu0 %v7251
        %7622 = vmatpush1.bf16.msra.mxu0 %v7250
        %7623 = vmatprep.subr.bf16.mxu0 %v7243
        %7624 = vmatpush1.bf16.msra.mxu0 %v7242
        %7625 = vmatprep.subr.bf16.mxu0 %v7235
        %7626 = vmatpush1.bf16.msra.mxu0 %v7234
        %7627 = vmatprep.subr.bf16.mxu0 %v7227
        %7628 = vmatpush1.bf16.msra.mxu0 %v7226
        %7629 = vmatprep.subr.bf16.mxu0 %v7219
        %7630 = vmatpush1.bf16.msra.mxu0 %v7218
        %7631 = vmatprep.subr.bf16.mxu0 %v7211
        %7632 = vmatpush1.bf16.msra.mxu0 %v7210
        %7633 = vmatprep.subr.bf16.mxu0 %v7203
        %7634 = vmatpush1.bf16.msra.mxu0 %v7202
        %7635 = vmatprep.subr.bf16.mxu0 %v7195
        %7636 = vmatpush1.bf16.msra.mxu0 %v7194
        %7637 = vmatprep.subr.bf16.mxu0 %v7315
        %7638 = vmatpush2.bf16.msra.mxu0 %v7314
        %7639 = vmatprep.subr.bf16.mxu0 %v7307
        %7640 = vmatpush2.bf16.msra.mxu0 %v7306
        %7641 = vmatprep.subr.bf16.mxu0 %v7299
        %7642 = vmatpush2.bf16.msra.mxu0 %v7298
        %7643 = vmatprep.subr.bf16.mxu0 %v7291
        %7644 = vmatpush2.bf16.msra.mxu0 %v7290
        %7645 = vmatprep.subr.bf16.mxu0 %v7283
        %7646 = vmatpush2.bf16.msra.mxu0 %v7282
        %7647 = vmatprep.subr.bf16.mxu0 %v7275
        %7648 = vmatpush2.bf16.msra.mxu0 %v7274
        %7649 = vmatprep.subr.bf16.mxu0 %v7267
        %7650 = vmatpush2.bf16.msra.mxu0 %v7266
        %7651 = vmatprep.subr.bf16.mxu0 %v7259
        %7652 = vmatpush2.bf16.msra.mxu0 %v7258
        %7653 = vmatprep.mubr.bf16.mxu0 %v5037
        %7654 = vmatmul.mubr.bf16.gmra.mxu0 %v5036
        %v7655 = vpop.f32.mrf.mxu0
        %v7656 = vadd.f32 %v7613, %v7655
        %v7657 = vpop.f32.mrf.mxu0
        %v7658 = vadd.f32 %v7615, %v7657
        %v7659 = vpop.f32.mrf.mxu0
        %v7660 = vadd.f32 %v7617, %v7659
        %v7661 = vpop.f32.mrf.mxu0
        %v7662 = vadd.f32 %v7619, %v7661
        %7663 = vdwg.mxu0
        %7664 = vmatprep.subr.bf16.mxu0 %v7125
        %7665 = vmatpush1.bf16.msra.mxu0 %v7124
        %7666 = vmatprep.subr.bf16.mxu0 %v7117
        %7667 = vmatpush1.bf16.msra.mxu0 %v7116
        %7668 = vmatprep.subr.bf16.mxu0 %v7109
        %7669 = vmatpush1.bf16.msra.mxu0 %v7108
        %7670 = vmatprep.subr.bf16.mxu0 %v7101
        %7671 = vmatpush1.bf16.msra.mxu0 %v7100
        %7672 = vmatprep.subr.bf16.mxu0 %v7093
        %7673 = vmatpush1.bf16.msra.mxu0 %v7092
        %7674 = vmatprep.subr.bf16.mxu0 %v7085
        %7675 = vmatpush1.bf16.msra.mxu0 %v7084
        %7676 = vmatprep.subr.bf16.mxu0 %v7077
        %7677 = vmatpush1.bf16.msra.mxu0 %v7076
        %7678 = vmatprep.subr.bf16.mxu0 %v7069
        %7679 = vmatpush1.bf16.msra.mxu0 %v7068
        %7680 = vmatprep.subr.bf16.mxu0 %v7189
        %7681 = vmatpush2.bf16.msra.mxu0 %v7188
        %7682 = vmatprep.subr.bf16.mxu0 %v7181
        %7683 = vmatpush2.bf16.msra.mxu0 %v7180
        %7684 = vmatprep.subr.bf16.mxu0 %v7173
        %7685 = vmatpush2.bf16.msra.mxu0 %v7172
        %7686 = vmatprep.subr.bf16.mxu0 %v7165
        %7687 = vmatpush2.bf16.msra.mxu0 %v7164
        %7688 = vmatprep.subr.bf16.mxu0 %v7157
        %7689 = vmatpush2.bf16.msra.mxu0 %v7156
        %7690 = vmatprep.subr.bf16.mxu0 %v7149
        %7691 = vmatpush2.bf16.msra.mxu0 %v7148
        %7692 = vmatprep.subr.bf16.mxu0 %v7141
        %7693 = vmatpush2.bf16.msra.mxu0 %v7140
        %7694 = vmatprep.subr.bf16.mxu0 %v7133
        %7695 = vmatpush2.bf16.msra.mxu0 %v7132
        %7696 = vmatprep.mubr.bf16.mxu0 %v5035
        %7697 = vmatmul.mubr.bf16.gmra.mxu0 %v5034
        %v7698 = vpop.f32.mrf.mxu0
        %v7699 = vadd.f32 %v6269, %v7698
        %v7700 = vpop.f32.mrf.mxu0
        %v7701 = vadd.f32 %v6273, %v7700
        %v7702 = vpop.f32.mrf.mxu0
        %v7703 = vadd.f32 %v6269, %v7702
        %v7704 = vpop.f32.mrf.mxu0
        %v7705 = vadd.f32 %v6273, %v7704
        %7706 = vdwg.mxu0
        %7707 = vmatprep.subr.bf16.mxu0 %v7253
        %7708 = vmatpush1.bf16.msra.mxu0 %v7252
        %7709 = vmatprep.subr.bf16.mxu0 %v7245
        %7710 = vmatpush1.bf16.msra.mxu0 %v7244
        %7711 = vmatprep.subr.bf16.mxu0 %v7237
        %7712 = vmatpush1.bf16.msra.mxu0 %v7236
        %7713 = vmatprep.subr.bf16.mxu0 %v7229
        %7714 = vmatpush1.bf16.msra.mxu0 %v7228
        %7715 = vmatprep.subr.bf16.mxu0 %v7221
        %7716 = vmatpush1.bf16.msra.mxu0 %v7220
        %7717 = vmatprep.subr.bf16.mxu0 %v7213
        %7718 = vmatpush1.bf16.msra.mxu0 %v7212
        %7719 = vmatprep.subr.bf16.mxu0 %v7205
        %7720 = vmatpush1.bf16.msra.mxu0 %v7204
        %7721 = vmatprep.subr.bf16.mxu0 %v7197
        %7722 = vmatpush1.bf16.msra.mxu0 %v7196
        %7723 = vmatprep.subr.bf16.mxu0 %v7317
        %7724 = vmatpush2.bf16.msra.mxu0 %v7316
        %7725 = vmatprep.subr.bf16.mxu0 %v7309
        %7726 = vmatpush2.bf16.msra.mxu0 %v7308
        %7727 = vmatprep.subr.bf16.mxu0 %v7301
        %7728 = vmatpush2.bf16.msra.mxu0 %v7300
        %7729 = vmatprep.subr.bf16.mxu0 %v7293
        %7730 = vmatpush2.bf16.msra.mxu0 %v7292
        %7731 = vmatprep.subr.bf16.mxu0 %v7285
        %7732 = vmatpush2.bf16.msra.mxu0 %v7284
        %7733 = vmatprep.subr.bf16.mxu0 %v7277
        %7734 = vmatpush2.bf16.msra.mxu0 %v7276
        %7735 = vmatprep.subr.bf16.mxu0 %v7269
        %7736 = vmatpush2.bf16.msra.mxu0 %v7268
        %7737 = vmatprep.subr.bf16.mxu0 %v7261
        %7738 = vmatpush2.bf16.msra.mxu0 %v7260
        %7739 = vmatprep.mubr.bf16.mxu0 %v5037
        %7740 = vmatmul.mubr.bf16.gmra.mxu0 %v5036
        %v7741 = vpop.f32.mrf.mxu0
        %v7742 = vadd.f32 %v7699, %v7741
        %v7743 = vpop.f32.mrf.mxu0
        %v7744 = vadd.f32 %v7701, %v7743
        %v7745 = vpop.f32.mrf.mxu0
        %v7746 = vadd.f32 %v7703, %v7745
        %v7747 = vpop.f32.mrf.mxu0
        %v7748 = vadd.f32 %v7705, %v7747
        %7749 = vdwg.mxu0
        %7750 = vmatprep.subr.bf16.mxu0 %v7127
        %7751 = vmatpush1.bf16.msra.mxu0 %v7126
        %7752 = vmatprep.subr.bf16.mxu0 %v7119
        %7753 = vmatpush1.bf16.msra.mxu0 %v7118
        %7754 = vmatprep.subr.bf16.mxu0 %v7111
        %7755 = vmatpush1.bf16.msra.mxu0 %v7110
        %7756 = vmatprep.subr.bf16.mxu0 %v7103
        %7757 = vmatpush1.bf16.msra.mxu0 %v7102
        %7758 = vmatprep.subr.bf16.mxu0 %v7095
        %7759 = vmatpush1.bf16.msra.mxu0 %v7094
        %7760 = vmatprep.subr.bf16.mxu0 %v7087
        %7761 = vmatpush1.bf16.msra.mxu0 %v7086
        %7762 = vmatprep.subr.bf16.mxu0 %v7079
        %7763 = vmatpush1.bf16.msra.mxu0 %v7078
        %7764 = vmatprep.subr.bf16.mxu0 %v7071
        %7765 = vmatpush1.bf16.msra.mxu0 %v7070
        %7766 = vmatprep.subr.bf16.mxu0 %v7191
        %7767 = vmatpush2.bf16.msra.mxu0 %v7190
        %7768 = vmatprep.subr.bf16.mxu0 %v7183
        %7769 = vmatpush2.bf16.msra.mxu0 %v7182
        %7770 = vmatprep.subr.bf16.mxu0 %v7175
        %7771 = vmatpush2.bf16.msra.mxu0 %v7174
        %7772 = vmatprep.subr.bf16.mxu0 %v7167
        %7773 = vmatpush2.bf16.msra.mxu0 %v7166
        %7774 = vmatprep.subr.bf16.mxu0 %v7159
        %7775 = vmatpush2.bf16.msra.mxu0 %v7158
        %7776 = vmatprep.subr.bf16.mxu0 %v7151
        %7777 = vmatpush2.bf16.msra.mxu0 %v7150
        %7778 = vmatprep.subr.bf16.mxu0 %v7143
        %7779 = vmatpush2.bf16.msra.mxu0 %v7142
        %7780 = vmatprep.subr.bf16.mxu0 %v7135
        %7781 = vmatpush2.bf16.msra.mxu0 %v7134
        %7782 = vmatprep.mubr.bf16.mxu0 %v5035
        %7783 = vmatmul.mubr.bf16.gmra.mxu0 %v5034
        %v7784 = vpop.f32.mrf.mxu0
        %v7785 = vadd.f32 %v6277, %v7784
        %v7786 = vpop.f32.mrf.mxu0
        %v7787 = vadd.f32 %v6281, %v7786
        %v7788 = vpop.f32.mrf.mxu0
        %v7789 = vadd.f32 %v6277, %v7788
        %v7790 = vpop.f32.mrf.mxu0
        %v7791 = vadd.f32 %v6281, %v7790
        %7792 = vdwg.mxu0
        %7793 = vmatprep.subr.bf16.mxu0 %v7255
        %7794 = vmatpush1.bf16.msra.mxu0 %v7254
        %7795 = vmatprep.subr.bf16.mxu0 %v7247
        %7796 = vmatpush1.bf16.msra.mxu0 %v7246
        %7797 = vmatprep.subr.bf16.mxu0 %v7239
        %7798 = vmatpush1.bf16.msra.mxu0 %v7238
        %7799 = vmatprep.subr.bf16.mxu0 %v7231
        %7800 = vmatpush1.bf16.msra.mxu0 %v7230
        %7801 = vmatprep.subr.bf16.mxu0 %v7223
        %7802 = vmatpush1.bf16.msra.mxu0 %v7222
        %7803 = vmatprep.subr.bf16.mxu0 %v7215
        %7804 = vmatpush1.bf16.msra.mxu0 %v7214
        %7805 = vmatprep.subr.bf16.mxu0 %v7207
        %7806 = vmatpush1.bf16.msra.mxu0 %v7206
        %7807 = vmatprep.subr.bf16.mxu0 %v7199
        %7808 = vmatpush1.bf16.msra.mxu0 %v7198
        %7809 = vmatprep.subr.bf16.mxu0 %v7319
        %7810 = vmatpush2.bf16.msra.mxu0 %v7318
        %7811 = vmatprep.subr.bf16.mxu0 %v7311
        %7812 = vmatpush2.bf16.msra.mxu0 %v7310
        %7813 = vmatprep.subr.bf16.mxu0 %v7303
        %7814 = vmatpush2.bf16.msra.mxu0 %v7302
        %7815 = vmatprep.subr.bf16.mxu0 %v7295
        %7816 = vmatpush2.bf16.msra.mxu0 %v7294
        %7817 = vmatprep.subr.bf16.mxu0 %v7287
        %7818 = vmatpush2.bf16.msra.mxu0 %v7286
        %7819 = vmatprep.subr.bf16.mxu0 %v7279
        %7820 = vmatpush2.bf16.msra.mxu0 %v7278
        %7821 = vmatprep.subr.bf16.mxu0 %v7271
        %7822 = vmatpush2.bf16.msra.mxu0 %v7270
        %7823 = vmatprep.subr.bf16.mxu0 %v7263
        %7824 = vmatpush2.bf16.msra.mxu0 %v7262
        %7825 = vmatprep.mubr.bf16.mxu0 %v5037
        %7826 = vmatmul.mubr.bf16.gmra.mxu0 %v5036
        %v7827 = vpop.f32.mrf.mxu0
        %v7828 = vadd.f32 %v7785, %v7827
        %v7829 = vpop.f32.mrf.mxu0
        %v7830 = vadd.f32 %v7787, %v7829
        %v7831 = vpop.f32.mrf.mxu0
        %v7832 = vadd.f32 %v7789, %v7831
        %v7833 = vpop.f32.mrf.mxu0
        %v7834 = vadd.f32 %v7791, %v7833
        %7835 = vdwg.mxu0
        %7836 = vmatprep.subr.bf16.mxu0 %v7129
        %7837 = vmatpush1.bf16.msra.mxu0 %v7128
        %7838 = vmatprep.subr.bf16.mxu0 %v7121
        %7839 = vmatpush1.bf16.msra.mxu0 %v7120
        %7840 = vmatprep.subr.bf16.mxu0 %v7113
        %7841 = vmatpush1.bf16.msra.mxu0 %v7112
        %7842 = vmatprep.subr.bf16.mxu0 %v7105
        %7843 = vmatpush1.bf16.msra.mxu0 %v7104
        %7844 = vmatprep.subr.bf16.mxu0 %v7097
        %7845 = vmatpush1.bf16.msra.mxu0 %v7096
        %7846 = vmatprep.subr.bf16.mxu0 %v7089
        %7847 = vmatpush1.bf16.msra.mxu0 %v7088
        %7848 = vmatprep.subr.bf16.mxu0 %v7081
        %7849 = vmatpush1.bf16.msra.mxu0 %v7080
        %7850 = vmatprep.subr.bf16.mxu0 %v7073
        %7851 = vmatpush1.bf16.msra.mxu0 %v7072
        %7852 = vmatprep.subr.bf16.mxu0 %v7193
        %7853 = vmatpush2.bf16.msra.mxu0 %v7192
        %7854 = vmatprep.subr.bf16.mxu0 %v7185
        %7855 = vmatpush2.bf16.msra.mxu0 %v7184
        %7856 = vmatprep.subr.bf16.mxu0 %v7177
        %7857 = vmatpush2.bf16.msra.mxu0 %v7176
        %7858 = vmatprep.subr.bf16.mxu0 %v7169
        %7859 = vmatpush2.bf16.msra.mxu0 %v7168
        %7860 = vmatprep.subr.bf16.mxu0 %v7161
        %7861 = vmatpush2.bf16.msra.mxu0 %v7160
        %7862 = vmatprep.subr.bf16.mxu0 %v7153
        %7863 = vmatpush2.bf16.msra.mxu0 %v7152
        %7864 = vmatprep.subr.bf16.mxu0 %v7145
        %7865 = vmatpush2.bf16.msra.mxu0 %v7144
        %7866 = vmatprep.subr.bf16.mxu0 %v7137
        %7867 = vmatpush2.bf16.msra.mxu0 %v7136
        %7868 = vmatprep.mubr.bf16.mxu0 %v5035
        %7869 = vmatmul.mubr.bf16.gmra.mxu0 %v5034
        %v7870 = vpop.f32.mrf.mxu0
        %v7871 = vadd.f32 %v6285, %v7870
        %v7872 = vpop.f32.mrf.mxu0
        %v7873 = vadd.f32 %v6289, %v7872
        %v7874 = vpop.f32.mrf.mxu0
        %v7875 = vadd.f32 %v6285, %v7874
        %v7876 = vpop.f32.mrf.mxu0
        %v7877 = vadd.f32 %v6289, %v7876
        %7878 = vdwg.mxu0
        %7879 = vmatprep.subr.bf16.mxu0 %v7257
        %7880 = vmatpush1.bf16.msra.mxu0 %v7256
        %7881 = vmatprep.subr.bf16.mxu0 %v7249
        %7882 = vmatpush1.bf16.msra.mxu0 %v7248
        %7883 = vmatprep.subr.bf16.mxu0 %v7241
        %7884 = vmatpush1.bf16.msra.mxu0 %v7240
        %7885 = vmatprep.subr.bf16.mxu0 %v7233
        %7886 = vmatpush1.bf16.msra.mxu0 %v7232
        %7887 = vmatprep.subr.bf16.mxu0 %v7225
        %7888 = vmatpush1.bf16.msra.mxu0 %v7224
        %7889 = vmatprep.subr.bf16.mxu0 %v7217
        %7890 = vmatpush1.bf16.msra.mxu0 %v7216
        %7891 = vmatprep.subr.bf16.mxu0 %v7209
        %7892 = vmatpush1.bf16.msra.mxu0 %v7208
        %7893 = vmatprep.subr.bf16.mxu0 %v7201
        %7894 = vmatpush1.bf16.msra.mxu0 %v7200
        %7895 = vmatprep.subr.bf16.mxu0 %v7321
        %7896 = vmatpush2.bf16.msra.mxu0 %v7320
        %7897 = vmatprep.subr.bf16.mxu0 %v7313
        %7898 = vmatpush2.bf16.msra.mxu0 %v7312
        %7899 = vmatprep.subr.bf16.mxu0 %v7305
        %7900 = vmatpush2.bf16.msra.mxu0 %v7304
        %7901 = vmatprep.subr.bf16.mxu0 %v7297
        %7902 = vmatpush2.bf16.msra.mxu0 %v7296
        %7903 = vmatprep.subr.bf16.mxu0 %v7289
        %7904 = vmatpush2.bf16.msra.mxu0 %v7288
        %7905 = vmatprep.subr.bf16.mxu0 %v7281
        %7906 = vmatpush2.bf16.msra.mxu0 %v7280
        %7907 = vmatprep.subr.bf16.mxu0 %v7273
        %7908 = vmatpush2.bf16.msra.mxu0 %v7272
        %7909 = vmatprep.subr.bf16.mxu0 %v7265
        %7910 = vmatpush2.bf16.msra.mxu0 %v7264
        %7911 = vmatprep.mubr.bf16.mxu0 %v5037
        %7912 = vmatmul.mubr.bf16.gmra.mxu0 %v5036
        %v7913 = vpop.f32.mrf.mxu0
        %v7914 = vadd.f32 %v7871, %v7913
        %v7915 = vpop.f32.mrf.mxu0
        %v7916 = vadd.f32 %v7873, %v7915
        %v7917 = vpop.f32.mrf.mxu0
        %v7918 = vadd.f32 %v7875, %v7917
        %v7919 = vpop.f32.mrf.mxu0
        %v7920 = vadd.f32 %v7877, %v7919
        %7921 = vdwg.mxu0
        %v7922 = vpack.c.bf16 %v5910, %v5906
        %v7923 = vpack.c.bf16 %v5912, %v5908
        %v7924 = vpack.c.bf16 %v5996, %v5992
        %v7925 = vpack.c.bf16 %v5998, %v5994
        %v7926 = vpack.c.bf16 %v7660, %v7656
        %v7927 = vpack.c.bf16 %v7662, %v7658
        %v7928 = vpack.c.bf16 %v7746, %v7742
        %v7929 = vpack.c.bf16 %v7748, %v7744
        %v7930 = vpack.c.bf16 %v7832, %v7828
        %v7931 = vpack.c.bf16 %v7834, %v7830
        %v7932 = vpack.c.bf16 %v7918, %v7914
        %v7933 = vpack.c.bf16 %v7920, %v7916
        %7934 = vmatprep.subr.bf16.mxu0 0
        %7935 = vmatpush1.bf16.xpose.msra.mxu0 0
        %7936 = vmatprep.subr.bf16.mxu0 0
        %7937 = vmatpush1.bf16.xpose.msra.mxu0 0
        %7938 = vmatprep.subr.bf16.mxu0 0
        %7939 = vmatpush1.bf16.xpose.msra.mxu0 0
        %7940 = vmatprep.subr.bf16.mxu0 0
        %7941 = vmatpush1.bf16.xpose.msra.mxu0 0
        %7942 = vmatprep.subr.bf16.mxu0 0
        %7943 = vmatpush1.bf16.xpose.msra.mxu0 0
        %7944 = vmatprep.subr.bf16.mxu0 0
        %7945 = vmatpush1.bf16.xpose.msra.mxu0 0
        %7946 = vmatprep.subr.bf16.mxu0 0
        %7947 = vmatpush1.bf16.xpose.msra.mxu0 0
        %7948 = vmatprep.subr.bf16.mxu0 %v7927
        %7949 = vmatpush1.bf16.xpose.msra.mxu0 %v7926
        %7950 = vmatprep.subr.bf16.mxu0 0
        %7951 = vmatpush2.bf16.xpose.msra.mxu0 0
        %7952 = vmatprep.subr.bf16.mxu0 0
        %7953 = vmatpush2.bf16.xpose.msra.mxu0 0
        %7954 = vmatprep.subr.bf16.mxu0 0
        %7955 = vmatpush2.bf16.xpose.msra.mxu0 0
        %7956 = vmatprep.subr.bf16.mxu0 0
        %7957 = vmatpush2.bf16.xpose.msra.mxu0 0
        %7958 = vmatprep.subr.bf16.mxu0 0
        %7959 = vmatpush2.bf16.xpose.msra.mxu0 0
        %7960 = vmatprep.subr.bf16.mxu0 0
        %7961 = vmatpush2.bf16.xpose.msra.mxu0 0
        %7962 = vmatprep.subr.bf16.mxu0 0
        %7963 = vmatpush2.bf16.xpose.msra.mxu0 0
        %7964 = vmatprep.subr.bf16.mxu0 0
        %7965 = vmatpush2.bf16.xpose.msra.mxu0 0
        %7966 = vmatprep.mubr.bf16.mxu0 %v7923
        %7967 = vmatmul.mubr.bf16.gmra.mxu0 %v7922
        %v7968 = vpop.f32.mrf.mxu0
        %v7969 = vadd.f32 0.0, %v7968
        %v7970 = vpop.f32.mrf.mxu0
        %v7971 = vpop.f32.mrf.mxu0
        %v7972 = vadd.f32 0.0, %v7971
        %v7973 = vpop.f32.mrf.mxu0
        %7974 = vdwg.mxu0
        %7975 = vmatprep.subr.bf16.mxu0 0
        %7976 = vmatpush1.bf16.xpose.msra.mxu0 0
        %7977 = vmatprep.subr.bf16.mxu0 0
        %7978 = vmatpush1.bf16.xpose.msra.mxu0 0
        %7979 = vmatprep.subr.bf16.mxu0 0
        %7980 = vmatpush1.bf16.xpose.msra.mxu0 0
        %7981 = vmatprep.subr.bf16.mxu0 0
        %7982 = vmatpush1.bf16.xpose.msra.mxu0 0
        %7983 = vmatprep.subr.bf16.mxu0 0
        %7984 = vmatpush1.bf16.xpose.msra.mxu0 0
        %7985 = vmatprep.subr.bf16.mxu0 0
        %7986 = vmatpush1.bf16.xpose.msra.mxu0 0
        %7987 = vmatprep.subr.bf16.mxu0 0
        %7988 = vmatpush1.bf16.xpose.msra.mxu0 0
        %7989 = vmatprep.subr.bf16.mxu0 %v7929
        %7990 = vmatpush1.bf16.xpose.msra.mxu0 %v7928
        %7991 = vmatprep.subr.bf16.mxu0 0
        %7992 = vmatpush2.bf16.xpose.msra.mxu0 0
        %7993 = vmatprep.subr.bf16.mxu0 0
        %7994 = vmatpush2.bf16.xpose.msra.mxu0 0
        %7995 = vmatprep.subr.bf16.mxu0 0
        %7996 = vmatpush2.bf16.xpose.msra.mxu0 0
        %7997 = vmatprep.subr.bf16.mxu0 0
        %7998 = vmatpush2.bf16.xpose.msra.mxu0 0
        %7999 = vmatprep.subr.bf16.mxu0 0
        %8000 = vmatpush2.bf16.xpose.msra.mxu0 0
        %8001 = vmatprep.subr.bf16.mxu0 0
        %8002 = vmatpush2.bf16.xpose.msra.mxu0 0
        %8003 = vmatprep.subr.bf16.mxu0 0
        %8004 = vmatpush2.bf16.xpose.msra.mxu0 0
        %8005 = vmatprep.subr.bf16.mxu0 0
        %8006 = vmatpush2.bf16.xpose.msra.mxu0 0
        %8007 = vmatprep.mubr.bf16.mxu0 %v7925
        %8008 = vmatmul.mubr.bf16.gmra.mxu0 %v7924
        %v8009 = vpop.f32.mrf.mxu0
        %v8010 = vadd.f32 %v7969, %v8009
        %v8011 = vpop.f32.mrf.mxu0
        %v8012 = vpop.f32.mrf.mxu0
        %v8013 = vadd.f32 %v7972, %v8012
        %v8014 = vpop.f32.mrf.mxu0
        %8015 = vdwg.mxu0
        %v8016 = vmul.f32 %v8010, 0.044194173
        %v8017 = vmul.f32 %v8013, 0.044194173
        %v8018 = vsel %vm3923, %v8016, -inf
        %8019 = vmax.xlane.f32.xlu0 %v8018
        %v8020 = vpop.xlane.xlu0 %8019
        %v8021 = vsel %vm3927, %v8017, -inf
        %8022 = vmax.xlane.f32.xlu0 %v8021
        %v8023 = vpop.xlane.xlu0 %8022
        %v8024 = vsub.f32 %v8016, %v8020
        %v8025 = vsub.f32 %v8017, %v8023
        %v8026 = vmul.f32 %v8024, 1.442695
        %v8027 = vpow.pop %v8026
        %v8028 = vmul.f32 %v8025, 1.442695
        %v8029 = vpow.pop %v8028
        %v8030 = vsel %vm3923, %v8027, 0.0
        %8031 = vadd.xlane.f32.xlu0 %v8030
        %v8032 = vpop.xlane.xlu0 %8031
        %v8033 = vsel %vm3927, %v8029, 0.0
        %8034 = vadd.xlane.f32.xlu0 %v8033
        %v8035 = vpop.xlane.xlu0 %8034
        %v8036 = vrcp.pop %v8032
        %v8037 = vrcp.pop %v8035
        %v8038 = vmul.f32 %v8027, %v8036
        %v8039 = vmul.f32 %v8029, %v8037
        %v8040 = vpack.c.bf16 %v8039, %v8038
        %v8042 = vsel %vm3923, %v8040, 0
        %v8045 = vsel %vm3953, %v7930, 0
        %v8048 = vsel %vm3953, %v7931, 0
        %v8051 = vsel %vm3953, %v7932, 0
        %v8054 = vsel %vm3953, %v7933, 0
        %8056 = vmatprep.subr.bf16.mxu0 0
        %8057 = vmatpush1.bf16.msra.mxu0 0
        %8058 = vmatprep.subr.bf16.mxu0 0
        %8059 = vmatpush1.bf16.msra.mxu0 0
        %8060 = vmatprep.subr.bf16.mxu0 0
        %8061 = vmatpush1.bf16.msra.mxu0 0
        %8062 = vmatprep.subr.bf16.mxu0 0
        %8063 = vmatpush1.bf16.msra.mxu0 0
        %8064 = vmatprep.subr.bf16.mxu0 0
        %8065 = vmatpush1.bf16.msra.mxu0 0
        %8066 = vmatprep.subr.bf16.mxu0 0
        %8067 = vmatpush1.bf16.msra.mxu0 0
        %8068 = vmatprep.subr.bf16.mxu0 0
        %8069 = vmatpush1.bf16.msra.mxu0 0
        %8070 = vmatprep.subr.bf16.mxu0 %v8048
        %8071 = vmatpush1.bf16.msra.mxu0 %v8045
        %8072 = vmatprep.subr.bf16.mxu0 0
        %8073 = vmatpush2.bf16.msra.mxu0 0
        %8074 = vmatprep.subr.bf16.mxu0 0
        %8075 = vmatpush2.bf16.msra.mxu0 0
        %8076 = vmatprep.subr.bf16.mxu0 0
        %8077 = vmatpush2.bf16.msra.mxu0 0
        %8078 = vmatprep.subr.bf16.mxu0 0
        %8079 = vmatpush2.bf16.msra.mxu0 0
        %8080 = vmatprep.subr.bf16.mxu0 0
        %8081 = vmatpush2.bf16.msra.mxu0 0
        %8082 = vmatprep.subr.bf16.mxu0 0
        %8083 = vmatpush2.bf16.msra.mxu0 0
        %8084 = vmatprep.subr.bf16.mxu0 0
        %8085 = vmatpush2.bf16.msra.mxu0 0
        %8086 = vmatprep.subr.bf16.mxu0 0
        %8087 = vmatpush2.bf16.msra.mxu0 0
        %8088 = vmatprep.mubr.bf16.mxu0 0
        %8089 = vmatmul.mubr.bf16.gmra.mxu0 %v8042
        %v8090 = vpop.f32.mrf.mxu0
        %v8091 = vadd.f32 0.0, %v8090
        %v8092 = vpop.f32.mrf.mxu0
        %v8093 = vadd.f32 0.0, %v8092
        %v8094 = vpop.f32.mrf.mxu0
        %v8095 = vadd.f32 0.0, %v8094
        %v8096 = vpop.f32.mrf.mxu0
        %v8097 = vadd.f32 0.0, %v8096
        %8098 = vdwg.mxu0
        %8099 = vmatprep.subr.bf16.mxu0 0
        %8100 = vmatpush1.bf16.msra.mxu0 0
        %8101 = vmatprep.subr.bf16.mxu0 0
        %8102 = vmatpush1.bf16.msra.mxu0 0
        %8103 = vmatprep.subr.bf16.mxu0 0
        %8104 = vmatpush1.bf16.msra.mxu0 0
        %8105 = vmatprep.subr.bf16.mxu0 0
        %8106 = vmatpush1.bf16.msra.mxu0 0
        %8107 = vmatprep.subr.bf16.mxu0 0
        %8108 = vmatpush1.bf16.msra.mxu0 0
        %8109 = vmatprep.subr.bf16.mxu0 0
        %8110 = vmatpush1.bf16.msra.mxu0 0
        %8111 = vmatprep.subr.bf16.mxu0 0
        %8112 = vmatpush1.bf16.msra.mxu0 0
        %8113 = vmatprep.subr.bf16.mxu0 %v8054
        %8114 = vmatpush1.bf16.msra.mxu0 %v8051
        %8115 = vmatprep.subr.bf16.mxu0 0
        %8116 = vmatpush2.bf16.msra.mxu0 0
        %8117 = vmatprep.subr.bf16.mxu0 0
        %8118 = vmatpush2.bf16.msra.mxu0 0
        %8119 = vmatprep.subr.bf16.mxu0 0
        %8120 = vmatpush2.bf16.msra.mxu0 0
        %8121 = vmatprep.subr.bf16.mxu0 0
        %8122 = vmatpush2.bf16.msra.mxu0 0
        %8123 = vmatprep.subr.bf16.mxu0 0
        %8124 = vmatpush2.bf16.msra.mxu0 0
        %8125 = vmatprep.subr.bf16.mxu0 0
        %8126 = vmatpush2.bf16.msra.mxu0 0
        %8127 = vmatprep.subr.bf16.mxu0 0
        %8128 = vmatpush2.bf16.msra.mxu0 0
        %8129 = vmatprep.subr.bf16.mxu0 0
        %8130 = vmatpush2.bf16.msra.mxu0 0
        %8131 = vmatprep.mubr.bf16.mxu0 0
        %8132 = vmatmul.mubr.bf16.gmra.mxu0 %v8042
        %v8133 = vpop.f32.mrf.mxu0
        %v8134 = vadd.f32 0.0, %v8133
        %v8135 = vpop.f32.mrf.mxu0
        %v8136 = vadd.f32 0.0, %v8135
        %v8137 = vpop.f32.mrf.mxu0
        %v8138 = vadd.f32 0.0, %v8137
        %v8139 = vpop.f32.mrf.mxu0
        %v8140 = vadd.f32 0.0, %v8139
        %8141 = vdwg.mxu0
        %v8142 = vpack.c.bf16 %v8095, %v8091
        %v8143 = vpack.c.bf16 %v8097, %v8093
        %v8144 = vpack.c.bf16 %v8138, %v8134
        %v8145 = vpack.c.bf16 %v8140, %v8136
        %v8146 = vld [vmem:[#allocation15] sm:$0xff]
        %v8147 = vld [vmem:[#allocation15 + $0x8] sm:$0xff]
        %v8148 = vld [vmem:[#allocation15 + $0x10] sm:$0xff]
        %v8149 = vld [vmem:[#allocation15 + $0x18] sm:$0xff]
        %v8150 = vld [vmem:[#allocation15 + $0x20] sm:$0xff]
        %v8151 = vld [vmem:[#allocation15 + $0x28] sm:$0xff]
        %v8152 = vld [vmem:[#allocation15 + $0x30] sm:$0xff]
        %v8153 = vld [vmem:[#allocation15 + $0x38] sm:$0xff]
        %v8154 = vld [vmem:[#allocation15 + $0x40] sm:$0xff]
        %v8155 = vld [vmem:[#allocation15 + $0x48] sm:$0xff]
        %v8156 = vld [vmem:[#allocation15 + $0x50] sm:$0xff]
        %v8157 = vld [vmem:[#allocation15 + $0x58] sm:$0xff]
        %v8158 = vld [vmem:[#allocation15 + $0x60] sm:$0xff]
        %v8159 = vld [vmem:[#allocation15 + $0x68] sm:$0xff]
        %v8160 = vld [vmem:[#allocation15 + $0x70] sm:$0xff]
        %v8161 = vld [vmem:[#allocation15 + $0x78] sm:$0xff]
        %v8162 = vld [vmem:[#allocation15 + $0x80] sm:$0xff]
        %v8163 = vld [vmem:[#allocation15 + $0x88] sm:$0xff]
        %v8164 = vld [vmem:[#allocation15 + $0x90] sm:$0xff]
        %v8165 = vld [vmem:[#allocation15 + $0x98] sm:$0xff]
        %v8166 = vld [vmem:[#allocation15 + $0xa0] sm:$0xff]
        %v8167 = vld [vmem:[#allocation15 + $0xa8] sm:$0xff]
        %v8168 = vld [vmem:[#allocation15 + $0xb0] sm:$0xff]
        %v8169 = vld [vmem:[#allocation15 + $0xb8] sm:$0xff]
        %v8170 = vld [vmem:[#allocation15 + $0xc0] sm:$0xff]
        %v8171 = vld [vmem:[#allocation15 + $0xc8] sm:$0xff]
        %v8172 = vld [vmem:[#allocation15 + $0xd0] sm:$0xff]
        %v8173 = vld [vmem:[#allocation15 + $0xd8] sm:$0xff]
        %v8174 = vld [vmem:[#allocation15 + $0xe0] sm:$0xff]
        %v8175 = vld [vmem:[#allocation15 + $0xe8] sm:$0xff]
        %v8176 = vld [vmem:[#allocation15 + $0xf0] sm:$0xff]
        %v8177 = vld [vmem:[#allocation15 + $0xf8] sm:$0xff]
        %v8178 = vld [vmem:[#allocation15 + $0x100] sm:$0xff]
        %v8179 = vld [vmem:[#allocation15 + $0x108] sm:$0xff]
        %v8180 = vld [vmem:[#allocation15 + $0x110] sm:$0xff]
        %v8181 = vld [vmem:[#allocation15 + $0x118] sm:$0xff]
        %v8182 = vld [vmem:[#allocation15 + $0x120] sm:$0xff]
        %v8183 = vld [vmem:[#allocation15 + $0x128] sm:$0xff]
        %v8184 = vld [vmem:[#allocation15 + $0x130] sm:$0xff]
        %v8185 = vld [vmem:[#allocation15 + $0x138] sm:$0xff]
        %v8186 = vld [vmem:[#allocation15 + $0x140] sm:$0xff]
        %v8187 = vld [vmem:[#allocation15 + $0x148] sm:$0xff]
        %v8188 = vld [vmem:[#allocation15 + $0x150] sm:$0xff]
        %v8189 = vld [vmem:[#allocation15 + $0x158] sm:$0xff]
        %v8190 = vld [vmem:[#allocation15 + $0x160] sm:$0xff]
        %v8191 = vld [vmem:[#allocation15 + $0x168] sm:$0xff]
        %v8192 = vld [vmem:[#allocation15 + $0x170] sm:$0xff]
        %v8193 = vld [vmem:[#allocation15 + $0x178] sm:$0xff]
        %v8194 = vld [vmem:[#allocation15 + $0x180] sm:$0xff]
        %v8195 = vld [vmem:[#allocation15 + $0x188] sm:$0xff]
        %v8196 = vld [vmem:[#allocation15 + $0x190] sm:$0xff]
        %v8197 = vld [vmem:[#allocation15 + $0x198] sm:$0xff]
        %v8198 = vld [vmem:[#allocation15 + $0x1a0] sm:$0xff]
        %v8199 = vld [vmem:[#allocation15 + $0x1a8] sm:$0xff]
        %v8200 = vld [vmem:[#allocation15 + $0x1b0] sm:$0xff]
        %v8201 = vld [vmem:[#allocation15 + $0x1b8] sm:$0xff]
        %v8202 = vld [vmem:[#allocation15 + $0x1c0] sm:$0xff]
        %v8203 = vld [vmem:[#allocation15 + $0x1c8] sm:$0xff]
        %v8204 = vld [vmem:[#allocation15 + $0x1d0] sm:$0xff]
        %v8205 = vld [vmem:[#allocation15 + $0x1d8] sm:$0xff]
        %v8206 = vld [vmem:[#allocation15 + $0x1e0] sm:$0xff]
        %v8207 = vld [vmem:[#allocation15 + $0x1e8] sm:$0xff]
        %v8208 = vld [vmem:[#allocation15 + $0x1f0] sm:$0xff]
        %v8209 = vld [vmem:[#allocation15 + $0x1f8] sm:$0xff]
        %v8210 = vld [vmem:[#allocation15 + $0x200] sm:$0xff]
        %v8211 = vld [vmem:[#allocation15 + $0x208] sm:$0xff]
        %v8212 = vld [vmem:[#allocation15 + $0x210] sm:$0xff]
        %v8213 = vld [vmem:[#allocation15 + $0x218] sm:$0xff]
        %v8214 = vld [vmem:[#allocation15 + $0x220] sm:$0xff]
        %v8215 = vld [vmem:[#allocation15 + $0x228] sm:$0xff]
        %v8216 = vld [vmem:[#allocation15 + $0x230] sm:$0xff]
        %v8217 = vld [vmem:[#allocation15 + $0x238] sm:$0xff]
        %v8218 = vld [vmem:[#allocation15 + $0x240] sm:$0xff]
        %v8219 = vld [vmem:[#allocation15 + $0x248] sm:$0xff]
        %v8220 = vld [vmem:[#allocation15 + $0x250] sm:$0xff]
        %v8221 = vld [vmem:[#allocation15 + $0x258] sm:$0xff]
        %v8222 = vld [vmem:[#allocation15 + $0x260] sm:$0xff]
        %v8223 = vld [vmem:[#allocation15 + $0x268] sm:$0xff]
        %v8224 = vld [vmem:[#allocation15 + $0x270] sm:$0xff]
        %v8225 = vld [vmem:[#allocation15 + $0x278] sm:$0xff]
        %v8226 = vld [vmem:[#allocation15 + $0x280] sm:$0xff]
        %v8227 = vld [vmem:[#allocation15 + $0x288] sm:$0xff]
        %v8228 = vld [vmem:[#allocation15 + $0x290] sm:$0xff]
        %v8229 = vld [vmem:[#allocation15 + $0x298] sm:$0xff]
        %v8230 = vld [vmem:[#allocation15 + $0x2a0] sm:$0xff]
        %v8231 = vld [vmem:[#allocation15 + $0x2a8] sm:$0xff]
        %v8232 = vld [vmem:[#allocation15 + $0x2b0] sm:$0xff]
        %v8233 = vld [vmem:[#allocation15 + $0x2b8] sm:$0xff]
        %v8234 = vld [vmem:[#allocation15 + $0x2c0] sm:$0xff]
        %v8235 = vld [vmem:[#allocation15 + $0x2c8] sm:$0xff]
        %v8236 = vld [vmem:[#allocation15 + $0x2d0] sm:$0xff]
        %v8237 = vld [vmem:[#allocation15 + $0x2d8] sm:$0xff]
        %v8238 = vld [vmem:[#allocation15 + $0x2e0] sm:$0xff]
        %v8239 = vld [vmem:[#allocation15 + $0x2e8] sm:$0xff]
        %v8240 = vld [vmem:[#allocation15 + $0x2f0] sm:$0xff]
        %v8241 = vld [vmem:[#allocation15 + $0x2f8] sm:$0xff]
        %v8242 = vld [vmem:[#allocation15 + $0x300] sm:$0xff]
        %v8243 = vld [vmem:[#allocation15 + $0x308] sm:$0xff]
        %v8244 = vld [vmem:[#allocation15 + $0x310] sm:$0xff]
        %v8245 = vld [vmem:[#allocation15 + $0x318] sm:$0xff]
        %v8246 = vld [vmem:[#allocation15 + $0x320] sm:$0xff]
        %v8247 = vld [vmem:[#allocation15 + $0x328] sm:$0xff]
        %v8248 = vld [vmem:[#allocation15 + $0x330] sm:$0xff]
        %v8249 = vld [vmem:[#allocation15 + $0x338] sm:$0xff]
        %v8250 = vld [vmem:[#allocation15 + $0x340] sm:$0xff]
        %v8251 = vld [vmem:[#allocation15 + $0x348] sm:$0xff]
        %v8252 = vld [vmem:[#allocation15 + $0x350] sm:$0xff]
        %v8253 = vld [vmem:[#allocation15 + $0x358] sm:$0xff]
        %v8254 = vld [vmem:[#allocation15 + $0x360] sm:$0xff]
        %v8255 = vld [vmem:[#allocation15 + $0x368] sm:$0xff]
        %v8256 = vld [vmem:[#allocation15 + $0x370] sm:$0xff]
        %v8257 = vld [vmem:[#allocation15 + $0x378] sm:$0xff]
        %v8258 = vld [vmem:[#allocation15 + $0x380] sm:$0xff]
        %v8259 = vld [vmem:[#allocation15 + $0x388] sm:$0xff]
        %v8260 = vld [vmem:[#allocation15 + $0x390] sm:$0xff]
        %v8261 = vld [vmem:[#allocation15 + $0x398] sm:$0xff]
        %v8262 = vld [vmem:[#allocation15 + $0x3a0] sm:$0xff]
        %v8263 = vld [vmem:[#allocation15 + $0x3a8] sm:$0xff]
        %v8264 = vld [vmem:[#allocation15 + $0x3b0] sm:$0xff]
        %v8265 = vld [vmem:[#allocation15 + $0x3b8] sm:$0xff]
        %v8266 = vld [vmem:[#allocation15 + $0x3c0] sm:$0xff]
        %v8267 = vld [vmem:[#allocation15 + $0x3c8] sm:$0xff]
        %v8268 = vld [vmem:[#allocation15 + $0x3d0] sm:$0xff]
        %v8269 = vld [vmem:[#allocation15 + $0x3d8] sm:$0xff]
        %v8270 = vld [vmem:[#allocation15 + $0x3e0] sm:$0xff]
        %v8271 = vld [vmem:[#allocation15 + $0x3e8] sm:$0xff]
        %v8272 = vld [vmem:[#allocation15 + $0x3f0] sm:$0xff]
        %v8273 = vld [vmem:[#allocation15 + $0x3f8] sm:$0xff]
        %v8274 = vld [vmem:[#allocation16] sm:$0xf]
        %v8276 = vlaneseq
        %v8277 = vshrl.u32 %v8276, 7
        %v8278 = vsub.s32 0, %v8277
        %v8279 = vrot.slane %v8274, %v8278
        %v8280 = vlaneseq
        %v8281 = vshrl.u32 %v8280, 7
        %v8282 = vsub.s32 1, %v8281
        %v8283 = vrot.slane %v8274, %v8282
        %v8284 = vlaneseq
        %v8285 = vshrl.u32 %v8284, 7
        %v8286 = vsub.s32 2, %v8285
        %v8287 = vrot.slane %v8274, %v8286
        %v8288 = vlaneseq
        %v8289 = vshrl.u32 %v8288, 7
        %v8290 = vsub.s32 3, %v8289
        %v8291 = vrot.slane %v8274, %v8290
        %v8424 = vunpack.c.l.b16 %v8146
        %v8425 = vunpack.c.h.b16 %v8146
        %v8426 = vunpack.c.l.b16 %v8147
        %v8427 = vunpack.c.h.b16 %v8147
        %v8428 = vunpack.c.l.b16 %v8148
        %v8429 = vunpack.c.h.b16 %v8148
        %v8430 = vunpack.c.l.b16 %v8149
        %v8431 = vunpack.c.h.b16 %v8149
        %v8432 = vunpack.c.l.b16 %v8150
        %v8433 = vunpack.c.h.b16 %v8150
        %v8434 = vunpack.c.l.b16 %v8151
        %v8435 = vunpack.c.h.b16 %v8151
        %v8436 = vunpack.c.l.b16 %v8152
        %v8437 = vunpack.c.h.b16 %v8152
        %v8438 = vunpack.c.l.b16 %v8153
        %v8439 = vunpack.c.h.b16 %v8153
        %v8440 = vunpack.c.l.b16 %v8154
        %v8441 = vunpack.c.h.b16 %v8154
        %v8442 = vunpack.c.l.b16 %v8155
        %v8443 = vunpack.c.h.b16 %v8155
        %v8444 = vunpack.c.l.b16 %v8156
        %v8445 = vunpack.c.h.b16 %v8156
        %v8446 = vunpack.c.l.b16 %v8157
        %v8447 = vunpack.c.h.b16 %v8157
        %v8448 = vunpack.c.l.b16 %v8158
        %v8449 = vunpack.c.h.b16 %v8158
        %v8450 = vunpack.c.l.b16 %v8159
        %v8451 = vunpack.c.h.b16 %v8159
        %v8452 = vunpack.c.l.b16 %v8160
        %v8453 = vunpack.c.h.b16 %v8160
        %v8454 = vunpack.c.l.b16 %v8161
        %v8455 = vunpack.c.h.b16 %v8161
        %v8456 = vunpack.c.l.b16 %v8162
        %v8457 = vunpack.c.h.b16 %v8162
        %v8458 = vunpack.c.l.b16 %v8163
        %v8459 = vunpack.c.h.b16 %v8163
        %v8460 = vunpack.c.l.b16 %v8164
        %v8461 = vunpack.c.h.b16 %v8164
        %v8462 = vunpack.c.l.b16 %v8165
        %v8463 = vunpack.c.h.b16 %v8165
        %v8464 = vunpack.c.l.b16 %v8166
        %v8465 = vunpack.c.h.b16 %v8166
        %v8466 = vunpack.c.l.b16 %v8167
        %v8467 = vunpack.c.h.b16 %v8167
        %v8468 = vunpack.c.l.b16 %v8168
        %v8469 = vunpack.c.h.b16 %v8168
        %v8470 = vunpack.c.l.b16 %v8169
        %v8471 = vunpack.c.h.b16 %v8169
        %v8472 = vunpack.c.l.b16 %v8170
        %v8473 = vunpack.c.h.b16 %v8170
        %v8474 = vunpack.c.l.b16 %v8171
        %v8475 = vunpack.c.h.b16 %v8171
        %v8476 = vunpack.c.l.b16 %v8172
        %v8477 = vunpack.c.h.b16 %v8172
        %v8478 = vunpack.c.l.b16 %v8173
        %v8479 = vunpack.c.h.b16 %v8173
        %v8480 = vunpack.c.l.b16 %v8174
        %v8481 = vunpack.c.h.b16 %v8174
        %v8482 = vunpack.c.l.b16 %v8175
        %v8483 = vunpack.c.h.b16 %v8175
        %v8484 = vunpack.c.l.b16 %v8176
        %v8485 = vunpack.c.h.b16 %v8176
        %v8486 = vunpack.c.l.b16 %v8177
        %v8487 = vunpack.c.h.b16 %v8177
        %v8488 = vunpack.c.l.b16 %v8178
        %v8489 = vunpack.c.h.b16 %v8178
        %v8490 = vunpack.c.l.b16 %v8179
        %v8491 = vunpack.c.h.b16 %v8179
        %v8492 = vunpack.c.l.b16 %v8180
        %v8493 = vunpack.c.h.b16 %v8180
        %v8494 = vunpack.c.l.b16 %v8181
        %v8495 = vunpack.c.h.b16 %v8181
        %v8496 = vunpack.c.l.b16 %v8182
        %v8497 = vunpack.c.h.b16 %v8182
        %v8498 = vunpack.c.l.b16 %v8183
        %v8499 = vunpack.c.h.b16 %v8183
        %v8500 = vunpack.c.l.b16 %v8184
        %v8501 = vunpack.c.h.b16 %v8184
        %v8502 = vunpack.c.l.b16 %v8185
        %v8503 = vunpack.c.h.b16 %v8185
        %v8504 = vunpack.c.l.b16 %v8186
        %v8505 = vunpack.c.h.b16 %v8186
        %v8506 = vunpack.c.l.b16 %v8187
        %v8507 = vunpack.c.h.b16 %v8187
        %v8508 = vunpack.c.l.b16 %v8188
        %v8509 = vunpack.c.h.b16 %v8188
        %v8510 = vunpack.c.l.b16 %v8189
        %v8511 = vunpack.c.h.b16 %v8189
        %v8512 = vunpack.c.l.b16 %v8190
        %v8513 = vunpack.c.h.b16 %v8190
        %v8514 = vunpack.c.l.b16 %v8191
        %v8515 = vunpack.c.h.b16 %v8191
        %v8516 = vunpack.c.l.b16 %v8192
        %v8517 = vunpack.c.h.b16 %v8192
        %v8518 = vunpack.c.l.b16 %v8193
        %v8519 = vunpack.c.h.b16 %v8193
        %v8520 = vunpack.c.l.b16 %v8194
        %v8521 = vunpack.c.h.b16 %v8194
        %v8522 = vunpack.c.l.b16 %v8195
        %v8523 = vunpack.c.h.b16 %v8195
        %v8524 = vunpack.c.l.b16 %v8196
        %v8525 = vunpack.c.h.b16 %v8196
        %v8526 = vunpack.c.l.b16 %v8197
        %v8527 = vunpack.c.h.b16 %v8197
        %v8528 = vunpack.c.l.b16 %v8198
        %v8529 = vunpack.c.h.b16 %v8198
        %v8530 = vunpack.c.l.b16 %v8199
        %v8531 = vunpack.c.h.b16 %v8199
        %v8532 = vunpack.c.l.b16 %v8200
        %v8533 = vunpack.c.h.b16 %v8200
        %v8534 = vunpack.c.l.b16 %v8201
        %v8535 = vunpack.c.h.b16 %v8201
        %v8536 = vunpack.c.l.b16 %v8202
        %v8537 = vunpack.c.h.b16 %v8202
        %v8538 = vunpack.c.l.b16 %v8203
        %v8539 = vunpack.c.h.b16 %v8203
        %v8540 = vunpack.c.l.b16 %v8204
        %v8541 = vunpack.c.h.b16 %v8204
        %v8542 = vunpack.c.l.b16 %v8205
        %v8543 = vunpack.c.h.b16 %v8205
        %v8544 = vunpack.c.l.b16 %v8206
        %v8545 = vunpack.c.h.b16 %v8206
        %v8546 = vunpack.c.l.b16 %v8207
        %v8547 = vunpack.c.h.b16 %v8207
        %v8548 = vunpack.c.l.b16 %v8208
        %v8549 = vunpack.c.h.b16 %v8208
        %v8550 = vunpack.c.l.b16 %v8209
        %v8551 = vunpack.c.h.b16 %v8209
        %v8552 = vunpack.c.l.b16 %v8210
        %v8553 = vunpack.c.h.b16 %v8210
        %v8554 = vunpack.c.l.b16 %v8211
        %v8555 = vunpack.c.h.b16 %v8211
        %v8556 = vunpack.c.l.b16 %v8212
        %v8557 = vunpack.c.h.b16 %v8212
        %v8558 = vunpack.c.l.b16 %v8213
        %v8559 = vunpack.c.h.b16 %v8213
        %v8560 = vunpack.c.l.b16 %v8214
        %v8561 = vunpack.c.h.b16 %v8214
        %v8562 = vunpack.c.l.b16 %v8215
        %v8563 = vunpack.c.h.b16 %v8215
        %v8564 = vunpack.c.l.b16 %v8216
        %v8565 = vunpack.c.h.b16 %v8216
        %v8566 = vunpack.c.l.b16 %v8217
        %v8567 = vunpack.c.h.b16 %v8217
        %v8568 = vunpack.c.l.b16 %v8218
        %v8569 = vunpack.c.h.b16 %v8218
        %v8570 = vunpack.c.l.b16 %v8219
        %v8571 = vunpack.c.h.b16 %v8219
        %v8572 = vunpack.c.l.b16 %v8220
        %v8573 = vunpack.c.h.b16 %v8220
        %v8574 = vunpack.c.l.b16 %v8221
        %v8575 = vunpack.c.h.b16 %v8221
        %v8576 = vunpack.c.l.b16 %v8222
        %v8577 = vunpack.c.h.b16 %v8222
        %v8578 = vunpack.c.l.b16 %v8223
        %v8579 = vunpack.c.h.b16 %v8223
        %v8580 = vunpack.c.l.b16 %v8224
        %v8581 = vunpack.c.h.b16 %v8224
        %v8582 = vunpack.c.l.b16 %v8225
        %v8583 = vunpack.c.h.b16 %v8225
        %v8584 = vunpack.c.l.b16 %v8226
        %v8585 = vunpack.c.h.b16 %v8226
        %v8586 = vunpack.c.l.b16 %v8227
        %v8587 = vunpack.c.h.b16 %v8227
        %v8588 = vunpack.c.l.b16 %v8228
        %v8589 = vunpack.c.h.b16 %v8228
        %v8590 = vunpack.c.l.b16 %v8229
        %v8591 = vunpack.c.h.b16 %v8229
        %v8592 = vunpack.c.l.b16 %v8230
        %v8593 = vunpack.c.h.b16 %v8230
        %v8594 = vunpack.c.l.b16 %v8231
        %v8595 = vunpack.c.h.b16 %v8231
        %v8596 = vunpack.c.l.b16 %v8232
        %v8597 = vunpack.c.h.b16 %v8232
        %v8598 = vunpack.c.l.b16 %v8233
        %v8599 = vunpack.c.h.b16 %v8233
        %v8600 = vunpack.c.l.b16 %v8234
        %v8601 = vunpack.c.h.b16 %v8234
        %v8602 = vunpack.c.l.b16 %v8235
        %v8603 = vunpack.c.h.b16 %v8235
        %v8604 = vunpack.c.l.b16 %v8236
        %v8605 = vunpack.c.h.b16 %v8236
        %v8606 = vunpack.c.l.b16 %v8237
        %v8607 = vunpack.c.h.b16 %v8237
        %v8608 = vunpack.c.l.b16 %v8238
        %v8609 = vunpack.c.h.b16 %v8238
        %v8610 = vunpack.c.l.b16 %v8239
        %v8611 = vunpack.c.h.b16 %v8239
        %v8612 = vunpack.c.l.b16 %v8240
        %v8613 = vunpack.c.h.b16 %v8240
        %v8614 = vunpack.c.l.b16 %v8241
        %v8615 = vunpack.c.h.b16 %v8241
        %v8616 = vunpack.c.l.b16 %v8242
        %v8617 = vunpack.c.h.b16 %v8242
        %v8618 = vunpack.c.l.b16 %v8243
        %v8619 = vunpack.c.h.b16 %v8243
        %v8620 = vunpack.c.l.b16 %v8244
        %v8621 = vunpack.c.h.b16 %v8244
        %v8622 = vunpack.c.l.b16 %v8245
        %v8623 = vunpack.c.h.b16 %v8245
        %v8624 = vunpack.c.l.b16 %v8246
        %v8625 = vunpack.c.h.b16 %v8246
        %v8626 = vunpack.c.l.b16 %v8247
        %v8627 = vunpack.c.h.b16 %v8247
        %v8628 = vunpack.c.l.b16 %v8248
        %v8629 = vunpack.c.h.b16 %v8248
        %v8630 = vunpack.c.l.b16 %v8249
        %v8631 = vunpack.c.h.b16 %v8249
        %v8632 = vunpack.c.l.b16 %v8250
        %v8633 = vunpack.c.h.b16 %v8250
        %v8634 = vunpack.c.l.b16 %v8251
        %v8635 = vunpack.c.h.b16 %v8251
        %v8636 = vunpack.c.l.b16 %v8252
        %v8637 = vunpack.c.h.b16 %v8252
        %v8638 = vunpack.c.l.b16 %v8253
        %v8639 = vunpack.c.h.b16 %v8253
        %v8640 = vunpack.c.l.b16 %v8254
        %v8641 = vunpack.c.h.b16 %v8254
        %v8642 = vunpack.c.l.b16 %v8255
        %v8643 = vunpack.c.h.b16 %v8255
        %v8644 = vunpack.c.l.b16 %v8256
        %v8645 = vunpack.c.h.b16 %v8256
        %v8646 = vunpack.c.l.b16 %v8257
        %v8647 = vunpack.c.h.b16 %v8257
        %v8648 = vunpack.c.l.b16 %v8258
        %v8649 = vunpack.c.h.b16 %v8258
        %v8650 = vunpack.c.l.b16 %v8259
        %v8651 = vunpack.c.h.b16 %v8259
        %v8652 = vunpack.c.l.b16 %v8260
        %v8653 = vunpack.c.h.b16 %v8260
        %v8654 = vunpack.c.l.b16 %v8261
        %v8655 = vunpack.c.h.b16 %v8261
        %v8656 = vunpack.c.l.b16 %v8262
        %v8657 = vunpack.c.h.b16 %v8262
        %v8658 = vunpack.c.l.b16 %v8263
        %v8659 = vunpack.c.h.b16 %v8263
        %v8660 = vunpack.c.l.b16 %v8264
        %v8661 = vunpack.c.h.b16 %v8264
        %v8662 = vunpack.c.l.b16 %v8265
        %v8663 = vunpack.c.h.b16 %v8265
        %v8664 = vunpack.c.l.b16 %v8266
        %v8665 = vunpack.c.h.b16 %v8266
        %v8666 = vunpack.c.l.b16 %v8267
        %v8667 = vunpack.c.h.b16 %v8267
        %v8668 = vunpack.c.l.b16 %v8268
        %v8669 = vunpack.c.h.b16 %v8268
        %v8670 = vunpack.c.l.b16 %v8269
        %v8671 = vunpack.c.h.b16 %v8269
        %v8672 = vunpack.c.l.b16 %v8270
        %v8673 = vunpack.c.h.b16 %v8270
        %v8674 = vunpack.c.l.b16 %v8271
        %v8675 = vunpack.c.h.b16 %v8271
        %v8676 = vunpack.c.l.b16 %v8272
        %v8677 = vunpack.c.h.b16 %v8272
        %v8678 = vunpack.c.l.b16 %v8273
        %v8679 = vunpack.c.h.b16 %v8273
        %v8680 = vpack.c.b16 %v8428, %v8424
        %v8681 = vpack.c.b16 %v8429, %v8425
        %v8682 = vpack.c.b16 %v8430, %v8426
        %v8683 = vpack.c.b16 %v8431, %v8427
        %v8684 = vpack.c.b16 %v8436, %v8432
        %v8685 = vpack.c.b16 %v8437, %v8433
        %v8686 = vpack.c.b16 %v8438, %v8434
        %v8687 = vpack.c.b16 %v8439, %v8435
        %v8688 = vpack.c.b16 %v8444, %v8440
        %v8689 = vpack.c.b16 %v8445, %v8441
        %v8690 = vpack.c.b16 %v8446, %v8442
        %v8691 = vpack.c.b16 %v8447, %v8443
        %v8692 = vpack.c.b16 %v8452, %v8448
        %v8693 = vpack.c.b16 %v8453, %v8449
        %v8694 = vpack.c.b16 %v8454, %v8450
        %v8695 = vpack.c.b16 %v8455, %v8451
        %v8696 = vpack.c.b16 %v8460, %v8456
        %v8697 = vpack.c.b16 %v8461, %v8457
        %v8698 = vpack.c.b16 %v8462, %v8458
        %v8699 = vpack.c.b16 %v8463, %v8459
        %v8700 = vpack.c.b16 %v8468, %v8464
        %v8701 = vpack.c.b16 %v8469, %v8465
        %v8702 = vpack.c.b16 %v8470, %v8466
        %v8703 = vpack.c.b16 %v8471, %v8467
        %v8704 = vpack.c.b16 %v8476, %v8472
        %v8705 = vpack.c.b16 %v8477, %v8473
        %v8706 = vpack.c.b16 %v8478, %v8474
        %v8707 = vpack.c.b16 %v8479, %v8475
        %v8708 = vpack.c.b16 %v8484, %v8480
        %v8709 = vpack.c.b16 %v8485, %v8481
        %v8710 = vpack.c.b16 %v8486, %v8482
        %v8711 = vpack.c.b16 %v8487, %v8483
        %v8712 = vpack.c.b16 %v8492, %v8488
        %v8713 = vpack.c.b16 %v8493, %v8489
        %v8714 = vpack.c.b16 %v8494, %v8490
        %v8715 = vpack.c.b16 %v8495, %v8491
        %v8716 = vpack.c.b16 %v8500, %v8496
        %v8717 = vpack.c.b16 %v8501, %v8497
        %v8718 = vpack.c.b16 %v8502, %v8498
        %v8719 = vpack.c.b16 %v8503, %v8499
        %v8720 = vpack.c.b16 %v8508, %v8504
        %v8721 = vpack.c.b16 %v8509, %v8505
        %v8722 = vpack.c.b16 %v8510, %v8506
        %v8723 = vpack.c.b16 %v8511, %v8507
        %v8724 = vpack.c.b16 %v8516, %v8512
        %v8725 = vpack.c.b16 %v8517, %v8513
        %v8726 = vpack.c.b16 %v8518, %v8514
        %v8727 = vpack.c.b16 %v8519, %v8515
        %v8728 = vpack.c.b16 %v8524, %v8520
        %v8729 = vpack.c.b16 %v8525, %v8521
        %v8730 = vpack.c.b16 %v8526, %v8522
        %v8731 = vpack.c.b16 %v8527, %v8523
        %v8732 = vpack.c.b16 %v8532, %v8528
        %v8733 = vpack.c.b16 %v8533, %v8529
        %v8734 = vpack.c.b16 %v8534, %v8530
        %v8735 = vpack.c.b16 %v8535, %v8531
        %v8736 = vpack.c.b16 %v8540, %v8536
        %v8737 = vpack.c.b16 %v8541, %v8537
        %v8738 = vpack.c.b16 %v8542, %v8538
        %v8739 = vpack.c.b16 %v8543, %v8539
        %v8740 = vpack.c.b16 %v8548, %v8544
        %v8741 = vpack.c.b16 %v8549, %v8545
        %v8742 = vpack.c.b16 %v8550, %v8546
        %v8743 = vpack.c.b16 %v8551, %v8547
        %v8744 = vpack.c.b16 %v8556, %v8552
        %v8745 = vpack.c.b16 %v8557, %v8553
        %v8746 = vpack.c.b16 %v8558, %v8554
        %v8747 = vpack.c.b16 %v8559, %v8555
        %v8748 = vpack.c.b16 %v8564, %v8560
        %v8749 = vpack.c.b16 %v8565, %v8561
        %v8750 = vpack.c.b16 %v8566, %v8562
        %v8751 = vpack.c.b16 %v8567, %v8563
        %v8752 = vpack.c.b16 %v8572, %v8568
        %v8753 = vpack.c.b16 %v8573, %v8569
        %v8754 = vpack.c.b16 %v8574, %v8570
        %v8755 = vpack.c.b16 %v8575, %v8571
        %v8756 = vpack.c.b16 %v8580, %v8576
        %v8757 = vpack.c.b16 %v8581, %v8577
        %v8758 = vpack.c.b16 %v8582, %v8578
        %v8759 = vpack.c.b16 %v8583, %v8579
        %v8760 = vpack.c.b16 %v8588, %v8584
        %v8761 = vpack.c.b16 %v8589, %v8585
        %v8762 = vpack.c.b16 %v8590, %v8586
        %v8763 = vpack.c.b16 %v8591, %v8587
        %v8764 = vpack.c.b16 %v8596, %v8592
        %v8765 = vpack.c.b16 %v8597, %v8593
        %v8766 = vpack.c.b16 %v8598, %v8594
        %v8767 = vpack.c.b16 %v8599, %v8595
        %v8768 = vpack.c.b16 %v8604, %v8600
        %v8769 = vpack.c.b16 %v8605, %v8601
        %v8770 = vpack.c.b16 %v8606, %v8602
        %v8771 = vpack.c.b16 %v8607, %v8603
        %v8772 = vpack.c.b16 %v8612, %v8608
        %v8773 = vpack.c.b16 %v8613, %v8609
        %v8774 = vpack.c.b16 %v8614, %v8610
        %v8775 = vpack.c.b16 %v8615, %v8611
        %v8776 = vpack.c.b16 %v8620, %v8616
        %v8777 = vpack.c.b16 %v8621, %v8617
        %v8778 = vpack.c.b16 %v8622, %v8618
        %v8779 = vpack.c.b16 %v8623, %v8619
        %v8780 = vpack.c.b16 %v8628, %v8624
        %v8781 = vpack.c.b16 %v8629, %v8625
        %v8782 = vpack.c.b16 %v8630, %v8626
        %v8783 = vpack.c.b16 %v8631, %v8627
        %v8784 = vpack.c.b16 %v8636, %v8632
        %v8785 = vpack.c.b16 %v8637, %v8633
        %v8786 = vpack.c.b16 %v8638, %v8634
        %v8787 = vpack.c.b16 %v8639, %v8635
        %v8788 = vpack.c.b16 %v8644, %v8640
        %v8789 = vpack.c.b16 %v8645, %v8641
        %v8790 = vpack.c.b16 %v8646, %v8642
        %v8791 = vpack.c.b16 %v8647, %v8643
        %v8792 = vpack.c.b16 %v8652, %v8648
        %v8793 = vpack.c.b16 %v8653, %v8649
        %v8794 = vpack.c.b16 %v8654, %v8650
        %v8795 = vpack.c.b16 %v8655, %v8651
        %v8796 = vpack.c.b16 %v8660, %v8656
        %v8797 = vpack.c.b16 %v8661, %v8657
        %v8798 = vpack.c.b16 %v8662, %v8658
        %v8799 = vpack.c.b16 %v8663, %v8659
        %v8800 = vpack.c.b16 %v8668, %v8664
        %v8801 = vpack.c.b16 %v8669, %v8665
        %v8802 = vpack.c.b16 %v8670, %v8666
        %v8803 = vpack.c.b16 %v8671, %v8667
        %v8804 = vpack.c.b16 %v8676, %v8672
        %v8805 = vpack.c.b16 %v8677, %v8673
        %v8806 = vpack.c.b16 %v8678, %v8674
        %v8807 = vpack.c.b16 %v8679, %v8675
        %8936 = vmatprep.subr.bf16.mxu0 %v8709
        %8937 = vmatpush1.bf16.msra.mxu0 %v8708
        %8938 = vmatprep.subr.bf16.mxu0 %v8705
        %8939 = vmatpush1.bf16.msra.mxu0 %v8704
        %8940 = vmatprep.subr.bf16.mxu0 %v8701
        %8941 = vmatpush1.bf16.msra.mxu0 %v8700
        %8942 = vmatprep.subr.bf16.mxu0 %v8697
        %8943 = vmatpush1.bf16.msra.mxu0 %v8696
        %8944 = vmatprep.subr.bf16.mxu0 %v8693
        %8945 = vmatpush1.bf16.msra.mxu0 %v8692
        %8946 = vmatprep.subr.bf16.mxu0 %v8689
        %8947 = vmatpush1.bf16.msra.mxu0 %v8688
        %8948 = vmatprep.subr.bf16.mxu0 %v8685
        %8949 = vmatpush1.bf16.msra.mxu0 %v8684
        %8950 = vmatprep.subr.bf16.mxu0 %v8681
        %8951 = vmatpush1.bf16.msra.mxu0 %v8680
        %8952 = vmatprep.subr.bf16.mxu0 %v8741
        %8953 = vmatpush2.bf16.msra.mxu0 %v8740
        %8954 = vmatprep.subr.bf16.mxu0 %v8737
        %8955 = vmatpush2.bf16.msra.mxu0 %v8736
        %8956 = vmatprep.subr.bf16.mxu0 %v8733
        %8957 = vmatpush2.bf16.msra.mxu0 %v8732
        %8958 = vmatprep.subr.bf16.mxu0 %v8729
        %8959 = vmatpush2.bf16.msra.mxu0 %v8728
        %8960 = vmatprep.subr.bf16.mxu0 %v8725
        %8961 = vmatpush2.bf16.msra.mxu0 %v8724
        %8962 = vmatprep.subr.bf16.mxu0 %v8721
        %8963 = vmatpush2.bf16.msra.mxu0 %v8720
        %8964 = vmatprep.subr.bf16.mxu0 %v8717
        %8965 = vmatpush2.bf16.msra.mxu0 %v8716
        %8966 = vmatprep.subr.bf16.mxu0 %v8713
        %8967 = vmatpush2.bf16.msra.mxu0 %v8712
        %8968 = vmatprep.mubr.bf16.mxu0 %v8143
        %8969 = vmatmul.mubr.bf16.gmra.mxu0 %v8142
        %v8970 = vpop.f32.mrf.mxu0
        %v8971 = vadd.f32 %v8279, %v8970
        %v8972 = vpop.f32.mrf.mxu0
        %v8973 = vadd.f32 %v8283, %v8972
        %v8974 = vpop.f32.mrf.mxu0
        %v8975 = vadd.f32 %v8279, %v8974
        %v8976 = vpop.f32.mrf.mxu0
        %v8977 = vadd.f32 %v8283, %v8976
        %8978 = vdwg.mxu0
        %8979 = vmatprep.subr.bf16.mxu0 %v8773
        %8980 = vmatpush1.bf16.msra.mxu0 %v8772
        %8981 = vmatprep.subr.bf16.mxu0 %v8769
        %8982 = vmatpush1.bf16.msra.mxu0 %v8768
        %8983 = vmatprep.subr.bf16.mxu0 %v8765
        %8984 = vmatpush1.bf16.msra.mxu0 %v8764
        %8985 = vmatprep.subr.bf16.mxu0 %v8761
        %8986 = vmatpush1.bf16.msra.mxu0 %v8760
        %8987 = vmatprep.subr.bf16.mxu0 %v8757
        %8988 = vmatpush1.bf16.msra.mxu0 %v8756
        %8989 = vmatprep.subr.bf16.mxu0 %v8753
        %8990 = vmatpush1.bf16.msra.mxu0 %v8752
        %8991 = vmatprep.subr.bf16.mxu0 %v8749
        %8992 = vmatpush1.bf16.msra.mxu0 %v8748
        %8993 = vmatprep.subr.bf16.mxu0 %v8745
        %8994 = vmatpush1.bf16.msra.mxu0 %v8744
        %8995 = vmatprep.subr.bf16.mxu0 %v8805
        %8996 = vmatpush2.bf16.msra.mxu0 %v8804
        %8997 = vmatprep.subr.bf16.mxu0 %v8801
        %8998 = vmatpush2.bf16.msra.mxu0 %v8800
        %8999 = vmatprep.subr.bf16.mxu0 %v8797
        %9000 = vmatpush2.bf16.msra.mxu0 %v8796
        %9001 = vmatprep.subr.bf16.mxu0 %v8793
        %9002 = vmatpush2.bf16.msra.mxu0 %v8792
        %9003 = vmatprep.subr.bf16.mxu0 %v8789
        %9004 = vmatpush2.bf16.msra.mxu0 %v8788
        %9005 = vmatprep.subr.bf16.mxu0 %v8785
        %9006 = vmatpush2.bf16.msra.mxu0 %v8784
        %9007 = vmatprep.subr.bf16.mxu0 %v8781
        %9008 = vmatpush2.bf16.msra.mxu0 %v8780
        %9009 = vmatprep.subr.bf16.mxu0 %v8777
        %9010 = vmatpush2.bf16.msra.mxu0 %v8776
        %9011 = vmatprep.mubr.bf16.mxu0 %v8145
        %9012 = vmatmul.mubr.bf16.gmra.mxu0 %v8144
        %v9013 = vpop.f32.mrf.mxu0
        %v9014 = vadd.f32 %v8971, %v9013
        %v9015 = vpop.f32.mrf.mxu0
        %v9016 = vadd.f32 %v8973, %v9015
        %v9017 = vpop.f32.mrf.mxu0
        %v9018 = vadd.f32 %v8975, %v9017
        %v9019 = vpop.f32.mrf.mxu0
        %v9020 = vadd.f32 %v8977, %v9019
        %9021 = vdwg.mxu0
        %9022 = vmatprep.subr.bf16.mxu0 %v8711
        %9023 = vmatpush1.bf16.msra.mxu0 %v8710
        %9024 = vmatprep.subr.bf16.mxu0 %v8707
        %9025 = vmatpush1.bf16.msra.mxu0 %v8706
        %9026 = vmatprep.subr.bf16.mxu0 %v8703
        %9027 = vmatpush1.bf16.msra.mxu0 %v8702
        %9028 = vmatprep.subr.bf16.mxu0 %v8699
        %9029 = vmatpush1.bf16.msra.mxu0 %v8698
        %9030 = vmatprep.subr.bf16.mxu0 %v8695
        %9031 = vmatpush1.bf16.msra.mxu0 %v8694
        %9032 = vmatprep.subr.bf16.mxu0 %v8691
        %9033 = vmatpush1.bf16.msra.mxu0 %v8690
        %9034 = vmatprep.subr.bf16.mxu0 %v8687
        %9035 = vmatpush1.bf16.msra.mxu0 %v8686
        %9036 = vmatprep.subr.bf16.mxu0 %v8683
        %9037 = vmatpush1.bf16.msra.mxu0 %v8682
        %9038 = vmatprep.subr.bf16.mxu0 %v8743
        %9039 = vmatpush2.bf16.msra.mxu0 %v8742
        %9040 = vmatprep.subr.bf16.mxu0 %v8739
        %9041 = vmatpush2.bf16.msra.mxu0 %v8738
        %9042 = vmatprep.subr.bf16.mxu0 %v8735
        %9043 = vmatpush2.bf16.msra.mxu0 %v8734
        %9044 = vmatprep.subr.bf16.mxu0 %v8731
        %9045 = vmatpush2.bf16.msra.mxu0 %v8730
        %9046 = vmatprep.subr.bf16.mxu0 %v8727
        %9047 = vmatpush2.bf16.msra.mxu0 %v8726
        %9048 = vmatprep.subr.bf16.mxu0 %v8723
        %9049 = vmatpush2.bf16.msra.mxu0 %v8722
        %9050 = vmatprep.subr.bf16.mxu0 %v8719
        %9051 = vmatpush2.bf16.msra.mxu0 %v8718
        %9052 = vmatprep.subr.bf16.mxu0 %v8715
        %9053 = vmatpush2.bf16.msra.mxu0 %v8714
        %9054 = vmatprep.mubr.bf16.mxu0 %v8143
        %9055 = vmatmul.mubr.bf16.gmra.mxu0 %v8142
        %v9056 = vpop.f32.mrf.mxu0
        %v9057 = vadd.f32 %v8287, %v9056
        %v9058 = vpop.f32.mrf.mxu0
        %v9059 = vadd.f32 %v8291, %v9058
        %v9060 = vpop.f32.mrf.mxu0
        %v9061 = vadd.f32 %v8287, %v9060
        %v9062 = vpop.f32.mrf.mxu0
        %v9063 = vadd.f32 %v8291, %v9062
        %9064 = vdwg.mxu0
        %9065 = vmatprep.subr.bf16.mxu0 %v8775
        %9066 = vmatpush1.bf16.msra.mxu0 %v8774
        %9067 = vmatprep.subr.bf16.mxu0 %v8771
        %9068 = vmatpush1.bf16.msra.mxu0 %v8770
        %9069 = vmatprep.subr.bf16.mxu0 %v8767
        %9070 = vmatpush1.bf16.msra.mxu0 %v8766
        %9071 = vmatprep.subr.bf16.mxu0 %v8763
        %9072 = vmatpush1.bf16.msra.mxu0 %v8762
        %9073 = vmatprep.subr.bf16.mxu0 %v8759
        %9074 = vmatpush1.bf16.msra.mxu0 %v8758
        %9075 = vmatprep.subr.bf16.mxu0 %v8755
        %9076 = vmatpush1.bf16.msra.mxu0 %v8754
        %9077 = vmatprep.subr.bf16.mxu0 %v8751
        %9078 = vmatpush1.bf16.msra.mxu0 %v8750
        %9079 = vmatprep.subr.bf16.mxu0 %v8747
        %9080 = vmatpush1.bf16.msra.mxu0 %v8746
        %9081 = vmatprep.subr.bf16.mxu0 %v8807
        %9082 = vmatpush2.bf16.msra.mxu0 %v8806
        %9083 = vmatprep.subr.bf16.mxu0 %v8803
        %9084 = vmatpush2.bf16.msra.mxu0 %v8802
        %9085 = vmatprep.subr.bf16.mxu0 %v8799
        %9086 = vmatpush2.bf16.msra.mxu0 %v8798
        %9087 = vmatprep.subr.bf16.mxu0 %v8795
        %9088 = vmatpush2.bf16.msra.mxu0 %v8794
        %9089 = vmatprep.subr.bf16.mxu0 %v8791
        %9090 = vmatpush2.bf16.msra.mxu0 %v8790
        %9091 = vmatprep.subr.bf16.mxu0 %v8787
        %9092 = vmatpush2.bf16.msra.mxu0 %v8786
        %9093 = vmatprep.subr.bf16.mxu0 %v8783
        %9094 = vmatpush2.bf16.msra.mxu0 %v8782
        %9095 = vmatprep.subr.bf16.mxu0 %v8779
        %9096 = vmatpush2.bf16.msra.mxu0 %v8778
        %9097 = vmatprep.mubr.bf16.mxu0 %v8145
        %9098 = vmatmul.mubr.bf16.gmra.mxu0 %v8144
        %v9099 = vpop.f32.mrf.mxu0
        %v9100 = vadd.f32 %v9057, %v9099
        %v9101 = vpop.f32.mrf.mxu0
        %v9102 = vadd.f32 %v9059, %v9101
        %v9103 = vpop.f32.mrf.mxu0
        %v9104 = vadd.f32 %v9061, %v9103
        %v9105 = vpop.f32.mrf.mxu0
        %v9106 = vadd.f32 %v9063, %v9105
        %9107 = vdwg.mxu0
        %v9108 = vadd.f32 %v5018, %v9014
        %v9109 = vadd.f32 %v5019, %v9016
        %v9110 = vadd.f32 %v5020, %v9100
        %v9111 = vadd.f32 %v5021, %v9102
        %v9112 = vadd.f32 %v5022, %v9018
        %v9113 = vadd.f32 %v5023, %v9020
        %v9114 = vadd.f32 %v5024, %v9104
        %v9115 = vadd.f32 %v5025, %v9106
        %v9116 = vld [vmem:[#allocation24] sm:$0xf]
        %v9117 = vld [vmem:[#allocation25] sm:$0xf]
        %v9118 = vadd.f32 %v9108, %v9109
        %v9119 = vadd.f32 %v9118, %v9110
        %v9120 = vadd.f32 %v9119, %v9111
        %9121 = vadd.xlane.f32.xlu0 %v9120
        %v9122 = vpop.xlane.xlu0 %9121
        %vm9123 = vcmask 1041408
        %v9124 = vsel %vm9123, %v9112, 0.0
        %v9125 = vsel %vm9123, %v9113, 0.0
        %v9126 = vadd.f32 %v9124, %v9125
        %v9127 = vsel %vm9123, %v9114, 0.0
        %v9128 = vadd.f32 %v9126, %v9127
        %v9129 = vsel %vm9123, %v9115, 0.0
        %v9130 = vadd.f32 %v9128, %v9129
        %9131 = vadd.xlane.f32.xlu0 %v9130
        %v9132 = vpop.xlane.xlu0 %9131
        %v9133 = vrcp.pop 512.0
        %v9134 = vmul.f32 %v9122, %v9133
        %v9135 = vmul.f32 %v9132, %v9133
        %v9136 = vsub.f32 %v9108, %v9134
        %v9137 = vsub.f32 %v9109, %v9134
        %v9138 = vsub.f32 %v9110, %v9134
        %v9139 = vsub.f32 %v9111, %v9134
        %v9140 = vsub.f32 %v9112, %v9135
        %v9141 = vsub.f32 %v9113, %v9135
        %v9142 = vsub.f32 %v9114, %v9135
        %v9143 = vsub.f32 %v9115, %v9135
        %v9144 = vmul.f32 %v9136, %v9136
        %v9145 = vmul.f32 %v9137, %v9137
        %v9146 = vmul.f32 %v9138, %v9138
        %v9147 = vmul.f32 %v9139, %v9139
        %v9148 = vmul.f32 %v9140, %v9140
        %v9149 = vmul.f32 %v9141, %v9141
        %v9150 = vmul.f32 %v9142, %v9142
        %v9151 = vmul.f32 %v9143, %v9143
        %v9152 = vadd.f32 %v9144, %v9145
        %v9153 = vadd.f32 %v9152, %v9146
        %v9154 = vadd.f32 %v9153, %v9147
        %9155 = vadd.xlane.f32.xlu0 %v9154
        %v9156 = vpop.xlane.xlu0 %9155
        %v9157 = vsel %vm9123, %v9148, 0.0
        %v9158 = vsel %vm9123, %v9149, 0.0
        %v9159 = vadd.f32 %v9157, %v9158
        %v9160 = vsel %vm9123, %v9150, 0.0
        %v9161 = vadd.f32 %v9159, %v9160
        %v9162 = vsel %vm9123, %v9151, 0.0
        %v9163 = vadd.f32 %v9161, %v9162
        %9164 = vadd.xlane.f32.xlu0 %v9163
        %v9165 = vpop.xlane.xlu0 %9164
        %v9166 = vmul.f32 %v9156, %v9133
        %v9167 = vmul.f32 %v9165, %v9133
        %v9168 = vadd.f32 %v9166, 1e-05
        %v9169 = vadd.f32 %v9167, 1e-05
        %v9170 = vrsqrt.pop %v9168
        %v9171 = vrsqrt.pop %v9169
        %v9172 = vmul.f32 %v9136, %v9170
        %v9173 = vmul.f32 %v9137, %v9170
        %v9174 = vmul.f32 %v9138, %v9170
        %v9175 = vmul.f32 %v9139, %v9170
        %v9176 = vmul.f32 %v9140, %v9171
        %v9177 = vmul.f32 %v9141, %v9171
        %v9178 = vmul.f32 %v9142, %v9171
        %v9179 = vmul.f32 %v9143, %v9171
        %v9181 = vlaneseq
        %v9182 = vshrl.u32 %v9181, 7
        %v9183 = vsub.s32 0, %v9182
        %v9184 = vrot.slane %v9116, %v9183
        %v9185 = vlaneseq
        %v9186 = vshrl.u32 %v9185, 7
        %v9187 = vsub.s32 1, %v9186
        %v9188 = vrot.slane %v9116, %v9187
        %v9189 = vlaneseq
        %v9190 = vshrl.u32 %v9189, 7
        %v9191 = vsub.s32 2, %v9190
        %v9192 = vrot.slane %v9116, %v9191
        %v9193 = vlaneseq
        %v9194 = vshrl.u32 %v9193, 7
        %v9195 = vsub.s32 3, %v9194
        %v9196 = vrot.slane %v9116, %v9195
        %v9201 = vmul.f32 %v9172, %v9184
        %v9202 = vmul.f32 %v9173, %v9188
        %v9203 = vmul.f32 %v9174, %v9192
        %v9204 = vmul.f32 %v9175, %v9196
        %v9205 = vmul.f32 %v9176, %v9184
        %v9206 = vmul.f32 %v9177, %v9188
        %v9207 = vmul.f32 %v9178, %v9192
        %v9208 = vmul.f32 %v9179, %v9196
        %v9210 = vlaneseq
        %v9211 = vshrl.u32 %v9210, 7
        %v9212 = vsub.s32 0, %v9211
        %v9213 = vrot.slane %v9117, %v9212
        %v9214 = vlaneseq
        %v9215 = vshrl.u32 %v9214, 7
        %v9216 = vsub.s32 1, %v9215
        %v9217 = vrot.slane %v9117, %v9216
        %v9218 = vlaneseq
        %v9219 = vshrl.u32 %v9218, 7
        %v9220 = vsub.s32 2, %v9219
        %v9221 = vrot.slane %v9117, %v9220
        %v9222 = vlaneseq
        %v9223 = vshrl.u32 %v9222, 7
        %v9224 = vsub.s32 3, %v9223
        %v9225 = vrot.slane %v9117, %v9224
        %v9230 = vadd.f32 %v9201, %v9213
        %v9231 = vadd.f32 %v9202, %v9217
        %v9232 = vadd.f32 %v9203, %v9221
        %v9233 = vadd.f32 %v9204, %v9225
        %v9234 = vadd.f32 %v9205, %v9213
        %v9235 = vadd.f32 %v9206, %v9217
        %v9236 = vadd.f32 %v9207, %v9221
        %v9237 = vadd.f32 %v9208, %v9225
        %v9238 = vpack.c.bf16 %v9234, %v9230
        %v9239 = vpack.c.bf16 %v9235, %v9231
        %v9240 = vpack.c.bf16 %v9236, %v9232
        %v9241 = vpack.c.bf16 %v9237, %v9233
        %v9242 = vld [vmem:[#allocation18] sm:$0xff]
        %v9243 = vld [vmem:[#allocation18 + $0x8] sm:$0xff]
        %v9244 = vld [vmem:[#allocation18 + $0x10] sm:$0xff]
        %v9245 = vld [vmem:[#allocation18 + $0x18] sm:$0xff]
        %v9246 = vld [vmem:[#allocation18 + $0x20] sm:$0xff]
        %v9247 = vld [vmem:[#allocation18 + $0x28] sm:$0xff]
        %v9248 = vld [vmem:[#allocation18 + $0x30] sm:$0xff]
        %v9249 = vld [vmem:[#allocation18 + $0x38] sm:$0xff]
        %v9250 = vld [vmem:[#allocation18 + $0x40] sm:$0xff]
        %v9251 = vld [vmem:[#allocation18 + $0x48] sm:$0xff]
        %v9252 = vld [vmem:[#allocation18 + $0x50] sm:$0xff]
        %v9253 = vld [vmem:[#allocation18 + $0x58] sm:$0xff]
        %v9254 = vld [vmem:[#allocation18 + $0x60] sm:$0xff]
        %v9255 = vld [vmem:[#allocation18 + $0x68] sm:$0xff]
        %v9256 = vld [vmem:[#allocation18 + $0x70] sm:$0xff]
        %v9257 = vld [vmem:[#allocation18 + $0x78] sm:$0xff]
        %v9258 = vld [vmem:[#allocation18 + $0x80] sm:$0xff]
        %v9259 = vld [vmem:[#allocation18 + $0x88] sm:$0xff]
        %v9260 = vld [vmem:[#allocation18 + $0x90] sm:$0xff]
        %v9261 = vld [vmem:[#allocation18 + $0x98] sm:$0xff]
        %v9262 = vld [vmem:[#allocation18 + $0xa0] sm:$0xff]
        %v9263 = vld [vmem:[#allocation18 + $0xa8] sm:$0xff]
        %v9264 = vld [vmem:[#allocation18 + $0xb0] sm:$0xff]
        %v9265 = vld [vmem:[#allocation18 + $0xb8] sm:$0xff]
        %v9266 = vld [vmem:[#allocation18 + $0xc0] sm:$0xff]
        %v9267 = vld [vmem:[#allocation18 + $0xc8] sm:$0xff]
        %v9268 = vld [vmem:[#allocation18 + $0xd0] sm:$0xff]
        %v9269 = vld [vmem:[#allocation18 + $0xd8] sm:$0xff]
        %v9270 = vld [vmem:[#allocation18 + $0xe0] sm:$0xff]
        %v9271 = vld [vmem:[#allocation18 + $0xe8] sm:$0xff]
        %v9272 = vld [vmem:[#allocation18 + $0xf0] sm:$0xff]
        %v9273 = vld [vmem:[#allocation18 + $0xf8] sm:$0xff]
        %v9274 = vld [vmem:[#allocation18 + $0x100] sm:$0xff]
        %v9275 = vld [vmem:[#allocation18 + $0x108] sm:$0xff]
        %v9276 = vld [vmem:[#allocation18 + $0x110] sm:$0xff]
        %v9277 = vld [vmem:[#allocation18 + $0x118] sm:$0xff]
        %v9278 = vld [vmem:[#allocation18 + $0x120] sm:$0xff]
        %v9279 = vld [vmem:[#allocation18 + $0x128] sm:$0xff]
        %v9280 = vld [vmem:[#allocation18 + $0x130] sm:$0xff]
        %v9281 = vld [vmem:[#allocation18 + $0x138] sm:$0xff]
        %v9282 = vld [vmem:[#allocation18 + $0x140] sm:$0xff]
        %v9283 = vld [vmem:[#allocation18 + $0x148] sm:$0xff]
        %v9284 = vld [vmem:[#allocation18 + $0x150] sm:$0xff]
        %v9285 = vld [vmem:[#allocation18 + $0x158] sm:$0xff]
        %v9286 = vld [vmem:[#allocation18 + $0x160] sm:$0xff]
        %v9287 = vld [vmem:[#allocation18 + $0x168] sm:$0xff]
        %v9288 = vld [vmem:[#allocation18 + $0x170] sm:$0xff]
        %v9289 = vld [vmem:[#allocation18 + $0x178] sm:$0xff]
        %v9290 = vld [vmem:[#allocation18 + $0x180] sm:$0xff]
        %v9291 = vld [vmem:[#allocation18 + $0x188] sm:$0xff]
        %v9292 = vld [vmem:[#allocation18 + $0x190] sm:$0xff]
        %v9293 = vld [vmem:[#allocation18 + $0x198] sm:$0xff]
        %v9294 = vld [vmem:[#allocation18 + $0x1a0] sm:$0xff]
        %v9295 = vld [vmem:[#allocation18 + $0x1a8] sm:$0xff]
        %v9296 = vld [vmem:[#allocation18 + $0x1b0] sm:$0xff]
        %v9297 = vld [vmem:[#allocation18 + $0x1b8] sm:$0xff]
        %v9298 = vld [vmem:[#allocation18 + $0x1c0] sm:$0xff]
        %v9299 = vld [vmem:[#allocation18 + $0x1c8] sm:$0xff]
        %v9300 = vld [vmem:[#allocation18 + $0x1d0] sm:$0xff]
        %v9301 = vld [vmem:[#allocation18 + $0x1d8] sm:$0xff]
        %v9302 = vld [vmem:[#allocation18 + $0x1e0] sm:$0xff]
        %v9303 = vld [vmem:[#allocation18 + $0x1e8] sm:$0xff]
        %v9304 = vld [vmem:[#allocation18 + $0x1f0] sm:$0xff]
        %v9305 = vld [vmem:[#allocation18 + $0x1f8] sm:$0xff]
        %v9306 = vld [vmem:[#allocation18 + $0x200] sm:$0xff]
        %v9307 = vld [vmem:[#allocation18 + $0x208] sm:$0xff]
        %v9308 = vld [vmem:[#allocation18 + $0x210] sm:$0xff]
        %v9309 = vld [vmem:[#allocation18 + $0x218] sm:$0xff]
        %v9310 = vld [vmem:[#allocation18 + $0x220] sm:$0xff]
        %v9311 = vld [vmem:[#allocation18 + $0x228] sm:$0xff]
        %v9312 = vld [vmem:[#allocation18 + $0x230] sm:$0xff]
        %v9313 = vld [vmem:[#allocation18 + $0x238] sm:$0xff]
        %v9314 = vld [vmem:[#allocation18 + $0x240] sm:$0xff]
        %v9315 = vld [vmem:[#allocation18 + $0x248] sm:$0xff]
        %v9316 = vld [vmem:[#allocation18 + $0x250] sm:$0xff]
        %v9317 = vld [vmem:[#allocation18 + $0x258] sm:$0xff]
        %v9318 = vld [vmem:[#allocation18 + $0x260] sm:$0xff]
        %v9319 = vld [vmem:[#allocation18 + $0x268] sm:$0xff]
        %v9320 = vld [vmem:[#allocation18 + $0x270] sm:$0xff]
        %v9321 = vld [vmem:[#allocation18 + $0x278] sm:$0xff]
        %v9322 = vld [vmem:[#allocation18 + $0x280] sm:$0xff]
        %v9323 = vld [vmem:[#allocation18 + $0x288] sm:$0xff]
        %v9324 = vld [vmem:[#allocation18 + $0x290] sm:$0xff]
        %v9325 = vld [vmem:[#allocation18 + $0x298] sm:$0xff]
        %v9326 = vld [vmem:[#allocation18 + $0x2a0] sm:$0xff]
        %v9327 = vld [vmem:[#allocation18 + $0x2a8] sm:$0xff]
        %v9328 = vld [vmem:[#allocation18 + $0x2b0] sm:$0xff]
        %v9329 = vld [vmem:[#allocation18 + $0x2b8] sm:$0xff]
        %v9330 = vld [vmem:[#allocation18 + $0x2c0] sm:$0xff]
        %v9331 = vld [vmem:[#allocation18 + $0x2c8] sm:$0xff]
        %v9332 = vld [vmem:[#allocation18 + $0x2d0] sm:$0xff]
        %v9333 = vld [vmem:[#allocation18 + $0x2d8] sm:$0xff]
        %v9334 = vld [vmem:[#allocation18 + $0x2e0] sm:$0xff]
        %v9335 = vld [vmem:[#allocation18 + $0x2e8] sm:$0xff]
        %v9336 = vld [vmem:[#allocation18 + $0x2f0] sm:$0xff]
        %v9337 = vld [vmem:[#allocation18 + $0x2f8] sm:$0xff]
        %v9338 = vld [vmem:[#allocation18 + $0x300] sm:$0xff]
        %v9339 = vld [vmem:[#allocation18 + $0x308] sm:$0xff]
        %v9340 = vld [vmem:[#allocation18 + $0x310] sm:$0xff]
        %v9341 = vld [vmem:[#allocation18 + $0x318] sm:$0xff]
        %v9342 = vld [vmem:[#allocation18 + $0x320] sm:$0xff]
        %v9343 = vld [vmem:[#allocation18 + $0x328] sm:$0xff]
        %v9344 = vld [vmem:[#allocation18 + $0x330] sm:$0xff]
        %v9345 = vld [vmem:[#allocation18 + $0x338] sm:$0xff]
        %v9346 = vld [vmem:[#allocation18 + $0x340] sm:$0xff]
        %v9347 = vld [vmem:[#allocation18 + $0x348] sm:$0xff]
        %v9348 = vld [vmem:[#allocation18 + $0x350] sm:$0xff]
        %v9349 = vld [vmem:[#allocation18 + $0x358] sm:$0xff]
        %v9350 = vld [vmem:[#allocation18 + $0x360] sm:$0xff]
        %v9351 = vld [vmem:[#allocation18 + $0x368] sm:$0xff]
        %v9352 = vld [vmem:[#allocation18 + $0x370] sm:$0xff]
        %v9353 = vld [vmem:[#allocation18 + $0x378] sm:$0xff]
        %v9354 = vld [vmem:[#allocation18 + $0x380] sm:$0xff]
        %v9355 = vld [vmem:[#allocation18 + $0x388] sm:$0xff]
        %v9356 = vld [vmem:[#allocation18 + $0x390] sm:$0xff]
        %v9357 = vld [vmem:[#allocation18 + $0x398] sm:$0xff]
        %v9358 = vld [vmem:[#allocation18 + $0x3a0] sm:$0xff]
        %v9359 = vld [vmem:[#allocation18 + $0x3a8] sm:$0xff]
        %v9360 = vld [vmem:[#allocation18 + $0x3b0] sm:$0xff]
        %v9361 = vld [vmem:[#allocation18 + $0x3b8] sm:$0xff]
        %v9362 = vld [vmem:[#allocation18 + $0x3c0] sm:$0xff]
        %v9363 = vld [vmem:[#allocation18 + $0x3c8] sm:$0xff]
        %v9364 = vld [vmem:[#allocation18 + $0x3d0] sm:$0xff]
        %v9365 = vld [vmem:[#allocation18 + $0x3d8] sm:$0xff]
        %v9366 = vld [vmem:[#allocation18 + $0x3e0] sm:$0xff]
        %v9367 = vld [vmem:[#allocation18 + $0x3e8] sm:$0xff]
        %v9368 = vld [vmem:[#allocation18 + $0x3f0] sm:$0xff]
        %v9369 = vld [vmem:[#allocation18 + $0x3f8] sm:$0xff]
        %v9370 = vld [vmem:[#allocation19] sm:$0xf]
        %v9372 = vlaneseq
        %v9373 = vshrl.u32 %v9372, 7
        %v9374 = vsub.s32 0, %v9373
        %v9375 = vrot.slane %v9370, %v9374
        %v9376 = vlaneseq
        %v9377 = vshrl.u32 %v9376, 7
        %v9378 = vsub.s32 1, %v9377
        %v9379 = vrot.slane %v9370, %v9378
        %v9380 = vlaneseq
        %v9381 = vshrl.u32 %v9380, 7
        %v9382 = vsub.s32 2, %v9381
        %v9383 = vrot.slane %v9370, %v9382
        %v9384 = vlaneseq
        %v9385 = vshrl.u32 %v9384, 7
        %v9386 = vsub.s32 3, %v9385
        %v9387 = vrot.slane %v9370, %v9386
        %v9520 = vunpack.c.l.b16 %v9242
        %v9521 = vunpack.c.h.b16 %v9242
        %v9522 = vunpack.c.l.b16 %v9243
        %v9523 = vunpack.c.h.b16 %v9243
        %v9524 = vunpack.c.l.b16 %v9244
        %v9525 = vunpack.c.h.b16 %v9244
        %v9526 = vunpack.c.l.b16 %v9245
        %v9527 = vunpack.c.h.b16 %v9245
        %v9528 = vunpack.c.l.b16 %v9246
        %v9529 = vunpack.c.h.b16 %v9246
        %v9530 = vunpack.c.l.b16 %v9247
        %v9531 = vunpack.c.h.b16 %v9247
        %v9532 = vunpack.c.l.b16 %v9248
        %v9533 = vunpack.c.h.b16 %v9248
        %v9534 = vunpack.c.l.b16 %v9249
        %v9535 = vunpack.c.h.b16 %v9249
        %v9536 = vunpack.c.l.b16 %v9250
        %v9537 = vunpack.c.h.b16 %v9250
        %v9538 = vunpack.c.l.b16 %v9251
        %v9539 = vunpack.c.h.b16 %v9251
        %v9540 = vunpack.c.l.b16 %v9252
        %v9541 = vunpack.c.h.b16 %v9252
        %v9542 = vunpack.c.l.b16 %v9253
        %v9543 = vunpack.c.h.b16 %v9253
        %v9544 = vunpack.c.l.b16 %v9254
        %v9545 = vunpack.c.h.b16 %v9254
        %v9546 = vunpack.c.l.b16 %v9255
        %v9547 = vunpack.c.h.b16 %v9255
        %v9548 = vunpack.c.l.b16 %v9256
        %v9549 = vunpack.c.h.b16 %v9256
        %v9550 = vunpack.c.l.b16 %v9257
        %v9551 = vunpack.c.h.b16 %v9257
        %v9552 = vunpack.c.l.b16 %v9258
        %v9553 = vunpack.c.h.b16 %v9258
        %v9554 = vunpack.c.l.b16 %v9259
        %v9555 = vunpack.c.h.b16 %v9259
        %v9556 = vunpack.c.l.b16 %v9260
        %v9557 = vunpack.c.h.b16 %v9260
        %v9558 = vunpack.c.l.b16 %v9261
        %v9559 = vunpack.c.h.b16 %v9261
        %v9560 = vunpack.c.l.b16 %v9262
        %v9561 = vunpack.c.h.b16 %v9262
        %v9562 = vunpack.c.l.b16 %v9263
        %v9563 = vunpack.c.h.b16 %v9263
        %v9564 = vunpack.c.l.b16 %v9264
        %v9565 = vunpack.c.h.b16 %v9264
        %v9566 = vunpack.c.l.b16 %v9265
        %v9567 = vunpack.c.h.b16 %v9265
        %v9568 = vunpack.c.l.b16 %v9266
        %v9569 = vunpack.c.h.b16 %v9266
        %v9570 = vunpack.c.l.b16 %v9267
        %v9571 = vunpack.c.h.b16 %v9267
        %v9572 = vunpack.c.l.b16 %v9268
        %v9573 = vunpack.c.h.b16 %v9268
        %v9574 = vunpack.c.l.b16 %v9269
        %v9575 = vunpack.c.h.b16 %v9269
        %v9576 = vunpack.c.l.b16 %v9270
        %v9577 = vunpack.c.h.b16 %v9270
        %v9578 = vunpack.c.l.b16 %v9271
        %v9579 = vunpack.c.h.b16 %v9271
        %v9580 = vunpack.c.l.b16 %v9272
        %v9581 = vunpack.c.h.b16 %v9272
        %v9582 = vunpack.c.l.b16 %v9273
        %v9583 = vunpack.c.h.b16 %v9273
        %v9584 = vunpack.c.l.b16 %v9274
        %v9585 = vunpack.c.h.b16 %v9274
        %v9586 = vunpack.c.l.b16 %v9275
        %v9587 = vunpack.c.h.b16 %v9275
        %v9588 = vunpack.c.l.b16 %v9276
        %v9589 = vunpack.c.h.b16 %v9276
        %v9590 = vunpack.c.l.b16 %v9277
        %v9591 = vunpack.c.h.b16 %v9277
        %v9592 = vunpack.c.l.b16 %v9278
        %v9593 = vunpack.c.h.b16 %v9278
        %v9594 = vunpack.c.l.b16 %v9279
        %v9595 = vunpack.c.h.b16 %v9279
        %v9596 = vunpack.c.l.b16 %v9280
        %v9597 = vunpack.c.h.b16 %v9280
        %v9598 = vunpack.c.l.b16 %v9281
        %v9599 = vunpack.c.h.b16 %v9281
        %v9600 = vunpack.c.l.b16 %v9282
        %v9601 = vunpack.c.h.b16 %v9282
        %v9602 = vunpack.c.l.b16 %v9283
        %v9603 = vunpack.c.h.b16 %v9283
        %v9604 = vunpack.c.l.b16 %v9284
        %v9605 = vunpack.c.h.b16 %v9284
        %v9606 = vunpack.c.l.b16 %v9285
        %v9607 = vunpack.c.h.b16 %v9285
        %v9608 = vunpack.c.l.b16 %v9286
        %v9609 = vunpack.c.h.b16 %v9286
        %v9610 = vunpack.c.l.b16 %v9287
        %v9611 = vunpack.c.h.b16 %v9287
        %v9612 = vunpack.c.l.b16 %v9288
        %v9613 = vunpack.c.h.b16 %v9288
        %v9614 = vunpack.c.l.b16 %v9289
        %v9615 = vunpack.c.h.b16 %v9289
        %v9616 = vunpack.c.l.b16 %v9290
        %v9617 = vunpack.c.h.b16 %v9290
        %v9618 = vunpack.c.l.b16 %v9291
        %v9619 = vunpack.c.h.b16 %v9291
        %v9620 = vunpack.c.l.b16 %v9292
        %v9621 = vunpack.c.h.b16 %v9292
        %v9622 = vunpack.c.l.b16 %v9293
        %v9623 = vunpack.c.h.b16 %v9293
        %v9624 = vunpack.c.l.b16 %v9294
        %v9625 = vunpack.c.h.b16 %v9294
        %v9626 = vunpack.c.l.b16 %v9295
        %v9627 = vunpack.c.h.b16 %v9295
        %v9628 = vunpack.c.l.b16 %v9296
        %v9629 = vunpack.c.h.b16 %v9296
        %v9630 = vunpack.c.l.b16 %v9297
        %v9631 = vunpack.c.h.b16 %v9297
        %v9632 = vunpack.c.l.b16 %v9298
        %v9633 = vunpack.c.h.b16 %v9298
        %v9634 = vunpack.c.l.b16 %v9299
        %v9635 = vunpack.c.h.b16 %v9299
        %v9636 = vunpack.c.l.b16 %v9300
        %v9637 = vunpack.c.h.b16 %v9300
        %v9638 = vunpack.c.l.b16 %v9301
        %v9639 = vunpack.c.h.b16 %v9301
        %v9640 = vunpack.c.l.b16 %v9302
        %v9641 = vunpack.c.h.b16 %v9302
        %v9642 = vunpack.c.l.b16 %v9303
        %v9643 = vunpack.c.h.b16 %v9303
        %v9644 = vunpack.c.l.b16 %v9304
        %v9645 = vunpack.c.h.b16 %v9304
        %v9646 = vunpack.c.l.b16 %v9305
        %v9647 = vunpack.c.h.b16 %v9305
        %v9648 = vunpack.c.l.b16 %v9306
        %v9649 = vunpack.c.h.b16 %v9306
        %v9650 = vunpack.c.l.b16 %v9307
        %v9651 = vunpack.c.h.b16 %v9307
        %v9652 = vunpack.c.l.b16 %v9308
        %v9653 = vunpack.c.h.b16 %v9308
        %v9654 = vunpack.c.l.b16 %v9309
        %v9655 = vunpack.c.h.b16 %v9309
        %v9656 = vunpack.c.l.b16 %v9310
        %v9657 = vunpack.c.h.b16 %v9310
        %v9658 = vunpack.c.l.b16 %v9311
        %v9659 = vunpack.c.h.b16 %v9311
        %v9660 = vunpack.c.l.b16 %v9312
        %v9661 = vunpack.c.h.b16 %v9312
        %v9662 = vunpack.c.l.b16 %v9313
        %v9663 = vunpack.c.h.b16 %v9313
        %v9664 = vunpack.c.l.b16 %v9314
        %v9665 = vunpack.c.h.b16 %v9314
        %v9666 = vunpack.c.l.b16 %v9315
        %v9667 = vunpack.c.h.b16 %v9315
        %v9668 = vunpack.c.l.b16 %v9316
        %v9669 = vunpack.c.h.b16 %v9316
        %v9670 = vunpack.c.l.b16 %v9317
        %v9671 = vunpack.c.h.b16 %v9317
        %v9672 = vunpack.c.l.b16 %v9318
        %v9673 = vunpack.c.h.b16 %v9318
        %v9674 = vunpack.c.l.b16 %v9319
        %v9675 = vunpack.c.h.b16 %v9319
        %v9676 = vunpack.c.l.b16 %v9320
        %v9677 = vunpack.c.h.b16 %v9320
        %v9678 = vunpack.c.l.b16 %v9321
        %v9679 = vunpack.c.h.b16 %v9321
        %v9680 = vunpack.c.l.b16 %v9322
        %v9681 = vunpack.c.h.b16 %v9322
        %v9682 = vunpack.c.l.b16 %v9323
        %v9683 = vunpack.c.h.b16 %v9323
        %v9684 = vunpack.c.l.b16 %v9324
        %v9685 = vunpack.c.h.b16 %v9324
        %v9686 = vunpack.c.l.b16 %v9325
        %v9687 = vunpack.c.h.b16 %v9325
        %v9688 = vunpack.c.l.b16 %v9326
        %v9689 = vunpack.c.h.b16 %v9326
        %v9690 = vunpack.c.l.b16 %v9327
        %v9691 = vunpack.c.h.b16 %v9327
        %v9692 = vunpack.c.l.b16 %v9328
        %v9693 = vunpack.c.h.b16 %v9328
        %v9694 = vunpack.c.l.b16 %v9329
        %v9695 = vunpack.c.h.b16 %v9329
        %v9696 = vunpack.c.l.b16 %v9330
        %v9697 = vunpack.c.h.b16 %v9330
        %v9698 = vunpack.c.l.b16 %v9331
        %v9699 = vunpack.c.h.b16 %v9331
        %v9700 = vunpack.c.l.b16 %v9332
        %v9701 = vunpack.c.h.b16 %v9332
        %v9702 = vunpack.c.l.b16 %v9333
        %v9703 = vunpack.c.h.b16 %v9333
        %v9704 = vunpack.c.l.b16 %v9334
        %v9705 = vunpack.c.h.b16 %v9334
        %v9706 = vunpack.c.l.b16 %v9335
        %v9707 = vunpack.c.h.b16 %v9335
        %v9708 = vunpack.c.l.b16 %v9336
        %v9709 = vunpack.c.h.b16 %v9336
        %v9710 = vunpack.c.l.b16 %v9337
        %v9711 = vunpack.c.h.b16 %v9337
        %v9712 = vunpack.c.l.b16 %v9338
        %v9713 = vunpack.c.h.b16 %v9338
        %v9714 = vunpack.c.l.b16 %v9339
        %v9715 = vunpack.c.h.b16 %v9339
        %v9716 = vunpack.c.l.b16 %v9340
        %v9717 = vunpack.c.h.b16 %v9340
        %v9718 = vunpack.c.l.b16 %v9341
        %v9719 = vunpack.c.h.b16 %v9341
        %v9720 = vunpack.c.l.b16 %v9342
        %v9721 = vunpack.c.h.b16 %v9342
        %v9722 = vunpack.c.l.b16 %v9343
        %v9723 = vunpack.c.h.b16 %v9343
        %v9724 = vunpack.c.l.b16 %v9344
        %v9725 = vunpack.c.h.b16 %v9344
        %v9726 = vunpack.c.l.b16 %v9345
        %v9727 = vunpack.c.h.b16 %v9345
        %v9728 = vunpack.c.l.b16 %v9346
        %v9729 = vunpack.c.h.b16 %v9346
        %v9730 = vunpack.c.l.b16 %v9347
        %v9731 = vunpack.c.h.b16 %v9347
        %v9732 = vunpack.c.l.b16 %v9348
        %v9733 = vunpack.c.h.b16 %v9348
        %v9734 = vunpack.c.l.b16 %v9349
        %v9735 = vunpack.c.h.b16 %v9349
        %v9736 = vunpack.c.l.b16 %v9350
        %v9737 = vunpack.c.h.b16 %v9350
        %v9738 = vunpack.c.l.b16 %v9351
        %v9739 = vunpack.c.h.b16 %v9351
        %v9740 = vunpack.c.l.b16 %v9352
        %v9741 = vunpack.c.h.b16 %v9352
        %v9742 = vunpack.c.l.b16 %v9353
        %v9743 = vunpack.c.h.b16 %v9353
        %v9744 = vunpack.c.l.b16 %v9354
        %v9745 = vunpack.c.h.b16 %v9354
        %v9746 = vunpack.c.l.b16 %v9355
        %v9747 = vunpack.c.h.b16 %v9355
        %v9748 = vunpack.c.l.b16 %v9356
        %v9749 = vunpack.c.h.b16 %v9356
        %v9750 = vunpack.c.l.b16 %v9357
        %v9751 = vunpack.c.h.b16 %v9357
        %v9752 = vunpack.c.l.b16 %v9358
        %v9753 = vunpack.c.h.b16 %v9358
        %v9754 = vunpack.c.l.b16 %v9359
        %v9755 = vunpack.c.h.b16 %v9359
        %v9756 = vunpack.c.l.b16 %v9360
        %v9757 = vunpack.c.h.b16 %v9360
        %v9758 = vunpack.c.l.b16 %v9361
        %v9759 = vunpack.c.h.b16 %v9361
        %v9760 = vunpack.c.l.b16 %v9362
        %v9761 = vunpack.c.h.b16 %v9362
        %v9762 = vunpack.c.l.b16 %v9363
        %v9763 = vunpack.c.h.b16 %v9363
        %v9764 = vunpack.c.l.b16 %v9364
        %v9765 = vunpack.c.h.b16 %v9364
        %v9766 = vunpack.c.l.b16 %v9365
        %v9767 = vunpack.c.h.b16 %v9365
        %v9768 = vunpack.c.l.b16 %v9366
        %v9769 = vunpack.c.h.b16 %v9366
        %v9770 = vunpack.c.l.b16 %v9367
        %v9771 = vunpack.c.h.b16 %v9367
        %v9772 = vunpack.c.l.b16 %v9368
        %v9773 = vunpack.c.h.b16 %v9368
        %v9774 = vunpack.c.l.b16 %v9369
        %v9775 = vunpack.c.h.b16 %v9369
        %v9776 = vpack.c.b16 %v9524, %v9520
        %v9777 = vpack.c.b16 %v9525, %v9521
        %v9778 = vpack.c.b16 %v9526, %v9522
        %v9779 = vpack.c.b16 %v9527, %v9523
        %v9780 = vpack.c.b16 %v9532, %v9528
        %v9781 = vpack.c.b16 %v9533, %v9529
        %v9782 = vpack.c.b16 %v9534, %v9530
        %v9783 = vpack.c.b16 %v9535, %v9531
        %v9784 = vpack.c.b16 %v9540, %v9536
        %v9785 = vpack.c.b16 %v9541, %v9537
        %v9786 = vpack.c.b16 %v9542, %v9538
        %v9787 = vpack.c.b16 %v9543, %v9539
        %v9788 = vpack.c.b16 %v9548, %v9544
        %v9789 = vpack.c.b16 %v9549, %v9545
        %v9790 = vpack.c.b16 %v9550, %v9546
        %v9791 = vpack.c.b16 %v9551, %v9547
        %v9792 = vpack.c.b16 %v9556, %v9552
        %v9793 = vpack.c.b16 %v9557, %v9553
        %v9794 = vpack.c.b16 %v9558, %v9554
        %v9795 = vpack.c.b16 %v9559, %v9555
        %v9796 = vpack.c.b16 %v9564, %v9560
        %v9797 = vpack.c.b16 %v9565, %v9561
        %v9798 = vpack.c.b16 %v9566, %v9562
        %v9799 = vpack.c.b16 %v9567, %v9563
        %v9800 = vpack.c.b16 %v9572, %v9568
        %v9801 = vpack.c.b16 %v9573, %v9569
        %v9802 = vpack.c.b16 %v9574, %v9570
        %v9803 = vpack.c.b16 %v9575, %v9571
        %v9804 = vpack.c.b16 %v9580, %v9576
        %v9805 = vpack.c.b16 %v9581, %v9577
        %v9806 = vpack.c.b16 %v9582, %v9578
        %v9807 = vpack.c.b16 %v9583, %v9579
        %v9808 = vpack.c.b16 %v9588, %v9584
        %v9809 = vpack.c.b16 %v9589, %v9585
        %v9810 = vpack.c.b16 %v9590, %v9586
        %v9811 = vpack.c.b16 %v9591, %v9587
        %v9812 = vpack.c.b16 %v9596, %v9592
        %v9813 = vpack.c.b16 %v9597, %v9593
        %v9814 = vpack.c.b16 %v9598, %v9594
        %v9815 = vpack.c.b16 %v9599, %v9595
        %v9816 = vpack.c.b16 %v9604, %v9600
        %v9817 = vpack.c.b16 %v9605, %v9601
        %v9818 = vpack.c.b16 %v9606, %v9602
        %v9819 = vpack.c.b16 %v9607, %v9603
        %v9820 = vpack.c.b16 %v9612, %v9608
        %v9821 = vpack.c.b16 %v9613, %v9609
        %v9822 = vpack.c.b16 %v9614, %v9610
        %v9823 = vpack.c.b16 %v9615, %v9611
        %v9824 = vpack.c.b16 %v9620, %v9616
        %v9825 = vpack.c.b16 %v9621, %v9617
        %v9826 = vpack.c.b16 %v9622, %v9618
        %v9827 = vpack.c.b16 %v9623, %v9619
        %v9828 = vpack.c.b16 %v9628, %v9624
        %v9829 = vpack.c.b16 %v9629, %v9625
        %v9830 = vpack.c.b16 %v9630, %v9626
        %v9831 = vpack.c.b16 %v9631, %v9627
        %v9832 = vpack.c.b16 %v9636, %v9632
        %v9833 = vpack.c.b16 %v9637, %v9633
        %v9834 = vpack.c.b16 %v9638, %v9634
        %v9835 = vpack.c.b16 %v9639, %v9635
        %v9836 = vpack.c.b16 %v9644, %v9640
        %v9837 = vpack.c.b16 %v9645, %v9641
        %v9838 = vpack.c.b16 %v9646, %v9642
        %v9839 = vpack.c.b16 %v9647, %v9643
        %v9840 = vpack.c.b16 %v9652, %v9648
        %v9841 = vpack.c.b16 %v9653, %v9649
        %v9842 = vpack.c.b16 %v9654, %v9650
        %v9843 = vpack.c.b16 %v9655, %v9651
        %v9844 = vpack.c.b16 %v9660, %v9656
        %v9845 = vpack.c.b16 %v9661, %v9657
        %v9846 = vpack.c.b16 %v9662, %v9658
        %v9847 = vpack.c.b16 %v9663, %v9659
        %v9848 = vpack.c.b16 %v9668, %v9664
        %v9849 = vpack.c.b16 %v9669, %v9665
        %v9850 = vpack.c.b16 %v9670, %v9666
        %v9851 = vpack.c.b16 %v9671, %v9667
        %v9852 = vpack.c.b16 %v9676, %v9672
        %v9853 = vpack.c.b16 %v9677, %v9673
        %v9854 = vpack.c.b16 %v9678, %v9674
        %v9855 = vpack.c.b16 %v9679, %v9675
        %v9856 = vpack.c.b16 %v9684, %v9680
        %v9857 = vpack.c.b16 %v9685, %v9681
        %v9858 = vpack.c.b16 %v9686, %v9682
        %v9859 = vpack.c.b16 %v9687, %v9683
        %v9860 = vpack.c.b16 %v9692, %v9688
        %v9861 = vpack.c.b16 %v9693, %v9689
        %v9862 = vpack.c.b16 %v9694, %v9690
        %v9863 = vpack.c.b16 %v9695, %v9691
        %v9864 = vpack.c.b16 %v9700, %v9696
        %v9865 = vpack.c.b16 %v9701, %v9697
        %v9866 = vpack.c.b16 %v9702, %v9698
        %v9867 = vpack.c.b16 %v9703, %v9699
        %v9868 = vpack.c.b16 %v9708, %v9704
        %v9869 = vpack.c.b16 %v9709, %v9705
        %v9870 = vpack.c.b16 %v9710, %v9706
        %v9871 = vpack.c.b16 %v9711, %v9707
        %v9872 = vpack.c.b16 %v9716, %v9712
        %v9873 = vpack.c.b16 %v9717, %v9713
        %v9874 = vpack.c.b16 %v9718, %v9714
        %v9875 = vpack.c.b16 %v9719, %v9715
        %v9876 = vpack.c.b16 %v9724, %v9720
        %v9877 = vpack.c.b16 %v9725, %v9721
        %v9878 = vpack.c.b16 %v9726, %v9722
        %v9879 = vpack.c.b16 %v9727, %v9723
        %v9880 = vpack.c.b16 %v9732, %v9728
        %v9881 = vpack.c.b16 %v9733, %v9729
        %v9882 = vpack.c.b16 %v9734, %v9730
        %v9883 = vpack.c.b16 %v9735, %v9731
        %v9884 = vpack.c.b16 %v9740, %v9736
        %v9885 = vpack.c.b16 %v9741, %v9737
        %v9886 = vpack.c.b16 %v9742, %v9738
        %v9887 = vpack.c.b16 %v9743, %v9739
        %v9888 = vpack.c.b16 %v9748, %v9744
        %v9889 = vpack.c.b16 %v9749, %v9745
        %v9890 = vpack.c.b16 %v9750, %v9746
        %v9891 = vpack.c.b16 %v9751, %v9747
        %v9892 = vpack.c.b16 %v9756, %v9752
        %v9893 = vpack.c.b16 %v9757, %v9753
        %v9894 = vpack.c.b16 %v9758, %v9754
        %v9895 = vpack.c.b16 %v9759, %v9755
        %v9896 = vpack.c.b16 %v9764, %v9760
        %v9897 = vpack.c.b16 %v9765, %v9761
        %v9898 = vpack.c.b16 %v9766, %v9762
        %v9899 = vpack.c.b16 %v9767, %v9763
        %v9900 = vpack.c.b16 %v9772, %v9768
        %v9901 = vpack.c.b16 %v9773, %v9769
        %v9902 = vpack.c.b16 %v9774, %v9770
        %v9903 = vpack.c.b16 %v9775, %v9771
        %10032 = vmatprep.subr.bf16.mxu0 %v9805
        %10033 = vmatpush1.bf16.msra.mxu0 %v9804
        %10034 = vmatprep.subr.bf16.mxu0 %v9801
        %10035 = vmatpush1.bf16.msra.mxu0 %v9800
        %10036 = vmatprep.subr.bf16.mxu0 %v9797
        %10037 = vmatpush1.bf16.msra.mxu0 %v9796
        %10038 = vmatprep.subr.bf16.mxu0 %v9793
        %10039 = vmatpush1.bf16.msra.mxu0 %v9792
        %10040 = vmatprep.subr.bf16.mxu0 %v9789
        %10041 = vmatpush1.bf16.msra.mxu0 %v9788
        %10042 = vmatprep.subr.bf16.mxu0 %v9785
        %10043 = vmatpush1.bf16.msra.mxu0 %v9784
        %10044 = vmatprep.subr.bf16.mxu0 %v9781
        %10045 = vmatpush1.bf16.msra.mxu0 %v9780
        %10046 = vmatprep.subr.bf16.mxu0 %v9777
        %10047 = vmatpush1.bf16.msra.mxu0 %v9776
        %10048 = vmatprep.subr.bf16.mxu0 %v9837
        %10049 = vmatpush2.bf16.msra.mxu0 %v9836
        %10050 = vmatprep.subr.bf16.mxu0 %v9833
        %10051 = vmatpush2.bf16.msra.mxu0 %v9832
        %10052 = vmatprep.subr.bf16.mxu0 %v9829
        %10053 = vmatpush2.bf16.msra.mxu0 %v9828
        %10054 = vmatprep.subr.bf16.mxu0 %v9825
        %10055 = vmatpush2.bf16.msra.mxu0 %v9824
        %10056 = vmatprep.subr.bf16.mxu0 %v9821
        %10057 = vmatpush2.bf16.msra.mxu0 %v9820
        %10058 = vmatprep.subr.bf16.mxu0 %v9817
        %10059 = vmatpush2.bf16.msra.mxu0 %v9816
        %10060 = vmatprep.subr.bf16.mxu0 %v9813
        %10061 = vmatpush2.bf16.msra.mxu0 %v9812
        %10062 = vmatprep.subr.bf16.mxu0 %v9809
        %10063 = vmatpush2.bf16.msra.mxu0 %v9808
        %10064 = vmatprep.mubr.bf16.mxu0 %v9239
        %10065 = vmatmul.mubr.bf16.gmra.mxu0 %v9238
        %v10066 = vpop.f32.mrf.mxu0
        %v10067 = vadd.f32 %v9375, %v10066
        %v10068 = vpop.f32.mrf.mxu0
        %v10069 = vadd.f32 %v9379, %v10068
        %v10070 = vpop.f32.mrf.mxu0
        %v10071 = vadd.f32 %v9375, %v10070
        %v10072 = vpop.f32.mrf.mxu0
        %v10073 = vadd.f32 %v9379, %v10072
        %10074 = vdwg.mxu0
        %10075 = vmatprep.subr.bf16.mxu0 %v9869
        %10076 = vmatpush1.bf16.msra.mxu0 %v9868
        %10077 = vmatprep.subr.bf16.mxu0 %v9865
        %10078 = vmatpush1.bf16.msra.mxu0 %v9864
        %10079 = vmatprep.subr.bf16.mxu0 %v9861
        %10080 = vmatpush1.bf16.msra.mxu0 %v9860
        %10081 = vmatprep.subr.bf16.mxu0 %v9857
        %10082 = vmatpush1.bf16.msra.mxu0 %v9856
        %10083 = vmatprep.subr.bf16.mxu0 %v9853
        %10084 = vmatpush1.bf16.msra.mxu0 %v9852
        %10085 = vmatprep.subr.bf16.mxu0 %v9849
        %10086 = vmatpush1.bf16.msra.mxu0 %v9848
        %10087 = vmatprep.subr.bf16.mxu0 %v9845
        %10088 = vmatpush1.bf16.msra.mxu0 %v9844
        %10089 = vmatprep.subr.bf16.mxu0 %v9841
        %10090 = vmatpush1.bf16.msra.mxu0 %v9840
        %10091 = vmatprep.subr.bf16.mxu0 %v9901
        %10092 = vmatpush2.bf16.msra.mxu0 %v9900
        %10093 = vmatprep.subr.bf16.mxu0 %v9897
        %10094 = vmatpush2.bf16.msra.mxu0 %v9896
        %10095 = vmatprep.subr.bf16.mxu0 %v9893
        %10096 = vmatpush2.bf16.msra.mxu0 %v9892
        %10097 = vmatprep.subr.bf16.mxu0 %v9889
        %10098 = vmatpush2.bf16.msra.mxu0 %v9888
        %10099 = vmatprep.subr.bf16.mxu0 %v9885
        %10100 = vmatpush2.bf16.msra.mxu0 %v9884
        %10101 = vmatprep.subr.bf16.mxu0 %v9881
        %10102 = vmatpush2.bf16.msra.mxu0 %v9880
        %10103 = vmatprep.subr.bf16.mxu0 %v9877
        %10104 = vmatpush2.bf16.msra.mxu0 %v9876
        %10105 = vmatprep.subr.bf16.mxu0 %v9873
        %10106 = vmatpush2.bf16.msra.mxu0 %v9872
        %10107 = vmatprep.mubr.bf16.mxu0 %v9241
        %10108 = vmatmul.mubr.bf16.gmra.mxu0 %v9240
        %v10109 = vpop.f32.mrf.mxu0
        %v10110 = vadd.f32 %v10067, %v10109
        %v10111 = vpop.f32.mrf.mxu0
        %v10112 = vadd.f32 %v10069, %v10111
        %v10113 = vpop.f32.mrf.mxu0
        %v10114 = vadd.f32 %v10071, %v10113
        %v10115 = vpop.f32.mrf.mxu0
        %v10116 = vadd.f32 %v10073, %v10115
        %10117 = vdwg.mxu0
        %10118 = vmatprep.subr.bf16.mxu0 %v9807
        %10119 = vmatpush1.bf16.msra.mxu0 %v9806
        %10120 = vmatprep.subr.bf16.mxu0 %v9803
        %10121 = vmatpush1.bf16.msra.mxu0 %v9802
        %10122 = vmatprep.subr.bf16.mxu0 %v9799
        %10123 = vmatpush1.bf16.msra.mxu0 %v9798
        %10124 = vmatprep.subr.bf16.mxu0 %v9795
        %10125 = vmatpush1.bf16.msra.mxu0 %v9794
        %10126 = vmatprep.subr.bf16.mxu0 %v9791
        %10127 = vmatpush1.bf16.msra.mxu0 %v9790
        %10128 = vmatprep.subr.bf16.mxu0 %v9787
        %10129 = vmatpush1.bf16.msra.mxu0 %v9786
        %10130 = vmatprep.subr.bf16.mxu0 %v9783
        %10131 = vmatpush1.bf16.msra.mxu0 %v9782
        %10132 = vmatprep.subr.bf16.mxu0 %v9779
        %10133 = vmatpush1.bf16.msra.mxu0 %v9778
        %10134 = vmatprep.subr.bf16.mxu0 %v9839
        %10135 = vmatpush2.bf16.msra.mxu0 %v9838
        %10136 = vmatprep.subr.bf16.mxu0 %v9835
        %10137 = vmatpush2.bf16.msra.mxu0 %v9834
        %10138 = vmatprep.subr.bf16.mxu0 %v9831
        %10139 = vmatpush2.bf16.msra.mxu0 %v9830
        %10140 = vmatprep.subr.bf16.mxu0 %v9827
        %10141 = vmatpush2.bf16.msra.mxu0 %v9826
        %10142 = vmatprep.subr.bf16.mxu0 %v9823
        %10143 = vmatpush2.bf16.msra.mxu0 %v9822
        %10144 = vmatprep.subr.bf16.mxu0 %v9819
        %10145 = vmatpush2.bf16.msra.mxu0 %v9818
        %10146 = vmatprep.subr.bf16.mxu0 %v9815
        %10147 = vmatpush2.bf16.msra.mxu0 %v9814
        %10148 = vmatprep.subr.bf16.mxu0 %v9811
        %10149 = vmatpush2.bf16.msra.mxu0 %v9810
        %10150 = vmatprep.mubr.bf16.mxu0 %v9239
        %10151 = vmatmul.mubr.bf16.gmra.mxu0 %v9238
        %v10152 = vpop.f32.mrf.mxu0
        %v10153 = vadd.f32 %v9383, %v10152
        %v10154 = vpop.f32.mrf.mxu0
        %v10155 = vadd.f32 %v9387, %v10154
        %v10156 = vpop.f32.mrf.mxu0
        %v10157 = vadd.f32 %v9383, %v10156
        %v10158 = vpop.f32.mrf.mxu0
        %v10159 = vadd.f32 %v9387, %v10158
        %10160 = vdwg.mxu0
        %10161 = vmatprep.subr.bf16.mxu0 %v9871
        %10162 = vmatpush1.bf16.msra.mxu0 %v9870
        %10163 = vmatprep.subr.bf16.mxu0 %v9867
        %10164 = vmatpush1.bf16.msra.mxu0 %v9866
        %10165 = vmatprep.subr.bf16.mxu0 %v9863
        %10166 = vmatpush1.bf16.msra.mxu0 %v9862
        %10167 = vmatprep.subr.bf16.mxu0 %v9859
        %10168 = vmatpush1.bf16.msra.mxu0 %v9858
        %10169 = vmatprep.subr.bf16.mxu0 %v9855
        %10170 = vmatpush1.bf16.msra.mxu0 %v9854
        %10171 = vmatprep.subr.bf16.mxu0 %v9851
        %10172 = vmatpush1.bf16.msra.mxu0 %v9850
        %10173 = vmatprep.subr.bf16.mxu0 %v9847
        %10174 = vmatpush1.bf16.msra.mxu0 %v9846
        %10175 = vmatprep.subr.bf16.mxu0 %v9843
        %10176 = vmatpush1.bf16.msra.mxu0 %v9842
        %10177 = vmatprep.subr.bf16.mxu0 %v9903
        %10178 = vmatpush2.bf16.msra.mxu0 %v9902
        %10179 = vmatprep.subr.bf16.mxu0 %v9899
        %10180 = vmatpush2.bf16.msra.mxu0 %v9898
        %10181 = vmatprep.subr.bf16.mxu0 %v9895
        %10182 = vmatpush2.bf16.msra.mxu0 %v9894
        %10183 = vmatprep.subr.bf16.mxu0 %v9891
        %10184 = vmatpush2.bf16.msra.mxu0 %v9890
        %10185 = vmatprep.subr.bf16.mxu0 %v9887
        %10186 = vmatpush2.bf16.msra.mxu0 %v9886
        %10187 = vmatprep.subr.bf16.mxu0 %v9883
        %10188 = vmatpush2.bf16.msra.mxu0 %v9882
        %10189 = vmatprep.subr.bf16.mxu0 %v9879
        %10190 = vmatpush2.bf16.msra.mxu0 %v9878
        %10191 = vmatprep.subr.bf16.mxu0 %v9875
        %10192 = vmatpush2.bf16.msra.mxu0 %v9874
        %10193 = vmatprep.mubr.bf16.mxu0 %v9241
        %10194 = vmatmul.mubr.bf16.gmra.mxu0 %v9240
        %v10195 = vpop.f32.mrf.mxu0
        %v10196 = vadd.f32 %v10153, %v10195
        %v10197 = vpop.f32.mrf.mxu0
        %v10198 = vadd.f32 %v10155, %v10197
        %v10199 = vpop.f32.mrf.mxu0
        %v10200 = vadd.f32 %v10157, %v10199
        %v10201 = vpop.f32.mrf.mxu0
        %v10202 = vadd.f32 %v10159, %v10201
        %10203 = vdwg.mxu0
        %v10204 = vmax.f32 %v10110, 0.0
        %v10205 = vmax.f32 %v10112, 0.0
        %v10206 = vmax.f32 %v10196, 0.0
        %v10207 = vmax.f32 %v10198, 0.0
        %v10208 = vmax.f32 %v10114, 0.0
        %v10209 = vmax.f32 %v10116, 0.0
        %v10210 = vmax.f32 %v10200, 0.0
        %v10211 = vmax.f32 %v10202, 0.0
        %v10212 = vpack.c.bf16 %v10208, %v10204
        %v10213 = vpack.c.bf16 %v10209, %v10205
        %v10214 = vpack.c.bf16 %v10210, %v10206
        %v10215 = vpack.c.bf16 %v10211, %v10207
        %v10216 = vld [vmem:[#allocation21] sm:$0xff]
        %v10217 = vld [vmem:[#allocation21 + $0x8] sm:$0xff]
        %v10218 = vld [vmem:[#allocation21 + $0x10] sm:$0xff]
        %v10219 = vld [vmem:[#allocation21 + $0x18] sm:$0xff]
        %v10220 = vld [vmem:[#allocation21 + $0x20] sm:$0xff]
        %v10221 = vld [vmem:[#allocation21 + $0x28] sm:$0xff]
        %v10222 = vld [vmem:[#allocation21 + $0x30] sm:$0xff]
        %v10223 = vld [vmem:[#allocation21 + $0x38] sm:$0xff]
        %v10224 = vld [vmem:[#allocation21 + $0x40] sm:$0xff]
        %v10225 = vld [vmem:[#allocation21 + $0x48] sm:$0xff]
        %v10226 = vld [vmem:[#allocation21 + $0x50] sm:$0xff]
        %v10227 = vld [vmem:[#allocation21 + $0x58] sm:$0xff]
        %v10228 = vld [vmem:[#allocation21 + $0x60] sm:$0xff]
        %v10229 = vld [vmem:[#allocation21 + $0x68] sm:$0xff]
        %v10230 = vld [vmem:[#allocation21 + $0x70] sm:$0xff]
        %v10231 = vld [vmem:[#allocation21 + $0x78] sm:$0xff]
        %v10232 = vld [vmem:[#allocation21 + $0x80] sm:$0xff]
        %v10233 = vld [vmem:[#allocation21 + $0x88] sm:$0xff]
        %v10234 = vld [vmem:[#allocation21 + $0x90] sm:$0xff]
        %v10235 = vld [vmem:[#allocation21 + $0x98] sm:$0xff]
        %v10236 = vld [vmem:[#allocation21 + $0xa0] sm:$0xff]
        %v10237 = vld [vmem:[#allocation21 + $0xa8] sm:$0xff]
        %v10238 = vld [vmem:[#allocation21 + $0xb0] sm:$0xff]
        %v10239 = vld [vmem:[#allocation21 + $0xb8] sm:$0xff]
        %v10240 = vld [vmem:[#allocation21 + $0xc0] sm:$0xff]
        %v10241 = vld [vmem:[#allocation21 + $0xc8] sm:$0xff]
        %v10242 = vld [vmem:[#allocation21 + $0xd0] sm:$0xff]
        %v10243 = vld [vmem:[#allocation21 + $0xd8] sm:$0xff]
        %v10244 = vld [vmem:[#allocation21 + $0xe0] sm:$0xff]
        %v10245 = vld [vmem:[#allocation21 + $0xe8] sm:$0xff]
        %v10246 = vld [vmem:[#allocation21 + $0xf0] sm:$0xff]
        %v10247 = vld [vmem:[#allocation21 + $0xf8] sm:$0xff]
        %v10248 = vld [vmem:[#allocation21 + $0x100] sm:$0xff]
        %v10249 = vld [vmem:[#allocation21 + $0x108] sm:$0xff]
        %v10250 = vld [vmem:[#allocation21 + $0x110] sm:$0xff]
        %v10251 = vld [vmem:[#allocation21 + $0x118] sm:$0xff]
        %v10252 = vld [vmem:[#allocation21 + $0x120] sm:$0xff]
        %v10253 = vld [vmem:[#allocation21 + $0x128] sm:$0xff]
        %v10254 = vld [vmem:[#allocation21 + $0x130] sm:$0xff]
        %v10255 = vld [vmem:[#allocation21 + $0x138] sm:$0xff]
        %v10256 = vld [vmem:[#allocation21 + $0x140] sm:$0xff]
        %v10257 = vld [vmem:[#allocation21 + $0x148] sm:$0xff]
        %v10258 = vld [vmem:[#allocation21 + $0x150] sm:$0xff]
        %v10259 = vld [vmem:[#allocation21 + $0x158] sm:$0xff]
        %v10260 = vld [vmem:[#allocation21 + $0x160] sm:$0xff]
        %v10261 = vld [vmem:[#allocation21 + $0x168] sm:$0xff]
        %v10262 = vld [vmem:[#allocation21 + $0x170] sm:$0xff]
        %v10263 = vld [vmem:[#allocation21 + $0x178] sm:$0xff]
        %v10264 = vld [vmem:[#allocation21 + $0x180] sm:$0xff]
        %v10265 = vld [vmem:[#allocation21 + $0x188] sm:$0xff]
        %v10266 = vld [vmem:[#allocation21 + $0x190] sm:$0xff]
        %v10267 = vld [vmem:[#allocation21 + $0x198] sm:$0xff]
        %v10268 = vld [vmem:[#allocation21 + $0x1a0] sm:$0xff]
        %v10269 = vld [vmem:[#allocation21 + $0x1a8] sm:$0xff]
        %v10270 = vld [vmem:[#allocation21 + $0x1b0] sm:$0xff]
        %v10271 = vld [vmem:[#allocation21 + $0x1b8] sm:$0xff]
        %v10272 = vld [vmem:[#allocation21 + $0x1c0] sm:$0xff]
        %v10273 = vld [vmem:[#allocation21 + $0x1c8] sm:$0xff]
        %v10274 = vld [vmem:[#allocation21 + $0x1d0] sm:$0xff]
        %v10275 = vld [vmem:[#allocation21 + $0x1d8] sm:$0xff]
        %v10276 = vld [vmem:[#allocation21 + $0x1e0] sm:$0xff]
        %v10277 = vld [vmem:[#allocation21 + $0x1e8] sm:$0xff]
        %v10278 = vld [vmem:[#allocation21 + $0x1f0] sm:$0xff]
        %v10279 = vld [vmem:[#allocation21 + $0x1f8] sm:$0xff]
        %v10280 = vld [vmem:[#allocation21 + $0x200] sm:$0xff]
        %v10281 = vld [vmem:[#allocation21 + $0x208] sm:$0xff]
        %v10282 = vld [vmem:[#allocation21 + $0x210] sm:$0xff]
        %v10283 = vld [vmem:[#allocation21 + $0x218] sm:$0xff]
        %v10284 = vld [vmem:[#allocation21 + $0x220] sm:$0xff]
        %v10285 = vld [vmem:[#allocation21 + $0x228] sm:$0xff]
        %v10286 = vld [vmem:[#allocation21 + $0x230] sm:$0xff]
        %v10287 = vld [vmem:[#allocation21 + $0x238] sm:$0xff]
        %v10288 = vld [vmem:[#allocation21 + $0x240] sm:$0xff]
        %v10289 = vld [vmem:[#allocation21 + $0x248] sm:$0xff]
        %v10290 = vld [vmem:[#allocation21 + $0x250] sm:$0xff]
        %v10291 = vld [vmem:[#allocation21 + $0x258] sm:$0xff]
        %v10292 = vld [vmem:[#allocation21 + $0x260] sm:$0xff]
        %v10293 = vld [vmem:[#allocation21 + $0x268] sm:$0xff]
        %v10294 = vld [vmem:[#allocation21 + $0x270] sm:$0xff]
        %v10295 = vld [vmem:[#allocation21 + $0x278] sm:$0xff]
        %v10296 = vld [vmem:[#allocation21 + $0x280] sm:$0xff]
        %v10297 = vld [vmem:[#allocation21 + $0x288] sm:$0xff]
        %v10298 = vld [vmem:[#allocation21 + $0x290] sm:$0xff]
        %v10299 = vld [vmem:[#allocation21 + $0x298] sm:$0xff]
        %v10300 = vld [vmem:[#allocation21 + $0x2a0] sm:$0xff]
        %v10301 = vld [vmem:[#allocation21 + $0x2a8] sm:$0xff]
        %v10302 = vld [vmem:[#allocation21 + $0x2b0] sm:$0xff]
        %v10303 = vld [vmem:[#allocation21 + $0x2b8] sm:$0xff]
        %v10304 = vld [vmem:[#allocation21 + $0x2c0] sm:$0xff]
        %v10305 = vld [vmem:[#allocation21 + $0x2c8] sm:$0xff]
        %v10306 = vld [vmem:[#allocation21 + $0x2d0] sm:$0xff]
        %v10307 = vld [vmem:[#allocation21 + $0x2d8] sm:$0xff]
        %v10308 = vld [vmem:[#allocation21 + $0x2e0] sm:$0xff]
        %v10309 = vld [vmem:[#allocation21 + $0x2e8] sm:$0xff]
        %v10310 = vld [vmem:[#allocation21 + $0x2f0] sm:$0xff]
        %v10311 = vld [vmem:[#allocation21 + $0x2f8] sm:$0xff]
        %v10312 = vld [vmem:[#allocation21 + $0x300] sm:$0xff]
        %v10313 = vld [vmem:[#allocation21 + $0x308] sm:$0xff]
        %v10314 = vld [vmem:[#allocation21 + $0x310] sm:$0xff]
        %v10315 = vld [vmem:[#allocation21 + $0x318] sm:$0xff]
        %v10316 = vld [vmem:[#allocation21 + $0x320] sm:$0xff]
        %v10317 = vld [vmem:[#allocation21 + $0x328] sm:$0xff]
        %v10318 = vld [vmem:[#allocation21 + $0x330] sm:$0xff]
        %v10319 = vld [vmem:[#allocation21 + $0x338] sm:$0xff]
        %v10320 = vld [vmem:[#allocation21 + $0x340] sm:$0xff]
        %v10321 = vld [vmem:[#allocation21 + $0x348] sm:$0xff]
        %v10322 = vld [vmem:[#allocation21 + $0x350] sm:$0xff]
        %v10323 = vld [vmem:[#allocation21 + $0x358] sm:$0xff]
        %v10324 = vld [vmem:[#allocation21 + $0x360] sm:$0xff]
        %v10325 = vld [vmem:[#allocation21 + $0x368] sm:$0xff]
        %v10326 = vld [vmem:[#allocation21 + $0x370] sm:$0xff]
        %v10327 = vld [vmem:[#allocation21 + $0x378] sm:$0xff]
        %v10328 = vld [vmem:[#allocation21 + $0x380] sm:$0xff]
        %v10329 = vld [vmem:[#allocation21 + $0x388] sm:$0xff]
        %v10330 = vld [vmem:[#allocation21 + $0x390] sm:$0xff]
        %v10331 = vld [vmem:[#allocation21 + $0x398] sm:$0xff]
        %v10332 = vld [vmem:[#allocation21 + $0x3a0] sm:$0xff]
        %v10333 = vld [vmem:[#allocation21 + $0x3a8] sm:$0xff]
        %v10334 = vld [vmem:[#allocation21 + $0x3b0] sm:$0xff]
        %v10335 = vld [vmem:[#allocation21 + $0x3b8] sm:$0xff]
        %v10336 = vld [vmem:[#allocation21 + $0x3c0] sm:$0xff]
        %v10337 = vld [vmem:[#allocation21 + $0x3c8] sm:$0xff]
        %v10338 = vld [vmem:[#allocation21 + $0x3d0] sm:$0xff]
        %v10339 = vld [vmem:[#allocation21 + $0x3d8] sm:$0xff]
        %v10340 = vld [vmem:[#allocation21 + $0x3e0] sm:$0xff]
        %v10341 = vld [vmem:[#allocation21 + $0x3e8] sm:$0xff]
        %v10342 = vld [vmem:[#allocation21 + $0x3f0] sm:$0xff]
        %v10343 = vld [vmem:[#allocation21 + $0x3f8] sm:$0xff]
        %v10344 = vld [vmem:[#allocation22] sm:$0xf]
        %v10346 = vlaneseq
        %v10347 = vshrl.u32 %v10346, 7
        %v10348 = vsub.s32 0, %v10347
        %v10349 = vrot.slane %v10344, %v10348
        %v10350 = vlaneseq
        %v10351 = vshrl.u32 %v10350, 7
        %v10352 = vsub.s32 1, %v10351
        %v10353 = vrot.slane %v10344, %v10352
        %v10354 = vlaneseq
        %v10355 = vshrl.u32 %v10354, 7
        %v10356 = vsub.s32 2, %v10355
        %v10357 = vrot.slane %v10344, %v10356
        %v10358 = vlaneseq
        %v10359 = vshrl.u32 %v10358, 7
        %v10360 = vsub.s32 3, %v10359
        %v10361 = vrot.slane %v10344, %v10360
        %v10494 = vunpack.c.l.b16 %v10216
        %v10495 = vunpack.c.h.b16 %v10216
        %v10496 = vunpack.c.l.b16 %v10217
        %v10497 = vunpack.c.h.b16 %v10217
        %v10498 = vunpack.c.l.b16 %v10218
        %v10499 = vunpack.c.h.b16 %v10218
        %v10500 = vunpack.c.l.b16 %v10219
        %v10501 = vunpack.c.h.b16 %v10219
        %v10502 = vunpack.c.l.b16 %v10220
        %v10503 = vunpack.c.h.b16 %v10220
        %v10504 = vunpack.c.l.b16 %v10221
        %v10505 = vunpack.c.h.b16 %v10221
        %v10506 = vunpack.c.l.b16 %v10222
        %v10507 = vunpack.c.h.b16 %v10222
        %v10508 = vunpack.c.l.b16 %v10223
        %v10509 = vunpack.c.h.b16 %v10223
        %v10510 = vunpack.c.l.b16 %v10224
        %v10511 = vunpack.c.h.b16 %v10224
        %v10512 = vunpack.c.l.b16 %v10225
        %v10513 = vunpack.c.h.b16 %v10225
        %v10514 = vunpack.c.l.b16 %v10226
        %v10515 = vunpack.c.h.b16 %v10226
        %v10516 = vunpack.c.l.b16 %v10227
        %v10517 = vunpack.c.h.b16 %v10227
        %v10518 = vunpack.c.l.b16 %v10228
        %v10519 = vunpack.c.h.b16 %v10228
        %v10520 = vunpack.c.l.b16 %v10229
        %v10521 = vunpack.c.h.b16 %v10229
        %v10522 = vunpack.c.l.b16 %v10230
        %v10523 = vunpack.c.h.b16 %v10230
        %v10524 = vunpack.c.l.b16 %v10231
        %v10525 = vunpack.c.h.b16 %v10231
        %v10526 = vunpack.c.l.b16 %v10232
        %v10527 = vunpack.c.h.b16 %v10232
        %v10528 = vunpack.c.l.b16 %v10233
        %v10529 = vunpack.c.h.b16 %v10233
        %v10530 = vunpack.c.l.b16 %v10234
        %v10531 = vunpack.c.h.b16 %v10234
        %v10532 = vunpack.c.l.b16 %v10235
        %v10533 = vunpack.c.h.b16 %v10235
        %v10534 = vunpack.c.l.b16 %v10236
        %v10535 = vunpack.c.h.b16 %v10236
        %v10536 = vunpack.c.l.b16 %v10237
        %v10537 = vunpack.c.h.b16 %v10237
        %v10538 = vunpack.c.l.b16 %v10238
        %v10539 = vunpack.c.h.b16 %v10238
        %v10540 = vunpack.c.l.b16 %v10239
        %v10541 = vunpack.c.h.b16 %v10239
        %v10542 = vunpack.c.l.b16 %v10240
        %v10543 = vunpack.c.h.b16 %v10240
        %v10544 = vunpack.c.l.b16 %v10241
        %v10545 = vunpack.c.h.b16 %v10241
        %v10546 = vunpack.c.l.b16 %v10242
        %v10547 = vunpack.c.h.b16 %v10242
        %v10548 = vunpack.c.l.b16 %v10243
        %v10549 = vunpack.c.h.b16 %v10243
        %v10550 = vunpack.c.l.b16 %v10244
        %v10551 = vunpack.c.h.b16 %v10244
        %v10552 = vunpack.c.l.b16 %v10245
        %v10553 = vunpack.c.h.b16 %v10245
        %v10554 = vunpack.c.l.b16 %v10246
        %v10555 = vunpack.c.h.b16 %v10246
        %v10556 = vunpack.c.l.b16 %v10247
        %v10557 = vunpack.c.h.b16 %v10247
        %v10558 = vunpack.c.l.b16 %v10248
        %v10559 = vunpack.c.h.b16 %v10248
        %v10560 = vunpack.c.l.b16 %v10249
        %v10561 = vunpack.c.h.b16 %v10249
        %v10562 = vunpack.c.l.b16 %v10250
        %v10563 = vunpack.c.h.b16 %v10250
        %v10564 = vunpack.c.l.b16 %v10251
        %v10565 = vunpack.c.h.b16 %v10251
        %v10566 = vunpack.c.l.b16 %v10252
        %v10567 = vunpack.c.h.b16 %v10252
        %v10568 = vunpack.c.l.b16 %v10253
        %v10569 = vunpack.c.h.b16 %v10253
        %v10570 = vunpack.c.l.b16 %v10254
        %v10571 = vunpack.c.h.b16 %v10254
        %v10572 = vunpack.c.l.b16 %v10255
        %v10573 = vunpack.c.h.b16 %v10255
        %v10574 = vunpack.c.l.b16 %v10256
        %v10575 = vunpack.c.h.b16 %v10256
        %v10576 = vunpack.c.l.b16 %v10257
        %v10577 = vunpack.c.h.b16 %v10257
        %v10578 = vunpack.c.l.b16 %v10258
        %v10579 = vunpack.c.h.b16 %v10258
        %v10580 = vunpack.c.l.b16 %v10259
        %v10581 = vunpack.c.h.b16 %v10259
        %v10582 = vunpack.c.l.b16 %v10260
        %v10583 = vunpack.c.h.b16 %v10260
        %v10584 = vunpack.c.l.b16 %v10261
        %v10585 = vunpack.c.h.b16 %v10261
        %v10586 = vunpack.c.l.b16 %v10262
        %v10587 = vunpack.c.h.b16 %v10262
        %v10588 = vunpack.c.l.b16 %v10263
        %v10589 = vunpack.c.h.b16 %v10263
        %v10590 = vunpack.c.l.b16 %v10264
        %v10591 = vunpack.c.h.b16 %v10264
        %v10592 = vunpack.c.l.b16 %v10265
        %v10593 = vunpack.c.h.b16 %v10265
        %v10594 = vunpack.c.l.b16 %v10266
        %v10595 = vunpack.c.h.b16 %v10266
        %v10596 = vunpack.c.l.b16 %v10267
        %v10597 = vunpack.c.h.b16 %v10267
        %v10598 = vunpack.c.l.b16 %v10268
        %v10599 = vunpack.c.h.b16 %v10268
        %v10600 = vunpack.c.l.b16 %v10269
        %v10601 = vunpack.c.h.b16 %v10269
        %v10602 = vunpack.c.l.b16 %v10270
        %v10603 = vunpack.c.h.b16 %v10270
        %v10604 = vunpack.c.l.b16 %v10271
        %v10605 = vunpack.c.h.b16 %v10271
        %v10606 = vunpack.c.l.b16 %v10272
        %v10607 = vunpack.c.h.b16 %v10272
        %v10608 = vunpack.c.l.b16 %v10273
        %v10609 = vunpack.c.h.b16 %v10273
        %v10610 = vunpack.c.l.b16 %v10274
        %v10611 = vunpack.c.h.b16 %v10274
        %v10612 = vunpack.c.l.b16 %v10275
        %v10613 = vunpack.c.h.b16 %v10275
        %v10614 = vunpack.c.l.b16 %v10276
        %v10615 = vunpack.c.h.b16 %v10276
        %v10616 = vunpack.c.l.b16 %v10277
        %v10617 = vunpack.c.h.b16 %v10277
        %v10618 = vunpack.c.l.b16 %v10278
        %v10619 = vunpack.c.h.b16 %v10278
        %v10620 = vunpack.c.l.b16 %v10279
        %v10621 = vunpack.c.h.b16 %v10279
        %v10622 = vunpack.c.l.b16 %v10280
        %v10623 = vunpack.c.h.b16 %v10280
        %v10624 = vunpack.c.l.b16 %v10281
        %v10625 = vunpack.c.h.b16 %v10281
        %v10626 = vunpack.c.l.b16 %v10282
        %v10627 = vunpack.c.h.b16 %v10282
        %v10628 = vunpack.c.l.b16 %v10283
        %v10629 = vunpack.c.h.b16 %v10283
        %v10630 = vunpack.c.l.b16 %v10284
        %v10631 = vunpack.c.h.b16 %v10284
        %v10632 = vunpack.c.l.b16 %v10285
        %v10633 = vunpack.c.h.b16 %v10285
        %v10634 = vunpack.c.l.b16 %v10286
        %v10635 = vunpack.c.h.b16 %v10286
        %v10636 = vunpack.c.l.b16 %v10287
        %v10637 = vunpack.c.h.b16 %v10287
        %v10638 = vunpack.c.l.b16 %v10288
        %v10639 = vunpack.c.h.b16 %v10288
        %v10640 = vunpack.c.l.b16 %v10289
        %v10641 = vunpack.c.h.b16 %v10289
        %v10642 = vunpack.c.l.b16 %v10290
        %v10643 = vunpack.c.h.b16 %v10290
        %v10644 = vunpack.c.l.b16 %v10291
        %v10645 = vunpack.c.h.b16 %v10291
        %v10646 = vunpack.c.l.b16 %v10292
        %v10647 = vunpack.c.h.b16 %v10292
        %v10648 = vunpack.c.l.b16 %v10293
        %v10649 = vunpack.c.h.b16 %v10293
        %v10650 = vunpack.c.l.b16 %v10294
        %v10651 = vunpack.c.h.b16 %v10294
        %v10652 = vunpack.c.l.b16 %v10295
        %v10653 = vunpack.c.h.b16 %v10295
        %v10654 = vunpack.c.l.b16 %v10296
        %v10655 = vunpack.c.h.b16 %v10296
        %v10656 = vunpack.c.l.b16 %v10297
        %v10657 = vunpack.c.h.b16 %v10297
        %v10658 = vunpack.c.l.b16 %v10298
        %v10659 = vunpack.c.h.b16 %v10298
        %v10660 = vunpack.c.l.b16 %v10299
        %v10661 = vunpack.c.h.b16 %v10299
        %v10662 = vunpack.c.l.b16 %v10300
        %v10663 = vunpack.c.h.b16 %v10300
        %v10664 = vunpack.c.l.b16 %v10301
        %v10665 = vunpack.c.h.b16 %v10301
        %v10666 = vunpack.c.l.b16 %v10302
        %v10667 = vunpack.c.h.b16 %v10302
        %v10668 = vunpack.c.l.b16 %v10303
        %v10669 = vunpack.c.h.b16 %v10303
        %v10670 = vunpack.c.l.b16 %v10304
        %v10671 = vunpack.c.h.b16 %v10304
        %v10672 = vunpack.c.l.b16 %v10305
        %v10673 = vunpack.c.h.b16 %v10305
        %v10674 = vunpack.c.l.b16 %v10306
        %v10675 = vunpack.c.h.b16 %v10306
        %v10676 = vunpack.c.l.b16 %v10307
        %v10677 = vunpack.c.h.b16 %v10307
        %v10678 = vunpack.c.l.b16 %v10308
        %v10679 = vunpack.c.h.b16 %v10308
        %v10680 = vunpack.c.l.b16 %v10309
        %v10681 = vunpack.c.h.b16 %v10309
        %v10682 = vunpack.c.l.b16 %v10310
        %v10683 = vunpack.c.h.b16 %v10310
        %v10684 = vunpack.c.l.b16 %v10311
        %v10685 = vunpack.c.h.b16 %v10311
        %v10686 = vunpack.c.l.b16 %v10312
        %v10687 = vunpack.c.h.b16 %v10312
        %v10688 = vunpack.c.l.b16 %v10313
        %v10689 = vunpack.c.h.b16 %v10313
        %v10690 = vunpack.c.l.b16 %v10314
        %v10691 = vunpack.c.h.b16 %v10314
        %v10692 = vunpack.c.l.b16 %v10315
        %v10693 = vunpack.c.h.b16 %v10315
        %v10694 = vunpack.c.l.b16 %v10316
        %v10695 = vunpack.c.h.b16 %v10316
        %v10696 = vunpack.c.l.b16 %v10317
        %v10697 = vunpack.c.h.b16 %v10317
        %v10698 = vunpack.c.l.b16 %v10318
        %v10699 = vunpack.c.h.b16 %v10318
        %v10700 = vunpack.c.l.b16 %v10319
        %v10701 = vunpack.c.h.b16 %v10319
        %v10702 = vunpack.c.l.b16 %v10320
        %v10703 = vunpack.c.h.b16 %v10320
        %v10704 = vunpack.c.l.b16 %v10321
        %v10705 = vunpack.c.h.b16 %v10321
        %v10706 = vunpack.c.l.b16 %v10322
        %v10707 = vunpack.c.h.b16 %v10322
        %v10708 = vunpack.c.l.b16 %v10323
        %v10709 = vunpack.c.h.b16 %v10323
        %v10710 = vunpack.c.l.b16 %v10324
        %v10711 = vunpack.c.h.b16 %v10324
        %v10712 = vunpack.c.l.b16 %v10325
        %v10713 = vunpack.c.h.b16 %v10325
        %v10714 = vunpack.c.l.b16 %v10326
        %v10715 = vunpack.c.h.b16 %v10326
        %v10716 = vunpack.c.l.b16 %v10327
        %v10717 = vunpack.c.h.b16 %v10327
        %v10718 = vunpack.c.l.b16 %v10328
        %v10719 = vunpack.c.h.b16 %v10328
        %v10720 = vunpack.c.l.b16 %v10329
        %v10721 = vunpack.c.h.b16 %v10329
        %v10722 = vunpack.c.l.b16 %v10330
        %v10723 = vunpack.c.h.b16 %v10330
        %v10724 = vunpack.c.l.b16 %v10331
        %v10725 = vunpack.c.h.b16 %v10331
        %v10726 = vunpack.c.l.b16 %v10332
        %v10727 = vunpack.c.h.b16 %v10332
        %v10728 = vunpack.c.l.b16 %v10333
        %v10729 = vunpack.c.h.b16 %v10333
        %v10730 = vunpack.c.l.b16 %v10334
        %v10731 = vunpack.c.h.b16 %v10334
        %v10732 = vunpack.c.l.b16 %v10335
        %v10733 = vunpack.c.h.b16 %v10335
        %v10734 = vunpack.c.l.b16 %v10336
        %v10735 = vunpack.c.h.b16 %v10336
        %v10736 = vunpack.c.l.b16 %v10337
        %v10737 = vunpack.c.h.b16 %v10337
        %v10738 = vunpack.c.l.b16 %v10338
        %v10739 = vunpack.c.h.b16 %v10338
        %v10740 = vunpack.c.l.b16 %v10339
        %v10741 = vunpack.c.h.b16 %v10339
        %v10742 = vunpack.c.l.b16 %v10340
        %v10743 = vunpack.c.h.b16 %v10340
        %v10744 = vunpack.c.l.b16 %v10341
        %v10745 = vunpack.c.h.b16 %v10341
        %v10746 = vunpack.c.l.b16 %v10342
        %v10747 = vunpack.c.h.b16 %v10342
        %v10748 = vunpack.c.l.b16 %v10343
        %v10749 = vunpack.c.h.b16 %v10343
        %v10750 = vpack.c.b16 %v10498, %v10494
        %v10751 = vpack.c.b16 %v10499, %v10495
        %v10752 = vpack.c.b16 %v10500, %v10496
        %v10753 = vpack.c.b16 %v10501, %v10497
        %v10754 = vpack.c.b16 %v10506, %v10502
        %v10755 = vpack.c.b16 %v10507, %v10503
        %v10756 = vpack.c.b16 %v10508, %v10504
        %v10757 = vpack.c.b16 %v10509, %v10505
        %v10758 = vpack.c.b16 %v10514, %v10510
        %v10759 = vpack.c.b16 %v10515, %v10511
        %v10760 = vpack.c.b16 %v10516, %v10512
        %v10761 = vpack.c.b16 %v10517, %v10513
        %v10762 = vpack.c.b16 %v10522, %v10518
        %v10763 = vpack.c.b16 %v10523, %v10519
        %v10764 = vpack.c.b16 %v10524, %v10520
        %v10765 = vpack.c.b16 %v10525, %v10521
        %v10766 = vpack.c.b16 %v10530, %v10526
        %v10767 = vpack.c.b16 %v10531, %v10527
        %v10768 = vpack.c.b16 %v10532, %v10528
        %v10769 = vpack.c.b16 %v10533, %v10529
        %v10770 = vpack.c.b16 %v10538, %v10534
        %v10771 = vpack.c.b16 %v10539, %v10535
        %v10772 = vpack.c.b16 %v10540, %v10536
        %v10773 = vpack.c.b16 %v10541, %v10537
        %v10774 = vpack.c.b16 %v10546, %v10542
        %v10775 = vpack.c.b16 %v10547, %v10543
        %v10776 = vpack.c.b16 %v10548, %v10544
        %v10777 = vpack.c.b16 %v10549, %v10545
        %v10778 = vpack.c.b16 %v10554, %v10550
        %v10779 = vpack.c.b16 %v10555, %v10551
        %v10780 = vpack.c.b16 %v10556, %v10552
        %v10781 = vpack.c.b16 %v10557, %v10553
        %v10782 = vpack.c.b16 %v10562, %v10558
        %v10783 = vpack.c.b16 %v10563, %v10559
        %v10784 = vpack.c.b16 %v10564, %v10560
        %v10785 = vpack.c.b16 %v10565, %v10561
        %v10786 = vpack.c.b16 %v10570, %v10566
        %v10787 = vpack.c.b16 %v10571, %v10567
        %v10788 = vpack.c.b16 %v10572, %v10568
        %v10789 = vpack.c.b16 %v10573, %v10569
        %v10790 = vpack.c.b16 %v10578, %v10574
        %v10791 = vpack.c.b16 %v10579, %v10575
        %v10792 = vpack.c.b16 %v10580, %v10576
        %v10793 = vpack.c.b16 %v10581, %v10577
        %v10794 = vpack.c.b16 %v10586, %v10582
        %v10795 = vpack.c.b16 %v10587, %v10583
        %v10796 = vpack.c.b16 %v10588, %v10584
        %v10797 = vpack.c.b16 %v10589, %v10585
        %v10798 = vpack.c.b16 %v10594, %v10590
        %v10799 = vpack.c.b16 %v10595, %v10591
        %v10800 = vpack.c.b16 %v10596, %v10592
        %v10801 = vpack.c.b16 %v10597, %v10593
        %v10802 = vpack.c.b16 %v10602, %v10598
        %v10803 = vpack.c.b16 %v10603, %v10599
        %v10804 = vpack.c.b16 %v10604, %v10600
        %v10805 = vpack.c.b16 %v10605, %v10601
        %v10806 = vpack.c.b16 %v10610, %v10606
        %v10807 = vpack.c.b16 %v10611, %v10607
        %v10808 = vpack.c.b16 %v10612, %v10608
        %v10809 = vpack.c.b16 %v10613, %v10609
        %v10810 = vpack.c.b16 %v10618, %v10614
        %v10811 = vpack.c.b16 %v10619, %v10615
        %v10812 = vpack.c.b16 %v10620, %v10616
        %v10813 = vpack.c.b16 %v10621, %v10617
        %v10814 = vpack.c.b16 %v10626, %v10622
        %v10815 = vpack.c.b16 %v10627, %v10623
        %v10816 = vpack.c.b16 %v10628, %v10624
        %v10817 = vpack.c.b16 %v10629, %v10625
        %v10818 = vpack.c.b16 %v10634, %v10630
        %v10819 = vpack.c.b16 %v10635, %v10631
        %v10820 = vpack.c.b16 %v10636, %v10632
        %v10821 = vpack.c.b16 %v10637, %v10633
        %v10822 = vpack.c.b16 %v10642, %v10638
        %v10823 = vpack.c.b16 %v10643, %v10639
        %v10824 = vpack.c.b16 %v10644, %v10640
        %v10825 = vpack.c.b16 %v10645, %v10641
        %v10826 = vpack.c.b16 %v10650, %v10646
        %v10827 = vpack.c.b16 %v10651, %v10647
        %v10828 = vpack.c.b16 %v10652, %v10648
        %v10829 = vpack.c.b16 %v10653, %v10649
        %v10830 = vpack.c.b16 %v10658, %v10654
        %v10831 = vpack.c.b16 %v10659, %v10655
        %v10832 = vpack.c.b16 %v10660, %v10656
        %v10833 = vpack.c.b16 %v10661, %v10657
        %v10834 = vpack.c.b16 %v10666, %v10662
        %v10835 = vpack.c.b16 %v10667, %v10663
        %v10836 = vpack.c.b16 %v10668, %v10664
        %v10837 = vpack.c.b16 %v10669, %v10665
        %v10838 = vpack.c.b16 %v10674, %v10670
        %v10839 = vpack.c.b16 %v10675, %v10671
        %v10840 = vpack.c.b16 %v10676, %v10672
        %v10841 = vpack.c.b16 %v10677, %v10673
        %v10842 = vpack.c.b16 %v10682, %v10678
        %v10843 = vpack.c.b16 %v10683, %v10679
        %v10844 = vpack.c.b16 %v10684, %v10680
        %v10845 = vpack.c.b16 %v10685, %v10681
        %v10846 = vpack.c.b16 %v10690, %v10686
        %v10847 = vpack.c.b16 %v10691, %v10687
        %v10848 = vpack.c.b16 %v10692, %v10688
        %v10849 = vpack.c.b16 %v10693, %v10689
        %v10850 = vpack.c.b16 %v10698, %v10694
        %v10851 = vpack.c.b16 %v10699, %v10695
        %v10852 = vpack.c.b16 %v10700, %v10696
        %v10853 = vpack.c.b16 %v10701, %v10697
        %v10854 = vpack.c.b16 %v10706, %v10702
        %v10855 = vpack.c.b16 %v10707, %v10703
        %v10856 = vpack.c.b16 %v10708, %v10704
        %v10857 = vpack.c.b16 %v10709, %v10705
        %v10858 = vpack.c.b16 %v10714, %v10710
        %v10859 = vpack.c.b16 %v10715, %v10711
        %v10860 = vpack.c.b16 %v10716, %v10712
        %v10861 = vpack.c.b16 %v10717, %v10713
        %v10862 = vpack.c.b16 %v10722, %v10718
        %v10863 = vpack.c.b16 %v10723, %v10719
        %v10864 = vpack.c.b16 %v10724, %v10720
        %v10865 = vpack.c.b16 %v10725, %v10721
        %v10866 = vpack.c.b16 %v10730, %v10726
        %v10867 = vpack.c.b16 %v10731, %v10727
        %v10868 = vpack.c.b16 %v10732, %v10728
        %v10869 = vpack.c.b16 %v10733, %v10729
        %v10870 = vpack.c.b16 %v10738, %v10734
        %v10871 = vpack.c.b16 %v10739, %v10735
        %v10872 = vpack.c.b16 %v10740, %v10736
        %v10873 = vpack.c.b16 %v10741, %v10737
        %v10874 = vpack.c.b16 %v10746, %v10742
        %v10875 = vpack.c.b16 %v10747, %v10743
        %v10876 = vpack.c.b16 %v10748, %v10744
        %v10877 = vpack.c.b16 %v10749, %v10745
        %11006 = vmatprep.subr.bf16.mxu0 %v10779
        %11007 = vmatpush1.bf16.msra.mxu0 %v10778
        %11008 = vmatprep.subr.bf16.mxu0 %v10775
        %11009 = vmatpush1.bf16.msra.mxu0 %v10774
        %11010 = vmatprep.subr.bf16.mxu0 %v10771
        %11011 = vmatpush1.bf16.msra.mxu0 %v10770
        %11012 = vmatprep.subr.bf16.mxu0 %v10767
        %11013 = vmatpush1.bf16.msra.mxu0 %v10766
        %11014 = vmatprep.subr.bf16.mxu0 %v10763
        %11015 = vmatpush1.bf16.msra.mxu0 %v10762
        %11016 = vmatprep.subr.bf16.mxu0 %v10759
        %11017 = vmatpush1.bf16.msra.mxu0 %v10758
        %11018 = vmatprep.subr.bf16.mxu0 %v10755
        %11019 = vmatpush1.bf16.msra.mxu0 %v10754
        %11020 = vmatprep.subr.bf16.mxu0 %v10751
        %11021 = vmatpush1.bf16.msra.mxu0 %v10750
        %11022 = vmatprep.subr.bf16.mxu0 %v10811
        %11023 = vmatpush2.bf16.msra.mxu0 %v10810
        %11024 = vmatprep.subr.bf16.mxu0 %v10807
        %11025 = vmatpush2.bf16.msra.mxu0 %v10806
        %11026 = vmatprep.subr.bf16.mxu0 %v10803
        %11027 = vmatpush2.bf16.msra.mxu0 %v10802
        %11028 = vmatprep.subr.bf16.mxu0 %v10799
        %11029 = vmatpush2.bf16.msra.mxu0 %v10798
        %11030 = vmatprep.subr.bf16.mxu0 %v10795
        %11031 = vmatpush2.bf16.msra.mxu0 %v10794
        %11032 = vmatprep.subr.bf16.mxu0 %v10791
        %11033 = vmatpush2.bf16.msra.mxu0 %v10790
        %11034 = vmatprep.subr.bf16.mxu0 %v10787
        %11035 = vmatpush2.bf16.msra.mxu0 %v10786
        %11036 = vmatprep.subr.bf16.mxu0 %v10783
        %11037 = vmatpush2.bf16.msra.mxu0 %v10782
        %11038 = vmatprep.mubr.bf16.mxu0 %v10213
        %11039 = vmatmul.mubr.bf16.gmra.mxu0 %v10212
        %v11040 = vpop.f32.mrf.mxu0
        %v11041 = vadd.f32 %v10349, %v11040
        %v11042 = vpop.f32.mrf.mxu0
        %v11043 = vadd.f32 %v10353, %v11042
        %v11044 = vpop.f32.mrf.mxu0
        %v11045 = vadd.f32 %v10349, %v11044
        %v11046 = vpop.f32.mrf.mxu0
        %v11047 = vadd.f32 %v10353, %v11046
        %11048 = vdwg.mxu0
        %11049 = vmatprep.subr.bf16.mxu0 %v10843
        %11050 = vmatpush1.bf16.msra.mxu0 %v10842
        %11051 = vmatprep.subr.bf16.mxu0 %v10839
        %11052 = vmatpush1.bf16.msra.mxu0 %v10838
        %11053 = vmatprep.subr.bf16.mxu0 %v10835
        %11054 = vmatpush1.bf16.msra.mxu0 %v10834
        %11055 = vmatprep.subr.bf16.mxu0 %v10831
        %11056 = vmatpush1.bf16.msra.mxu0 %v10830
        %11057 = vmatprep.subr.bf16.mxu0 %v10827
        %11058 = vmatpush1.bf16.msra.mxu0 %v10826
        %11059 = vmatprep.subr.bf16.mxu0 %v10823
        %11060 = vmatpush1.bf16.msra.mxu0 %v10822
        %11061 = vmatprep.subr.bf16.mxu0 %v10819
        %11062 = vmatpush1.bf16.msra.mxu0 %v10818
        %11063 = vmatprep.subr.bf16.mxu0 %v10815
        %11064 = vmatpush1.bf16.msra.mxu0 %v10814
        %11065 = vmatprep.subr.bf16.mxu0 %v10875
        %11066 = vmatpush2.bf16.msra.mxu0 %v10874
        %11067 = vmatprep.subr.bf16.mxu0 %v10871
        %11068 = vmatpush2.bf16.msra.mxu0 %v10870
        %11069 = vmatprep.subr.bf16.mxu0 %v10867
        %11070 = vmatpush2.bf16.msra.mxu0 %v10866
        %11071 = vmatprep.subr.bf16.mxu0 %v10863
        %11072 = vmatpush2.bf16.msra.mxu0 %v10862
        %11073 = vmatprep.subr.bf16.mxu0 %v10859
        %11074 = vmatpush2.bf16.msra.mxu0 %v10858
        %11075 = vmatprep.subr.bf16.mxu0 %v10855
        %11076 = vmatpush2.bf16.msra.mxu0 %v10854
        %11077 = vmatprep.subr.bf16.mxu0 %v10851
        %11078 = vmatpush2.bf16.msra.mxu0 %v10850
        %11079 = vmatprep.subr.bf16.mxu0 %v10847
        %11080 = vmatpush2.bf16.msra.mxu0 %v10846
        %11081 = vmatprep.mubr.bf16.mxu0 %v10215
        %11082 = vmatmul.mubr.bf16.gmra.mxu0 %v10214
        %v11083 = vpop.f32.mrf.mxu0
        %v11084 = vadd.f32 %v11041, %v11083
        %v11085 = vpop.f32.mrf.mxu0
        %v11086 = vadd.f32 %v11043, %v11085
        %v11087 = vpop.f32.mrf.mxu0
        %v11088 = vadd.f32 %v11045, %v11087
        %v11089 = vpop.f32.mrf.mxu0
        %v11090 = vadd.f32 %v11047, %v11089
        %11091 = vdwg.mxu0
        %11092 = vmatprep.subr.bf16.mxu0 %v10781
        %11093 = vmatpush1.bf16.msra.mxu0 %v10780
        %11094 = vmatprep.subr.bf16.mxu0 %v10777
        %11095 = vmatpush1.bf16.msra.mxu0 %v10776
        %11096 = vmatprep.subr.bf16.mxu0 %v10773
        %11097 = vmatpush1.bf16.msra.mxu0 %v10772
        %11098 = vmatprep.subr.bf16.mxu0 %v10769
        %11099 = vmatpush1.bf16.msra.mxu0 %v10768
        %11100 = vmatprep.subr.bf16.mxu0 %v10765
        %11101 = vmatpush1.bf16.msra.mxu0 %v10764
        %11102 = vmatprep.subr.bf16.mxu0 %v10761
        %11103 = vmatpush1.bf16.msra.mxu0 %v10760
        %11104 = vmatprep.subr.bf16.mxu0 %v10757
        %11105 = vmatpush1.bf16.msra.mxu0 %v10756
        %11106 = vmatprep.subr.bf16.mxu0 %v10753
        %11107 = vmatpush1.bf16.msra.mxu0 %v10752
        %11108 = vmatprep.subr.bf16.mxu0 %v10813
        %11109 = vmatpush2.bf16.msra.mxu0 %v10812
        %11110 = vmatprep.subr.bf16.mxu0 %v10809
        %11111 = vmatpush2.bf16.msra.mxu0 %v10808
        %11112 = vmatprep.subr.bf16.mxu0 %v10805
        %11113 = vmatpush2.bf16.msra.mxu0 %v10804
        %11114 = vmatprep.subr.bf16.mxu0 %v10801
        %11115 = vmatpush2.bf16.msra.mxu0 %v10800
        %11116 = vmatprep.subr.bf16.mxu0 %v10797
        %11117 = vmatpush2.bf16.msra.mxu0 %v10796
        %11118 = vmatprep.subr.bf16.mxu0 %v10793
        %11119 = vmatpush2.bf16.msra.mxu0 %v10792
        %11120 = vmatprep.subr.bf16.mxu0 %v10789
        %11121 = vmatpush2.bf16.msra.mxu0 %v10788
        %11122 = vmatprep.subr.bf16.mxu0 %v10785
        %11123 = vmatpush2.bf16.msra.mxu0 %v10784
        %11124 = vmatprep.mubr.bf16.mxu0 %v10213
        %11125 = vmatmul.mubr.bf16.gmra.mxu0 %v10212
        %v11126 = vpop.f32.mrf.mxu0
        %v11127 = vadd.f32 %v10357, %v11126
        %v11128 = vpop.f32.mrf.mxu0
        %v11129 = vadd.f32 %v10361, %v11128
        %v11130 = vpop.f32.mrf.mxu0
        %v11131 = vadd.f32 %v10357, %v11130
        %v11132 = vpop.f32.mrf.mxu0
        %v11133 = vadd.f32 %v10361, %v11132
        %11134 = vdwg.mxu0
        %11135 = vmatprep.subr.bf16.mxu0 %v10845
        %11136 = vmatpush1.bf16.msra.mxu0 %v10844
        %11137 = vmatprep.subr.bf16.mxu0 %v10841
        %11138 = vmatpush1.bf16.msra.mxu0 %v10840
        %11139 = vmatprep.subr.bf16.mxu0 %v10837
        %11140 = vmatpush1.bf16.msra.mxu0 %v10836
        %11141 = vmatprep.subr.bf16.mxu0 %v10833
        %11142 = vmatpush1.bf16.msra.mxu0 %v10832
        %11143 = vmatprep.subr.bf16.mxu0 %v10829
        %11144 = vmatpush1.bf16.msra.mxu0 %v10828
        %11145 = vmatprep.subr.bf16.mxu0 %v10825
        %11146 = vmatpush1.bf16.msra.mxu0 %v10824
        %11147 = vmatprep.subr.bf16.mxu0 %v10821
        %11148 = vmatpush1.bf16.msra.mxu0 %v10820
        %11149 = vmatprep.subr.bf16.mxu0 %v10817
        %11150 = vmatpush1.bf16.msra.mxu0 %v10816
        %11151 = vmatprep.subr.bf16.mxu0 %v10877
        %11152 = vmatpush2.bf16.msra.mxu0 %v10876
        %11153 = vmatprep.subr.bf16.mxu0 %v10873
        %11154 = vmatpush2.bf16.msra.mxu0 %v10872
        %11155 = vmatprep.subr.bf16.mxu0 %v10869
        %11156 = vmatpush2.bf16.msra.mxu0 %v10868
        %11157 = vmatprep.subr.bf16.mxu0 %v10865
        %11158 = vmatpush2.bf16.msra.mxu0 %v10864
        %11159 = vmatprep.subr.bf16.mxu0 %v10861
        %11160 = vmatpush2.bf16.msra.mxu0 %v10860
        %11161 = vmatprep.subr.bf16.mxu0 %v10857
        %11162 = vmatpush2.bf16.msra.mxu0 %v10856
        %11163 = vmatprep.subr.bf16.mxu0 %v10853
        %11164 = vmatpush2.bf16.msra.mxu0 %v10852
        %11165 = vmatprep.subr.bf16.mxu0 %v10849
        %11166 = vmatpush2.bf16.msra.mxu0 %v10848
        %11167 = vmatprep.mubr.bf16.mxu0 %v10215
        %11168 = vmatmul.mubr.bf16.gmra.mxu0 %v10214
        %v11169 = vpop.f32.mrf.mxu0
        %v11170 = vadd.f32 %v11127, %v11169
        %v11171 = vpop.f32.mrf.mxu0
        %v11172 = vadd.f32 %v11129, %v11171
        %v11173 = vpop.f32.mrf.mxu0
        %v11174 = vadd.f32 %v11131, %v11173
        %v11175 = vpop.f32.mrf.mxu0
        %v11176 = vadd.f32 %v11133, %v11175
        %11177 = vdwg.mxu0
        %v11178 = vadd.f32 %v9230, %v11084
        %v11179 = vadd.f32 %v9231, %v11086
        %v11180 = vadd.f32 %v9232, %v11170
        %v11181 = vadd.f32 %v9233, %v11172
        %v11182 = vadd.f32 %v9234, %v11088
        %v11183 = vadd.f32 %v9235, %v11090
        %v11184 = vadd.f32 %v9236, %v11174
        %v11185 = vadd.f32 %v9237, %v11176
        %v11186 = vld [vmem:[#allocation27] sm:$0xf]
        %v11187 = vld [vmem:[#allocation28] sm:$0xf]
        %v11188 = vadd.f32 %v11178, %v11179
        %v11189 = vadd.f32 %v11188, %v11180
        %v11190 = vadd.f32 %v11189, %v11181
        %11191 = vadd.xlane.f32.xlu0 %v11190
        %v11192 = vpop.xlane.xlu0 %11191
        %v11193 = vsel %vm9123, %v11182, 0.0
        %v11194 = vsel %vm9123, %v11183, 0.0
        %v11195 = vadd.f32 %v11193, %v11194
        %v11196 = vsel %vm9123, %v11184, 0.0
        %v11197 = vadd.f32 %v11195, %v11196
        %v11198 = vsel %vm9123, %v11185, 0.0
        %v11199 = vadd.f32 %v11197, %v11198
        %11200 = vadd.xlane.f32.xlu0 %v11199
        %v11201 = vpop.xlane.xlu0 %11200
        %v11202 = vmul.f32 %v11192, %v9133
        %v11203 = vmul.f32 %v11201, %v9133
        %v11204 = vsub.f32 %v11178, %v11202
        %v11205 = vsub.f32 %v11179, %v11202
        %v11206 = vsub.f32 %v11180, %v11202
        %v11207 = vsub.f32 %v11181, %v11202
        %v11208 = vsub.f32 %v11182, %v11203
        %v11209 = vsub.f32 %v11183, %v11203
        %v11210 = vsub.f32 %v11184, %v11203
        %v11211 = vsub.f32 %v11185, %v11203
        %v11212 = vmul.f32 %v11204, %v11204
        %v11213 = vmul.f32 %v11205, %v11205
        %v11214 = vmul.f32 %v11206, %v11206
        %v11215 = vmul.f32 %v11207, %v11207
        %v11216 = vmul.f32 %v11208, %v11208
        %v11217 = vmul.f32 %v11209, %v11209
        %v11218 = vmul.f32 %v11210, %v11210
        %v11219 = vmul.f32 %v11211, %v11211
        %v11220 = vadd.f32 %v11212, %v11213
        %v11221 = vadd.f32 %v11220, %v11214
        %v11222 = vadd.f32 %v11221, %v11215
        %11223 = vadd.xlane.f32.xlu0 %v11222
        %v11224 = vpop.xlane.xlu0 %11223
        %v11225 = vsel %vm9123, %v11216, 0.0
        %v11226 = vsel %vm9123, %v11217, 0.0
        %v11227 = vadd.f32 %v11225, %v11226
        %v11228 = vsel %vm9123, %v11218, 0.0
        %v11229 = vadd.f32 %v11227, %v11228
        %v11230 = vsel %vm9123, %v11219, 0.0
        %v11231 = vadd.f32 %v11229, %v11230
        %11232 = vadd.xlane.f32.xlu0 %v11231
        %v11233 = vpop.xlane.xlu0 %11232
        %v11234 = vmul.f32 %v11224, %v9133
        %v11235 = vmul.f32 %v11233, %v9133
        %v11236 = vadd.f32 %v11234, 1e-05
        %v11237 = vadd.f32 %v11235, 1e-05
        %v11238 = vrsqrt.pop %v11236
        %v11239 = vrsqrt.pop %v11237
        %v11240 = vmul.f32 %v11204, %v11238
        %v11241 = vmul.f32 %v11205, %v11238
        %v11242 = vmul.f32 %v11206, %v11238
        %v11243 = vmul.f32 %v11207, %v11238
        %v11244 = vmul.f32 %v11208, %v11239
        %v11245 = vmul.f32 %v11209, %v11239
        %v11246 = vmul.f32 %v11210, %v11239
        %v11247 = vmul.f32 %v11211, %v11239
        %v11249 = vlaneseq
        %v11250 = vshrl.u32 %v11249, 7
        %v11251 = vsub.s32 0, %v11250
        %v11252 = vrot.slane %v11186, %v11251
        %v11253 = vlaneseq
        %v11254 = vshrl.u32 %v11253, 7
        %v11255 = vsub.s32 1, %v11254
        %v11256 = vrot.slane %v11186, %v11255
        %v11257 = vlaneseq
        %v11258 = vshrl.u32 %v11257, 7
        %v11259 = vsub.s32 2, %v11258
        %v11260 = vrot.slane %v11186, %v11259
        %v11261 = vlaneseq
        %v11262 = vshrl.u32 %v11261, 7
        %v11263 = vsub.s32 3, %v11262
        %v11264 = vrot.slane %v11186, %v11263
        %v11269 = vmul.f32 %v11240, %v11252
        %v11270 = vmul.f32 %v11241, %v11256
        %v11271 = vmul.f32 %v11242, %v11260
        %v11272 = vmul.f32 %v11243, %v11264
        %v11273 = vmul.f32 %v11244, %v11252
        %v11274 = vmul.f32 %v11245, %v11256
        %v11275 = vmul.f32 %v11246, %v11260
        %v11276 = vmul.f32 %v11247, %v11264
        %v11278 = vlaneseq
        %v11279 = vshrl.u32 %v11278, 7
        %v11280 = vsub.s32 0, %v11279
        %v11281 = vrot.slane %v11187, %v11280
        %v11282 = vlaneseq
        %v11283 = vshrl.u32 %v11282, 7
        %v11284 = vsub.s32 1, %v11283
        %v11285 = vrot.slane %v11187, %v11284
        %v11286 = vlaneseq
        %v11287 = vshrl.u32 %v11286, 7
        %v11288 = vsub.s32 2, %v11287
        %v11289 = vrot.slane %v11187, %v11288
        %v11290 = vlaneseq
        %v11291 = vshrl.u32 %v11290, 7
        %v11292 = vsub.s32 3, %v11291
        %v11293 = vrot.slane %v11187, %v11292
        %v11298 = vadd.f32 %v11269, %v11281
        %v11299 = vadd.f32 %v11270, %v11285
        %v11300 = vadd.f32 %v11271, %v11289
        %v11301 = vadd.f32 %v11272, %v11293
        %v11302 = vadd.f32 %v11273, %v11281
        %v11303 = vadd.f32 %v11274, %v11285
        %v11304 = vadd.f32 %v11275, %v11289
        %v11305 = vadd.f32 %v11276, %v11293
        %11306 = vst [vmem:[%s924] sm:$0xff] %v11298
        %11307 = vst [vmem:[%s924 + $0x8] sm:$0xff] %v11299
        %11308 = vst [vmem:[%s924 + $0x10] sm:$0xff] %v11300
        %11309 = vst [vmem:[%s924 + $0x18] sm:$0xff] %v11301
        %11310 = vst [vmem:[%s924 + $0x20] sm:$0x3] %v11302
        %11311 = vst [vmem:[%s924 + $0x28] sm:$0x3] %v11303
        %11312 = vst [vmem:[%s924 + $0x30] sm:$0x3] %v11304
        %11313 = vst [vmem:[%s924 + $0x38] sm:$0x3] %v11305
        %11314 = vst.msk [vmem:[%s929] sm:$0xff] %vm3923, %v3947
        %11315 = vst.msk [vmem:[%s929 + $0x8] sm:$0x3] %vm3927, %v3948
        %p11316 = scmp.lt.s32.totalorder %s43, 1
        %s11317 = scalar_select %p11316, %s43, 1
        %s11318 = smul.addr %s11317, 8
        %s11319 = smul.addr %s11318, 8
        %s11320 = scalar_lea.vmem %s20, %s11319
        %p11321 = scmp.lt.s32.totalorder %s43, 1
        %s11322 = scalar_select %p11321, %s43, 1
        %s11323 = smul.addr %s11322, 2
        %s11324 = smul.addr %s11323, 8
        %s11325 = scalar_lea.vmem %s21, %s11324
        // Predicated region
        $region173: #{self_han_layer.1} parent=99 // pred_check
          %p11326 = pneg %p491
        $region174: #{self_han_layer.1} parent=99 // pred_check_branch
          %11328 = sbr.rel (%p11326) target = $region176
        $region175: #{self_han_layer.1} parent=99 // pred_region
          _
        $region176: #{self_han_layer.1} parent=99 // pred_fallthru
          _
        // Predicated region
        $region177: #{self_han_layer.1} parent=99 // pred_check
          %p11329 = pneg %p517
        $region178: #{self_han_layer.1} parent=99 // pred_check_branch
          %11331 = sbr.rel (%p11329) target = $region180
        $region179: #{self_han_layer.1} parent=99 // pred_region
          _
        $region180: #{self_han_layer.1} parent=99 // pred_fallthru
          _
      $region100: #{self_han_layer.1} parent=5 // pred_fallthru
        _
      %p11332 = scmp.le.s32.totalorder 2, %s38
      // Predicated region
      $region181: #{self_han_layer.1} parent=5 // pred_check
        %p11333 = pneg %p11332
      $region182: #{self_han_layer.1} parent=5 // pred_check_branch
        %11335 = sbr.rel (%p11333) target = $region184
      $region183: #{self_han_layer.1} parent=5 // pred_region
        %s11336 = ssub.s32 %s38, 2
        // Predicated region
        $region185: #{self_han_layer.1} parent=183 // pred_check
          %p11337 = pneg %p497
        $region186: #{self_han_layer.1} parent=183 // pred_check_branch
          %11339 = sbr.rel (%p11337) target = $region188
        $region187: #{self_han_layer.1} parent=183 // pred_region
          %p11340 = scmp.lt.s32.totalorder %s44, 1
          %s11341 = scalar_select %p11340, %s44, 1
          %s11342 = smul.addr %s11341, 8
          %s11343 = smul.addr %s11342, 8
          %s11344 = scalar_lea.vmem %s20, %s11343
        $region188: #{self_han_layer.1} parent=183 // pred_fallthru
          _
        // Predicated region
        $region189: #{self_han_layer.1} parent=183 // pred_check
          %p11345 = pneg %p523
        $region190: #{self_han_layer.1} parent=183 // pred_check_branch
          %11347 = sbr.rel (%p11345) target = $region192
        $region191: #{self_han_layer.1} parent=183 // pred_region
          %p11348 = scmp.lt.s32.totalorder %s44, 1
          %s11349 = scalar_select %p11348, %s44, 1
          %s11350 = smul.addr %s11349, 2
          %s11351 = smul.addr %s11350, 8
          %s11352 = scalar_lea.vmem %s21, %s11351
        $region192: #{self_han_layer.1} parent=183 // pred_fallthru
          _
      $region184: #{self_han_layer.1} parent=5 // pred_fallthru
        _
    $region6: #{self_han_layer.1} parent=1 // loop_footer
      %s42 = sadd.s32 1, %s38
    $region7: #{self_han_layer.1} parent=1 // loop_footer_branch
      %37 = sbr.rel target = $region3
    $region8: #{self_han_layer.1} parent=1 // loop_exit
      _
    %11353 = vsyncpa [#allocation3], 1
    %s11354 = scalar_lea.sflag [#allocation3], 1
    %11355 = vsyncpa %s11354, 1
    %11356 = vsyncpa [#allocation5], 1
    %11357 = vsyncpa [#allocation8], 1
    %11358 = vsyncpa [#allocation11], 1
    %11359 = vsyncpa [#allocation14], 1
    %11360 = vsyncpa [#allocation17], 1
    %11361 = vsyncpa [#allocation20], 1
    %11362 = vsyncpa [#allocation23], 1
    %11363 = vsyncpa [#allocation26], 1
    %11364 = vsyncpa [#allocation29], 1

</llo_original>
